<compile_context>
chip_gen: v7x
topology: tpu7x:2x2x1
jax: 0.10.0
libtpu: 0.0.40
codegen_flags: <defaults>
</compile_context>

<pallas_src>
import functools
import math

import jax
import jax.numpy as jnp
from jax.experimental import pallas as pl
from jax.experimental.pallas import tpu as pltpu


# ----------------------------------------------------------------------------
# Model config
# ----------------------------------------------------------------------------
IN_C = 3
C0_PAD = 8          # input channels padded 3 -> 8 so K-packed tap slabs align
BB_C1 = 16
BB_C2 = 32          # backbone output channels (feature map)
RPN_C = 32
NUM_ANCHORS = 3
ANCHOR_SCALES = (4.0, 8.0, 16.0)
RPN_OUT = 16        # A objectness + 4A deltas = 15, padded to 16 lanes
TOPK_PROPOSALS = 8
POOL = 4
FC_DIM = 64
FC_PAD = 128        # fc1/fc2 width padded to 128 lanes (lane-dense MXU)
NUM_CLASSES = 5     # background + 4 foreground classes
BACKBONE_STRIDE = 2
HEAD_PAD = 128      # lane-dense padded output width for the fused roi head
BBOX_XFORM_CLIP = math.log(1000.0 / 16.0)


# ----------------------------------------------------------------------------
# Fused backbone + RPN kernel (one image per grid step)
# ----------------------------------------------------------------------------
def _backbone_rpn_kernel(x_ref, w1, b1, w2, b2, w3, b3, wh, bh,
                         feat_ref, rpn_ref,
                         buf1, buf2, p1, p2, p3, *, H, W, Wp, Hf, Wf):
    """All spatial maps are flattened with a uniform padded row width Wp.

    x_ref : ((H+3)*Wp, C0_PAD) f32  zero-padded input image (1px halo + slack)
    w*    : (9*Cin, Cout) bf16      K-packed 3x3 conv weights (HWIO order)
    wh    : (RPN_C, RPN_OUT) bf16   fused 1x1 objectness+bbox head
    feat_ref: (Hf*Wp, BB_C2) bf16   backbone feature map (valid cols [0, Wf))
    rpn_ref : (Hf*Wp, RPN_OUT) f32  [sigmoid(obj) | deltas | pad]
    buf1/buf2: padded VMEM buffers between layers; p1/p2/p3: K-packed patches.
    """
    C0 = x_ref.shape[-1]
    C1 = w2.shape[0] // 9
    C2 = w3.shape[0] // 9
    M1 = H * Wp          # bb1 output rows (stride 1)
    M2 = Hf * Wp         # bb2 / rpn_conv output rows (feature map)

    # ---- bb1: 3x3, stride 1, pad 1, C0 -> BB_C1, ReLU -------------------
    for t in range(9):
        di, dj = divmod(t, 3)
        p1[:, t * C0:(t + 1) * C0] = x_ref[pl.ds(di * Wp + dj, M1), :]
    a1 = jnp.dot(p1[...].astype(jnp.bfloat16), w1[...],
                 preferred_element_type=jnp.float32) + b1[...]
    a1 = jnp.maximum(a1, 0.0)
    col1 = jax.lax.broadcasted_iota(jnp.int32, (M1, 1), 0) % Wp
    a1 = jnp.where(col1 < W, a1, 0.0)        # zero the garbage columns
    buf1[...] = jnp.zeros_like(buf1)
    buf1[pl.ds(Wp + 1, M1), :] = a1          # shifted copy -> padded interior

    # ---- bb2: 3x3, stride 2, pad 1, BB_C1 -> BB_C2, ReLU ----------------
    # Stride-2 taps are single stride-2 flat slices: element m of the slice is
    # input index 2*m + (di*Wp + dj), which is exactly pixel (2i+di, 2j+dj)
    # for output position m = i*Wp + j.
    for t in range(9):
        di, dj = divmod(t, 3)
        p2[:, t * C1:(t + 1) * C1] = buf1[pl.ds(di * Wp + dj, M2, 2), :]
    a2 = jnp.dot(p2[...].astype(jnp.bfloat16), w2[...],
                 preferred_element_type=jnp.float32) + b2[...]
    a2 = jnp.maximum(a2, 0.0)
    col2 = jax.lax.broadcasted_iota(jnp.int32, (M2, 1), 0) % Wp
    a2 = jnp.where(col2 < Wf, a2, 0.0)
    feat_ref[...] = a2.astype(feat_ref.dtype)      # bf16 HBM writeback
    buf2[...] = jnp.zeros_like(buf2)
    buf2[pl.ds(Wp + 1, M2), :] = a2

    # ---- rpn_conv: 3x3, stride 1, pad 1, BB_C2 -> RPN_C, ReLU -----------
    for t in range(9):
        di, dj = divmod(t, 3)
        p3[:, t * C2:(t + 1) * C2] = buf2[pl.ds(di * Wp + dj, M2), :]
    a3 = jnp.dot(p3[...].astype(jnp.bfloat16), w3[...],
                 preferred_element_type=jnp.float32) + b3[...]
    a3 = jnp.maximum(a3, 0.0)

    # ---- rpn head (fused 1x1 objectness + bbox), sigmoid in-kernel ------
    h = jnp.dot(a3.astype(jnp.bfloat16), wh[...],
                preferred_element_type=jnp.float32) + bh[...]
    lane = jax.lax.broadcasted_iota(jnp.int32, h.shape, 1)
    obj = 1.0 / (1.0 + jnp.exp(-h))                # EUP; only obj lanes kept
    rpn_ref[...] = jnp.where(lane < NUM_ANCHORS, obj, h).astype(rpn_ref.dtype)


def backbone_rpn(params, x_pad, *, H, W):
    N = x_pad.shape[0]
    Wp = W + 2
    Hf, Wf = H // 2, W // 2
    Rtot = H + 3                       # 1 top pad + 1 bottom pad + 1 slack row
    M1 = H * Wp
    M2 = Hf * Wp
    kern = functools.partial(_backbone_rpn_kernel, H=H, W=W, Wp=Wp, Hf=Hf, Wf=Wf)
    feat, rpn = pl.pallas_call(
        kern,
        out_shape=(jax.ShapeDtypeStruct((N, M2, BB_C2), jnp.bfloat16),
                   jax.ShapeDtypeStruct((N, M2, RPN_OUT), jnp.float32)),
        grid=(N,),
        in_specs=[
            pl.BlockSpec((None, Rtot * Wp, C0_PAD), lambda n: (n, 0, 0)),
            pl.BlockSpec((9 * C0_PAD, BB_C1), lambda n: (0, 0)),
            pl.BlockSpec((1, BB_C1), lambda n: (0, 0)),
            pl.BlockSpec((9 * BB_C1, BB_C2), lambda n: (0, 0)),
            pl.BlockSpec((1, BB_C2), lambda n: (0, 0)),
            pl.BlockSpec((9 * BB_C2, RPN_C), lambda n: (0, 0)),
            pl.BlockSpec((1, RPN_C), lambda n: (0, 0)),
            pl.BlockSpec((RPN_C, RPN_OUT), lambda n: (0, 0)),
            pl.BlockSpec((1, RPN_OUT), lambda n: (0, 0)),
        ],
        out_specs=(pl.BlockSpec((None, M2, BB_C2), lambda n: (n, 0, 0)),
                   pl.BlockSpec((None, M2, RPN_OUT), lambda n: (n, 0, 0))),
        scratch_shapes=[
            pltpu.VMEM((Rtot * Wp, BB_C1), jnp.float32),   # buf1 (padded bb1 out)
            pltpu.VMEM((Rtot * Wp, BB_C2), jnp.float32),   # buf2 (padded feature)
            pltpu.VMEM((M1, 9 * C0_PAD), jnp.float32),     # p1
            pltpu.VMEM((M2, 9 * BB_C1), jnp.float32),      # p2
            pltpu.VMEM((M2, 9 * BB_C2), jnp.float32),      # p3
        ],
        compiler_params=pltpu.CompilerParams(dimension_semantics=("parallel",)),
    )(x_pad, params["bb1_w"], params["bb1_b"], params["bb2_w"], params["bb2_b"],
      params["rpn_conv_w"], params["rpn_conv_b"],
      params["rpn_head_w"], params["rpn_head_b"])
    return feat, rpn


# ----------------------------------------------------------------------------
# Fused roi_heads kernel: fc1 -> fc2 -> fused cls/box head -> masked softmax
# ----------------------------------------------------------------------------
def _roi_heads_kernel(x_ref, w1_ref, b1_ref, w2_ref, b2_ref, wh_ref, bh_ref,
                      o_ref, *, num_classes):
    x = x_ref[...]                                                 # (R, D) bf16
    h1 = jnp.maximum(jnp.dot(x, w1_ref[...],
                             preferred_element_type=jnp.float32) + b1_ref[...], 0.0)
    h2 = jnp.maximum(jnp.dot(h1.astype(jnp.bfloat16), w2_ref[...],
                             preferred_element_type=jnp.float32) + b2_ref[...], 0.0)
    head = jnp.dot(h2.astype(jnp.bfloat16), wh_ref[...],
                   preferred_element_type=jnp.float32) + bh_ref[...]  # (R, 128) f32
    # Masked softmax over the first `num_classes` lanes; `head` must stay f32
    # here (the -1e30 mask would overflow in bf16).  approx reciprocal is fine
    # for argmax/scores (probabilities may deviate ~1e-3 from summing to 1).
    lane = jax.lax.broadcasted_iota(jnp.int32, head.shape, 1)
    is_cls = lane < num_classes
    logits = jnp.where(is_cls, head, -1e30)
    m = jnp.max(logits, axis=-1, keepdims=True)
    e = jnp.where(is_cls, jnp.exp(logits - m), 0.0)
    denom = jnp.sum(e, axis=-1, keepdims=True)
    probs = e * pl.reciprocal(denom, approx=True)
    o_ref[...] = jnp.where(is_cls, probs, head)


def pallas_roi_heads(roi_flat, params):
    R, D = roi_flat.shape
    return pl.pallas_call(
        functools.partial(_roi_heads_kernel, num_classes=NUM_CLASSES),
        out_shape=jax.ShapeDtypeStruct((R, HEAD_PAD), jnp.float32),
        grid=(1,),                         # TM = R: single lane-dense grid step
        in_specs=[
            pl.BlockSpec((R, D), lambda i: (0, 0)),
            pl.BlockSpec((D, FC_PAD), lambda i: (0, 0)),
            pl.BlockSpec((1, FC_PAD), lambda i: (0, 0)),
            pl.BlockSpec((FC_PAD, FC_PAD), lambda i: (0, 0)),
            pl.BlockSpec((1, FC_PAD), lambda i: (0, 0)),
            pl.BlockSpec((FC_PAD, HEAD_PAD), lambda i: (0, 0)),
            pl.BlockSpec((1, HEAD_PAD), lambda i: (0, 0)),
        ],
        out_specs=pl.BlockSpec((R, HEAD_PAD), lambda i: (0, 0)),
        compiler_params=pltpu.CompilerParams(dimension_semantics=("arbitrary",)),
    )(roi_flat.astype(jnp.bfloat16),
      params["fc1_w"], params["fc1_b"], params["fc2_w"], params["fc2_b"],
      params["head_w"], params["head_b"])


# ----------------------------------------------------------------------------
# Box utilities / ROIAlign (JAX glue)
# ----------------------------------------------------------------------------
def decode_boxes(anchors, deltas):
    wa = anchors[:, 2] - anchors[:, 0]
    ha = anchors[:, 3] - anchors[:, 1]
    cxa = anchors[:, 0] + 0.5 * wa
    cya = anchors[:, 1] + 0.5 * ha
    dx, dy = deltas[:, 0], deltas[:, 1]
    dw = jnp.minimum(deltas[:, 2], BBOX_XFORM_CLIP)
    dh = jnp.minimum(deltas[:, 3], BBOX_XFORM_CLIP)
    cx = dx * wa + cxa
    cy = dy * ha + cya
    w = jnp.exp(dw) * wa
    h = jnp.exp(dh) * ha
    return jnp.stack(
        [cx - 0.5 * w, cy - 0.5 * h, cx + 0.5 * w, cy + 0.5 * h], axis=-1)


def clip_boxes(boxes, H, W):
    x1 = jnp.clip(boxes[..., 0], 0.0, W - 1.0)
    y1 = jnp.clip(boxes[..., 1], 0.0, H - 1.0)
    x2 = jnp.clip(boxes[..., 2], 0.0, W - 1.0)
    y2 = jnp.clip(boxes[..., 3], 0.0, H - 1.0)
    return jnp.stack([x1, y1, x2, y2], axis=-1)


def make_anchors(Hf, Wf, stride, scales):
    ys = (jnp.arange(Hf, dtype=jnp.float32) + 0.5) * stride
    xs = (jnp.arange(Wf, dtype=jnp.float32) + 0.5) * stride
    cy, cx = jnp.meshgrid(ys, xs, indexing="ij")
    per_scale = []
    for s in scales:
        per_scale.append(
            jnp.stack([cx - s / 2, cy - s / 2, cx + s / 2, cy + s / 2], axis=-1))
    return jnp.stack(per_scale, axis=0)  # (A, Hf, Wf, 4)


def roi_align_nhwc(feat, rois, batch_idx, spatial_scale, pool=4):
    """Simplified ROIAlign (1 bilinear sample per bin). feat: (N,Hf,Wf,C)."""
    # TODO(synk): a Pallas scalar-prefetch DMA-gather ROIAlign only pays off at
    # larger R; kept as XLA glue here.
    Hf, Wf = feat.shape[1], feat.shape[2]
    x1 = rois[:, 0] * spatial_scale
    y1 = rois[:, 1] * spatial_scale
    x2 = rois[:, 2] * spatial_scale
    y2 = rois[:, 3] * spatial_scale
    w = jnp.maximum(x2 - x1, 1.0)
    h = jnp.maximum(y2 - y1, 1.0)
    bins = (jnp.arange(pool, dtype=jnp.float32) + 0.5) / pool
    ys = y1[:, None] + bins[None, :] * h[:, None]
    xs = x1[:, None] + bins[None, :] * w[:, None]

    def sample_one(b, ys_r, xs_r):
        f = feat[b]
        yy = jnp.clip(ys_r, 0.0, Hf - 1.0)
        xx = jnp.clip(xs_r, 0.0, Wf - 1.0)
        y0 = jnp.clip(jnp.floor(yy).astype(jnp.int32), 0, Hf - 2)
        x0 = jnp.clip(jnp.floor(xx).astype(jnp.int32), 0, Wf - 2)   # fixed: Wf
        ly = (yy - y0.astype(jnp.float32))[:, None, None]
        lx = (xx - x0.astype(jnp.float32))[None, :, None]
        f00 = f[y0[:, None], x0[None, :]]
        f01 = f[y0[:, None], x0[None, :] + 1]
        f10 = f[y0[:, None] + 1, x0[None, :]]
        f11 = f[y0[:, None] + 1, x0[None, :] + 1]
        return (f00 * (1 - ly) * (1 - lx) + f01 * (1 - ly) * lx
                + f10 * ly * (1 - lx) + f11 * ly * lx)
    return jax.vmap(sample_one)(batch_idx, ys, xs)                  # (R,P,P,C)


# ----------------------------------------------------------------------------
# Parameters: K-packed conv weights, fused + lane-padded heads, all bf16.
# ----------------------------------------------------------------------------
def init_params(key):
    def conv_init(k, KH, KW, cin, cout):
        std = 1.0 / math.sqrt(cin * KH * KW)
        return jax.random.normal(k, (KH, KW, cin, cout), jnp.float32) * std

    def fc_init(k, inn, out):
        std = 1.0 / math.sqrt(inn)
        return jax.random.normal(k, (inn, out), jnp.float32) * std

    keys = jax.random.split(key, 10)
    p = {}
    w1 = conv_init(keys[0], 3, 3, IN_C, BB_C1)
    w1 = jnp.pad(w1, ((0, 0), (0, 0), (0, C0_PAD - IN_C), (0, 0)))
    p["bb1_w"] = w1.reshape(9 * C0_PAD, BB_C1).astype(jnp.bfloat16)
    p["bb1_b"] = jnp.zeros((1, BB_C1), jnp.float32)
    w2 = conv_init(keys[1], 3, 3, BB_C1, BB_C2)
    p["bb2_w"] = w2.reshape(9 * BB_C1, BB_C2).astype(jnp.bfloat16)
    p["bb2_b"] = jnp.zeros((1, BB_C2), jnp.float32)
    w3 = conv_init(keys[2], 3, 3, BB_C2, RPN_C)
    p["rpn_conv_w"] = w3.reshape(9 * BB_C2, RPN_C).astype(jnp.bfloat16)
    p["rpn_conv_b"] = jnp.zeros((1, RPN_C), jnp.float32)

    # Fused RPN head: [objectness (A) | bbox deltas (4A) | pad] -> 16 lanes.
    rpn_cls_w = fc_init(keys[3], RPN_C, NUM_ANCHORS)
    rpn_reg_w = fc_init(keys[4], RPN_C, 4 * NUM_ANCHORS)
    rpn_w = jnp.concatenate([rpn_cls_w, rpn_reg_w], axis=-1)
    p["rpn_head_w"] = jnp.pad(
        rpn_w, ((0, 0), (0, RPN_OUT - rpn_w.shape[-1]))).astype(jnp.bfloat16)
    p["rpn_head_b"] = jnp.zeros((1, RPN_OUT), jnp.float32)

    # roi_heads FCs, lane-padded 64 -> 128 (zero pad keeps math identical).
    D = BB_C2 * POOL * POOL
    fc1 = fc_init(keys[5], D, FC_DIM)
    p["fc1_w"] = jnp.pad(fc1, ((0, 0), (0, FC_PAD - FC_DIM))).astype(jnp.bfloat16)
    p["fc1_b"] = jnp.zeros((1, FC_PAD), jnp.float32)
    fc2 = fc_init(keys[6], FC_DIM, FC_DIM)
    p["fc2_w"] = jnp.pad(fc2, ((0, FC_PAD - FC_DIM),
                               (0, FC_PAD - FC_DIM))).astype(jnp.bfloat16)
    p["fc2_b"] = jnp.zeros((1, FC_PAD), jnp.float32)

    # Fused lane-dense box head: [cls logits (NC) | box deltas (4NC) | pad].
    cls_w = fc_init(keys[7], FC_DIM, NUM_CLASSES)
    box_w = fc_init(keys[8], FC_DIM, 4 * NUM_CLASSES)
    head_w = jnp.concatenate([cls_w, box_w], axis=-1)
    head_w = jnp.pad(head_w, ((0, FC_PAD - FC_DIM),
                              (0, HEAD_PAD - head_w.shape[-1])))
    p["head_w"] = head_w.astype(jnp.bfloat16)
    p["head_b"] = jnp.zeros((1, HEAD_PAD), jnp.float32)
    return p


# ----------------------------------------------------------------------------
# GeneralizedRCNN forward (inference)
# ----------------------------------------------------------------------------
def generalized_rcnn_forward(params, images):
    N, C, H, W = images.shape
    assert C == IN_C and H % 2 == 0 and W % 2 == 0
    x = jnp.transpose(images, (0, 2, 3, 1))                # NCHW -> NHWC once
    # Single XLA-side pad of the raw 3-channel input: 1px conv halo, one slack
    # row for the in-kernel shifted/stride-2 reads, channels 3 -> 8.
    Wp = W + 2
    x_pad = jnp.pad(x, ((0, 0), (1, 2), (1, 1), (0, C0_PAD - IN_C)))
    x_pad = x_pad.reshape(N, (H + 3) * Wp, C0_PAD)

    # ---- backbone + rpn (one fused Pallas kernel) ----
    feat_flat, rpn_flat = backbone_rpn(params, x_pad, H=H, W=W)
    Hf, Wf = H // 2, W // 2
    feat = feat_flat.reshape(N, Hf, Wp, BB_C2)[:, :, :Wf, :].astype(jnp.float32)
    rpn = rpn_flat.reshape(N, Hf, Wp, RPN_OUT)[:, :, :Wf, :]
    A = NUM_ANCHORS
    obj_prob = rpn[..., :A]                                # sigmoid done in-kernel
    reg = rpn[..., A:A + 4 * A].reshape(N, Hf, Wf, A, 4)

    anchors = make_anchors(Hf, Wf, BACKBONE_STRIDE, ANCHOR_SCALES)
    anchors_flat = anchors.transpose(1, 2, 0, 3).reshape(-1, 4)
    scores = obj_prob.reshape(N, -1)
    deltas = reg.reshape(N, -1, 4)

    K = TOPK_PROPOSALS
    _, top_idx = jax.lax.top_k(scores, K)
    sel_anchors = anchors_flat[top_idx]
    sel_deltas = jnp.take_along_axis(deltas, top_idx[:, :, None], axis=1)
    proposals = decode_boxes(sel_anchors.reshape(-1, 4), sel_deltas.reshape(-1, 4))
    proposals = clip_boxes(proposals, H, W)                # (N*K, 4)

    # ---- roi_heads (ROIAlign glue + single fused Pallas kernel) ----
    batch_idx = jnp.repeat(jnp.arange(N, dtype=jnp.int32), K)
    roi_feats = roi_align_nhwc(feat, proposals, batch_idx,
                               spatial_scale=1.0 / BACKBONE_STRIDE, pool=POOL)
    roi_flat = roi_feats.reshape(N * K, -1)                # (R, P*P*C)

    head_out = pallas_roi_heads(roi_flat, params)          # (R, 128)
    probs = head_out[:, :NUM_CLASSES]
    box_pred = head_out[:, NUM_CLASSES:5 * NUM_CLASSES].reshape(-1, NUM_CLASSES, 4)

    labels = (jnp.argmax(probs[:, 1:], axis=-1) + 1).astype(jnp.int32)
    det_scores = jnp.take_along_axis(probs, labels[:, None], axis=1)[:, 0]
    cls_deltas = jnp.take_along_axis(
        box_pred, labels[:, None, None], axis=1)[:, 0, :]
    det_boxes = clip_boxes(decode_boxes(proposals, cls_deltas), H, W)

    # TODO(synk): per-class NMS / BoxList assembly has no clean Pallas analogue;
    # returning dense per-proposal detections instead.
    return {
        "boxes": det_boxes.reshape(N, K, 4),
        "scores": det_scores.reshape(N, K),
        "labels": labels.reshape(N, K),
        "proposals": proposals.reshape(N, K, 4),
    }


if __name__ == "__main__":
    key = jax.random.PRNGKey(0)
    pkey, ikey = jax.random.split(key)
    params = init_params(pkey)
    images = jax.random.normal(ikey, (2, IN_C, 16, 16), jnp.float32)

    fwd = jax.jit(generalized_rcnn_forward)
    out = fwd(params, images)
    out = jax.block_until_ready(out)

    assert out["boxes"].shape == (2, TOPK_PROPOSALS, 4)
    assert out["scores"].shape == (2, TOPK_PROPOSALS)
    assert out["labels"].shape == (2, TOPK_PROPOSALS)
    assert bool(jnp.all(jnp.isfinite(out["boxes"])))
    assert bool(jnp.all(jnp.isfinite(out["scores"])))
    print("KERNEL_OK")
</pallas_src>

<mosaic_0001>
module attributes {stable_mosaic.version = 11 : i64} {
  func.func @_backbone_rpn_kernel(%arg0: i32, %arg1: memref<1x342x8xf32, #tpu.memory_space<vmem>>, %arg2: memref<72x16xbf16, #tpu.memory_space<vmem>>, %arg3: memref<1x16xf32, #tpu.memory_space<vmem>>, %arg4: memref<144x32xbf16, #tpu.memory_space<vmem>>, %arg5: memref<1x32xf32, #tpu.memory_space<vmem>>, %arg6: memref<288x32xbf16, #tpu.memory_space<vmem>>, %arg7: memref<1x32xf32, #tpu.memory_space<vmem>>, %arg8: memref<32x16xbf16, #tpu.memory_space<vmem>>, %arg9: memref<1x16xf32, #tpu.memory_space<vmem>>, %arg10: memref<1x144x32xbf16, #tpu.memory_space<vmem>>, %arg11: memref<1x144x16xf32, #tpu.memory_space<vmem>>, %arg12: memref<342x16xf32, #tpu.memory_space<vmem>>, %arg13: memref<342x32xf32, #tpu.memory_space<vmem>>, %arg14: memref<288x72xf32, #tpu.memory_space<vmem>>, %arg15: memref<144x144xf32, #tpu.memory_space<vmem>>, %arg16: memref<144x288xf32, #tpu.memory_space<vmem>>) attributes {dimension_semantics = [#tpu.dimension_semantics<parallel>], iteration_bounds = array<i64: 2>, scalar_prefetch = 0 : i64, scratch_operands = 5 : i64, tpu.core_type = #tpu.core_type<tc>, window_params = [{transform_indices = @transform_0, window_bounds = array<i64: 1, 342, 8>}, {pipeline_mode = #tpu.pipeline_mode<synchronous>, transform_indices = @transform_1, window_bounds = array<i64: 72, 16>}, {pipeline_mode = #tpu.pipeline_mode<synchronous>, transform_indices = @transform_2, window_bounds = array<i64: 1, 16>}, {pipeline_mode = #tpu.pipeline_mode<synchronous>, transform_indices = @transform_3, window_bounds = array<i64: 144, 32>}, {pipeline_mode = #tpu.pipeline_mode<synchronous>, transform_indices = @transform_4, window_bounds = array<i64: 1, 32>}, {pipeline_mode = #tpu.pipeline_mode<synchronous>, transform_indices = @transform_5, window_bounds = array<i64: 288, 32>}, {pipeline_mode = #tpu.pipeline_mode<synchronous>, transform_indices = @transform_6, window_bounds = array<i64: 1, 32>}, {pipeline_mode = #tpu.pipeline_mode<synchronous>, transform_indices = @transform_7, window_bounds = array<i64: 32, 16>}, {pipeline_mode = #tpu.pipeline_mode<synchronous>, transform_indices = @transform_8, window_bounds = array<i64: 1, 16>}, {transform_indices = @transform_9, window_bounds = array<i64: 1, 144, 32>}, {transform_indices = @transform_10, window_bounds = array<i64: 1, 144, 16>}]} {
    %c0 = arith.constant 0 : index
    %c0_0 = arith.constant 0 : index
    %c0_1 = arith.constant 0 : index
    %0 = vector.load %arg1[%c0, %c0_0, %c0_1] : memref<1x342x8xf32, #tpu.memory_space<vmem>>, vector<1x288x8xf32>
    %1 = vector.shape_cast %0 : vector<1x288x8xf32> to vector<288x8xf32>
    %c0_2 = arith.constant 0 : index
    %c0_3 = arith.constant 0 : index
    %2 = vector.load %arg14[%c0_2, %c0_3] : memref<288x72xf32, #tpu.memory_space<vmem>>, vector<288x8xf32>
    tpu.vector_store %arg14[%c0_2, %c0_3], %1 {strides = array<i32>} : memref<288x72xf32, #tpu.memory_space<vmem>>, vector<288x8xf32>,
    %c0_4 = arith.constant 0 : index
    %c1 = arith.constant 1 : index
    %c0_5 = arith.constant 0 : index
    %3 = vector.load %arg1[%c0_4, %c1, %c0_5] : memref<1x342x8xf32, #tpu.memory_space<vmem>>, vector<1x288x8xf32>
    %4 = vector.shape_cast %3 : vector<1x288x8xf32> to vector<288x8xf32>
    %c0_6 = arith.constant 0 : index
    %c8 = arith.constant 8 : index
    %5 = vector.load %arg14[%c0_6, %c8] : memref<288x72xf32, #tpu.memory_space<vmem>>, vector<288x8xf32>
    tpu.vector_store %arg14[%c0_6, %c8], %4 {strides = array<i32>} : memref<288x72xf32, #tpu.memory_space<vmem>>, vector<288x8xf32>,
    %c0_7 = arith.constant 0 : index
    %c2 = arith.constant 2 : index
    %c0_8 = arith.constant 0 : index
    %6 = vector.load %arg1[%c0_7, %c2, %c0_8] : memref<1x342x8xf32, #tpu.memory_space<vmem>>, vector<1x288x8xf32>
    %7 = vector.shape_cast %6 : vector<1x288x8xf32> to vector<288x8xf32>
    %c0_9 = arith.constant 0 : index
    %c16 = arith.constant 16 : index
    %8 = vector.load %arg14[%c0_9, %c16] : memref<288x72xf32, #tpu.memory_space<vmem>>, vector<288x8xf32>
    tpu.vector_store %arg14[%c0_9, %c16], %7 {strides = array<i32>} : memref<288x72xf32, #tpu.memory_space<vmem>>, vector<288x8xf32>,
    %c0_10 = arith.constant 0 : index
    %c18 = arith.constant 18 : index
    %c0_11 = arith.constant 0 : index
    %9 = vector.load %arg1[%c0_10, %c18, %c0_11] : memref<1x342x8xf32, #tpu.memory_space<vmem>>, vector<1x288x8xf32>
    %10 = vector.shape_cast %9 : vector<1x288x8xf32> to vector<288x8xf32>
    %c0_12 = arith.constant 0 : index
    %c24 = arith.constant 24 : index
    %11 = vector.load %arg14[%c0_12, %c24] : memref<288x72xf32, #tpu.memory_space<vmem>>, vector<288x8xf32>
    tpu.vector_store %arg14[%c0_12, %c24], %10 {strides = array<i32>} : memref<288x72xf32, #tpu.memory_space<vmem>>, vector<288x8xf32>,
    %c0_13 = arith.constant 0 : index
    %c19 = arith.constant 19 : index
    %c0_14 = arith.constant 0 : index
    %12 = vector.load %arg1[%c0_13, %c19, %c0_14] : memref<1x342x8xf32, #tpu.memory_space<vmem>>, vector<1x288x8xf32>
    %13 = vector.shape_cast %12 : vector<1x288x8xf32> to vector<288x8xf32>
    %c0_15 = arith.constant 0 : index
    %c32 = arith.constant 32 : index
    %14 = vector.load %arg14[%c0_15, %c32] : memref<288x72xf32, #tpu.memory_space<vmem>>, vector<288x8xf32>
    tpu.vector_store %arg14[%c0_15, %c32], %13 {strides = array<i32>} : memref<288x72xf32, #tpu.memory_space<vmem>>, vector<288x8xf32>,
    %c0_16 = arith.constant 0 : index
    %c20 = arith.constant 20 : index
    %c0_17 = arith.constant 0 : index
    %15 = vector.load %arg1[%c0_16, %c20, %c0_17] : memref<1x342x8xf32, #tpu.memory_space<vmem>>, vector<1x288x8xf32>
    %16 = vector.shape_cast %15 : vector<1x288x8xf32> to vector<288x8xf32>
    %c0_18 = arith.constant 0 : index
    %c40 = arith.constant 40 : index
    %17 = vector.load %arg14[%c0_18, %c40] : memref<288x72xf32, #tpu.memory_space<vmem>>, vector<288x8xf32>
    tpu.vector_store %arg14[%c0_18, %c40], %16 {strides = array<i32>} : memref<288x72xf32, #tpu.memory_space<vmem>>, vector<288x8xf32>,
    %c0_19 = arith.constant 0 : index
    %c36 = arith.constant 36 : index
    %c0_20 = arith.constant 0 : index
    %18 = vector.load %arg1[%c0_19, %c36, %c0_20] : memref<1x342x8xf32, #tpu.memory_space<vmem>>, vector<1x288x8xf32>
    %19 = vector.shape_cast %18 : vector<1x288x8xf32> to vector<288x8xf32>
    %c0_21 = arith.constant 0 : index
    %c48 = arith.constant 48 : index
    %20 = vector.load %arg14[%c0_21, %c48] : memref<288x72xf32, #tpu.memory_space<vmem>>, vector<288x8xf32>
    tpu.vector_store %arg14[%c0_21, %c48], %19 {strides = array<i32>} : memref<288x72xf32, #tpu.memory_space<vmem>>, vector<288x8xf32>,
    %c0_22 = arith.constant 0 : index
    %c37 = arith.constant 37 : index
    %c0_23 = arith.constant 0 : index
    %21 = vector.load %arg1[%c0_22, %c37, %c0_23] : memref<1x342x8xf32, #tpu.memory_space<vmem>>, vector<1x288x8xf32>
    %22 = vector.shape_cast %21 : vector<1x288x8xf32> to vector<288x8xf32>
    %c0_24 = arith.constant 0 : index
    %c56 = arith.constant 56 : index
    %23 = vector.load %arg14[%c0_24, %c56] : memref<288x72xf32, #tpu.memory_space<vmem>>, vector<288x8xf32>
    tpu.vector_store %arg14[%c0_24, %c56], %22 {strides = array<i32>} : memref<288x72xf32, #tpu.memory_space<vmem>>, vector<288x8xf32>,
    %c0_25 = arith.constant 0 : index
    %c38 = arith.constant 38 : index
    %c0_26 = arith.constant 0 : index
    %24 = vector.load %arg1[%c0_25, %c38, %c0_26] : memref<1x342x8xf32, #tpu.memory_space<vmem>>, vector<1x288x8xf32>
    %25 = vector.shape_cast %24 : vector<1x288x8xf32> to vector<288x8xf32>
    %c0_27 = arith.constant 0 : index
    %c64 = arith.constant 64 : index
    %26 = vector.load %arg14[%c0_27, %c64] : memref<288x72xf32, #tpu.memory_space<vmem>>, vector<288x8xf32>
    tpu.vector_store %arg14[%c0_27, %c64], %25 {strides = array<i32>} : memref<288x72xf32, #tpu.memory_space<vmem>>, vector<288x8xf32>,
    %c0_28 = arith.constant 0 : index
    %c0_29 = arith.constant 0 : index
    %27 = vector.load %arg14[%c0_28, %c0_29] : memref<288x72xf32, #tpu.memory_space<vmem>>, vector<288x72xf32>
    %28 = arith.truncf %27 : vector<288x72xf32> to vector<288x72xbf16>
    %c0_30 = arith.constant 0 : index
    %c0_31 = arith.constant 0 : index
    %29 = vector.load %arg2[%c0_30, %c0_31] : memref<72x16xbf16, #tpu.memory_space<vmem>>, vector<72x16xbf16>
    %cst = arith.constant dense<0.000000e+00> : vector<288x16xf32>
    %30 = tpu.matmul %28, %29, %cst {dimension_numbers = #tpu.dot_dimension_numbers<[1], [0], [0], [1], [0, 0, 1, 1], [], []>} : vector<288x72xbf16>, vector<72x16xbf16>, vector<288x16xf32> -> vector<288x16xf32>
    %c0_32 = arith.constant 0 : index
    %c0_33 = arith.constant 0 : index
    %31 = vector.load %arg3[%c0_32, %c0_33] : memref<1x16xf32, #tpu.memory_space<vmem>>, vector<1x16xf32>
    %32 = vector.broadcast %31 : vector<1x16xf32> to vector<288x16xf32>
    %33 = arith.addf %30, %32 : vector<288x16xf32>
    %cst_34 = arith.constant 0.000000e+00 : f32
    %34 = vector.broadcast %cst_34 : f32 to vector<288x16xf32>
    %35 = arith.maximumf %33, %34 : vector<288x16xf32>
    %36 = tpu.iota {dimensions = array<i32: 0>} : vector<288x1xi32>
    %c18_i32 = arith.constant 18 : i32
    %c0_i32 = arith.constant 0 : i32
    %37 = arith.cmpi eq, %c18_i32, %c0_i32 : i32
    %c1_i32 = arith.constant 1 : i32
    %38 = arith.select %37, %c1_i32, %c18_i32 : i32
    %39 = vector.broadcast %38 : i32 to vector<288x1xi32>
    %40 = arith.remsi %36, %39 : vector<288x1xi32>
    %c0_i32_35 = arith.constant 0 : i32
    %41 = vector.broadcast %c0_i32_35 : i32 to vector<288x1xi32>
    %42 = arith.cmpi ne, %40, %41 : vector<288x1xi32>
    %c0_i32_36 = arith.constant 0 : i32
    %43 = vector.broadcast %c0_i32_36 : i32 to vector<288x1xi32>
    %44 = arith.cmpi slt, %40, %43 : vector<288x1xi32>
    %c0_i32_37 = arith.constant 0 : i32
    %45 = arith.cmpi slt, %38, %c0_i32_37 : i32
    %46 = vector.broadcast %45 : i1 to vector<288x1xi1>
    %47 = vector.broadcast %46 : vector<288x1xi1> to vector<288x1xi1>
    %48 = arith.xori %44, %47 : vector<288x1xi1>
    %49 = arith.andi %48, %42 : vector<288x1xi1>
    %50 = vector.broadcast %38 : i32 to vector<288x1xi32>
    %51 = arith.addi %40, %50 : vector<288x1xi32>
    %52 = arith.select %49, %51, %40 : vector<288x1xi1>, vector<288x1xi32>
    %c16_i32 = arith.constant 16 : i32
    %53 = vector.broadcast %c16_i32 : i32 to vector<288x1xi32>
    %54 = arith.cmpi slt, %52, %53 : vector<288x1xi32>
    %cst_38 = arith.constant 0.000000e+00 : f32
    %55 = vector.shape_cast %54 : vector<288x1xi1> to vector<288x1xi1>
    %56 = vector.broadcast %55 : vector<288x1xi1> to vector<288x16xi1>
    %57 = vector.broadcast %cst_38 : f32 to vector<288x16xf32>
    %58 = arith.select %56, %35, %57 : vector<288x16xi1>, vector<288x16xf32>
    %cst_39 = arith.constant 0.000000e+00 : f32
    %59 = vector.broadcast %cst_39 : f32 to vector<342x16xf32>
    %c0_40 = arith.constant 0 : index
    %c0_41 = arith.constant 0 : index
    %60 = vector.load %arg12[%c0_40, %c0_41] : memref<342x16xf32, #tpu.memory_space<vmem>>, vector<342x16xf32>
    tpu.vector_store %arg12[%c0_40, %c0_41], %59 {strides = array<i32>} : memref<342x16xf32, #tpu.memory_space<vmem>>, vector<342x16xf32>,
    %c19_42 = arith.constant 19 : index
    %c0_43 = arith.constant 0 : index
    %61 = vector.load %arg12[%c19_42, %c0_43] : memref<342x16xf32, #tpu.memory_space<vmem>>, vector<288x16xf32>
    tpu.vector_store %arg12[%c19_42, %c0_43], %58 {strides = array<i32>} : memref<342x16xf32, #tpu.memory_space<vmem>>, vector<288x16xf32>,
    %c0_44 = arith.constant 0 : index
    %c0_45 = arith.constant 0 : index
    %62 = tpu.strided_load %arg12[%c0_44, %c0_45] {strides = array<i32: 2, 1>} : memref<342x16xf32, #tpu.memory_space<vmem>>, vector<144x16xf32>
    %c0_46 = arith.constant 0 : index
    %c0_47 = arith.constant 0 : index
    %63 = vector.load %arg15[%c0_46, %c0_47] : memref<144x144xf32, #tpu.memory_space<vmem>>, vector<144x16xf32>
    tpu.vector_store %arg15[%c0_46, %c0_47], %62 {strides = array<i32>} : memref<144x144xf32, #tpu.memory_space<vmem>>, vector<144x16xf32>,
    %c1_48 = arith.constant 1 : index
    %c0_49 = arith.constant 0 : index
    %64 = tpu.strided_load %arg12[%c1_48, %c0_49] {strides = array<i32: 2, 1>} : memref<342x16xf32, #tpu.memory_space<vmem>>, vector<144x16xf32>
    %c0_50 = arith.constant 0 : index
    %c16_51 = arith.constant 16 : index
    %65 = vector.load %arg15[%c0_50, %c16_51] : memref<144x144xf32, #tpu.memory_space<vmem>>, vector<144x16xf32>
    tpu.vector_store %arg15[%c0_50, %c16_51], %64 {strides = array<i32>} : memref<144x144xf32, #tpu.memory_space<vmem>>, vector<144x16xf32>,
    %c2_52 = arith.constant 2 : index
    %c0_53 = arith.constant 0 : index
    %66 = tpu.strided_load %arg12[%c2_52, %c0_53] {strides = array<i32: 2, 1>} : memref<342x16xf32, #tpu.memory_space<vmem>>, vector<144x16xf32>
    %c0_54 = arith.constant 0 : index
    %c32_55 = arith.constant 32 : index
    %67 = vector.load %arg15[%c0_54, %c32_55] : memref<144x144xf32, #tpu.memory_space<vmem>>, vector<144x16xf32>
    tpu.vector_store %arg15[%c0_54, %c32_55], %66 {strides = array<i32>} : memref<144x144xf32, #tpu.memory_space<vmem>>, vector<144x16xf32>,
    %c18_56 = arith.constant 18 : index
    %c0_57 = arith.constant 0 : index
    %68 = tpu.strided_load %arg12[%c18_56, %c0_57] {strides = array<i32: 2, 1>} : memref<342x16xf32, #tpu.memory_space<vmem>>, vector<144x16xf32>
    %c0_58 = arith.constant 0 : index
    %c48_59 = arith.constant 48 : index
    %69 = vector.load %arg15[%c0_58, %c48_59] : memref<144x144xf32, #tpu.memory_space<vmem>>, vector<144x16xf32>
    tpu.vector_store %arg15[%c0_58, %c48_59], %68 {strides = array<i32>} : memref<144x144xf32, #tpu.memory_space<vmem>>, vector<144x16xf32>,
    %c19_60 = arith.constant 19 : index
    %c0_61 = arith.constant 0 : index
    %70 = tpu.strided_load %arg12[%c19_60, %c0_61] {strides = array<i32: 2, 1>} : memref<342x16xf32, #tpu.memory_space<vmem>>, vector<144x16xf32>
    %c0_62 = arith.constant 0 : index
    %c64_63 = arith.constant 64 : index
    %71 = vector.load %arg15[%c0_62, %c64_63] : memref<144x144xf32, #tpu.memory_space<vmem>>, vector<144x16xf32>
    tpu.vector_store %arg15[%c0_62, %c64_63], %70 {strides = array<i32>} : memref<144x144xf32, #tpu.memory_space<vmem>>, vector<144x16xf32>,
    %c20_64 = arith.constant 20 : index
    %c0_65 = arith.constant 0 : index
    %72 = tpu.strided_load %arg12[%c20_64, %c0_65] {strides = array<i32: 2, 1>} : memref<342x16xf32, #tpu.memory_space<vmem>>, vector<144x16xf32>
    %c0_66 = arith.constant 0 : index
    %c80 = arith.constant 80 : index
    %73 = vector.load %arg15[%c0_66, %c80] : memref<144x144xf32, #tpu.memory_space<vmem>>, vector<144x16xf32>
    tpu.vector_store %arg15[%c0_66, %c80], %72 {strides = array<i32>} : memref<144x144xf32, #tpu.memory_space<vmem>>, vector<144x16xf32>,
    %c36_67 = arith.constant 36 : index
    %c0_68 = arith.constant 0 : index
    %74 = tpu.strided_load %arg12[%c36_67, %c0_68] {strides = array<i32: 2, 1>} : memref<342x16xf32, #tpu.memory_space<vmem>>, vector<144x16xf32>
    %c0_69 = arith.constant 0 : index
    %c96 = arith.constant 96 : index
    %75 = vector.load %arg15[%c0_69, %c96] : memref<144x144xf32, #tpu.memory_space<vmem>>, vector<144x16xf32>
    tpu.vector_store %arg15[%c0_69, %c96], %74 {strides = array<i32>} : memref<144x144xf32, #tpu.memory_space<vmem>>, vector<144x16xf32>,
    %c37_70 = arith.constant 37 : index
    %c0_71 = arith.constant 0 : index
    %76 = tpu.strided_load %arg12[%c37_70, %c0_71] {strides = array<i32: 2, 1>} : memref<342x16xf32, #tpu.memory_space<vmem>>, vector<144x16xf32>
    %c0_72 = arith.constant 0 : index
    %c112 = arith.constant 112 : index
    %77 = vector.load %arg15[%c0_72, %c112] : memref<144x144xf32, #tpu.memory_space<vmem>>, vector<144x16xf32>
    tpu.vector_store %arg15[%c0_72, %c112], %76 {strides = array<i32>} : memref<144x144xf32, #tpu.memory_space<vmem>>, vector<144x16xf32>,
    %c38_73 = arith.constant 38 : index
    %c0_74 = arith.constant 0 : index
    %78 = tpu.strided_load %arg12[%c38_73, %c0_74] {strides = array<i32: 2, 1>} : memref<342x16xf32, #tpu.memory_space<vmem>>, vector<144x16xf32>
    %c0_75 = arith.constant 0 : index
    %c128 = arith.constant 128 : index
    %79 = vector.load %arg15[%c0_75, %c128] : memref<144x144xf32, #tpu.memory_space<vmem>>, vector<144x16xf32>
    tpu.vector_store %arg15[%c0_75, %c128], %78 {strides = array<i32>} : memref<144x144xf32, #tpu.memory_space<vmem>>, vector<144x16xf32>,
    %c0_76 = arith.constant 0 : index
    %c0_77 = arith.constant 0 : index
    %80 = vector.load %arg15[%c0_76, %c0_77] : memref<144x144xf32, #tpu.memory_space<vmem>>, vector<144x144xf32>
    %81 = arith.truncf %80 : vector<144x144xf32> to vector<144x144xbf16>
    %c0_78 = arith.constant 0 : index
    %c0_79 = arith.constant 0 : index
    %82 = vector.load %arg4[%c0_78, %c0_79] : memref<144x32xbf16, #tpu.memory_space<vmem>>, vector<144x32xbf16>
    %cst_80 = arith.constant dense<0.000000e+00> : vector<144x32xf32>
    %83 = tpu.matmul %81, %82, %cst_80 {dimension_numbers = #tpu.dot_dimension_numbers<[1], [0], [0], [1], [0, 0, 1, 1], [], []>} : vector<144x144xbf16>, vector<144x32xbf16>, vector<144x32xf32> -> vector<144x32xf32>
    %c0_81 = arith.constant 0 : index
    %c0_82 = arith.constant 0 : index
    %84 = vector.load %arg5[%c0_81, %c0_82] : memref<1x32xf32, #tpu.memory_space<vmem>>, vector<1x32xf32>
    %85 = vector.broadcast %84 : vector<1x32xf32> to vector<144x32xf32>
    %86 = arith.addf %83, %85 : vector<144x32xf32>
    %cst_83 = arith.constant 0.000000e+00 : f32
    %87 = vector.broadcast %cst_83 : f32 to vector<144x32xf32>
    %88 = arith.maximumf %86, %87 : vector<144x32xf32>
    %89 = tpu.iota {dimensions = array<i32: 0>} : vector<144x1xi32>
    %c18_i32_84 = arith.constant 18 : i32
    %c0_i32_85 = arith.constant 0 : i32
    %90 = arith.cmpi eq, %c18_i32_84, %c0_i32_85 : i32
    %c1_i32_86 = arith.constant 1 : i32
    %91 = arith.select %90, %c1_i32_86, %c18_i32_84 : i32
    %92 = vector.broadcast %91 : i32 to vector<144x1xi32>
    %93 = arith.remsi %89, %92 : vector<144x1xi32>
    %c0_i32_87 = arith.constant 0 : i32
    %94 = vector.broadcast %c0_i32_87 : i32 to vector<144x1xi32>
    %95 = arith.cmpi ne, %93, %94 : vector<144x1xi32>
    %c0_i32_88 = arith.constant 0 : i32
    %96 = vector.broadcast %c0_i32_88 : i32 to vector<144x1xi32>
    %97 = arith.cmpi slt, %93, %96 : vector<144x1xi32>
    %c0_i32_89 = arith.constant 0 : i32
    %98 = arith.cmpi slt, %91, %c0_i32_89 : i32
    %99 = vector.broadcast %98 : i1 to vector<144x1xi1>
    %100 = vector.broadcast %99 : vector<144x1xi1> to vector<144x1xi1>
    %101 = arith.xori %97, %100 : vector<144x1xi1>
    %102 = arith.andi %101, %95 : vector<144x1xi1>
    %103 = vector.broadcast %91 : i32 to vector<144x1xi32>
    %104 = arith.addi %93, %103 : vector<144x1xi32>
    %105 = arith.select %102, %104, %93 : vector<144x1xi1>, vector<144x1xi32>
    %c8_i32 = arith.constant 8 : i32
    %106 = vector.broadcast %c8_i32 : i32 to vector<144x1xi32>
    %107 = arith.cmpi slt, %105, %106 : vector<144x1xi32>
    %cst_90 = arith.constant 0.000000e+00 : f32
    %108 = vector.shape_cast %107 : vector<144x1xi1> to vector<144x1xi1>
    %109 = vector.broadcast %108 : vector<144x1xi1> to vector<144x32xi1>
    %110 = vector.broadcast %cst_90 : f32 to vector<144x32xf32>
    %111 = arith.select %109, %88, %110 : vector<144x32xi1>, vector<144x32xf32>
    %112 = arith.truncf %111 : vector<144x32xf32> to vector<144x32xbf16>
    %c0_91 = arith.constant 0 : index
    %c0_92 = arith.constant 0 : index
    %c0_93 = arith.constant 0 : index
    %113 = vector.load %arg10[%c0_91, %c0_92, %c0_93] : memref<1x144x32xbf16, #tpu.memory_space<vmem>>, vector<1x144x32xbf16>
    %114 = vector.shape_cast %113 : vector<1x144x32xbf16> to vector<144x32xbf16>
    %115 = vector.shape_cast %112 : vector<144x32xbf16> to vector<1x144x32xbf16>
    tpu.vector_store %arg10[%c0_91, %c0_92, %c0_93], %115 {strides = array<i32>} : memref<1x144x32xbf16, #tpu.memory_space<vmem>>, vector<1x144x32xbf16>,
    %cst_94 = arith.constant 0.000000e+00 : f32
    %116 = vector.broadcast %cst_94 : f32 to vector<342x32xf32>
    %c0_95 = arith.constant 0 : index
    %c0_96 = arith.constant 0 : index
    %117 = vector.load %arg13[%c0_95, %c0_96] : memref<342x32xf32, #tpu.memory_space<vmem>>, vector<342x32xf32>
    tpu.vector_store %arg13[%c0_95, %c0_96], %116 {strides = array<i32>} : memref<342x32xf32, #tpu.memory_space<vmem>>, vector<342x32xf32>,
    %c19_97 = arith.constant 19 : index
    %c0_98 = arith.constant 0 : index
    %118 = vector.load %arg13[%c19_97, %c0_98] : memref<342x32xf32, #tpu.memory_space<vmem>>, vector<144x32xf32>
    tpu.vector_store %arg13[%c19_97, %c0_98], %111 {strides = array<i32>} : memref<342x32xf32, #tpu.memory_space<vmem>>, vector<144x32xf32>,
    %c0_99 = arith.constant 0 : index
    %c0_100 = arith.constant 0 : index
    %119 = vector.load %arg13[%c0_99, %c0_100] : memref<342x32xf32, #tpu.memory_space<vmem>>, vector<144x32xf32>
    %c0_101 = arith.constant 0 : index
    %c0_102 = arith.constant 0 : index
    %120 = vector.load %arg16[%c0_101, %c0_102] : memref<144x288xf32, #tpu.memory_space<vmem>>, vector<144x32xf32>
    tpu.vector_store %arg16[%c0_101, %c0_102], %119 {strides = array<i32>} : memref<144x288xf32, #tpu.memory_space<vmem>>, vector<144x32xf32>,
    %c1_103 = arith.constant 1 : index
    %c0_104 = arith.constant 0 : index
    %121 = vector.load %arg13[%c1_103, %c0_104] : memref<342x32xf32, #tpu.memory_space<vmem>>, vector<144x32xf32>
    %c0_105 = arith.constant 0 : index
    %c32_106 = arith.constant 32 : index
    %122 = vector.load %arg16[%c0_105, %c32_106] : memref<144x288xf32, #tpu.memory_space<vmem>>, vector<144x32xf32>
    tpu.vector_store %arg16[%c0_105, %c32_106], %121 {strides = array<i32>} : memref<144x288xf32, #tpu.memory_space<vmem>>, vector<144x32xf32>,
    %c2_107 = arith.constant 2 : index
    %c0_108 = arith.constant 0 : index
    %123 = vector.load %arg13[%c2_107, %c0_108] : memref<342x32xf32, #tpu.memory_space<vmem>>, vector<144x32xf32>
    %c0_109 = arith.constant 0 : index
    %c64_110 = arith.constant 64 : index
    %124 = vector.load %arg16[%c0_109, %c64_110] : memref<144x288xf32, #tpu.memory_space<vmem>>, vector<144x32xf32>
    tpu.vector_store %arg16[%c0_109, %c64_110], %123 {strides = array<i32>} : memref<144x288xf32, #tpu.memory_space<vmem>>, vector<144x32xf32>,
    %c18_111 = arith.constant 18 : index
    %c0_112 = arith.constant 0 : index
    %125 = vector.load %arg13[%c18_111, %c0_112] : memref<342x32xf32, #tpu.memory_space<vmem>>, vector<144x32xf32>
    %c0_113 = arith.constant 0 : index
    %c96_114 = arith.constant 96 : index
    %126 = vector.load %arg16[%c0_113, %c96_114] : memref<144x288xf32, #tpu.memory_space<vmem>>, vector<144x32xf32>
    tpu.vector_store %arg16[%c0_113, %c96_114], %125 {strides = array<i32>} : memref<144x288xf32, #tpu.memory_space<vmem>>, vector<144x32xf32>,
    %c19_115 = arith.constant 19 : index
    %c0_116 = arith.constant 0 : index
    %127 = vector.load %arg13[%c19_115, %c0_116] : memref<342x32xf32, #tpu.memory_space<vmem>>, vector<144x32xf32>
    %c0_117 = arith.constant 0 : index
    %c128_118 = arith.constant 128 : index
    %128 = vector.load %arg16[%c0_117, %c128_118] : memref<144x288xf32, #tpu.memory_space<vmem>>, vector<144x32xf32>
    tpu.vector_store %arg16[%c0_117, %c128_118], %127 {strides = array<i32>} : memref<144x288xf32, #tpu.memory_space<vmem>>, vector<144x32xf32>,
    %c20_119 = arith.constant 20 : index
    %c0_120 = arith.constant 0 : index
    %129 = vector.load %arg13[%c20_119, %c0_120] : memref<342x32xf32, #tpu.memory_space<vmem>>, vector<144x32xf32>
    %c0_121 = arith.constant 0 : index
    %c160 = arith.constant 160 : index
    %130 = vector.load %arg16[%c0_121, %c160] : memref<144x288xf32, #tpu.memory_space<vmem>>, vector<144x32xf32>
    tpu.vector_store %arg16[%c0_121, %c160], %129 {strides = array<i32>} : memref<144x288xf32, #tpu.memory_space<vmem>>, vector<144x32xf32>,
    %c36_122 = arith.constant 36 : index
    %c0_123 = arith.constant 0 : index
    %131 = vector.load %arg13[%c36_122, %c0_123] : memref<342x32xf32, #tpu.memory_space<vmem>>, vector<144x32xf32>
    %c0_124 = arith.constant 0 : index
    %c192 = arith.constant 192 : index
    %132 = vector.load %arg16[%c0_124, %c192] : memref<144x288xf32, #tpu.memory_space<vmem>>, vector<144x32xf32>
    tpu.vector_store %arg16[%c0_124, %c192], %131 {strides = array<i32>} : memref<144x288xf32, #tpu.memory_space<vmem>>, vector<144x32xf32>,
    %c37_125 = arith.constant 37 : index
    %c0_126 = arith.constant 0 : index
    %133 = vector.load %arg13[%c37_125, %c0_126] : memref<342x32xf32, #tpu.memory_space<vmem>>, vector<144x32xf32>
    %c0_127 = arith.constant 0 : index
    %c224 = arith.constant 224 : index
    %134 = vector.load %arg16[%c0_127, %c224] : memref<144x288xf32, #tpu.memory_space<vmem>>, vector<144x32xf32>
    tpu.vector_store %arg16[%c0_127, %c224], %133 {strides = array<i32>} : memref<144x288xf32, #tpu.memory_space<vmem>>, vector<144x32xf32>,
    %c38_128 = arith.constant 38 : index
    %c0_129 = arith.constant 0 : index
    %135 = vector.load %arg13[%c38_128, %c0_129] : memref<342x32xf32, #tpu.memory_space<vmem>>, vector<144x32xf32>
    %c0_130 = arith.constant 0 : index
    %c256 = arith.constant 256 : index
    %136 = vector.load %arg16[%c0_130, %c256] : memref<144x288xf32, #tpu.memory_space<vmem>>, vector<144x32xf32>
    tpu.vector_store %arg16[%c0_130, %c256], %135 {strides = array<i32>} : memref<144x288xf32, #tpu.memory_space<vmem>>, vector<144x32xf32>,
    %c0_131 = arith.constant 0 : index
    %c0_132 = arith.constant 0 : index
    %137 = vector.load %arg16[%c0_131, %c0_132] : memref<144x288xf32, #tpu.memory_space<vmem>>, vector<144x288xf32>
    %138 = arith.truncf %137 : vector<144x288xf32> to vector<144x288xbf16>
    %c0_133 = arith.constant 0 : index
    %c0_134 = arith.constant 0 : index
    %139 = vector.load %arg6[%c0_133, %c0_134] : memref<288x32xbf16, #tpu.memory_space<vmem>>, vector<288x32xbf16>
    %cst_135 = arith.constant dense<0.000000e+00> : vector<144x32xf32>
    %140 = tpu.matmul %138, %139, %cst_135 {dimension_numbers = #tpu.dot_dimension_numbers<[1], [0], [0], [1], [0, 0, 1, 1], [], []>} : vector<144x288xbf16>, vector<288x32xbf16>, vector<144x32xf32> -> vector<144x32xf32>
    %c0_136 = arith.constant 0 : index
    %c0_137 = arith.constant 0 : index
    %141 = vector.load %arg7[%c0_136, %c0_137] : memref<1x32xf32, #tpu.memory_space<vmem>>, vector<1x32xf32>
    %142 = vector.broadcast %141 : vector<1x32xf32> to vector<144x32xf32>
    %143 = arith.addf %140, %142 : vector<144x32xf32>
    %cst_138 = arith.constant 0.000000e+00 : f32
    %144 = vector.broadcast %cst_138 : f32 to vector<144x32xf32>
    %145 = arith.maximumf %143, %144 : vector<144x32xf32>
    %146 = arith.truncf %145 : vector<144x32xf32> to vector<144x32xbf16>
    %c0_139 = arith.constant 0 : index
    %c0_140 = arith.constant 0 : index
    %147 = vector.load %arg8[%c0_139, %c0_140] : memref<32x16xbf16, #tpu.memory_space<vmem>>, vector<32x16xbf16>
    %cst_141 = arith.constant dense<0.000000e+00> : vector<144x16xf32>
    %148 = tpu.matmul %146, %147, %cst_141 {dimension_numbers = #tpu.dot_dimension_numbers<[1], [0], [0], [1], [0, 0, 1, 1], [], []>} : vector<144x32xbf16>, vector<32x16xbf16>, vector<144x16xf32> -> vector<144x16xf32>
    %c0_142 = arith.constant 0 : index
    %c0_143 = arith.constant 0 : index
    %149 = vector.load %arg9[%c0_142, %c0_143] : memref<1x16xf32, #tpu.memory_space<vmem>>, vector<1x16xf32>
    %150 = vector.broadcast %149 : vector<1x16xf32> to vector<144x16xf32>
    %151 = arith.addf %148, %150 : vector<144x16xf32>
    %152 = tpu.iota {dimensions = array<i32: 1>} : vector<144x16xi32>
    %cst_144 = arith.constant 0.000000e+00 : f32
    %153 = vector.broadcast %cst_144 : f32 to vector<144x16xf32>
    %154 = arith.subf %153, %151 : vector<144x16xf32>
    %155 = math.exp %154 : vector<144x16xf32>
    %cst_145 = arith.constant 1.000000e+00 : f32
    %156 = vector.broadcast %cst_145 : f32 to vector<144x16xf32>
    %157 = arith.addf %156, %155 : vector<144x16xf32>
    %cst_146 = arith.constant 1.000000e+00 : f32
    %158 = vector.broadcast %cst_146 : f32 to vector<144x16xf32>
    %159 = arith.divf %158, %157 : vector<144x16xf32>
    %c3_i32 = arith.constant 3 : i32
    %160 = vector.broadcast %c3_i32 : i32 to vector<144x16xi32>
    %161 = arith.cmpi slt, %152, %160 : vector<144x16xi32>
    %162 = arith.select %161, %159, %151 : vector<144x16xi1>, vector<144x16xf32>
    %c0_147 = arith.constant 0 : index
    %c0_148 = arith.constant 0 : index
    %c0_149 = arith.constant 0 : index
    %163 = vector.load %arg11[%c0_147, %c0_148, %c0_149] : memref<1x144x16xf32, #tpu.memory_space<vmem>>, vector<1x144x16xf32>
    %164 = vector.shape_cast %163 : vector<1x144x16xf32> to vector<144x16xf32>
    %165 = vector.shape_cast %162 : vector<144x16xf32> to vector<1x144x16xf32>
    tpu.vector_store %arg11[%c0_147, %c0_148, %c0_149], %165 {strides = array<i32>} : memref<1x144x16xf32, #tpu.memory_space<vmem>>, vector<1x144x16xf32>,
    return
  }
  func.func @transform_0(%arg0: i32) -> (i32, i32, i32) {
    %c0_i32 = arith.constant 0 : i32
    %c0_i32_0 = arith.constant 0 : i32
    %c0_i32_1 = arith.constant 0 : i32
    return %arg0, %c0_i32, %c0_i32_0 : i32, i32, i32
  }
  func.func @transform_1(%arg0: i32) -> (i32, i32) {
    %c0_i32 = arith.constant 0 : i32
    %c0_i32_0 = arith.constant 0 : i32
    %c0_i32_1 = arith.constant 0 : i32
    return %c0_i32, %c0_i32_0 : i32, i32
  }
  func.func @transform_2(%arg0: i32) -> (i32, i32) {
    %c0_i32 = arith.constant 0 : i32
    %c0_i32_0 = arith.constant 0 : i32
    %c0_i32_1 = arith.constant 0 : i32
    return %c0_i32, %c0_i32_0 : i32, i32
  }
  func.func @transform_3(%arg0: i32) -> (i32, i32) {
    %c0_i32 = arith.constant 0 : i32
    %c0_i32_0 = arith.constant 0 : i32
    %c0_i32_1 = arith.constant 0 : i32
    return %c0_i32, %c0_i32_0 : i32, i32
  }
  func.func @transform_4(%arg0: i32) -> (i32, i32) {
    %c0_i32 = arith.constant 0 : i32
    %c0_i32_0 = arith.constant 0 : i32
    %c0_i32_1 = arith.constant 0 : i32
    return %c0_i32, %c0_i32_0 : i32, i32
  }
  func.func @transform_5(%arg0: i32) -> (i32, i32) {
    %c0_i32 = arith.constant 0 : i32
    %c0_i32_0 = arith.constant 0 : i32
    %c0_i32_1 = arith.constant 0 : i32
    return %c0_i32, %c0_i32_0 : i32, i32
  }
  func.func @transform_6(%arg0: i32) -> (i32, i32) {
    %c0_i32 = arith.constant 0 : i32
    %c0_i32_0 = arith.constant 0 : i32
    %c0_i32_1 = arith.constant 0 : i32
    return %c0_i32, %c0_i32_0 : i32, i32
  }
  func.func @transform_7(%arg0: i32) -> (i32, i32) {
    %c0_i32 = arith.constant 0 : i32
    %c0_i32_0 = arith.constant 0 : i32
    %c0_i32_1 = arith.constant 0 : i32
    return %c0_i32, %c0_i32_0 : i32, i32
  }
  func.func @transform_8(%arg0: i32) -> (i32, i32) {
    %c0_i32 = arith.constant 0 : i32
    %c0_i32_0 = arith.constant 0 : i32
    %c0_i32_1 = arith.constant 0 : i32
    return %c0_i32, %c0_i32_0 : i32, i32
  }
  func.func @transform_9(%arg0: i32) -> (i32, i32, i32) {
    %c0_i32 = arith.constant 0 : i32
    %c0_i32_0 = arith.constant 0 : i32
    %c0_i32_1 = arith.constant 0 : i32
    return %arg0, %c0_i32, %c0_i32_0 : i32, i32, i32
  }
  func.func @transform_10(%arg0: i32) -> (i32, i32, i32) {
    %c0_i32 = arith.constant 0 : i32
    %c0_i32_0 = arith.constant 0 : i32
    %c0_i32_1 = arith.constant 0 : i32
    return %arg0, %c0_i32, %c0_i32_0 : i32, i32, i32
  }
}

module attributes {stable_mosaic.version = 11 : i64} {
  func.func @_roi_heads_kernel(%arg0: i32, %arg1: memref<16x512xbf16, #tpu.memory_space<vmem>>, %arg2: memref<512x128xbf16, #tpu.memory_space<vmem>>, %arg3: memref<1x128xf32, #tpu.memory_space<vmem>>, %arg4: memref<128x128xbf16, #tpu.memory_space<vmem>>, %arg5: memref<1x128xf32, #tpu.memory_space<vmem>>, %arg6: memref<128x128xbf16, #tpu.memory_space<vmem>>, %arg7: memref<1x128xf32, #tpu.memory_space<vmem>>, %arg8: memref<16x128xf32, #tpu.memory_space<vmem>>) attributes {dimension_semantics = [#tpu.dimension_semantics<arbitrary>], iteration_bounds = array<i64: 1>, scalar_prefetch = 0 : i64, scratch_operands = 0 : i64, tpu.core_type = #tpu.core_type<tc>, window_params = [{pipeline_mode = #tpu.pipeline_mode<synchronous>, transform_indices = @transform_0, window_bounds = array<i64: 16, 512>}, {pipeline_mode = #tpu.pipeline_mode<synchronous>, transform_indices = @transform_1, window_bounds = array<i64: 512, 128>}, {pipeline_mode = #tpu.pipeline_mode<synchronous>, transform_indices = @transform_2, window_bounds = array<i64: 1, 128>}, {pipeline_mode = #tpu.pipeline_mode<synchronous>, transform_indices = @transform_3, window_bounds = array<i64: 128, 128>}, {pipeline_mode = #tpu.pipeline_mode<synchronous>, transform_indices = @transform_4, window_bounds = array<i64: 1, 128>}, {pipeline_mode = #tpu.pipeline_mode<synchronous>, transform_indices = @transform_5, window_bounds = array<i64: 128, 128>}, {pipeline_mode = #tpu.pipeline_mode<synchronous>, transform_indices = @transform_6, window_bounds = array<i64: 1, 128>}, {pipeline_mode = #tpu.pipeline_mode<synchronous>, transform_indices = @transform_7, window_bounds = array<i64: 16, 128>}]} {
    %c0 = arith.constant 0 : index
    %c0_0 = arith.constant 0 : index
    %0 = vector.load %arg1[%c0, %c0_0] : memref<16x512xbf16, #tpu.memory_space<vmem>>, vector<16x512xbf16>
    %c0_1 = arith.constant 0 : index
    %c0_2 = arith.constant 0 : index
    %1 = vector.load %arg2[%c0_1, %c0_2] : memref<512x128xbf16, #tpu.memory_space<vmem>>, vector<512x128xbf16>
    %cst = arith.constant dense<0.000000e+00> : vector<16x128xf32>
    %2 = tpu.matmul %0, %1, %cst {dimension_numbers = #tpu.dot_dimension_numbers<[1], [0], [0], [1], [0, 0, 1, 1], [], []>} : vector<16x512xbf16>, vector<512x128xbf16>, vector<16x128xf32> -> vector<16x128xf32>
    %c0_3 = arith.constant 0 : index
    %c0_4 = arith.constant 0 : index
    %3 = vector.load %arg3[%c0_3, %c0_4] : memref<1x128xf32, #tpu.memory_space<vmem>>, vector<1x128xf32>
    %4 = vector.broadcast %3 : vector<1x128xf32> to vector<16x128xf32>
    %5 = arith.addf %2, %4 : vector<16x128xf32>
    %cst_5 = arith.constant 0.000000e+00 : f32
    %6 = vector.broadcast %cst_5 : f32 to vector<16x128xf32>
    %7 = arith.maximumf %5, %6 : vector<16x128xf32>
    %8 = arith.truncf %7 : vector<16x128xf32> to vector<16x128xbf16>
    %c0_6 = arith.constant 0 : index
    %c0_7 = arith.constant 0 : index
    %9 = vector.load %arg4[%c0_6, %c0_7] : memref<128x128xbf16, #tpu.memory_space<vmem>>, vector<128x128xbf16>
    %cst_8 = arith.constant dense<0.000000e+00> : vector<16x128xf32>
    %10 = tpu.matmul %8, %9, %cst_8 {dimension_numbers = #tpu.dot_dimension_numbers<[1], [0], [0], [1], [0, 0, 1, 1], [], []>} : vector<16x128xbf16>, vector<128x128xbf16>, vector<16x128xf32> -> vector<16x128xf32>
    %c0_9 = arith.constant 0 : index
    %c0_10 = arith.constant 0 : index
    %11 = vector.load %arg5[%c0_9, %c0_10] : memref<1x128xf32, #tpu.memory_space<vmem>>, vector<1x128xf32>
    %12 = vector.broadcast %11 : vector<1x128xf32> to vector<16x128xf32>
    %13 = arith.addf %10, %12 : vector<16x128xf32>
    %cst_11 = arith.constant 0.000000e+00 : f32
    %14 = vector.broadcast %cst_11 : f32 to vector<16x128xf32>
    %15 = arith.maximumf %13, %14 : vector<16x128xf32>
    %16 = arith.truncf %15 : vector<16x128xf32> to vector<16x128xbf16>
    %c0_12 = arith.constant 0 : index
    %c0_13 = arith.constant 0 : index
    %17 = vector.load %arg6[%c0_12, %c0_13] : memref<128x128xbf16, #tpu.memory_space<vmem>>, vector<128x128xbf16>
    %cst_14 = arith.constant dense<0.000000e+00> : vector<16x128xf32>
    %18 = tpu.matmul %16, %17, %cst_14 {dimension_numbers = #tpu.dot_dimension_numbers<[1], [0], [0], [1], [0, 0, 1, 1], [], []>} : vector<16x128xbf16>, vector<128x128xbf16>, vector<16x128xf32> -> vector<16x128xf32>
    %c0_15 = arith.constant 0 : index
    %c0_16 = arith.constant 0 : index
    %19 = vector.load %arg7[%c0_15, %c0_16] : memref<1x128xf32, #tpu.memory_space<vmem>>, vector<1x128xf32>
    %20 = vector.broadcast %19 : vector<1x128xf32> to vector<16x128xf32>
    %21 = arith.addf %18, %20 : vector<16x128xf32>
    %22 = tpu.iota {dimensions = array<i32: 1>} : vector<16x128xi32>
    %c5_i32 = arith.constant 5 : i32
    %23 = vector.broadcast %c5_i32 : i32 to vector<16x128xi32>
    %24 = arith.cmpi slt, %22, %23 : vector<16x128xi32>
    %cst_17 = arith.constant -1.000000e+30 : f32
    %25 = vector.broadcast %cst_17 : f32 to vector<16x128xf32>
    %26 = arith.select %24, %21, %25 : vector<16x128xi1>, vector<16x128xf32>
    %cst_18 = arith.constant dense<0xFF800000> : vector<16xf32>
    %27 = vector.multi_reduction <maximumf>, %26, %cst_18 [1] : vector<16x128xf32> to vector<16xf32>
    %28 = vector.shape_cast %27 : vector<16xf32> to vector<16x1xf32>
    %29 = vector.broadcast %28 : vector<16x1xf32> to vector<16x128xf32>
    %30 = arith.subf %26, %29 : vector<16x128xf32>
    %31 = math.exp %30 : vector<16x128xf32>
    %cst_19 = arith.constant 0.000000e+00 : f32
    %32 = vector.broadcast %cst_19 : f32 to vector<16x128xf32>
    %33 = arith.select %24, %31, %32 : vector<16x128xi1>, vector<16x128xf32>
    %cst_20 = arith.constant dense<0.000000e+00> : vector<16xf32>
    %34 = vector.multi_reduction <add>, %33, %cst_20 [1] : vector<16x128xf32> to vector<16xf32>
    %35 = vector.shape_cast %34 : vector<16xf32> to vector<16x1xf32>
    %36 = tpu.reciprocal %35 {approx = true} : vector<16x1xf32> -> vector<16x1xf32>
    %37 = vector.broadcast %36 : vector<16x1xf32> to vector<16x128xf32>
    %38 = arith.mulf %33, %37 : vector<16x128xf32>
    %39 = arith.select %24, %38, %21 : vector<16x128xi1>, vector<16x128xf32>
    %c0_21 = arith.constant 0 : index
    %c0_22 = arith.constant 0 : index
    %40 = vector.load %arg8[%c0_21, %c0_22] : memref<16x128xf32, #tpu.memory_space<vmem>>, vector<16x128xf32>
    tpu.vector_store %arg8[%c0_21, %c0_22], %39 {strides = array<i32>} : memref<16x128xf32, #tpu.memory_space<vmem>>, vector<16x128xf32>,
    return
  }
  func.func @transform_0(%arg0: i32) -> (i32, i32) {
    %c0_i32 = arith.constant 0 : i32
    %c0_i32_0 = arith.constant 0 : i32
    %c0_i32_1 = arith.constant 0 : i32
    return %c0_i32, %c0_i32_0 : i32, i32
  }
  func.func @transform_1(%arg0: i32) -> (i32, i32) {
    %c0_i32 = arith.constant 0 : i32
    %c0_i32_0 = arith.constant 0 : i32
    %c0_i32_1 = arith.constant 0 : i32
    return %c0_i32, %c0_i32_0 : i32, i32
  }
  func.func @transform_2(%arg0: i32) -> (i32, i32) {
    %c0_i32 = arith.constant 0 : i32
    %c0_i32_0 = arith.constant 0 : i32
    %c0_i32_1 = arith.constant 0 : i32
    return %c0_i32, %c0_i32_0 : i32, i32
  }
  func.func @transform_3(%arg0: i32) -> (i32, i32) {
    %c0_i32 = arith.constant 0 : i32
    %c0_i32_0 = arith.constant 0 : i32
    %c0_i32_1 = arith.constant 0 : i32
    return %c0_i32, %c0_i32_0 : i32, i32
  }
  func.func @transform_4(%arg0: i32) -> (i32, i32) {
    %c0_i32 = arith.constant 0 : i32
    %c0_i32_0 = arith.constant 0 : i32
    %c0_i32_1 = arith.constant 0 : i32
    return %c0_i32, %c0_i32_0 : i32, i32
  }
  func.func @transform_5(%arg0: i32) -> (i32, i32) {
    %c0_i32 = arith.constant 0 : i32
    %c0_i32_0 = arith.constant 0 : i32
    %c0_i32_1 = arith.constant 0 : i32
    return %c0_i32, %c0_i32_0 : i32, i32
  }
  func.func @transform_6(%arg0: i32) -> (i32, i32) {
    %c0_i32 = arith.constant 0 : i32
    %c0_i32_0 = arith.constant 0 : i32
    %c0_i32_1 = arith.constant 0 : i32
    return %c0_i32, %c0_i32_0 : i32, i32
  }
  func.func @transform_7(%arg0: i32) -> (i32, i32) {
    %c0_i32 = arith.constant 0 : i32
    %c0_i32_0 = arith.constant 0 : i32
    %c0_i32_1 = arith.constant 0 : i32
    return %c0_i32, %c0_i32_0 : i32, i32
  }
}

</mosaic_0001>

<llo_original>
// kernel: generalized_rcnn_forward.3
$region0: #{generalized_rcnn_forward.3}
  #allocation0 [shape = 'u32[]', space=smem, size = 0x4, offset = 0x4, fixed_abs, tag = 'smem constant byte address 0x4 - core index']
  #allocation1 [shape = 'u32[144,128]{1,0:T(1,128)}', space=vmem, size = 0x12000, scoped, tag = 'internal scratch']
  %s0 = inlined_call_operand.vmem [shape: bf16[16,512], index: 0, kind: input, shape index: {}]
  %s1 = inlined_call_operand.vmem [shape: bf16[512,128], index: 1, kind: input, shape index: {}]
  %s2 = inlined_call_operand.vmem [shape: f32[1,128], index: 2, kind: input, shape index: {}]
  %s3 = inlined_call_operand.vmem [shape: bf16[128,128], index: 3, kind: input, shape index: {}]
  %s4 = inlined_call_operand.vmem [shape: f32[1,128], index: 4, kind: input, shape index: {}]
  %s5 = inlined_call_operand.vmem [shape: bf16[128,128], index: 5, kind: input, shape index: {}]
  %s6 = inlined_call_operand.vmem [shape: f32[1,128], index: 6, kind: input, shape index: {}]
  %s7 = inlined_call_operand.vmem [shape: f32[16,128], index: 7, kind: output, shape index: {}]
  %s8 = sld [smem:[#allocation0]]
  $region38: #{generalized_rcnn_forward.3} parent=0
    _
  %s10 = ssub.s32 1, %s8
  %s11 = scalar_select 0, %s10, %s8
  // Predicated region
  $region2: #{generalized_rcnn_forward.3} parent=0 // pred_check
    _
  $region3: #{generalized_rcnn_forward.3} parent=0 // pred_check_branch
    %13 = sbr.rel (0) target = $region5
  $region4: #{generalized_rcnn_forward.3} parent=0 // pred_region
    _
  $region5: #{generalized_rcnn_forward.3} parent=0 // pred_fallthru
    _
  // Predicated region
  $region6: #{generalized_rcnn_forward.3} parent=0 // pred_check
    _
  $region7: #{generalized_rcnn_forward.3} parent=0 // pred_check_branch
    %15 = sbr.rel (0) target = $region9
  $region8: #{generalized_rcnn_forward.3} parent=0 // pred_region
    _
  $region9: #{generalized_rcnn_forward.3} parent=0 // pred_fallthru
    _
  // Predicated region
  $region10: #{generalized_rcnn_forward.3} parent=0 // pred_check
    _
  $region11: #{generalized_rcnn_forward.3} parent=0 // pred_check_branch
    %17 = sbr.rel (0) target = $region13
  $region12: #{generalized_rcnn_forward.3} parent=0 // pred_region
    _
  $region13: #{generalized_rcnn_forward.3} parent=0 // pred_fallthru
    _
  // Predicated region
  $region14: #{generalized_rcnn_forward.3} parent=0 // pred_check
    _
  $region15: #{generalized_rcnn_forward.3} parent=0 // pred_check_branch
    %19 = sbr.rel (0) target = $region17
  $region16: #{generalized_rcnn_forward.3} parent=0 // pred_region
    _
  $region17: #{generalized_rcnn_forward.3} parent=0 // pred_fallthru
    _
  // Predicated region
  $region18: #{generalized_rcnn_forward.3} parent=0 // pred_check
    _
  $region19: #{generalized_rcnn_forward.3} parent=0 // pred_check_branch
    %21 = sbr.rel (0) target = $region21
  $region20: #{generalized_rcnn_forward.3} parent=0 // pred_region
    _
  $region21: #{generalized_rcnn_forward.3} parent=0 // pred_fallthru
    _
  // Predicated region
  $region22: #{generalized_rcnn_forward.3} parent=0 // pred_check
    _
  $region23: #{generalized_rcnn_forward.3} parent=0 // pred_check_branch
    %23 = sbr.rel (0) target = $region25
  $region24: #{generalized_rcnn_forward.3} parent=0 // pred_region
    _
  $region25: #{generalized_rcnn_forward.3} parent=0 // pred_fallthru
    _
  // Predicated region
  $region26: #{generalized_rcnn_forward.3} parent=0 // pred_check
    _
  $region27: #{generalized_rcnn_forward.3} parent=0 // pred_check_branch
    %25 = sbr.rel (0) target = $region29
  $region28: #{generalized_rcnn_forward.3} parent=0 // pred_region
    _
  $region29: #{generalized_rcnn_forward.3} parent=0 // pred_fallthru
    _
  %v27 = vld [vmem:[%s0] sm:$0xff]
  %v28 = vld [vmem:[%s0 + $0x8] sm:$0xff]
  %v29 = vld [vmem:[%s0 + $0x10] sm:$0xff]
  %v30 = vld [vmem:[%s0 + $0x18] sm:$0xff]
  %v31 = vld [vmem:[%s1] sm:$0xf]
  %v32 = vld [vmem:[%s1 + $0x4] sm:$0xf]
  %v33 = vld [vmem:[%s1 + $0x8] sm:$0xf]
  %v34 = vld [vmem:[%s1 + $0xc] sm:$0xf]
  %v35 = vld [vmem:[%s1 + $0x10] sm:$0xf]
  %v36 = vld [vmem:[%s1 + $0x14] sm:$0xf]
  %v37 = vld [vmem:[%s1 + $0x18] sm:$0xf]
  %v38 = vld [vmem:[%s1 + $0x1c] sm:$0xf]
  %v39 = vld [vmem:[%s1 + $0x20] sm:$0xf]
  %v40 = vld [vmem:[%s1 + $0x24] sm:$0xf]
  %v41 = vld [vmem:[%s1 + $0x28] sm:$0xf]
  %v42 = vld [vmem:[%s1 + $0x2c] sm:$0xf]
  %v43 = vld [vmem:[%s1 + $0x30] sm:$0xf]
  %v44 = vld [vmem:[%s1 + $0x34] sm:$0xf]
  %v45 = vld [vmem:[%s1 + $0x38] sm:$0xf]
  %v46 = vld [vmem:[%s1 + $0x3c] sm:$0xf]
  %v47 = vld [vmem:[%s1 + $0x40] sm:$0xf]
  %v48 = vld [vmem:[%s1 + $0x44] sm:$0xf]
  %v49 = vld [vmem:[%s1 + $0x48] sm:$0xf]
  %v50 = vld [vmem:[%s1 + $0x4c] sm:$0xf]
  %v51 = vld [vmem:[%s1 + $0x50] sm:$0xf]
  %v52 = vld [vmem:[%s1 + $0x54] sm:$0xf]
  %v53 = vld [vmem:[%s1 + $0x58] sm:$0xf]
  %v54 = vld [vmem:[%s1 + $0x5c] sm:$0xf]
  %v55 = vld [vmem:[%s1 + $0x60] sm:$0xf]
  %v56 = vld [vmem:[%s1 + $0x64] sm:$0xf]
  %v57 = vld [vmem:[%s1 + $0x68] sm:$0xf]
  %v58 = vld [vmem:[%s1 + $0x6c] sm:$0xf]
  %v59 = vld [vmem:[%s1 + $0x70] sm:$0xf]
  %v60 = vld [vmem:[%s1 + $0x74] sm:$0xf]
  %v61 = vld [vmem:[%s1 + $0x78] sm:$0xf]
  %v62 = vld [vmem:[%s1 + $0x7c] sm:$0xf]
  %v63 = vld [vmem:[%s1 + $0x80] sm:$0xf]
  %v64 = vld [vmem:[%s1 + $0x84] sm:$0xf]
  %v65 = vld [vmem:[%s1 + $0x88] sm:$0xf]
  %v66 = vld [vmem:[%s1 + $0x8c] sm:$0xf]
  %v67 = vld [vmem:[%s1 + $0x90] sm:$0xf]
  %v68 = vld [vmem:[%s1 + $0x94] sm:$0xf]
  %v69 = vld [vmem:[%s1 + $0x98] sm:$0xf]
  %v70 = vld [vmem:[%s1 + $0x9c] sm:$0xf]
  %v71 = vld [vmem:[%s1 + $0xa0] sm:$0xf]
  %v72 = vld [vmem:[%s1 + $0xa4] sm:$0xf]
  %v73 = vld [vmem:[%s1 + $0xa8] sm:$0xf]
  %v74 = vld [vmem:[%s1 + $0xac] sm:$0xf]
  %v75 = vld [vmem:[%s1 + $0xb0] sm:$0xf]
  %v76 = vld [vmem:[%s1 + $0xb4] sm:$0xf]
  %v77 = vld [vmem:[%s1 + $0xb8] sm:$0xf]
  %v78 = vld [vmem:[%s1 + $0xbc] sm:$0xf]
  %v79 = vld [vmem:[%s1 + $0xc0] sm:$0xf]
  %v80 = vld [vmem:[%s1 + $0xc4] sm:$0xf]
  %v81 = vld [vmem:[%s1 + $0xc8] sm:$0xf]
  %v82 = vld [vmem:[%s1 + $0xcc] sm:$0xf]
  %v83 = vld [vmem:[%s1 + $0xd0] sm:$0xf]
  %v84 = vld [vmem:[%s1 + $0xd4] sm:$0xf]
  %v85 = vld [vmem:[%s1 + $0xd8] sm:$0xf]
  %v86 = vld [vmem:[%s1 + $0xdc] sm:$0xf]
  %v87 = vld [vmem:[%s1 + $0xe0] sm:$0xf]
  %v88 = vld [vmem:[%s1 + $0xe4] sm:$0xf]
  %v89 = vld [vmem:[%s1 + $0xe8] sm:$0xf]
  %v90 = vld [vmem:[%s1 + $0xec] sm:$0xf]
  %v91 = vld [vmem:[%s1 + $0xf0] sm:$0xf]
  %v92 = vld [vmem:[%s1 + $0xf4] sm:$0xf]
  %v93 = vld [vmem:[%s1 + $0xf8] sm:$0xf]
  %v94 = vld [vmem:[%s1 + $0xfc] sm:$0xf]
  %v95 = vld [vmem:[%s2] sm:$0x1]
  %v97 = vlaneseq
  %v98 = vshrl.u32 %v97, 7
  %v99 = vsub.s32 0, %v98
  %v100 = vrot.slane %v95, %v99
  %v106 = vunpack.c.l.b16 %v27
  %v107 = vunpack.c.h.b16 %v27
  %v108 = vunpack.c.l.b16 %v28
  %v109 = vunpack.c.h.b16 %v28
  %v110 = vunpack.c.l.b16 %v29
  %v111 = vunpack.c.h.b16 %v29
  %v112 = vunpack.c.l.b16 %v30
  %v113 = vunpack.c.h.b16 %v30
  %v114 = vpack.c.b16 %v110, %v106
  %v115 = vpack.c.b16 %v111, %v107
  %v116 = vpack.c.b16 %v112, %v108
  %v117 = vpack.c.b16 %v113, %v109
  %v186 = vunpack.c.l.b16 %v31
  %v187 = vunpack.c.l.b16 %v32
  %v188 = vunpack.c.l.b16 %v33
  %v189 = vunpack.c.l.b16 %v34
  %v190 = vunpack.c.l.b16 %v35
  %v191 = vunpack.c.l.b16 %v36
  %v192 = vunpack.c.l.b16 %v37
  %v193 = vunpack.c.l.b16 %v38
  %v194 = vunpack.c.l.b16 %v39
  %v195 = vunpack.c.l.b16 %v40
  %v196 = vunpack.c.l.b16 %v41
  %v197 = vunpack.c.l.b16 %v42
  %v198 = vunpack.c.l.b16 %v43
  %v199 = vunpack.c.l.b16 %v44
  %v200 = vunpack.c.l.b16 %v45
  %v201 = vunpack.c.l.b16 %v46
  %v202 = vunpack.c.l.b16 %v47
  %v203 = vunpack.c.l.b16 %v48
  %v204 = vunpack.c.l.b16 %v49
  %v205 = vunpack.c.l.b16 %v50
  %v206 = vunpack.c.l.b16 %v51
  %v207 = vunpack.c.l.b16 %v52
  %v208 = vunpack.c.l.b16 %v53
  %v209 = vunpack.c.l.b16 %v54
  %v210 = vunpack.c.l.b16 %v55
  %v211 = vunpack.c.l.b16 %v56
  %v212 = vunpack.c.l.b16 %v57
  %v213 = vunpack.c.l.b16 %v58
  %v214 = vunpack.c.l.b16 %v59
  %v215 = vunpack.c.l.b16 %v60
  %v216 = vunpack.c.l.b16 %v61
  %v217 = vunpack.c.l.b16 %v62
  %v218 = vunpack.c.l.b16 %v63
  %v219 = vunpack.c.l.b16 %v64
  %v220 = vunpack.c.l.b16 %v65
  %v221 = vunpack.c.l.b16 %v66
  %v222 = vunpack.c.l.b16 %v67
  %v223 = vunpack.c.l.b16 %v68
  %v224 = vunpack.c.l.b16 %v69
  %v225 = vunpack.c.l.b16 %v70
  %v226 = vunpack.c.l.b16 %v71
  %v227 = vunpack.c.l.b16 %v72
  %v228 = vunpack.c.l.b16 %v73
  %v229 = vunpack.c.l.b16 %v74
  %v230 = vunpack.c.l.b16 %v75
  %v231 = vunpack.c.l.b16 %v76
  %v232 = vunpack.c.l.b16 %v77
  %v233 = vunpack.c.l.b16 %v78
  %v234 = vunpack.c.l.b16 %v79
  %v235 = vunpack.c.l.b16 %v80
  %v236 = vunpack.c.l.b16 %v81
  %v237 = vunpack.c.l.b16 %v82
  %v238 = vunpack.c.l.b16 %v83
  %v239 = vunpack.c.l.b16 %v84
  %v240 = vunpack.c.l.b16 %v85
  %v241 = vunpack.c.l.b16 %v86
  %v242 = vunpack.c.l.b16 %v87
  %v243 = vunpack.c.l.b16 %v88
  %v244 = vunpack.c.l.b16 %v89
  %v245 = vunpack.c.l.b16 %v90
  %v246 = vunpack.c.l.b16 %v91
  %v247 = vunpack.c.l.b16 %v92
  %v248 = vunpack.c.l.b16 %v93
  %v249 = vunpack.c.l.b16 %v94
  %v250 = vpack.c.b16 %v187, %v186
  %v251 = vpack.c.b16 %v189, %v188
  %v252 = vpack.c.b16 %v191, %v190
  %v253 = vpack.c.b16 %v193, %v192
  %v254 = vpack.c.b16 %v195, %v194
  %v255 = vpack.c.b16 %v197, %v196
  %v256 = vpack.c.b16 %v199, %v198
  %v257 = vpack.c.b16 %v201, %v200
  %v258 = vpack.c.b16 %v203, %v202
  %v259 = vpack.c.b16 %v205, %v204
  %v260 = vpack.c.b16 %v207, %v206
  %v261 = vpack.c.b16 %v209, %v208
  %v262 = vpack.c.b16 %v211, %v210
  %v263 = vpack.c.b16 %v213, %v212
  %v264 = vpack.c.b16 %v215, %v214
  %v265 = vpack.c.b16 %v217, %v216
  %v266 = vpack.c.b16 %v219, %v218
  %v267 = vpack.c.b16 %v221, %v220
  %v268 = vpack.c.b16 %v223, %v222
  %v269 = vpack.c.b16 %v225, %v224
  %v270 = vpack.c.b16 %v227, %v226
  %v271 = vpack.c.b16 %v229, %v228
  %v272 = vpack.c.b16 %v231, %v230
  %v273 = vpack.c.b16 %v233, %v232
  %v274 = vpack.c.b16 %v235, %v234
  %v275 = vpack.c.b16 %v237, %v236
  %v276 = vpack.c.b16 %v239, %v238
  %v277 = vpack.c.b16 %v241, %v240
  %v278 = vpack.c.b16 %v243, %v242
  %v279 = vpack.c.b16 %v245, %v244
  %v280 = vpack.c.b16 %v247, %v246
  %v281 = vpack.c.b16 %v249, %v248
  %314 = vmatprep.subr.bf16.mxu0 0
  %315 = vmatpush1.bf16.msra.mxu0 %v250
  %316 = vmatprep.subr.bf16.mxu0 0
  %317 = vmatpush1.bf16.msra.mxu0 %v251
  %318 = vmatprep.subr.bf16.mxu0 0
  %319 = vmatpush1.bf16.msra.mxu0 %v252
  %320 = vmatprep.subr.bf16.mxu0 0
  %321 = vmatpush1.bf16.msra.mxu0 %v253
  %322 = vmatprep.subr.bf16.mxu0 0
  %323 = vmatpush1.bf16.msra.mxu0 %v254
  %324 = vmatprep.subr.bf16.mxu0 0
  %325 = vmatpush1.bf16.msra.mxu0 %v255
  %326 = vmatprep.subr.bf16.mxu0 0
  %327 = vmatpush1.bf16.msra.mxu0 %v256
  %328 = vmatprep.subr.bf16.mxu0 0
  %329 = vmatpush1.bf16.msra.mxu0 %v257
  %330 = vmatprep.subr.bf16.mxu0 0
  %331 = vmatpush1.bf16.msra.mxu0 %v258
  %332 = vmatprep.subr.bf16.mxu0 0
  %333 = vmatpush1.bf16.msra.mxu0 %v259
  %334 = vmatprep.subr.bf16.mxu0 0
  %335 = vmatpush1.bf16.msra.mxu0 %v260
  %336 = vmatprep.subr.bf16.mxu0 0
  %337 = vmatpush1.bf16.msra.mxu0 %v261
  %338 = vmatprep.subr.bf16.mxu0 0
  %339 = vmatpush1.bf16.msra.mxu0 %v262
  %340 = vmatprep.subr.bf16.mxu0 0
  %341 = vmatpush1.bf16.msra.mxu0 %v263
  %342 = vmatprep.subr.bf16.mxu0 0
  %343 = vmatpush1.bf16.msra.mxu0 %v264
  %344 = vmatprep.subr.bf16.mxu0 0
  %345 = vmatpush1.bf16.msra.mxu0 %v265
  %346 = vmatprep.mubr.bf16.mxu0 %v115
  %347 = vmatmul.mubr.bf16.gmra.mrb[0].mxu0 %v114
  %v348 = vpop.f32.mrb[0].mxu0
  %v349 = vadd.f32 %v100, %v348
  %v350 = vpop.f32.mrb[0].mxu0
  %v351 = vpop.f32.mrb[0].mxu0
  %v352 = vadd.f32 %v100, %v351
  %v353 = vpop.f32.mrb[0].mxu0
  %354 = vdwg.mxu0
  %355 = vmatprep.subr.bf16.mxu0 0
  %356 = vmatpush1.bf16.msra.mxu0 %v266
  %357 = vmatprep.subr.bf16.mxu0 0
  %358 = vmatpush1.bf16.msra.mxu0 %v267
  %359 = vmatprep.subr.bf16.mxu0 0
  %360 = vmatpush1.bf16.msra.mxu0 %v268
  %361 = vmatprep.subr.bf16.mxu0 0
  %362 = vmatpush1.bf16.msra.mxu0 %v269
  %363 = vmatprep.subr.bf16.mxu0 0
  %364 = vmatpush1.bf16.msra.mxu0 %v270
  %365 = vmatprep.subr.bf16.mxu0 0
  %366 = vmatpush1.bf16.msra.mxu0 %v271
  %367 = vmatprep.subr.bf16.mxu0 0
  %368 = vmatpush1.bf16.msra.mxu0 %v272
  %369 = vmatprep.subr.bf16.mxu0 0
  %370 = vmatpush1.bf16.msra.mxu0 %v273
  %371 = vmatprep.subr.bf16.mxu0 0
  %372 = vmatpush1.bf16.msra.mxu0 %v274
  %373 = vmatprep.subr.bf16.mxu0 0
  %374 = vmatpush1.bf16.msra.mxu0 %v275
  %375 = vmatprep.subr.bf16.mxu0 0
  %376 = vmatpush1.bf16.msra.mxu0 %v276
  %377 = vmatprep.subr.bf16.mxu0 0
  %378 = vmatpush1.bf16.msra.mxu0 %v277
  %379 = vmatprep.subr.bf16.mxu0 0
  %380 = vmatpush1.bf16.msra.mxu0 %v278
  %381 = vmatprep.subr.bf16.mxu0 0
  %382 = vmatpush1.bf16.msra.mxu0 %v279
  %383 = vmatprep.subr.bf16.mxu0 0
  %384 = vmatpush1.bf16.msra.mxu0 %v280
  %385 = vmatprep.subr.bf16.mxu0 0
  %386 = vmatpush1.bf16.msra.mxu0 %v281
  %387 = vmatprep.mubr.bf16.mxu0 %v117
  %388 = vmatmul.mubr.bf16.gmra.mrb[0].mxu0 %v116
  %v389 = vpop.f32.mrb[0].mxu0
  %v390 = vadd.f32 %v349, %v389
  %v391 = vpop.f32.mrb[0].mxu0
  %v392 = vpop.f32.mrb[0].mxu0
  %v393 = vadd.f32 %v352, %v392
  %v394 = vpop.f32.mrb[0].mxu0
  %395 = vdwg.mxu0
  %v396 = vmax.f32 %v390, 0.0
  %v397 = vmax.f32 %v393, 0.0
  %v398 = vpack.c.bf16 %v397, %v396
  %v399 = vld [vmem:[%s3] sm:$0xf]
  %v400 = vld [vmem:[%s3 + $0x4] sm:$0xf]
  %v401 = vld [vmem:[%s3 + $0x8] sm:$0xf]
  %v402 = vld [vmem:[%s3 + $0xc] sm:$0xf]
  %v403 = vld [vmem:[%s3 + $0x10] sm:$0xf]
  %v404 = vld [vmem:[%s3 + $0x14] sm:$0xf]
  %v405 = vld [vmem:[%s3 + $0x18] sm:$0xf]
  %v406 = vld [vmem:[%s3 + $0x1c] sm:$0xf]
  %v407 = vld [vmem:[%s3 + $0x20] sm:$0xf]
  %v408 = vld [vmem:[%s3 + $0x24] sm:$0xf]
  %v409 = vld [vmem:[%s3 + $0x28] sm:$0xf]
  %v410 = vld [vmem:[%s3 + $0x2c] sm:$0xf]
  %v411 = vld [vmem:[%s3 + $0x30] sm:$0xf]
  %v412 = vld [vmem:[%s3 + $0x34] sm:$0xf]
  %v413 = vld [vmem:[%s3 + $0x38] sm:$0xf]
  %v414 = vld [vmem:[%s3 + $0x3c] sm:$0xf]
  %v415 = vld [vmem:[%s4] sm:$0x1]
  %v417 = vlaneseq
  %v418 = vshrl.u32 %v417, 7
  %v419 = vsub.s32 0, %v418
  %v420 = vrot.slane %v415, %v419
  %v438 = vunpack.c.l.b16 %v399
  %v439 = vunpack.c.l.b16 %v400
  %v440 = vunpack.c.l.b16 %v401
  %v441 = vunpack.c.l.b16 %v402
  %v442 = vunpack.c.l.b16 %v403
  %v443 = vunpack.c.l.b16 %v404
  %v444 = vunpack.c.l.b16 %v405
  %v445 = vunpack.c.l.b16 %v406
  %v446 = vunpack.c.l.b16 %v407
  %v447 = vunpack.c.l.b16 %v408
  %v448 = vunpack.c.l.b16 %v409
  %v449 = vunpack.c.l.b16 %v410
  %v450 = vunpack.c.l.b16 %v411
  %v451 = vunpack.c.l.b16 %v412
  %v452 = vunpack.c.l.b16 %v413
  %v453 = vunpack.c.l.b16 %v414
  %v454 = vpack.c.b16 %v439, %v438
  %v455 = vpack.c.b16 %v441, %v440
  %v456 = vpack.c.b16 %v443, %v442
  %v457 = vpack.c.b16 %v445, %v444
  %v458 = vpack.c.b16 %v447, %v446
  %v459 = vpack.c.b16 %v449, %v448
  %v460 = vpack.c.b16 %v451, %v450
  %v461 = vpack.c.b16 %v453, %v452
  %470 = vmatprep.subr.bf16.mxu0 0
  %471 = vmatpush1.bf16.msra.mxu0 %v454
  %472 = vmatprep.subr.bf16.mxu0 0
  %473 = vmatpush1.bf16.msra.mxu0 %v455
  %474 = vmatprep.subr.bf16.mxu0 0
  %475 = vmatpush1.bf16.msra.mxu0 %v456
  %476 = vmatprep.subr.bf16.mxu0 0
  %477 = vmatpush1.bf16.msra.mxu0 %v457
  %478 = vmatprep.subr.bf16.mxu0 0
  %479 = vmatpush1.bf16.msra.mxu0 %v458
  %480 = vmatprep.subr.bf16.mxu0 0
  %481 = vmatpush1.bf16.msra.mxu0 %v459
  %482 = vmatprep.subr.bf16.mxu0 0
  %483 = vmatpush1.bf16.msra.mxu0 %v460
  %484 = vmatprep.subr.bf16.mxu0 0
  %485 = vmatpush1.bf16.msra.mxu0 %v461
  %486 = vmatprep.subr.bf16.mxu0 0
  %487 = vmatpush1.bf16.msra.mxu0 0
  %488 = vmatprep.subr.bf16.mxu0 0
  %489 = vmatpush1.bf16.msra.mxu0 0
  %490 = vmatprep.subr.bf16.mxu0 0
  %491 = vmatpush1.bf16.msra.mxu0 0
  %492 = vmatprep.subr.bf16.mxu0 0
  %493 = vmatpush1.bf16.msra.mxu0 0
  %494 = vmatprep.subr.bf16.mxu0 0
  %495 = vmatpush1.bf16.msra.mxu0 0
  %496 = vmatprep.subr.bf16.mxu0 0
  %497 = vmatpush1.bf16.msra.mxu0 0
  %498 = vmatprep.subr.bf16.mxu0 0
  %499 = vmatpush1.bf16.msra.mxu0 0
  %500 = vmatprep.subr.bf16.mxu0 0
  %501 = vmatpush1.bf16.msra.mxu0 0
  %502 = vmatprep.mubr.bf16.mxu0 0
  %503 = vmatmul.mubr.bf16.gmra.mrb[0].mxu0 %v398
  %v504 = vpop.f32.mrb[0].mxu0
  %v505 = vadd.f32 %v420, %v504
  %v506 = vpop.f32.mrb[0].mxu0
  %v507 = vpop.f32.mrb[0].mxu0
  %v508 = vadd.f32 %v420, %v507
  %v509 = vpop.f32.mrb[0].mxu0
  %510 = vdwg.mxu0
  %v511 = vmax.f32 %v505, 0.0
  %v512 = vmax.f32 %v508, 0.0
  %v513 = vpack.c.bf16 %v512, %v511
  %v514 = vld [vmem:[%s5] sm:$0xf]
  %v515 = vld [vmem:[%s5 + $0x4] sm:$0xf]
  %v516 = vld [vmem:[%s5 + $0x8] sm:$0xf]
  %v517 = vld [vmem:[%s5 + $0xc] sm:$0xf]
  %v518 = vld [vmem:[%s5 + $0x10] sm:$0xf]
  %v519 = vld [vmem:[%s5 + $0x14] sm:$0xf]
  %v520 = vld [vmem:[%s5 + $0x18] sm:$0xf]
  %v521 = vld [vmem:[%s5 + $0x1c] sm:$0xf]
  %v522 = vld [vmem:[%s5 + $0x20] sm:$0xf]
  %v523 = vld [vmem:[%s5 + $0x24] sm:$0xf]
  %v524 = vld [vmem:[%s5 + $0x28] sm:$0xf]
  %v525 = vld [vmem:[%s5 + $0x2c] sm:$0xf]
  %v526 = vld [vmem:[%s5 + $0x30] sm:$0xf]
  %v527 = vld [vmem:[%s5 + $0x34] sm:$0xf]
  %v528 = vld [vmem:[%s5 + $0x38] sm:$0xf]
  %v529 = vld [vmem:[%s5 + $0x3c] sm:$0xf]
  %v530 = vld [vmem:[%s6] sm:$0x1]
  %v532 = vlaneseq
  %v533 = vshrl.u32 %v532, 7
  %v534 = vsub.s32 0, %v533
  %v535 = vrot.slane %v530, %v534
  %v553 = vunpack.c.l.b16 %v514
  %v554 = vunpack.c.l.b16 %v515
  %v555 = vunpack.c.l.b16 %v516
  %v556 = vunpack.c.l.b16 %v517
  %v557 = vunpack.c.l.b16 %v518
  %v558 = vunpack.c.l.b16 %v519
  %v559 = vunpack.c.l.b16 %v520
  %v560 = vunpack.c.l.b16 %v521
  %v561 = vunpack.c.l.b16 %v522
  %v562 = vunpack.c.l.b16 %v523
  %v563 = vunpack.c.l.b16 %v524
  %v564 = vunpack.c.l.b16 %v525
  %v565 = vunpack.c.l.b16 %v526
  %v566 = vunpack.c.l.b16 %v527
  %v567 = vunpack.c.l.b16 %v528
  %v568 = vunpack.c.l.b16 %v529
  %v569 = vpack.c.b16 %v554, %v553
  %v570 = vpack.c.b16 %v556, %v555
  %v571 = vpack.c.b16 %v558, %v557
  %v572 = vpack.c.b16 %v560, %v559
  %v573 = vpack.c.b16 %v562, %v561
  %v574 = vpack.c.b16 %v564, %v563
  %v575 = vpack.c.b16 %v566, %v565
  %v576 = vpack.c.b16 %v568, %v567
  %585 = vmatprep.subr.bf16.mxu0 0
  %586 = vmatpush1.bf16.msra.mxu0 %v569
  %587 = vmatprep.subr.bf16.mxu0 0
  %588 = vmatpush1.bf16.msra.mxu0 %v570
  %589 = vmatprep.subr.bf16.mxu0 0
  %590 = vmatpush1.bf16.msra.mxu0 %v571
  %591 = vmatprep.subr.bf16.mxu0 0
  %592 = vmatpush1.bf16.msra.mxu0 %v572
  %593 = vmatprep.subr.bf16.mxu0 0
  %594 = vmatpush1.bf16.msra.mxu0 %v573
  %595 = vmatprep.subr.bf16.mxu0 0
  %596 = vmatpush1.bf16.msra.mxu0 %v574
  %597 = vmatprep.subr.bf16.mxu0 0
  %598 = vmatpush1.bf16.msra.mxu0 %v575
  %599 = vmatprep.subr.bf16.mxu0 0
  %600 = vmatpush1.bf16.msra.mxu0 %v576
  %601 = vmatprep.subr.bf16.mxu0 0
  %602 = vmatpush1.bf16.msra.mxu0 0
  %603 = vmatprep.subr.bf16.mxu0 0
  %604 = vmatpush1.bf16.msra.mxu0 0
  %605 = vmatprep.subr.bf16.mxu0 0
  %606 = vmatpush1.bf16.msra.mxu0 0
  %607 = vmatprep.subr.bf16.mxu0 0
  %608 = vmatpush1.bf16.msra.mxu0 0
  %609 = vmatprep.subr.bf16.mxu0 0
  %610 = vmatpush1.bf16.msra.mxu0 0
  %611 = vmatprep.subr.bf16.mxu0 0
  %612 = vmatpush1.bf16.msra.mxu0 0
  %613 = vmatprep.subr.bf16.mxu0 0
  %614 = vmatpush1.bf16.msra.mxu0 0
  %615 = vmatprep.subr.bf16.mxu0 0
  %616 = vmatpush1.bf16.msra.mxu0 0
  %617 = vmatprep.mubr.bf16.mxu0 0
  %618 = vmatmul.mubr.bf16.gmra.mrb[0].mxu0 %v513
  %v619 = vpop.f32.mrb[0].mxu0
  %v620 = vadd.f32 %v535, %v619
  %v621 = vpop.f32.mrb[0].mxu0
  %v622 = vpop.f32.mrb[0].mxu0
  %v623 = vadd.f32 %v535, %v622
  %v624 = vpop.f32.mrb[0].mxu0
  %625 = vdwg.mxu0
  %v626 = vlaneseq
  %v627 = vand.u32 %v626, 127
  %vm628 = vcmp.lt.s32.totalorder %v627, 5
  %v629 = vsel %vm628, %v620, -1e+30
  %v630 = vsel %vm628, %v623, -1e+30
  %631 = vmax.xlane.f32.xlu0 %v629
  %v632 = vpop.xlane.xlu0 %631
  %633 = vmax.xlane.f32.xlu0 %v630
  %v634 = vpop.xlane.xlu0 %633
  %v635 = vsub.f32 %v629, %v632
  %v636 = vsub.f32 %v630, %v634
  %v637 = vmul.f32 %v635, 1.442695
  %v638 = vpow.pop %v637
  %v639 = vmul.f32 %v636, 1.442695
  %v640 = vpow.pop %v639
  %v641 = vsel %vm628, %v638, 0.0
  %v642 = vsel %vm628, %v640, 0.0
  %643 = vadd.xlane.f32.xlu0 %v641
  %v644 = vpop.xlane.xlu0 %643
  %645 = vadd.xlane.f32.xlu0 %v642
  %v646 = vpop.xlane.xlu0 %645
  %v647 = vrcp.pop %v644
  %v648 = vrcp.pop %v646
  %v649 = vmul.f32 %v641, %v647
  %v650 = vmul.f32 %v642, %v648
  %v651 = vsel %vm628, %v649, %v620
  %v652 = vsel %vm628, %v650, %v623
  %653 = vst [vmem:[%s7] sm:$0xff] %v651
  %654 = vst [vmem:[%s7 + $0x8] sm:$0xff] %v652
  // Predicated region
  $region30: #{generalized_rcnn_forward.3} parent=0 // pred_check
    _
  $region31: #{generalized_rcnn_forward.3} parent=0 // pred_check_branch
    %656 = sbr.rel (0) target = $region33
  $region32: #{generalized_rcnn_forward.3} parent=0 // pred_region
    _
  $region33: #{generalized_rcnn_forward.3} parent=0 // pred_fallthru
    _
  // Predicated region
  $region34: #{generalized_rcnn_forward.3} parent=0 // pred_check
    _
  $region35: #{generalized_rcnn_forward.3} parent=0 // pred_check_branch
    %658 = sbr.rel (0) target = $region37
  $region36: #{generalized_rcnn_forward.3} parent=0 // pred_region
    _
  $region37: #{generalized_rcnn_forward.3} parent=0 // pred_fallthru
    _

// kernel: generalized_rcnn_forward.2
$region0: #{generalized_rcnn_forward.2}
  #allocation0 [shape = 'u32[]', space=smem, size = 0x4, offset = 0x4, fixed_abs, tag = 'smem constant byte address 0x4 - core index']
  #allocation1 [shape = 'u32[144,128]{1,0:T(1,128)}', space=vmem, size = 0x12000, scoped, tag = 'internal scratch']
  #allocation2 [shape = 'f32[342,16]{1,0:T(8,128)}', space=vmem, size = 0x2b000, scoped, tag = 'scratch operand']
  #allocation3 [shape = 'f32[342,32]{1,0:T(8,128)}', space=vmem, size = 0x2b000, scoped, tag = 'scratch operand']
  #allocation4 [shape = 'f32[288,72]{1,0:T(8,128)}', space=vmem, size = 0x24000, scoped, tag = 'scratch operand']
  #allocation5 [shape = 'f32[144,144]{1,0:T(8,128)}', space=vmem, size = 0x24000, scoped, tag = 'scratch operand']
  #allocation6 [shape = 'f32[144,288]{1,0:T(8,128)}', space=vmem, size = 0x36000, scoped, tag = 'scratch operand']
  %s0 = inlined_call_operand.vmem [shape: f32[2,342,8], index: 0, kind: input, shape index: {}]
  %s1 = inlined_call_operand.vmem [shape: bf16[72,16], index: 1, kind: input, shape index: {}]
  %s2 = inlined_call_operand.vmem [shape: f32[1,16], index: 2, kind: input, shape index: {}]
  %s3 = inlined_call_operand.vmem [shape: bf16[144,32], index: 3, kind: input, shape index: {}]
  %s4 = inlined_call_operand.vmem [shape: f32[1,32], index: 4, kind: input, shape index: {}]
  %s5 = inlined_call_operand.vmem [shape: bf16[288,32], index: 5, kind: input, shape index: {}]
  %s6 = inlined_call_operand.vmem [shape: f32[1,32], index: 6, kind: input, shape index: {}]
  %s7 = inlined_call_operand.vmem [shape: bf16[32,16], index: 7, kind: input, shape index: {}]
  %s8 = inlined_call_operand.vmem [shape: f32[1,16], index: 8, kind: input, shape index: {}]
  %s9 = inlined_call_operand.vmem [shape: bf16[2,144,32], index: 9, kind: output, shape index: {0}]
  %s10 = inlined_call_operand.vmem [shape: f32[2,144,16], index: 10, kind: output, shape index: {1}]
  %11 = xla_tuple %s9, %s10
  %s12 = sld [smem:[#allocation0]]
  $region77: #{generalized_rcnn_forward.2} parent=0
    _
  %s14 = ssub.s32 1, %s12
  %s15 = scalar_select 0, %s14, %s12
  loop: start=0, step=1, limit=4
  $region2: #{generalized_rcnn_forward.2} parent=0 // loop_pre_header
    _
  $region3: #{generalized_rcnn_forward.2} parent=0 // loop_header
    %s17 = sphi 0, %s21
    %p18 = scmp.ge.s32.totalorder %s17, 4
    %s27 = sphi 0, %s29
    %s30 = sphi 0, %s27
    %s31 = sphi 0, %s30
    %s47 = sphi 0, %s31
    %s51 = sphi 0, %s51
    %s53 = sphi 0, %s51
    %s54 = sphi 0, %s53
    %s68 = sphi 0, %s54
    %s72 = sphi 0, %s72
    %s74 = sphi 0, %s72
    %s75 = sphi 0, %s74
    %s89 = sphi 0, %s75
    %s93 = sphi 0, %s93
    %s95 = sphi 0, %s93
    %s96 = sphi 0, %s95
    %s110 = sphi 0, %s96
    %s114 = sphi 0, %s114
    %s116 = sphi 0, %s114
    %s117 = sphi 0, %s116
    %s131 = sphi 0, %s117
    %s135 = sphi 0, %s135
    %s137 = sphi 0, %s135
    %s138 = sphi 0, %s137
    %s152 = sphi 0, %s138
    %s156 = sphi 0, %s156
    %s158 = sphi 0, %s156
    %s159 = sphi 0, %s158
    %s173 = sphi 0, %s159
    %s177 = sphi 0, %s177
    %s179 = sphi 0, %s177
    %s180 = sphi 0, %s179
    %s194 = sphi 0, %s180
    %s198 = sphi 0, %s198
    %s200 = sphi 0, %s198
    %s201 = sphi 0, %s200
    %s215 = sphi 0, %s201
    %s221 = sphi 0, %s223
    %s224 = sphi 0, %s221
    %s225 = sphi 0, %s224
    %s241 = sphi 0, %s225
    %s247 = sphi 0, %s249
    %s250 = sphi 0, %s247
    %s251 = sphi 0, %s250
    %s267 = sphi 0, %s251
  $region4: #{generalized_rcnn_forward.2} parent=0 // loop_header_branch
    %20 = sbr.rel (%p18) target = $region8
  $region5: #{generalized_rcnn_forward.2} parent=0 // loop_body
    %s22 = ssub.s32 %s17, 1
    %s23 = ssub.s32 %s17, 2
    %s24 = sadd.s32 %s17, 1
    %s25 = ssub.s32 %s17, %s24
    %p26 = scmp.eq.s32.totalorder %s25, 0
    %s28 = sadd.s32 %s27, 1
    %s29 = scalar_select %p26, %s27, %s28
    %p32 = pneg %p26
    %p33 = scmp.eq.s32.totalorder %s17, 1
    %p34 = por %p32, %p33
    %p35 = scmp.ne.s32.totalorder %s27, %s30
    %p36 = scmp.eq.s32.totalorder %s17, 0
    %p37 = por %p35, %p36
    %p38 = scmp.ne.s32.totalorder %s27, %s30
    %p39 = scmp.eq.s32.totalorder %s22, 1
    %p40 = por %p38, %p39
    %p41 = scmp.ne.s32.totalorder %s30, %s31
    %p42 = scmp.eq.s32.totalorder %s22, 0
    %p43 = por %p41, %p42
    %p44 = scmp.ne.s32.totalorder %s30, %s31
    %p45 = scmp.eq.s32.totalorder %s23, 1
    %p46 = por %p44, %p45
    %p48 = scmp.ne.s32.totalorder %s31, %s47
    %p49 = scmp.eq.s32.totalorder %s23, 0
    %p50 = por %p48, %p49
    %s52 = sadd.s32 %s51, 1
    %p55 = scmp.eq.s32.totalorder %s17, 1
    %p56 = scmp.ne.s32.totalorder %s51, %s53
    %p57 = scmp.eq.s32.totalorder %s17, 0
    %p58 = por %p56, %p57
    %p59 = scmp.ne.s32.totalorder %s51, %s53
    %p60 = scmp.eq.s32.totalorder %s22, 1
    %p61 = por %p59, %p60
    %p62 = scmp.ne.s32.totalorder %s53, %s54
    %p63 = scmp.eq.s32.totalorder %s22, 0
    %p64 = por %p62, %p63
    %p65 = scmp.ne.s32.totalorder %s53, %s54
    %p66 = scmp.eq.s32.totalorder %s23, 1
    %p67 = por %p65, %p66
    %p69 = scmp.ne.s32.totalorder %s54, %s68
    %p70 = scmp.eq.s32.totalorder %s23, 0
    %p71 = por %p69, %p70
    %s73 = sadd.s32 %s72, 1
    %p76 = scmp.eq.s32.totalorder %s17, 1
    %p77 = scmp.ne.s32.totalorder %s72, %s74
    %p78 = scmp.eq.s32.totalorder %s17, 0
    %p79 = por %p77, %p78
    %p80 = scmp.ne.s32.totalorder %s72, %s74
    %p81 = scmp.eq.s32.totalorder %s22, 1
    %p82 = por %p80, %p81
    %p83 = scmp.ne.s32.totalorder %s74, %s75
    %p84 = scmp.eq.s32.totalorder %s22, 0
    %p85 = por %p83, %p84
    %p86 = scmp.ne.s32.totalorder %s74, %s75
    %p87 = scmp.eq.s32.totalorder %s23, 1
    %p88 = por %p86, %p87
    %p90 = scmp.ne.s32.totalorder %s75, %s89
    %p91 = scmp.eq.s32.totalorder %s23, 0
    %p92 = por %p90, %p91
    %s94 = sadd.s32 %s93, 1
    %p97 = scmp.eq.s32.totalorder %s17, 1
    %p98 = scmp.ne.s32.totalorder %s93, %s95
    %p99 = scmp.eq.s32.totalorder %s17, 0
    %p100 = por %p98, %p99
    %p101 = scmp.ne.s32.totalorder %s93, %s95
    %p102 = scmp.eq.s32.totalorder %s22, 1
    %p103 = por %p101, %p102
    %p104 = scmp.ne.s32.totalorder %s95, %s96
    %p105 = scmp.eq.s32.totalorder %s22, 0
    %p106 = por %p104, %p105
    %p107 = scmp.ne.s32.totalorder %s95, %s96
    %p108 = scmp.eq.s32.totalorder %s23, 1
    %p109 = por %p107, %p108
    %p111 = scmp.ne.s32.totalorder %s96, %s110
    %p112 = scmp.eq.s32.totalorder %s23, 0
    %p113 = por %p111, %p112
    %s115 = sadd.s32 %s114, 1
    %p118 = scmp.eq.s32.totalorder %s17, 1
    %p119 = scmp.ne.s32.totalorder %s114, %s116
    %p120 = scmp.eq.s32.totalorder %s17, 0
    %p121 = por %p119, %p120
    %p122 = scmp.ne.s32.totalorder %s114, %s116
    %p123 = scmp.eq.s32.totalorder %s22, 1
    %p124 = por %p122, %p123
    %p125 = scmp.ne.s32.totalorder %s116, %s117
    %p126 = scmp.eq.s32.totalorder %s22, 0
    %p127 = por %p125, %p126
    %p128 = scmp.ne.s32.totalorder %s116, %s117
    %p129 = scmp.eq.s32.totalorder %s23, 1
    %p130 = por %p128, %p129
    %p132 = scmp.ne.s32.totalorder %s117, %s131
    %p133 = scmp.eq.s32.totalorder %s23, 0
    %p134 = por %p132, %p133
    %s136 = sadd.s32 %s135, 1
    %p139 = scmp.eq.s32.totalorder %s17, 1
    %p140 = scmp.ne.s32.totalorder %s135, %s137
    %p141 = scmp.eq.s32.totalorder %s17, 0
    %p142 = por %p140, %p141
    %p143 = scmp.ne.s32.totalorder %s135, %s137
    %p144 = scmp.eq.s32.totalorder %s22, 1
    %p145 = por %p143, %p144
    %p146 = scmp.ne.s32.totalorder %s137, %s138
    %p147 = scmp.eq.s32.totalorder %s22, 0
    %p148 = por %p146, %p147
    %p149 = scmp.ne.s32.totalorder %s137, %s138
    %p150 = scmp.eq.s32.totalorder %s23, 1
    %p151 = por %p149, %p150
    %p153 = scmp.ne.s32.totalorder %s138, %s152
    %p154 = scmp.eq.s32.totalorder %s23, 0
    %p155 = por %p153, %p154
    %s157 = sadd.s32 %s156, 1
    %p160 = scmp.eq.s32.totalorder %s17, 1
    %p161 = scmp.ne.s32.totalorder %s156, %s158
    %p162 = scmp.eq.s32.totalorder %s17, 0
    %p163 = por %p161, %p162
    %p164 = scmp.ne.s32.totalorder %s156, %s158
    %p165 = scmp.eq.s32.totalorder %s22, 1
    %p166 = por %p164, %p165
    %p167 = scmp.ne.s32.totalorder %s158, %s159
    %p168 = scmp.eq.s32.totalorder %s22, 0
    %p169 = por %p167, %p168
    %p170 = scmp.ne.s32.totalorder %s158, %s159
    %p171 = scmp.eq.s32.totalorder %s23, 1
    %p172 = por %p170, %p171
    %p174 = scmp.ne.s32.totalorder %s159, %s173
    %p175 = scmp.eq.s32.totalorder %s23, 0
    %p176 = por %p174, %p175
    %s178 = sadd.s32 %s177, 1
    %p181 = scmp.eq.s32.totalorder %s17, 1
    %p182 = scmp.ne.s32.totalorder %s177, %s179
    %p183 = scmp.eq.s32.totalorder %s17, 0
    %p184 = por %p182, %p183
    %p185 = scmp.ne.s32.totalorder %s177, %s179
    %p186 = scmp.eq.s32.totalorder %s22, 1
    %p187 = por %p185, %p186
    %p188 = scmp.ne.s32.totalorder %s179, %s180
    %p189 = scmp.eq.s32.totalorder %s22, 0
    %p190 = por %p188, %p189
    %p191 = scmp.ne.s32.totalorder %s179, %s180
    %p192 = scmp.eq.s32.totalorder %s23, 1
    %p193 = por %p191, %p192
    %p195 = scmp.ne.s32.totalorder %s180, %s194
    %p196 = scmp.eq.s32.totalorder %s23, 0
    %p197 = por %p195, %p196
    %s199 = sadd.s32 %s198, 1
    %p202 = scmp.eq.s32.totalorder %s17, 1
    %p203 = scmp.ne.s32.totalorder %s198, %s200
    %p204 = scmp.eq.s32.totalorder %s17, 0
    %p205 = por %p203, %p204
    %p206 = scmp.ne.s32.totalorder %s198, %s200
    %p207 = scmp.eq.s32.totalorder %s22, 1
    %p208 = por %p206, %p207
    %p209 = scmp.ne.s32.totalorder %s200, %s201
    %p210 = scmp.eq.s32.totalorder %s22, 0
    %p211 = por %p209, %p210
    %p212 = scmp.ne.s32.totalorder %s200, %s201
    %p213 = scmp.eq.s32.totalorder %s23, 1
    %p214 = por %p212, %p213
    %p216 = scmp.ne.s32.totalorder %s201, %s215
    %p217 = scmp.eq.s32.totalorder %s23, 0
    %p218 = por %p216, %p217
    %s219 = ssub.s32 %s17, %s24
    %p220 = scmp.eq.s32.totalorder %s219, 0
    %s222 = sadd.s32 %s221, 1
    %s223 = scalar_select %p220, %s221, %s222
    %p226 = pneg %p220
    %p227 = scmp.eq.s32.totalorder %s17, 1
    %p228 = por %p226, %p227
    %p229 = scmp.ne.s32.totalorder %s221, %s224
    %p230 = scmp.eq.s32.totalorder %s17, 0
    %p231 = por %p229, %p230
    %p232 = scmp.ne.s32.totalorder %s221, %s224
    %p233 = scmp.eq.s32.totalorder %s22, 1
    %p234 = por %p232, %p233
    %p235 = scmp.ne.s32.totalorder %s224, %s225
    %p236 = scmp.eq.s32.totalorder %s22, 0
    %p237 = por %p235, %p236
    %p238 = scmp.ne.s32.totalorder %s224, %s225
    %p239 = scmp.eq.s32.totalorder %s23, 1
    %p240 = por %p238, %p239
    %p242 = scmp.ne.s32.totalorder %s225, %s241
    %p243 = scmp.eq.s32.totalorder %s23, 0
    %p244 = por %p242, %p243
    %s245 = ssub.s32 %s17, %s24
    %p246 = scmp.eq.s32.totalorder %s245, 0
    %s248 = sadd.s32 %s247, 1
    %s249 = scalar_select %p246, %s247, %s248
    %p252 = pneg %p246
    %p253 = scmp.eq.s32.totalorder %s17, 1
    %p254 = por %p252, %p253
    %p255 = scmp.ne.s32.totalorder %s247, %s250
    %p256 = scmp.eq.s32.totalorder %s17, 0
    %p257 = por %p255, %p256
    %p258 = scmp.ne.s32.totalorder %s247, %s250
    %p259 = scmp.eq.s32.totalorder %s22, 1
    %p260 = por %p258, %p259
    %p261 = scmp.ne.s32.totalorder %s250, %s251
    %p262 = scmp.eq.s32.totalorder %s22, 0
    %p263 = por %p261, %p262
    %p264 = scmp.ne.s32.totalorder %s250, %s251
    %p265 = scmp.eq.s32.totalorder %s23, 1
    %p266 = por %p264, %p265
    %p268 = scmp.ne.s32.totalorder %s251, %s267
    %p269 = scmp.eq.s32.totalorder %s23, 0
    %p270 = por %p268, %p269
    %p271 = scmp.le.s32.totalorder 1, %s17
    %p272 = scmp.lt.s32.totalorder %s17, 3
    %p273 = pnand %p271, %p272
    %p274 = pneg %p273
    // Predicated region
    $region9: #{generalized_rcnn_forward.2} parent=5 // pred_check
      _
    $region10: #{generalized_rcnn_forward.2} parent=5 // pred_check_branch
      %276 = sbr.rel (%p273) target = $region12
    $region11: #{generalized_rcnn_forward.2} parent=5 // pred_region
      %s277 = ssub.s32 %s17, 1
      // Predicated region
      $region13: #{generalized_rcnn_forward.2} parent=11 // pred_check
        %p278 = pneg %p64
      $region14: #{generalized_rcnn_forward.2} parent=11 // pred_check_branch
        %280 = sbr.rel (%p278) target = $region16
      $region15: #{generalized_rcnn_forward.2} parent=11 // pred_region
        _
      $region16: #{generalized_rcnn_forward.2} parent=11 // pred_fallthru
        _
      // Predicated region
      $region17: #{generalized_rcnn_forward.2} parent=11 // pred_check
        %p281 = pneg %p85
      $region18: #{generalized_rcnn_forward.2} parent=11 // pred_check_branch
        %283 = sbr.rel (%p281) target = $region20
      $region19: #{generalized_rcnn_forward.2} parent=11 // pred_region
        _
      $region20: #{generalized_rcnn_forward.2} parent=11 // pred_fallthru
        _
      // Predicated region
      $region21: #{generalized_rcnn_forward.2} parent=11 // pred_check
        %p284 = pneg %p106
      $region22: #{generalized_rcnn_forward.2} parent=11 // pred_check_branch
        %286 = sbr.rel (%p284) target = $region24
      $region23: #{generalized_rcnn_forward.2} parent=11 // pred_region
        _
      $region24: #{generalized_rcnn_forward.2} parent=11 // pred_fallthru
        _
      // Predicated region
      $region25: #{generalized_rcnn_forward.2} parent=11 // pred_check
        %p287 = pneg %p127
      $region26: #{generalized_rcnn_forward.2} parent=11 // pred_check_branch
        %289 = sbr.rel (%p287) target = $region28
      $region27: #{generalized_rcnn_forward.2} parent=11 // pred_region
        _
      $region28: #{generalized_rcnn_forward.2} parent=11 // pred_fallthru
        _
      // Predicated region
      $region29: #{generalized_rcnn_forward.2} parent=11 // pred_check
        %p290 = pneg %p148
      $region30: #{generalized_rcnn_forward.2} parent=11 // pred_check_branch
        %292 = sbr.rel (%p290) target = $region32
      $region31: #{generalized_rcnn_forward.2} parent=11 // pred_region
        _
      $region32: #{generalized_rcnn_forward.2} parent=11 // pred_fallthru
        _
      // Predicated region
      $region33: #{generalized_rcnn_forward.2} parent=11 // pred_check
        %p293 = pneg %p169
      $region34: #{generalized_rcnn_forward.2} parent=11 // pred_check_branch
        %295 = sbr.rel (%p293) target = $region36
      $region35: #{generalized_rcnn_forward.2} parent=11 // pred_region
        _
      $region36: #{generalized_rcnn_forward.2} parent=11 // pred_fallthru
        _
      // Predicated region
      $region37: #{generalized_rcnn_forward.2} parent=11 // pred_check
        %p296 = pneg %p190
      $region38: #{generalized_rcnn_forward.2} parent=11 // pred_check_branch
        %298 = sbr.rel (%p296) target = $region40
      $region39: #{generalized_rcnn_forward.2} parent=11 // pred_region
        _
      $region40: #{generalized_rcnn_forward.2} parent=11 // pred_fallthru
        _
      // Predicated region
      $region41: #{generalized_rcnn_forward.2} parent=11 // pred_check
        %p299 = pneg %p211
      $region42: #{generalized_rcnn_forward.2} parent=11 // pred_check_branch
        %301 = sbr.rel (%p299) target = $region44
      $region43: #{generalized_rcnn_forward.2} parent=11 // pred_region
        _
      $region44: #{generalized_rcnn_forward.2} parent=11 // pred_fallthru
        _
    $region12: #{generalized_rcnn_forward.2} parent=5 // pred_fallthru
      _
    %p302 = scmp.lt.s32.totalorder %s17, 2
    // Predicated region
    $region45: #{generalized_rcnn_forward.2} parent=5 // pred_check
      %p303 = pneg %p302
    $region46: #{generalized_rcnn_forward.2} parent=5 // pred_check_branch
      %305 = sbr.rel (%p303) target = $region48
    $region47: #{generalized_rcnn_forward.2} parent=5 // pred_region
      // Predicated region
      $region49: #{generalized_rcnn_forward.2} parent=47 // pred_check
        %p306 = pneg %p37
      $region50: #{generalized_rcnn_forward.2} parent=47 // pred_check_branch
        %308 = sbr.rel (%p306) target = $region52
      $region51: #{generalized_rcnn_forward.2} parent=47 // pred_region
        %p309 = scmp.lt.s32.totalorder %s17, 1
        %s310 = scalar_select %p309, %s17, 1
        %s311 = smul.addr %s310, 43
        %s312 = smul.addr %s311, 8
        %s313 = scalar_lea.vmem %s0, %s312
      $region52: #{generalized_rcnn_forward.2} parent=47 // pred_fallthru
        _
    $region48: #{generalized_rcnn_forward.2} parent=5 // pred_fallthru
      _
    %p314 = scmp.le.s32.totalorder 1, %s17
    %p315 = scmp.lt.s32.totalorder %s17, 3
    %p316 = pnand %p314, %p315
    %p317 = pneg %p316
    // Predicated region
    $region53: #{generalized_rcnn_forward.2} parent=5 // pred_check
      _
    $region54: #{generalized_rcnn_forward.2} parent=5 // pred_check_branch
      %319 = sbr.rel (%p316) target = $region56
    $region55: #{generalized_rcnn_forward.2} parent=5 // pred_region
      %s320 = ssub.s32 %s17, 1
      %p321 = scmp.lt.s32.totalorder %s22, 1
      %s322 = scalar_select %p321, %s22, 1
      %s323 = smul.addr %s322, 43
      %s324 = smul.addr %s323, 8
      %s325 = scalar_lea.vmem %s0, %s324
      %p326 = pneg %p43
      %p327 = pneg %p40
      %p328 = pneg %p64
      %p329 = pneg %p61
      %p330 = pneg %p85
      %p331 = pneg %p82
      %p332 = pneg %p106
      %p333 = pneg %p103
      %p334 = pneg %p127
      %p335 = pneg %p124
      %p336 = pneg %p148
      %p337 = pneg %p145
      %p338 = pneg %p169
      %p339 = pneg %p166
      %p340 = pneg %p190
      %p341 = pneg %p187
      %p342 = pneg %p211
      %p343 = pneg %p208
      %p344 = pneg %p237
      %p345 = pneg %p234
      %p346 = scmp.lt.s32.totalorder %s22, 1
      %s347 = scalar_select %p346, %s22, 1
      %s348 = smul.addr %s347, 18
      %s349 = smul.addr %s348, 4
      %s350 = scalar_lea.vmem %s9, %s349
      %p351 = pneg %p263
      %p352 = pneg %p260
      %p353 = scmp.lt.s32.totalorder %s22, 1
      %s354 = scalar_select %p353, %s22, 1
      %s355 = smul.addr %s354, 18
      %s356 = smul.addr %s355, 8
      %s357 = scalar_lea.vmem %s10, %s356
      %p358 = scmp.lt.s32.totalorder %s22, 1
      %s359 = scalar_select %p358, %s22, 1
      %s360 = smul.addr %s359, 43
      %s361 = smul.addr %s360, 8
      %s362 = scalar_lea.vmem %s0, %s361
      %p363 = scmp.lt.s32.totalorder %s22, 1
      %s364 = scalar_select %p363, %s22, 1
      %s365 = smul.addr %s364, 18
      %s366 = smul.addr %s365, 4
      %s367 = scalar_lea.vmem %s9, %s366
      %p368 = scmp.lt.s32.totalorder %s22, 1
      %s369 = scalar_select %p368, %s22, 1
      %s370 = smul.addr %s369, 18
      %s371 = smul.addr %s370, 8
      %s372 = scalar_lea.vmem %s10, %s371
      %v374 = vld [vmem:[%s362] sm:$0xff]
      %v375 = vld [vmem:[%s362 + $0x8] sm:$0xff]
      %v376 = vld [vmem:[%s362 + $0x10] sm:$0xff]
      %v377 = vld [vmem:[%s362 + $0x18] sm:$0xff]
      %v378 = vld [vmem:[%s362 + $0x20] sm:$0xff]
      %v379 = vld [vmem:[%s362 + $0x28] sm:$0xff]
      %v380 = vld [vmem:[%s362 + $0x30] sm:$0xff]
      %v381 = vld [vmem:[%s362 + $0x38] sm:$0xff]
      %v382 = vld [vmem:[%s362 + $0x40] sm:$0xff]
      %v383 = vld [vmem:[%s362 + $0x48] sm:$0xff]
      %v384 = vld [vmem:[%s362 + $0x50] sm:$0xff]
      %v385 = vld [vmem:[%s362 + $0x58] sm:$0xff]
      %v386 = vld [vmem:[%s362 + $0x60] sm:$0xff]
      %v387 = vld [vmem:[%s362 + $0x68] sm:$0xff]
      %v388 = vld [vmem:[%s362 + $0x70] sm:$0xff]
      %v389 = vld [vmem:[%s362 + $0x78] sm:$0xff]
      %v390 = vld [vmem:[%s362 + $0x80] sm:$0xff]
      %v391 = vld [vmem:[%s362 + $0x88] sm:$0xff]
      %v392 = vld [vmem:[%s362 + $0x90] sm:$0xff]
      %v393 = vld [vmem:[%s362 + $0x98] sm:$0xff]
      %v394 = vld [vmem:[%s362 + $0xa0] sm:$0xff]
      %v395 = vld [vmem:[%s362 + $0xa8] sm:$0xff]
      %v396 = vld [vmem:[%s362 + $0xb0] sm:$0xff]
      %v397 = vld [vmem:[%s362 + $0xb8] sm:$0xff]
      %v398 = vld [vmem:[%s362 + $0xc0] sm:$0xff]
      %v399 = vld [vmem:[%s362 + $0xc8] sm:$0xff]
      %v400 = vld [vmem:[%s362 + $0xd0] sm:$0xff]
      %v401 = vld [vmem:[%s362 + $0xd8] sm:$0xff]
      %v402 = vld [vmem:[%s362 + $0xe0] sm:$0xff]
      %v403 = vld [vmem:[%s362 + $0xe8] sm:$0xff]
      %v404 = vld [vmem:[%s362 + $0xf0] sm:$0xff]
      %v405 = vld [vmem:[%s362 + $0xf8] sm:$0xff]
      %v406 = vld [vmem:[%s362 + $0x100] sm:$0xff]
      %v407 = vld [vmem:[%s362 + $0x108] sm:$0xff]
      %v408 = vld [vmem:[%s362 + $0x110] sm:$0xff]
      %v409 = vld [vmem:[%s362 + $0x118] sm:$0xff]
      %vm410 = vcmask 64512
      %411 = vst.msk [vmem:[#allocation4] sm:$0xff] %vm410, %v374
      %412 = vst.msk [vmem:[#allocation4 + $0x8] sm:$0xff] %vm410, %v375
      %413 = vst.msk [vmem:[#allocation4 + $0x10] sm:$0xff] %vm410, %v376
      %414 = vst.msk [vmem:[#allocation4 + $0x18] sm:$0xff] %vm410, %v377
      %415 = vst.msk [vmem:[#allocation4 + $0x20] sm:$0xff] %vm410, %v378
      %416 = vst.msk [vmem:[#allocation4 + $0x28] sm:$0xff] %vm410, %v379
      %417 = vst.msk [vmem:[#allocation4 + $0x30] sm:$0xff] %vm410, %v380
      %418 = vst.msk [vmem:[#allocation4 + $0x38] sm:$0xff] %vm410, %v381
      %419 = vst.msk [vmem:[#allocation4 + $0x40] sm:$0xff] %vm410, %v382
      %420 = vst.msk [vmem:[#allocation4 + $0x48] sm:$0xff] %vm410, %v383
      %421 = vst.msk [vmem:[#allocation4 + $0x50] sm:$0xff] %vm410, %v384
      %422 = vst.msk [vmem:[#allocation4 + $0x58] sm:$0xff] %vm410, %v385
      %423 = vst.msk [vmem:[#allocation4 + $0x60] sm:$0xff] %vm410, %v386
      %424 = vst.msk [vmem:[#allocation4 + $0x68] sm:$0xff] %vm410, %v387
      %425 = vst.msk [vmem:[#allocation4 + $0x70] sm:$0xff] %vm410, %v388
      %426 = vst.msk [vmem:[#allocation4 + $0x78] sm:$0xff] %vm410, %v389
      %427 = vst.msk [vmem:[#allocation4 + $0x80] sm:$0xff] %vm410, %v390
      %428 = vst.msk [vmem:[#allocation4 + $0x88] sm:$0xff] %vm410, %v391
      %429 = vst.msk [vmem:[#allocation4 + $0x90] sm:$0xff] %vm410, %v392
      %430 = vst.msk [vmem:[#allocation4 + $0x98] sm:$0xff] %vm410, %v393
      %431 = vst.msk [vmem:[#allocation4 + $0xa0] sm:$0xff] %vm410, %v394
      %432 = vst.msk [vmem:[#allocation4 + $0xa8] sm:$0xff] %vm410, %v395
      %433 = vst.msk [vmem:[#allocation4 + $0xb0] sm:$0xff] %vm410, %v396
      %434 = vst.msk [vmem:[#allocation4 + $0xb8] sm:$0xff] %vm410, %v397
      %435 = vst.msk [vmem:[#allocation4 + $0xc0] sm:$0xff] %vm410, %v398
      %436 = vst.msk [vmem:[#allocation4 + $0xc8] sm:$0xff] %vm410, %v399
      %437 = vst.msk [vmem:[#allocation4 + $0xd0] sm:$0xff] %vm410, %v400
      %438 = vst.msk [vmem:[#allocation4 + $0xd8] sm:$0xff] %vm410, %v401
      %439 = vst.msk [vmem:[#allocation4 + $0xe0] sm:$0xff] %vm410, %v402
      %440 = vst.msk [vmem:[#allocation4 + $0xe8] sm:$0xff] %vm410, %v403
      %441 = vst.msk [vmem:[#allocation4 + $0xf0] sm:$0xff] %vm410, %v404
      %442 = vst.msk [vmem:[#allocation4 + $0xf8] sm:$0xff] %vm410, %v405
      %443 = vst.msk [vmem:[#allocation4 + $0x100] sm:$0xff] %vm410, %v406
      %444 = vst.msk [vmem:[#allocation4 + $0x108] sm:$0xff] %vm410, %v407
      %445 = vst.msk [vmem:[#allocation4 + $0x110] sm:$0xff] %vm410, %v408
      %446 = vst.msk [vmem:[#allocation4 + $0x118] sm:$0xff] %vm410, %v409
      %v447 = vld [vmem:[%s362 + $0x1] sm:$0xff]
      %v448 = vld [vmem:[%s362 + $0x9] sm:$0xff]
      %v449 = vld [vmem:[%s362 + $0x11] sm:$0xff]
      %v450 = vld [vmem:[%s362 + $0x19] sm:$0xff]
      %v451 = vld [vmem:[%s362 + $0x21] sm:$0xff]
      %v452 = vld [vmem:[%s362 + $0x29] sm:$0xff]
      %v453 = vld [vmem:[%s362 + $0x31] sm:$0xff]
      %v454 = vld [vmem:[%s362 + $0x39] sm:$0xff]
      %v455 = vld [vmem:[%s362 + $0x41] sm:$0xff]
      %v456 = vld [vmem:[%s362 + $0x49] sm:$0xff]
      %v457 = vld [vmem:[%s362 + $0x51] sm:$0xff]
      %v458 = vld [vmem:[%s362 + $0x59] sm:$0xff]
      %v459 = vld [vmem:[%s362 + $0x61] sm:$0xff]
      %v460 = vld [vmem:[%s362 + $0x69] sm:$0xff]
      %v461 = vld [vmem:[%s362 + $0x71] sm:$0xff]
      %v462 = vld [vmem:[%s362 + $0x79] sm:$0xff]
      %v463 = vld [vmem:[%s362 + $0x81] sm:$0xff]
      %v464 = vld [vmem:[%s362 + $0x89] sm:$0xff]
      %v465 = vld [vmem:[%s362 + $0x91] sm:$0xff]
      %v466 = vld [vmem:[%s362 + $0x99] sm:$0xff]
      %v467 = vld [vmem:[%s362 + $0xa1] sm:$0xff]
      %v468 = vld [vmem:[%s362 + $0xa9] sm:$0xff]
      %v469 = vld [vmem:[%s362 + $0xb1] sm:$0xff]
      %v470 = vld [vmem:[%s362 + $0xb9] sm:$0xff]
      %v471 = vld [vmem:[%s362 + $0xc1] sm:$0xff]
      %v472 = vld [vmem:[%s362 + $0xc9] sm:$0xff]
      %v473 = vld [vmem:[%s362 + $0xd1] sm:$0xff]
      %v474 = vld [vmem:[%s362 + $0xd9] sm:$0xff]
      %v475 = vld [vmem:[%s362 + $0xe1] sm:$0xff]
      %v476 = vld [vmem:[%s362 + $0xe9] sm:$0xff]
      %v477 = vld [vmem:[%s362 + $0xf1] sm:$0xff]
      %v478 = vld [vmem:[%s362 + $0xf9] sm:$0xff]
      %v479 = vld [vmem:[%s362 + $0x101] sm:$0xff]
      %v480 = vld [vmem:[%s362 + $0x109] sm:$0xff]
      %v481 = vld [vmem:[%s362 + $0x111] sm:$0xff]
      %v482 = vld [vmem:[%s362 + $0x119] sm:$0xff]
      %519 = vrot.lane.b32.xlu0 %v447, 8
      %v520 = vpop.permute.xlu0 %519
      %521 = vrot.lane.b32.xlu0 %v448, 8
      %v522 = vpop.permute.xlu0 %521
      %523 = vrot.lane.b32.xlu0 %v449, 8
      %v524 = vpop.permute.xlu0 %523
      %525 = vrot.lane.b32.xlu0 %v450, 8
      %v526 = vpop.permute.xlu0 %525
      %527 = vrot.lane.b32.xlu0 %v451, 8
      %v528 = vpop.permute.xlu0 %527
      %529 = vrot.lane.b32.xlu0 %v452, 8
      %v530 = vpop.permute.xlu0 %529
      %531 = vrot.lane.b32.xlu0 %v453, 8
      %v532 = vpop.permute.xlu0 %531
      %533 = vrot.lane.b32.xlu0 %v454, 8
      %v534 = vpop.permute.xlu0 %533
      %535 = vrot.lane.b32.xlu0 %v455, 8
      %v536 = vpop.permute.xlu0 %535
      %537 = vrot.lane.b32.xlu0 %v456, 8
      %v538 = vpop.permute.xlu0 %537
      %539 = vrot.lane.b32.xlu0 %v457, 8
      %v540 = vpop.permute.xlu0 %539
      %541 = vrot.lane.b32.xlu0 %v458, 8
      %v542 = vpop.permute.xlu0 %541
      %543 = vrot.lane.b32.xlu0 %v459, 8
      %v544 = vpop.permute.xlu0 %543
      %545 = vrot.lane.b32.xlu0 %v460, 8
      %v546 = vpop.permute.xlu0 %545
      %547 = vrot.lane.b32.xlu0 %v461, 8
      %v548 = vpop.permute.xlu0 %547
      %549 = vrot.lane.b32.xlu0 %v462, 8
      %v550 = vpop.permute.xlu0 %549
      %551 = vrot.lane.b32.xlu0 %v463, 8
      %v552 = vpop.permute.xlu0 %551
      %553 = vrot.lane.b32.xlu0 %v464, 8
      %v554 = vpop.permute.xlu0 %553
      %555 = vrot.lane.b32.xlu0 %v465, 8
      %v556 = vpop.permute.xlu0 %555
      %557 = vrot.lane.b32.xlu0 %v466, 8
      %v558 = vpop.permute.xlu0 %557
      %559 = vrot.lane.b32.xlu0 %v467, 8
      %v560 = vpop.permute.xlu0 %559
      %561 = vrot.lane.b32.xlu0 %v468, 8
      %v562 = vpop.permute.xlu0 %561
      %563 = vrot.lane.b32.xlu0 %v469, 8
      %v564 = vpop.permute.xlu0 %563
      %565 = vrot.lane.b32.xlu0 %v470, 8
      %v566 = vpop.permute.xlu0 %565
      %567 = vrot.lane.b32.xlu0 %v471, 8
      %v568 = vpop.permute.xlu0 %567
      %569 = vrot.lane.b32.xlu0 %v472, 8
      %v570 = vpop.permute.xlu0 %569
      %571 = vrot.lane.b32.xlu0 %v473, 8
      %v572 = vpop.permute.xlu0 %571
      %573 = vrot.lane.b32.xlu0 %v474, 8
      %v574 = vpop.permute.xlu0 %573
      %575 = vrot.lane.b32.xlu0 %v475, 8
      %v576 = vpop.permute.xlu0 %575
      %577 = vrot.lane.b32.xlu0 %v476, 8
      %v578 = vpop.permute.xlu0 %577
      %579 = vrot.lane.b32.xlu0 %v477, 8
      %v580 = vpop.permute.xlu0 %579
      %581 = vrot.lane.b32.xlu0 %v478, 8
      %v582 = vpop.permute.xlu0 %581
      %583 = vrot.lane.b32.xlu0 %v479, 8
      %v584 = vpop.permute.xlu0 %583
      %585 = vrot.lane.b32.xlu0 %v480, 8
      %v586 = vpop.permute.xlu0 %585
      %587 = vrot.lane.b32.xlu0 %v481, 8
      %v588 = vpop.permute.xlu0 %587
      %589 = vrot.lane.b32.xlu0 %v482, 8
      %v590 = vpop.permute.xlu0 %589
      %vm627 = vcmask 130112
      %628 = vst.msk [vmem:[#allocation4] sm:$0xff] %vm627, %v520
      %629 = vst.msk [vmem:[#allocation4 + $0x8] sm:$0xff] %vm627, %v522
      %630 = vst.msk [vmem:[#allocation4 + $0x10] sm:$0xff] %vm627, %v524
      %631 = vst.msk [vmem:[#allocation4 + $0x18] sm:$0xff] %vm627, %v526
      %632 = vst.msk [vmem:[#allocation4 + $0x20] sm:$0xff] %vm627, %v528
      %633 = vst.msk [vmem:[#allocation4 + $0x28] sm:$0xff] %vm627, %v530
      %634 = vst.msk [vmem:[#allocation4 + $0x30] sm:$0xff] %vm627, %v532
      %635 = vst.msk [vmem:[#allocation4 + $0x38] sm:$0xff] %vm627, %v534
      %636 = vst.msk [vmem:[#allocation4 + $0x40] sm:$0xff] %vm627, %v536
      %637 = vst.msk [vmem:[#allocation4 + $0x48] sm:$0xff] %vm627, %v538
      %638 = vst.msk [vmem:[#allocation4 + $0x50] sm:$0xff] %vm627, %v540
      %639 = vst.msk [vmem:[#allocation4 + $0x58] sm:$0xff] %vm627, %v542
      %640 = vst.msk [vmem:[#allocation4 + $0x60] sm:$0xff] %vm627, %v544
      %641 = vst.msk [vmem:[#allocation4 + $0x68] sm:$0xff] %vm627, %v546
      %642 = vst.msk [vmem:[#allocation4 + $0x70] sm:$0xff] %vm627, %v548
      %643 = vst.msk [vmem:[#allocation4 + $0x78] sm:$0xff] %vm627, %v550
      %644 = vst.msk [vmem:[#allocation4 + $0x80] sm:$0xff] %vm627, %v552
      %645 = vst.msk [vmem:[#allocation4 + $0x88] sm:$0xff] %vm627, %v554
      %646 = vst.msk [vmem:[#allocation4 + $0x90] sm:$0xff] %vm627, %v556
      %647 = vst.msk [vmem:[#allocation4 + $0x98] sm:$0xff] %vm627, %v558
      %648 = vst.msk [vmem:[#allocation4 + $0xa0] sm:$0xff] %vm627, %v560
      %649 = vst.msk [vmem:[#allocation4 + $0xa8] sm:$0xff] %vm627, %v562
      %650 = vst.msk [vmem:[#allocation4 + $0xb0] sm:$0xff] %vm627, %v564
      %651 = vst.msk [vmem:[#allocation4 + $0xb8] sm:$0xff] %vm627, %v566
      %652 = vst.msk [vmem:[#allocation4 + $0xc0] sm:$0xff] %vm627, %v568
      %653 = vst.msk [vmem:[#allocation4 + $0xc8] sm:$0xff] %vm627, %v570
      %654 = vst.msk [vmem:[#allocation4 + $0xd0] sm:$0xff] %vm627, %v572
      %655 = vst.msk [vmem:[#allocation4 + $0xd8] sm:$0xff] %vm627, %v574
      %656 = vst.msk [vmem:[#allocation4 + $0xe0] sm:$0xff] %vm627, %v576
      %657 = vst.msk [vmem:[#allocation4 + $0xe8] sm:$0xff] %vm627, %v578
      %658 = vst.msk [vmem:[#allocation4 + $0xf0] sm:$0xff] %vm627, %v580
      %659 = vst.msk [vmem:[#allocation4 + $0xf8] sm:$0xff] %vm627, %v582
      %660 = vst.msk [vmem:[#allocation4 + $0x100] sm:$0xff] %vm627, %v584
      %661 = vst.msk [vmem:[#allocation4 + $0x108] sm:$0xff] %vm627, %v586
      %662 = vst.msk [vmem:[#allocation4 + $0x110] sm:$0xff] %vm627, %v588
      %663 = vst.msk [vmem:[#allocation4 + $0x118] sm:$0xff] %vm627, %v590
      %v664 = vld [vmem:[%s362 + $0x2] sm:$0xff]
      %v665 = vld [vmem:[%s362 + $0xa] sm:$0xff]
      %v666 = vld [vmem:[%s362 + $0x12] sm:$0xff]
      %v667 = vld [vmem:[%s362 + $0x1a] sm:$0xff]
      %v668 = vld [vmem:[%s362 + $0x22] sm:$0xff]
      %v669 = vld [vmem:[%s362 + $0x2a] sm:$0xff]
      %v670 = vld [vmem:[%s362 + $0x32] sm:$0xff]
      %v671 = vld [vmem:[%s362 + $0x3a] sm:$0xff]
      %v672 = vld [vmem:[%s362 + $0x42] sm:$0xff]
      %v673 = vld [vmem:[%s362 + $0x4a] sm:$0xff]
      %v674 = vld [vmem:[%s362 + $0x52] sm:$0xff]
      %v675 = vld [vmem:[%s362 + $0x5a] sm:$0xff]
      %v676 = vld [vmem:[%s362 + $0x62] sm:$0xff]
      %v677 = vld [vmem:[%s362 + $0x6a] sm:$0xff]
      %v678 = vld [vmem:[%s362 + $0x72] sm:$0xff]
      %v679 = vld [vmem:[%s362 + $0x7a] sm:$0xff]
      %v680 = vld [vmem:[%s362 + $0x82] sm:$0xff]
      %v681 = vld [vmem:[%s362 + $0x8a] sm:$0xff]
      %v682 = vld [vmem:[%s362 + $0x92] sm:$0xff]
      %v683 = vld [vmem:[%s362 + $0x9a] sm:$0xff]
      %v684 = vld [vmem:[%s362 + $0xa2] sm:$0xff]
      %v685 = vld [vmem:[%s362 + $0xaa] sm:$0xff]
      %v686 = vld [vmem:[%s362 + $0xb2] sm:$0xff]
      %v687 = vld [vmem:[%s362 + $0xba] sm:$0xff]
      %v688 = vld [vmem:[%s362 + $0xc2] sm:$0xff]
      %v689 = vld [vmem:[%s362 + $0xca] sm:$0xff]
      %v690 = vld [vmem:[%s362 + $0xd2] sm:$0xff]
      %v691 = vld [vmem:[%s362 + $0xda] sm:$0xff]
      %v692 = vld [vmem:[%s362 + $0xe2] sm:$0xff]
      %v693 = vld [vmem:[%s362 + $0xea] sm:$0xff]
      %v694 = vld [vmem:[%s362 + $0xf2] sm:$0xff]
      %v695 = vld [vmem:[%s362 + $0xfa] sm:$0xff]
      %v696 = vld [vmem:[%s362 + $0x102] sm:$0xff]
      %v697 = vld [vmem:[%s362 + $0x10a] sm:$0xff]
      %v698 = vld [vmem:[%s362 + $0x112] sm:$0xff]
      %v699 = vld [vmem:[%s362 + $0x11a] sm:$0xff]
      %736 = vrot.lane.b32.xlu0 %v664, 16
      %v737 = vpop.permute.xlu0 %736
      %738 = vrot.lane.b32.xlu0 %v665, 16
      %v739 = vpop.permute.xlu0 %738
      %740 = vrot.lane.b32.xlu0 %v666, 16
      %v741 = vpop.permute.xlu0 %740
      %742 = vrot.lane.b32.xlu0 %v667, 16
      %v743 = vpop.permute.xlu0 %742
      %744 = vrot.lane.b32.xlu0 %v668, 16
      %v745 = vpop.permute.xlu0 %744
      %746 = vrot.lane.b32.xlu0 %v669, 16
      %v747 = vpop.permute.xlu0 %746
      %748 = vrot.lane.b32.xlu0 %v670, 16
      %v749 = vpop.permute.xlu0 %748
      %750 = vrot.lane.b32.xlu0 %v671, 16
      %v751 = vpop.permute.xlu0 %750
      %752 = vrot.lane.b32.xlu0 %v672, 16
      %v753 = vpop.permute.xlu0 %752
      %754 = vrot.lane.b32.xlu0 %v673, 16
      %v755 = vpop.permute.xlu0 %754
      %756 = vrot.lane.b32.xlu0 %v674, 16
      %v757 = vpop.permute.xlu0 %756
      %758 = vrot.lane.b32.xlu0 %v675, 16
      %v759 = vpop.permute.xlu0 %758
      %760 = vrot.lane.b32.xlu0 %v676, 16
      %v761 = vpop.permute.xlu0 %760
      %762 = vrot.lane.b32.xlu0 %v677, 16
      %v763 = vpop.permute.xlu0 %762
      %764 = vrot.lane.b32.xlu0 %v678, 16
      %v765 = vpop.permute.xlu0 %764
      %766 = vrot.lane.b32.xlu0 %v679, 16
      %v767 = vpop.permute.xlu0 %766
      %768 = vrot.lane.b32.xlu0 %v680, 16
      %v769 = vpop.permute.xlu0 %768
      %770 = vrot.lane.b32.xlu0 %v681, 16
      %v771 = vpop.permute.xlu0 %770
      %772 = vrot.lane.b32.xlu0 %v682, 16
      %v773 = vpop.permute.xlu0 %772
      %774 = vrot.lane.b32.xlu0 %v683, 16
      %v775 = vpop.permute.xlu0 %774
      %776 = vrot.lane.b32.xlu0 %v684, 16
      %v777 = vpop.permute.xlu0 %776
      %778 = vrot.lane.b32.xlu0 %v685, 16
      %v779 = vpop.permute.xlu0 %778
      %780 = vrot.lane.b32.xlu0 %v686, 16
      %v781 = vpop.permute.xlu0 %780
      %782 = vrot.lane.b32.xlu0 %v687, 16
      %v783 = vpop.permute.xlu0 %782
      %784 = vrot.lane.b32.xlu0 %v688, 16
      %v785 = vpop.permute.xlu0 %784
      %786 = vrot.lane.b32.xlu0 %v689, 16
      %v787 = vpop.permute.xlu0 %786
      %788 = vrot.lane.b32.xlu0 %v690, 16
      %v789 = vpop.permute.xlu0 %788
      %790 = vrot.lane.b32.xlu0 %v691, 16
      %v791 = vpop.permute.xlu0 %790
      %792 = vrot.lane.b32.xlu0 %v692, 16
      %v793 = vpop.permute.xlu0 %792
      %794 = vrot.lane.b32.xlu0 %v693, 16
      %v795 = vpop.permute.xlu0 %794
      %796 = vrot.lane.b32.xlu0 %v694, 16
      %v797 = vpop.permute.xlu0 %796
      %798 = vrot.lane.b32.xlu0 %v695, 16
      %v799 = vpop.permute.xlu0 %798
      %800 = vrot.lane.b32.xlu0 %v696, 16
      %v801 = vpop.permute.xlu0 %800
      %802 = vrot.lane.b32.xlu0 %v697, 16
      %v803 = vpop.permute.xlu0 %802
      %804 = vrot.lane.b32.xlu0 %v698, 16
      %v805 = vpop.permute.xlu0 %804
      %806 = vrot.lane.b32.xlu0 %v699, 16
      %v807 = vpop.permute.xlu0 %806
      %vm844 = vcmask 195712
      %845 = vst.msk [vmem:[#allocation4] sm:$0xff] %vm844, %v737
      %846 = vst.msk [vmem:[#allocation4 + $0x8] sm:$0xff] %vm844, %v739
      %847 = vst.msk [vmem:[#allocation4 + $0x10] sm:$0xff] %vm844, %v741
      %848 = vst.msk [vmem:[#allocation4 + $0x18] sm:$0xff] %vm844, %v743
      %849 = vst.msk [vmem:[#allocation4 + $0x20] sm:$0xff] %vm844, %v745
      %850 = vst.msk [vmem:[#allocation4 + $0x28] sm:$0xff] %vm844, %v747
      %851 = vst.msk [vmem:[#allocation4 + $0x30] sm:$0xff] %vm844, %v749
      %852 = vst.msk [vmem:[#allocation4 + $0x38] sm:$0xff] %vm844, %v751
      %853 = vst.msk [vmem:[#allocation4 + $0x40] sm:$0xff] %vm844, %v753
      %854 = vst.msk [vmem:[#allocation4 + $0x48] sm:$0xff] %vm844, %v755
      %855 = vst.msk [vmem:[#allocation4 + $0x50] sm:$0xff] %vm844, %v757
      %856 = vst.msk [vmem:[#allocation4 + $0x58] sm:$0xff] %vm844, %v759
      %857 = vst.msk [vmem:[#allocation4 + $0x60] sm:$0xff] %vm844, %v761
      %858 = vst.msk [vmem:[#allocation4 + $0x68] sm:$0xff] %vm844, %v763
      %859 = vst.msk [vmem:[#allocation4 + $0x70] sm:$0xff] %vm844, %v765
      %860 = vst.msk [vmem:[#allocation4 + $0x78] sm:$0xff] %vm844, %v767
      %861 = vst.msk [vmem:[#allocation4 + $0x80] sm:$0xff] %vm844, %v769
      %862 = vst.msk [vmem:[#allocation4 + $0x88] sm:$0xff] %vm844, %v771
      %863 = vst.msk [vmem:[#allocation4 + $0x90] sm:$0xff] %vm844, %v773
      %864 = vst.msk [vmem:[#allocation4 + $0x98] sm:$0xff] %vm844, %v775
      %865 = vst.msk [vmem:[#allocation4 + $0xa0] sm:$0xff] %vm844, %v777
      %866 = vst.msk [vmem:[#allocation4 + $0xa8] sm:$0xff] %vm844, %v779
      %867 = vst.msk [vmem:[#allocation4 + $0xb0] sm:$0xff] %vm844, %v781
      %868 = vst.msk [vmem:[#allocation4 + $0xb8] sm:$0xff] %vm844, %v783
      %869 = vst.msk [vmem:[#allocation4 + $0xc0] sm:$0xff] %vm844, %v785
      %870 = vst.msk [vmem:[#allocation4 + $0xc8] sm:$0xff] %vm844, %v787
      %871 = vst.msk [vmem:[#allocation4 + $0xd0] sm:$0xff] %vm844, %v789
      %872 = vst.msk [vmem:[#allocation4 + $0xd8] sm:$0xff] %vm844, %v791
      %873 = vst.msk [vmem:[#allocation4 + $0xe0] sm:$0xff] %vm844, %v793
      %874 = vst.msk [vmem:[#allocation4 + $0xe8] sm:$0xff] %vm844, %v795
      %875 = vst.msk [vmem:[#allocation4 + $0xf0] sm:$0xff] %vm844, %v797
      %876 = vst.msk [vmem:[#allocation4 + $0xf8] sm:$0xff] %vm844, %v799
      %877 = vst.msk [vmem:[#allocation4 + $0x100] sm:$0xff] %vm844, %v801
      %878 = vst.msk [vmem:[#allocation4 + $0x108] sm:$0xff] %vm844, %v803
      %879 = vst.msk [vmem:[#allocation4 + $0x110] sm:$0xff] %vm844, %v805
      %880 = vst.msk [vmem:[#allocation4 + $0x118] sm:$0xff] %vm844, %v807
      %v881 = vld [vmem:[%s362 + $0x12] sm:$0xff]
      %v882 = vld [vmem:[%s362 + $0x1a] sm:$0xff]
      %v883 = vld [vmem:[%s362 + $0x22] sm:$0xff]
      %v884 = vld [vmem:[%s362 + $0x2a] sm:$0xff]
      %v885 = vld [vmem:[%s362 + $0x32] sm:$0xff]
      %v886 = vld [vmem:[%s362 + $0x3a] sm:$0xff]
      %v887 = vld [vmem:[%s362 + $0x42] sm:$0xff]
      %v888 = vld [vmem:[%s362 + $0x4a] sm:$0xff]
      %v889 = vld [vmem:[%s362 + $0x52] sm:$0xff]
      %v890 = vld [vmem:[%s362 + $0x5a] sm:$0xff]
      %v891 = vld [vmem:[%s362 + $0x62] sm:$0xff]
      %v892 = vld [vmem:[%s362 + $0x6a] sm:$0xff]
      %v893 = vld [vmem:[%s362 + $0x72] sm:$0xff]
      %v894 = vld [vmem:[%s362 + $0x7a] sm:$0xff]
      %v895 = vld [vmem:[%s362 + $0x82] sm:$0xff]
      %v896 = vld [vmem:[%s362 + $0x8a] sm:$0xff]
      %v897 = vld [vmem:[%s362 + $0x92] sm:$0xff]
      %v898 = vld [vmem:[%s362 + $0x9a] sm:$0xff]
      %v899 = vld [vmem:[%s362 + $0xa2] sm:$0xff]
      %v900 = vld [vmem:[%s362 + $0xaa] sm:$0xff]
      %v901 = vld [vmem:[%s362 + $0xb2] sm:$0xff]
      %v902 = vld [vmem:[%s362 + $0xba] sm:$0xff]
      %v903 = vld [vmem:[%s362 + $0xc2] sm:$0xff]
      %v904 = vld [vmem:[%s362 + $0xca] sm:$0xff]
      %v905 = vld [vmem:[%s362 + $0xd2] sm:$0xff]
      %v906 = vld [vmem:[%s362 + $0xda] sm:$0xff]
      %v907 = vld [vmem:[%s362 + $0xe2] sm:$0xff]
      %v908 = vld [vmem:[%s362 + $0xea] sm:$0xff]
      %v909 = vld [vmem:[%s362 + $0xf2] sm:$0xff]
      %v910 = vld [vmem:[%s362 + $0xfa] sm:$0xff]
      %v911 = vld [vmem:[%s362 + $0x102] sm:$0xff]
      %v912 = vld [vmem:[%s362 + $0x10a] sm:$0xff]
      %v913 = vld [vmem:[%s362 + $0x112] sm:$0xff]
      %v914 = vld [vmem:[%s362 + $0x11a] sm:$0xff]
      %v915 = vld [vmem:[%s362 + $0x122] sm:$0xff]
      %v916 = vld [vmem:[%s362 + $0x12a] sm:$0xff]
      %953 = vrot.lane.b32.xlu0 %v881, 24
      %v954 = vpop.permute.xlu0 %953
      %955 = vrot.lane.b32.xlu0 %v882, 24
      %v956 = vpop.permute.xlu0 %955
      %957 = vrot.lane.b32.xlu0 %v883, 24
      %v958 = vpop.permute.xlu0 %957
      %959 = vrot.lane.b32.xlu0 %v884, 24
      %v960 = vpop.permute.xlu0 %959
      %961 = vrot.lane.b32.xlu0 %v885, 24
      %v962 = vpop.permute.xlu0 %961
      %963 = vrot.lane.b32.xlu0 %v886, 24
      %v964 = vpop.permute.xlu0 %963
      %965 = vrot.lane.b32.xlu0 %v887, 24
      %v966 = vpop.permute.xlu0 %965
      %967 = vrot.lane.b32.xlu0 %v888, 24
      %v968 = vpop.permute.xlu0 %967
      %969 = vrot.lane.b32.xlu0 %v889, 24
      %v970 = vpop.permute.xlu0 %969
      %971 = vrot.lane.b32.xlu0 %v890, 24
      %v972 = vpop.permute.xlu0 %971
      %973 = vrot.lane.b32.xlu0 %v891, 24
      %v974 = vpop.permute.xlu0 %973
      %975 = vrot.lane.b32.xlu0 %v892, 24
      %v976 = vpop.permute.xlu0 %975
      %977 = vrot.lane.b32.xlu0 %v893, 24
      %v978 = vpop.permute.xlu0 %977
      %979 = vrot.lane.b32.xlu0 %v894, 24
      %v980 = vpop.permute.xlu0 %979
      %981 = vrot.lane.b32.xlu0 %v895, 24
      %v982 = vpop.permute.xlu0 %981
      %983 = vrot.lane.b32.xlu0 %v896, 24
      %v984 = vpop.permute.xlu0 %983
      %985 = vrot.lane.b32.xlu0 %v897, 24
      %v986 = vpop.permute.xlu0 %985
      %987 = vrot.lane.b32.xlu0 %v898, 24
      %v988 = vpop.permute.xlu0 %987
      %989 = vrot.lane.b32.xlu0 %v899, 24
      %v990 = vpop.permute.xlu0 %989
      %991 = vrot.lane.b32.xlu0 %v900, 24
      %v992 = vpop.permute.xlu0 %991
      %993 = vrot.lane.b32.xlu0 %v901, 24
      %v994 = vpop.permute.xlu0 %993
      %995 = vrot.lane.b32.xlu0 %v902, 24
      %v996 = vpop.permute.xlu0 %995
      %997 = vrot.lane.b32.xlu0 %v903, 24
      %v998 = vpop.permute.xlu0 %997
      %999 = vrot.lane.b32.xlu0 %v904, 24
      %v1000 = vpop.permute.xlu0 %999
      %1001 = vrot.lane.b32.xlu0 %v905, 24
      %v1002 = vpop.permute.xlu0 %1001
      %1003 = vrot.lane.b32.xlu0 %v906, 24
      %v1004 = vpop.permute.xlu0 %1003
      %1005 = vrot.lane.b32.xlu0 %v907, 24
      %v1006 = vpop.permute.xlu0 %1005
      %1007 = vrot.lane.b32.xlu0 %v908, 24
      %v1008 = vpop.permute.xlu0 %1007
      %1009 = vrot.lane.b32.xlu0 %v909, 24
      %v1010 = vpop.permute.xlu0 %1009
      %1011 = vrot.lane.b32.xlu0 %v910, 24
      %v1012 = vpop.permute.xlu0 %1011
      %1013 = vrot.lane.b32.xlu0 %v911, 24
      %v1014 = vpop.permute.xlu0 %1013
      %1015 = vrot.lane.b32.xlu0 %v912, 24
      %v1016 = vpop.permute.xlu0 %1015
      %1017 = vrot.lane.b32.xlu0 %v913, 24
      %v1018 = vpop.permute.xlu0 %1017
      %1019 = vrot.lane.b32.xlu0 %v914, 24
      %v1020 = vpop.permute.xlu0 %1019
      %1021 = vrot.lane.b32.xlu0 %v915, 24
      %v1022 = vpop.permute.xlu0 %1021
      %1023 = vrot.lane.b32.xlu0 %v916, 24
      %v1024 = vpop.permute.xlu0 %1023
      %vm1061 = vcmask 261312
      %1062 = vst.msk [vmem:[#allocation4] sm:$0xff] %vm1061, %v954
      %1063 = vst.msk [vmem:[#allocation4 + $0x8] sm:$0xff] %vm1061, %v956
      %1064 = vst.msk [vmem:[#allocation4 + $0x10] sm:$0xff] %vm1061, %v958
      %1065 = vst.msk [vmem:[#allocation4 + $0x18] sm:$0xff] %vm1061, %v960
      %1066 = vst.msk [vmem:[#allocation4 + $0x20] sm:$0xff] %vm1061, %v962
      %1067 = vst.msk [vmem:[#allocation4 + $0x28] sm:$0xff] %vm1061, %v964
      %1068 = vst.msk [vmem:[#allocation4 + $0x30] sm:$0xff] %vm1061, %v966
      %1069 = vst.msk [vmem:[#allocation4 + $0x38] sm:$0xff] %vm1061, %v968
      %1070 = vst.msk [vmem:[#allocation4 + $0x40] sm:$0xff] %vm1061, %v970
      %1071 = vst.msk [vmem:[#allocation4 + $0x48] sm:$0xff] %vm1061, %v972
      %1072 = vst.msk [vmem:[#allocation4 + $0x50] sm:$0xff] %vm1061, %v974
      %1073 = vst.msk [vmem:[#allocation4 + $0x58] sm:$0xff] %vm1061, %v976
      %1074 = vst.msk [vmem:[#allocation4 + $0x60] sm:$0xff] %vm1061, %v978
      %1075 = vst.msk [vmem:[#allocation4 + $0x68] sm:$0xff] %vm1061, %v980
      %1076 = vst.msk [vmem:[#allocation4 + $0x70] sm:$0xff] %vm1061, %v982
      %1077 = vst.msk [vmem:[#allocation4 + $0x78] sm:$0xff] %vm1061, %v984
      %1078 = vst.msk [vmem:[#allocation4 + $0x80] sm:$0xff] %vm1061, %v986
      %1079 = vst.msk [vmem:[#allocation4 + $0x88] sm:$0xff] %vm1061, %v988
      %1080 = vst.msk [vmem:[#allocation4 + $0x90] sm:$0xff] %vm1061, %v990
      %1081 = vst.msk [vmem:[#allocation4 + $0x98] sm:$0xff] %vm1061, %v992
      %1082 = vst.msk [vmem:[#allocation4 + $0xa0] sm:$0xff] %vm1061, %v994
      %1083 = vst.msk [vmem:[#allocation4 + $0xa8] sm:$0xff] %vm1061, %v996
      %1084 = vst.msk [vmem:[#allocation4 + $0xb0] sm:$0xff] %vm1061, %v998
      %1085 = vst.msk [vmem:[#allocation4 + $0xb8] sm:$0xff] %vm1061, %v1000
      %1086 = vst.msk [vmem:[#allocation4 + $0xc0] sm:$0xff] %vm1061, %v1002
      %1087 = vst.msk [vmem:[#allocation4 + $0xc8] sm:$0xff] %vm1061, %v1004
      %1088 = vst.msk [vmem:[#allocation4 + $0xd0] sm:$0xff] %vm1061, %v1006
      %1089 = vst.msk [vmem:[#allocation4 + $0xd8] sm:$0xff] %vm1061, %v1008
      %1090 = vst.msk [vmem:[#allocation4 + $0xe0] sm:$0xff] %vm1061, %v1010
      %1091 = vst.msk [vmem:[#allocation4 + $0xe8] sm:$0xff] %vm1061, %v1012
      %1092 = vst.msk [vmem:[#allocation4 + $0xf0] sm:$0xff] %vm1061, %v1014
      %1093 = vst.msk [vmem:[#allocation4 + $0xf8] sm:$0xff] %vm1061, %v1016
      %1094 = vst.msk [vmem:[#allocation4 + $0x100] sm:$0xff] %vm1061, %v1018
      %1095 = vst.msk [vmem:[#allocation4 + $0x108] sm:$0xff] %vm1061, %v1020
      %1096 = vst.msk [vmem:[#allocation4 + $0x110] sm:$0xff] %vm1061, %v1022
      %1097 = vst.msk [vmem:[#allocation4 + $0x118] sm:$0xff] %vm1061, %v1024
      %v1098 = vld [vmem:[%s362 + $0x13] sm:$0xff]
      %v1099 = vld [vmem:[%s362 + $0x1b] sm:$0xff]
      %v1100 = vld [vmem:[%s362 + $0x23] sm:$0xff]
      %v1101 = vld [vmem:[%s362 + $0x2b] sm:$0xff]
      %v1102 = vld [vmem:[%s362 + $0x33] sm:$0xff]
      %v1103 = vld [vmem:[%s362 + $0x3b] sm:$0xff]
      %v1104 = vld [vmem:[%s362 + $0x43] sm:$0xff]
      %v1105 = vld [vmem:[%s362 + $0x4b] sm:$0xff]
      %v1106 = vld [vmem:[%s362 + $0x53] sm:$0xff]
      %v1107 = vld [vmem:[%s362 + $0x5b] sm:$0xff]
      %v1108 = vld [vmem:[%s362 + $0x63] sm:$0xff]
      %v1109 = vld [vmem:[%s362 + $0x6b] sm:$0xff]
      %v1110 = vld [vmem:[%s362 + $0x73] sm:$0xff]
      %v1111 = vld [vmem:[%s362 + $0x7b] sm:$0xff]
      %v1112 = vld [vmem:[%s362 + $0x83] sm:$0xff]
      %v1113 = vld [vmem:[%s362 + $0x8b] sm:$0xff]
      %v1114 = vld [vmem:[%s362 + $0x93] sm:$0xff]
      %v1115 = vld [vmem:[%s362 + $0x9b] sm:$0xff]
      %v1116 = vld [vmem:[%s362 + $0xa3] sm:$0xff]
      %v1117 = vld [vmem:[%s362 + $0xab] sm:$0xff]
      %v1118 = vld [vmem:[%s362 + $0xb3] sm:$0xff]
      %v1119 = vld [vmem:[%s362 + $0xbb] sm:$0xff]
      %v1120 = vld [vmem:[%s362 + $0xc3] sm:$0xff]
      %v1121 = vld [vmem:[%s362 + $0xcb] sm:$0xff]
      %v1122 = vld [vmem:[%s362 + $0xd3] sm:$0xff]
      %v1123 = vld [vmem:[%s362 + $0xdb] sm:$0xff]
      %v1124 = vld [vmem:[%s362 + $0xe3] sm:$0xff]
      %v1125 = vld [vmem:[%s362 + $0xeb] sm:$0xff]
      %v1126 = vld [vmem:[%s362 + $0xf3] sm:$0xff]
      %v1127 = vld [vmem:[%s362 + $0xfb] sm:$0xff]
      %v1128 = vld [vmem:[%s362 + $0x103] sm:$0xff]
      %v1129 = vld [vmem:[%s362 + $0x10b] sm:$0xff]
      %v1130 = vld [vmem:[%s362 + $0x113] sm:$0xff]
      %v1131 = vld [vmem:[%s362 + $0x11b] sm:$0xff]
      %v1132 = vld [vmem:[%s362 + $0x123] sm:$0xff]
      %v1133 = vld [vmem:[%s362 + $0x12b] sm:$0xff]
      %1170 = vrot.lane.b32.xlu0 %v1098, 32
      %v1171 = vpop.permute.xlu0 %1170
      %1172 = vrot.lane.b32.xlu0 %v1099, 32
      %v1173 = vpop.permute.xlu0 %1172
      %1174 = vrot.lane.b32.xlu0 %v1100, 32
      %v1175 = vpop.permute.xlu0 %1174
      %1176 = vrot.lane.b32.xlu0 %v1101, 32
      %v1177 = vpop.permute.xlu0 %1176
      %1178 = vrot.lane.b32.xlu0 %v1102, 32
      %v1179 = vpop.permute.xlu0 %1178
      %1180 = vrot.lane.b32.xlu0 %v1103, 32
      %v1181 = vpop.permute.xlu0 %1180
      %1182 = vrot.lane.b32.xlu0 %v1104, 32
      %v1183 = vpop.permute.xlu0 %1182
      %1184 = vrot.lane.b32.xlu0 %v1105, 32
      %v1185 = vpop.permute.xlu0 %1184
      %1186 = vrot.lane.b32.xlu0 %v1106, 32
      %v1187 = vpop.permute.xlu0 %1186
      %1188 = vrot.lane.b32.xlu0 %v1107, 32
      %v1189 = vpop.permute.xlu0 %1188
      %1190 = vrot.lane.b32.xlu0 %v1108, 32
      %v1191 = vpop.permute.xlu0 %1190
      %1192 = vrot.lane.b32.xlu0 %v1109, 32
      %v1193 = vpop.permute.xlu0 %1192
      %1194 = vrot.lane.b32.xlu0 %v1110, 32
      %v1195 = vpop.permute.xlu0 %1194
      %1196 = vrot.lane.b32.xlu0 %v1111, 32
      %v1197 = vpop.permute.xlu0 %1196
      %1198 = vrot.lane.b32.xlu0 %v1112, 32
      %v1199 = vpop.permute.xlu0 %1198
      %1200 = vrot.lane.b32.xlu0 %v1113, 32
      %v1201 = vpop.permute.xlu0 %1200
      %1202 = vrot.lane.b32.xlu0 %v1114, 32
      %v1203 = vpop.permute.xlu0 %1202
      %1204 = vrot.lane.b32.xlu0 %v1115, 32
      %v1205 = vpop.permute.xlu0 %1204
      %1206 = vrot.lane.b32.xlu0 %v1116, 32
      %v1207 = vpop.permute.xlu0 %1206
      %1208 = vrot.lane.b32.xlu0 %v1117, 32
      %v1209 = vpop.permute.xlu0 %1208
      %1210 = vrot.lane.b32.xlu0 %v1118, 32
      %v1211 = vpop.permute.xlu0 %1210
      %1212 = vrot.lane.b32.xlu0 %v1119, 32
      %v1213 = vpop.permute.xlu0 %1212
      %1214 = vrot.lane.b32.xlu0 %v1120, 32
      %v1215 = vpop.permute.xlu0 %1214
      %1216 = vrot.lane.b32.xlu0 %v1121, 32
      %v1217 = vpop.permute.xlu0 %1216
      %1218 = vrot.lane.b32.xlu0 %v1122, 32
      %v1219 = vpop.permute.xlu0 %1218
      %1220 = vrot.lane.b32.xlu0 %v1123, 32
      %v1221 = vpop.permute.xlu0 %1220
      %1222 = vrot.lane.b32.xlu0 %v1124, 32
      %v1223 = vpop.permute.xlu0 %1222
      %1224 = vrot.lane.b32.xlu0 %v1125, 32
      %v1225 = vpop.permute.xlu0 %1224
      %1226 = vrot.lane.b32.xlu0 %v1126, 32
      %v1227 = vpop.permute.xlu0 %1226
      %1228 = vrot.lane.b32.xlu0 %v1127, 32
      %v1229 = vpop.permute.xlu0 %1228
      %1230 = vrot.lane.b32.xlu0 %v1128, 32
      %v1231 = vpop.permute.xlu0 %1230
      %1232 = vrot.lane.b32.xlu0 %v1129, 32
      %v1233 = vpop.permute.xlu0 %1232
      %1234 = vrot.lane.b32.xlu0 %v1130, 32
      %v1235 = vpop.permute.xlu0 %1234
      %1236 = vrot.lane.b32.xlu0 %v1131, 32
      %v1237 = vpop.permute.xlu0 %1236
      %1238 = vrot.lane.b32.xlu0 %v1132, 32
      %v1239 = vpop.permute.xlu0 %1238
      %1240 = vrot.lane.b32.xlu0 %v1133, 32
      %v1241 = vpop.permute.xlu0 %1240
      %vm1278 = vcmask 326912
      %1279 = vst.msk [vmem:[#allocation4] sm:$0xff] %vm1278, %v1171
      %1280 = vst.msk [vmem:[#allocation4 + $0x8] sm:$0xff] %vm1278, %v1173
      %1281 = vst.msk [vmem:[#allocation4 + $0x10] sm:$0xff] %vm1278, %v1175
      %1282 = vst.msk [vmem:[#allocation4 + $0x18] sm:$0xff] %vm1278, %v1177
      %1283 = vst.msk [vmem:[#allocation4 + $0x20] sm:$0xff] %vm1278, %v1179
      %1284 = vst.msk [vmem:[#allocation4 + $0x28] sm:$0xff] %vm1278, %v1181
      %1285 = vst.msk [vmem:[#allocation4 + $0x30] sm:$0xff] %vm1278, %v1183
      %1286 = vst.msk [vmem:[#allocation4 + $0x38] sm:$0xff] %vm1278, %v1185
      %1287 = vst.msk [vmem:[#allocation4 + $0x40] sm:$0xff] %vm1278, %v1187
      %1288 = vst.msk [vmem:[#allocation4 + $0x48] sm:$0xff] %vm1278, %v1189
      %1289 = vst.msk [vmem:[#allocation4 + $0x50] sm:$0xff] %vm1278, %v1191
      %1290 = vst.msk [vmem:[#allocation4 + $0x58] sm:$0xff] %vm1278, %v1193
      %1291 = vst.msk [vmem:[#allocation4 + $0x60] sm:$0xff] %vm1278, %v1195
      %1292 = vst.msk [vmem:[#allocation4 + $0x68] sm:$0xff] %vm1278, %v1197
      %1293 = vst.msk [vmem:[#allocation4 + $0x70] sm:$0xff] %vm1278, %v1199
      %1294 = vst.msk [vmem:[#allocation4 + $0x78] sm:$0xff] %vm1278, %v1201
      %1295 = vst.msk [vmem:[#allocation4 + $0x80] sm:$0xff] %vm1278, %v1203
      %1296 = vst.msk [vmem:[#allocation4 + $0x88] sm:$0xff] %vm1278, %v1205
      %1297 = vst.msk [vmem:[#allocation4 + $0x90] sm:$0xff] %vm1278, %v1207
      %1298 = vst.msk [vmem:[#allocation4 + $0x98] sm:$0xff] %vm1278, %v1209
      %1299 = vst.msk [vmem:[#allocation4 + $0xa0] sm:$0xff] %vm1278, %v1211
      %1300 = vst.msk [vmem:[#allocation4 + $0xa8] sm:$0xff] %vm1278, %v1213
      %1301 = vst.msk [vmem:[#allocation4 + $0xb0] sm:$0xff] %vm1278, %v1215
      %1302 = vst.msk [vmem:[#allocation4 + $0xb8] sm:$0xff] %vm1278, %v1217
      %1303 = vst.msk [vmem:[#allocation4 + $0xc0] sm:$0xff] %vm1278, %v1219
      %1304 = vst.msk [vmem:[#allocation4 + $0xc8] sm:$0xff] %vm1278, %v1221
      %1305 = vst.msk [vmem:[#allocation4 + $0xd0] sm:$0xff] %vm1278, %v1223
      %1306 = vst.msk [vmem:[#allocation4 + $0xd8] sm:$0xff] %vm1278, %v1225
      %1307 = vst.msk [vmem:[#allocation4 + $0xe0] sm:$0xff] %vm1278, %v1227
      %1308 = vst.msk [vmem:[#allocation4 + $0xe8] sm:$0xff] %vm1278, %v1229
      %1309 = vst.msk [vmem:[#allocation4 + $0xf0] sm:$0xff] %vm1278, %v1231
      %1310 = vst.msk [vmem:[#allocation4 + $0xf8] sm:$0xff] %vm1278, %v1233
      %1311 = vst.msk [vmem:[#allocation4 + $0x100] sm:$0xff] %vm1278, %v1235
      %1312 = vst.msk [vmem:[#allocation4 + $0x108] sm:$0xff] %vm1278, %v1237
      %1313 = vst.msk [vmem:[#allocation4 + $0x110] sm:$0xff] %vm1278, %v1239
      %1314 = vst.msk [vmem:[#allocation4 + $0x118] sm:$0xff] %vm1278, %v1241
      %v1315 = vld [vmem:[%s362 + $0x14] sm:$0xff]
      %v1316 = vld [vmem:[%s362 + $0x1c] sm:$0xff]
      %v1317 = vld [vmem:[%s362 + $0x24] sm:$0xff]
      %v1318 = vld [vmem:[%s362 + $0x2c] sm:$0xff]
      %v1319 = vld [vmem:[%s362 + $0x34] sm:$0xff]
      %v1320 = vld [vmem:[%s362 + $0x3c] sm:$0xff]
      %v1321 = vld [vmem:[%s362 + $0x44] sm:$0xff]
      %v1322 = vld [vmem:[%s362 + $0x4c] sm:$0xff]
      %v1323 = vld [vmem:[%s362 + $0x54] sm:$0xff]
      %v1324 = vld [vmem:[%s362 + $0x5c] sm:$0xff]
      %v1325 = vld [vmem:[%s362 + $0x64] sm:$0xff]
      %v1326 = vld [vmem:[%s362 + $0x6c] sm:$0xff]
      %v1327 = vld [vmem:[%s362 + $0x74] sm:$0xff]
      %v1328 = vld [vmem:[%s362 + $0x7c] sm:$0xff]
      %v1329 = vld [vmem:[%s362 + $0x84] sm:$0xff]
      %v1330 = vld [vmem:[%s362 + $0x8c] sm:$0xff]
      %v1331 = vld [vmem:[%s362 + $0x94] sm:$0xff]
      %v1332 = vld [vmem:[%s362 + $0x9c] sm:$0xff]
      %v1333 = vld [vmem:[%s362 + $0xa4] sm:$0xff]
      %v1334 = vld [vmem:[%s362 + $0xac] sm:$0xff]
      %v1335 = vld [vmem:[%s362 + $0xb4] sm:$0xff]
      %v1336 = vld [vmem:[%s362 + $0xbc] sm:$0xff]
      %v1337 = vld [vmem:[%s362 + $0xc4] sm:$0xff]
      %v1338 = vld [vmem:[%s362 + $0xcc] sm:$0xff]
      %v1339 = vld [vmem:[%s362 + $0xd4] sm:$0xff]
      %v1340 = vld [vmem:[%s362 + $0xdc] sm:$0xff]
      %v1341 = vld [vmem:[%s362 + $0xe4] sm:$0xff]
      %v1342 = vld [vmem:[%s362 + $0xec] sm:$0xff]
      %v1343 = vld [vmem:[%s362 + $0xf4] sm:$0xff]
      %v1344 = vld [vmem:[%s362 + $0xfc] sm:$0xff]
      %v1345 = vld [vmem:[%s362 + $0x104] sm:$0xff]
      %v1346 = vld [vmem:[%s362 + $0x10c] sm:$0xff]
      %v1347 = vld [vmem:[%s362 + $0x114] sm:$0xff]
      %v1348 = vld [vmem:[%s362 + $0x11c] sm:$0xff]
      %v1349 = vld [vmem:[%s362 + $0x124] sm:$0xff]
      %v1350 = vld [vmem:[%s362 + $0x12c] sm:$0xff]
      %1387 = vrot.lane.b32.xlu0 %v1315, 40
      %v1388 = vpop.permute.xlu0 %1387
      %1389 = vrot.lane.b32.xlu0 %v1316, 40
      %v1390 = vpop.permute.xlu0 %1389
      %1391 = vrot.lane.b32.xlu0 %v1317, 40
      %v1392 = vpop.permute.xlu0 %1391
      %1393 = vrot.lane.b32.xlu0 %v1318, 40
      %v1394 = vpop.permute.xlu0 %1393
      %1395 = vrot.lane.b32.xlu0 %v1319, 40
      %v1396 = vpop.permute.xlu0 %1395
      %1397 = vrot.lane.b32.xlu0 %v1320, 40
      %v1398 = vpop.permute.xlu0 %1397
      %1399 = vrot.lane.b32.xlu0 %v1321, 40
      %v1400 = vpop.permute.xlu0 %1399
      %1401 = vrot.lane.b32.xlu0 %v1322, 40
      %v1402 = vpop.permute.xlu0 %1401
      %1403 = vrot.lane.b32.xlu0 %v1323, 40
      %v1404 = vpop.permute.xlu0 %1403
      %1405 = vrot.lane.b32.xlu0 %v1324, 40
      %v1406 = vpop.permute.xlu0 %1405
      %1407 = vrot.lane.b32.xlu0 %v1325, 40
      %v1408 = vpop.permute.xlu0 %1407
      %1409 = vrot.lane.b32.xlu0 %v1326, 40
      %v1410 = vpop.permute.xlu0 %1409
      %1411 = vrot.lane.b32.xlu0 %v1327, 40
      %v1412 = vpop.permute.xlu0 %1411
      %1413 = vrot.lane.b32.xlu0 %v1328, 40
      %v1414 = vpop.permute.xlu0 %1413
      %1415 = vrot.lane.b32.xlu0 %v1329, 40
      %v1416 = vpop.permute.xlu0 %1415
      %1417 = vrot.lane.b32.xlu0 %v1330, 40
      %v1418 = vpop.permute.xlu0 %1417
      %1419 = vrot.lane.b32.xlu0 %v1331, 40
      %v1420 = vpop.permute.xlu0 %1419
      %1421 = vrot.lane.b32.xlu0 %v1332, 40
      %v1422 = vpop.permute.xlu0 %1421
      %1423 = vrot.lane.b32.xlu0 %v1333, 40
      %v1424 = vpop.permute.xlu0 %1423
      %1425 = vrot.lane.b32.xlu0 %v1334, 40
      %v1426 = vpop.permute.xlu0 %1425
      %1427 = vrot.lane.b32.xlu0 %v1335, 40
      %v1428 = vpop.permute.xlu0 %1427
      %1429 = vrot.lane.b32.xlu0 %v1336, 40
      %v1430 = vpop.permute.xlu0 %1429
      %1431 = vrot.lane.b32.xlu0 %v1337, 40
      %v1432 = vpop.permute.xlu0 %1431
      %1433 = vrot.lane.b32.xlu0 %v1338, 40
      %v1434 = vpop.permute.xlu0 %1433
      %1435 = vrot.lane.b32.xlu0 %v1339, 40
      %v1436 = vpop.permute.xlu0 %1435
      %1437 = vrot.lane.b32.xlu0 %v1340, 40
      %v1438 = vpop.permute.xlu0 %1437
      %1439 = vrot.lane.b32.xlu0 %v1341, 40
      %v1440 = vpop.permute.xlu0 %1439
      %1441 = vrot.lane.b32.xlu0 %v1342, 40
      %v1442 = vpop.permute.xlu0 %1441
      %1443 = vrot.lane.b32.xlu0 %v1343, 40
      %v1444 = vpop.permute.xlu0 %1443
      %1445 = vrot.lane.b32.xlu0 %v1344, 40
      %v1446 = vpop.permute.xlu0 %1445
      %1447 = vrot.lane.b32.xlu0 %v1345, 40
      %v1448 = vpop.permute.xlu0 %1447
      %1449 = vrot.lane.b32.xlu0 %v1346, 40
      %v1450 = vpop.permute.xlu0 %1449
      %1451 = vrot.lane.b32.xlu0 %v1347, 40
      %v1452 = vpop.permute.xlu0 %1451
      %1453 = vrot.lane.b32.xlu0 %v1348, 40
      %v1454 = vpop.permute.xlu0 %1453
      %1455 = vrot.lane.b32.xlu0 %v1349, 40
      %v1456 = vpop.permute.xlu0 %1455
      %1457 = vrot.lane.b32.xlu0 %v1350, 40
      %v1458 = vpop.permute.xlu0 %1457
      %vm1495 = vcmask 392512
      %1496 = vst.msk [vmem:[#allocation4] sm:$0xff] %vm1495, %v1388
      %1497 = vst.msk [vmem:[#allocation4 + $0x8] sm:$0xff] %vm1495, %v1390
      %1498 = vst.msk [vmem:[#allocation4 + $0x10] sm:$0xff] %vm1495, %v1392
      %1499 = vst.msk [vmem:[#allocation4 + $0x18] sm:$0xff] %vm1495, %v1394
      %1500 = vst.msk [vmem:[#allocation4 + $0x20] sm:$0xff] %vm1495, %v1396
      %1501 = vst.msk [vmem:[#allocation4 + $0x28] sm:$0xff] %vm1495, %v1398
      %1502 = vst.msk [vmem:[#allocation4 + $0x30] sm:$0xff] %vm1495, %v1400
      %1503 = vst.msk [vmem:[#allocation4 + $0x38] sm:$0xff] %vm1495, %v1402
      %1504 = vst.msk [vmem:[#allocation4 + $0x40] sm:$0xff] %vm1495, %v1404
      %1505 = vst.msk [vmem:[#allocation4 + $0x48] sm:$0xff] %vm1495, %v1406
      %1506 = vst.msk [vmem:[#allocation4 + $0x50] sm:$0xff] %vm1495, %v1408
      %1507 = vst.msk [vmem:[#allocation4 + $0x58] sm:$0xff] %vm1495, %v1410
      %1508 = vst.msk [vmem:[#allocation4 + $0x60] sm:$0xff] %vm1495, %v1412
      %1509 = vst.msk [vmem:[#allocation4 + $0x68] sm:$0xff] %vm1495, %v1414
      %1510 = vst.msk [vmem:[#allocation4 + $0x70] sm:$0xff] %vm1495, %v1416
      %1511 = vst.msk [vmem:[#allocation4 + $0x78] sm:$0xff] %vm1495, %v1418
      %1512 = vst.msk [vmem:[#allocation4 + $0x80] sm:$0xff] %vm1495, %v1420
      %1513 = vst.msk [vmem:[#allocation4 + $0x88] sm:$0xff] %vm1495, %v1422
      %1514 = vst.msk [vmem:[#allocation4 + $0x90] sm:$0xff] %vm1495, %v1424
      %1515 = vst.msk [vmem:[#allocation4 + $0x98] sm:$0xff] %vm1495, %v1426
      %1516 = vst.msk [vmem:[#allocation4 + $0xa0] sm:$0xff] %vm1495, %v1428
      %1517 = vst.msk [vmem:[#allocation4 + $0xa8] sm:$0xff] %vm1495, %v1430
      %1518 = vst.msk [vmem:[#allocation4 + $0xb0] sm:$0xff] %vm1495, %v1432
      %1519 = vst.msk [vmem:[#allocation4 + $0xb8] sm:$0xff] %vm1495, %v1434
      %1520 = vst.msk [vmem:[#allocation4 + $0xc0] sm:$0xff] %vm1495, %v1436
      %1521 = vst.msk [vmem:[#allocation4 + $0xc8] sm:$0xff] %vm1495, %v1438
      %1522 = vst.msk [vmem:[#allocation4 + $0xd0] sm:$0xff] %vm1495, %v1440
      %1523 = vst.msk [vmem:[#allocation4 + $0xd8] sm:$0xff] %vm1495, %v1442
      %1524 = vst.msk [vmem:[#allocation4 + $0xe0] sm:$0xff] %vm1495, %v1444
      %1525 = vst.msk [vmem:[#allocation4 + $0xe8] sm:$0xff] %vm1495, %v1446
      %1526 = vst.msk [vmem:[#allocation4 + $0xf0] sm:$0xff] %vm1495, %v1448
      %1527 = vst.msk [vmem:[#allocation4 + $0xf8] sm:$0xff] %vm1495, %v1450
      %1528 = vst.msk [vmem:[#allocation4 + $0x100] sm:$0xff] %vm1495, %v1452
      %1529 = vst.msk [vmem:[#allocation4 + $0x108] sm:$0xff] %vm1495, %v1454
      %1530 = vst.msk [vmem:[#allocation4 + $0x110] sm:$0xff] %vm1495, %v1456
      %1531 = vst.msk [vmem:[#allocation4 + $0x118] sm:$0xff] %vm1495, %v1458
      %v1532 = vld [vmem:[%s362 + $0x24] sm:$0xff]
      %v1533 = vld [vmem:[%s362 + $0x2c] sm:$0xff]
      %v1534 = vld [vmem:[%s362 + $0x34] sm:$0xff]
      %v1535 = vld [vmem:[%s362 + $0x3c] sm:$0xff]
      %v1536 = vld [vmem:[%s362 + $0x44] sm:$0xff]
      %v1537 = vld [vmem:[%s362 + $0x4c] sm:$0xff]
      %v1538 = vld [vmem:[%s362 + $0x54] sm:$0xff]
      %v1539 = vld [vmem:[%s362 + $0x5c] sm:$0xff]
      %v1540 = vld [vmem:[%s362 + $0x64] sm:$0xff]
      %v1541 = vld [vmem:[%s362 + $0x6c] sm:$0xff]
      %v1542 = vld [vmem:[%s362 + $0x74] sm:$0xff]
      %v1543 = vld [vmem:[%s362 + $0x7c] sm:$0xff]
      %v1544 = vld [vmem:[%s362 + $0x84] sm:$0xff]
      %v1545 = vld [vmem:[%s362 + $0x8c] sm:$0xff]
      %v1546 = vld [vmem:[%s362 + $0x94] sm:$0xff]
      %v1547 = vld [vmem:[%s362 + $0x9c] sm:$0xff]
      %v1548 = vld [vmem:[%s362 + $0xa4] sm:$0xff]
      %v1549 = vld [vmem:[%s362 + $0xac] sm:$0xff]
      %v1550 = vld [vmem:[%s362 + $0xb4] sm:$0xff]
      %v1551 = vld [vmem:[%s362 + $0xbc] sm:$0xff]
      %v1552 = vld [vmem:[%s362 + $0xc4] sm:$0xff]
      %v1553 = vld [vmem:[%s362 + $0xcc] sm:$0xff]
      %v1554 = vld [vmem:[%s362 + $0xd4] sm:$0xff]
      %v1555 = vld [vmem:[%s362 + $0xdc] sm:$0xff]
      %v1556 = vld [vmem:[%s362 + $0xe4] sm:$0xff]
      %v1557 = vld [vmem:[%s362 + $0xec] sm:$0xff]
      %v1558 = vld [vmem:[%s362 + $0xf4] sm:$0xff]
      %v1559 = vld [vmem:[%s362 + $0xfc] sm:$0xff]
      %v1560 = vld [vmem:[%s362 + $0x104] sm:$0xff]
      %v1561 = vld [vmem:[%s362 + $0x10c] sm:$0xff]
      %v1562 = vld [vmem:[%s362 + $0x114] sm:$0xff]
      %v1563 = vld [vmem:[%s362 + $0x11c] sm:$0xff]
      %v1564 = vld [vmem:[%s362 + $0x124] sm:$0xff]
      %v1565 = vld [vmem:[%s362 + $0x12c] sm:$0xff]
      %v1566 = vld [vmem:[%s362 + $0x134] sm:$0xff]
      %v1567 = vld [vmem:[%s362 + $0x13c] sm:$0xff]
      %1604 = vrot.lane.b32.xlu0 %v1532, 48
      %v1605 = vpop.permute.xlu0 %1604
      %1606 = vrot.lane.b32.xlu0 %v1533, 48
      %v1607 = vpop.permute.xlu0 %1606
      %1608 = vrot.lane.b32.xlu0 %v1534, 48
      %v1609 = vpop.permute.xlu0 %1608
      %1610 = vrot.lane.b32.xlu0 %v1535, 48
      %v1611 = vpop.permute.xlu0 %1610
      %1612 = vrot.lane.b32.xlu0 %v1536, 48
      %v1613 = vpop.permute.xlu0 %1612
      %1614 = vrot.lane.b32.xlu0 %v1537, 48
      %v1615 = vpop.permute.xlu0 %1614
      %1616 = vrot.lane.b32.xlu0 %v1538, 48
      %v1617 = vpop.permute.xlu0 %1616
      %1618 = vrot.lane.b32.xlu0 %v1539, 48
      %v1619 = vpop.permute.xlu0 %1618
      %1620 = vrot.lane.b32.xlu0 %v1540, 48
      %v1621 = vpop.permute.xlu0 %1620
      %1622 = vrot.lane.b32.xlu0 %v1541, 48
      %v1623 = vpop.permute.xlu0 %1622
      %1624 = vrot.lane.b32.xlu0 %v1542, 48
      %v1625 = vpop.permute.xlu0 %1624
      %1626 = vrot.lane.b32.xlu0 %v1543, 48
      %v1627 = vpop.permute.xlu0 %1626
      %1628 = vrot.lane.b32.xlu0 %v1544, 48
      %v1629 = vpop.permute.xlu0 %1628
      %1630 = vrot.lane.b32.xlu0 %v1545, 48
      %v1631 = vpop.permute.xlu0 %1630
      %1632 = vrot.lane.b32.xlu0 %v1546, 48
      %v1633 = vpop.permute.xlu0 %1632
      %1634 = vrot.lane.b32.xlu0 %v1547, 48
      %v1635 = vpop.permute.xlu0 %1634
      %1636 = vrot.lane.b32.xlu0 %v1548, 48
      %v1637 = vpop.permute.xlu0 %1636
      %1638 = vrot.lane.b32.xlu0 %v1549, 48
      %v1639 = vpop.permute.xlu0 %1638
      %1640 = vrot.lane.b32.xlu0 %v1550, 48
      %v1641 = vpop.permute.xlu0 %1640
      %1642 = vrot.lane.b32.xlu0 %v1551, 48
      %v1643 = vpop.permute.xlu0 %1642
      %1644 = vrot.lane.b32.xlu0 %v1552, 48
      %v1645 = vpop.permute.xlu0 %1644
      %1646 = vrot.lane.b32.xlu0 %v1553, 48
      %v1647 = vpop.permute.xlu0 %1646
      %1648 = vrot.lane.b32.xlu0 %v1554, 48
      %v1649 = vpop.permute.xlu0 %1648
      %1650 = vrot.lane.b32.xlu0 %v1555, 48
      %v1651 = vpop.permute.xlu0 %1650
      %1652 = vrot.lane.b32.xlu0 %v1556, 48
      %v1653 = vpop.permute.xlu0 %1652
      %1654 = vrot.lane.b32.xlu0 %v1557, 48
      %v1655 = vpop.permute.xlu0 %1654
      %1656 = vrot.lane.b32.xlu0 %v1558, 48
      %v1657 = vpop.permute.xlu0 %1656
      %1658 = vrot.lane.b32.xlu0 %v1559, 48
      %v1659 = vpop.permute.xlu0 %1658
      %1660 = vrot.lane.b32.xlu0 %v1560, 48
      %v1661 = vpop.permute.xlu0 %1660
      %1662 = vrot.lane.b32.xlu0 %v1561, 48
      %v1663 = vpop.permute.xlu0 %1662
      %1664 = vrot.lane.b32.xlu0 %v1562, 48
      %v1665 = vpop.permute.xlu0 %1664
      %1666 = vrot.lane.b32.xlu0 %v1563, 48
      %v1667 = vpop.permute.xlu0 %1666
      %1668 = vrot.lane.b32.xlu0 %v1564, 48
      %v1669 = vpop.permute.xlu0 %1668
      %1670 = vrot.lane.b32.xlu0 %v1565, 48
      %v1671 = vpop.permute.xlu0 %1670
      %1672 = vrot.lane.b32.xlu0 %v1566, 48
      %v1673 = vpop.permute.xlu0 %1672
      %1674 = vrot.lane.b32.xlu0 %v1567, 48
      %v1675 = vpop.permute.xlu0 %1674
      %vm1712 = vcmask 458112
      %1713 = vst.msk [vmem:[#allocation4] sm:$0xff] %vm1712, %v1605
      %1714 = vst.msk [vmem:[#allocation4 + $0x8] sm:$0xff] %vm1712, %v1607
      %1715 = vst.msk [vmem:[#allocation4 + $0x10] sm:$0xff] %vm1712, %v1609
      %1716 = vst.msk [vmem:[#allocation4 + $0x18] sm:$0xff] %vm1712, %v1611
      %1717 = vst.msk [vmem:[#allocation4 + $0x20] sm:$0xff] %vm1712, %v1613
      %1718 = vst.msk [vmem:[#allocation4 + $0x28] sm:$0xff] %vm1712, %v1615
      %1719 = vst.msk [vmem:[#allocation4 + $0x30] sm:$0xff] %vm1712, %v1617
      %1720 = vst.msk [vmem:[#allocation4 + $0x38] sm:$0xff] %vm1712, %v1619
      %1721 = vst.msk [vmem:[#allocation4 + $0x40] sm:$0xff] %vm1712, %v1621
      %1722 = vst.msk [vmem:[#allocation4 + $0x48] sm:$0xff] %vm1712, %v1623
      %1723 = vst.msk [vmem:[#allocation4 + $0x50] sm:$0xff] %vm1712, %v1625
      %1724 = vst.msk [vmem:[#allocation4 + $0x58] sm:$0xff] %vm1712, %v1627
      %1725 = vst.msk [vmem:[#allocation4 + $0x60] sm:$0xff] %vm1712, %v1629
      %1726 = vst.msk [vmem:[#allocation4 + $0x68] sm:$0xff] %vm1712, %v1631
      %1727 = vst.msk [vmem:[#allocation4 + $0x70] sm:$0xff] %vm1712, %v1633
      %1728 = vst.msk [vmem:[#allocation4 + $0x78] sm:$0xff] %vm1712, %v1635
      %1729 = vst.msk [vmem:[#allocation4 + $0x80] sm:$0xff] %vm1712, %v1637
      %1730 = vst.msk [vmem:[#allocation4 + $0x88] sm:$0xff] %vm1712, %v1639
      %1731 = vst.msk [vmem:[#allocation4 + $0x90] sm:$0xff] %vm1712, %v1641
      %1732 = vst.msk [vmem:[#allocation4 + $0x98] sm:$0xff] %vm1712, %v1643
      %1733 = vst.msk [vmem:[#allocation4 + $0xa0] sm:$0xff] %vm1712, %v1645
      %1734 = vst.msk [vmem:[#allocation4 + $0xa8] sm:$0xff] %vm1712, %v1647
      %1735 = vst.msk [vmem:[#allocation4 + $0xb0] sm:$0xff] %vm1712, %v1649
      %1736 = vst.msk [vmem:[#allocation4 + $0xb8] sm:$0xff] %vm1712, %v1651
      %1737 = vst.msk [vmem:[#allocation4 + $0xc0] sm:$0xff] %vm1712, %v1653
      %1738 = vst.msk [vmem:[#allocation4 + $0xc8] sm:$0xff] %vm1712, %v1655
      %1739 = vst.msk [vmem:[#allocation4 + $0xd0] sm:$0xff] %vm1712, %v1657
      %1740 = vst.msk [vmem:[#allocation4 + $0xd8] sm:$0xff] %vm1712, %v1659
      %1741 = vst.msk [vmem:[#allocation4 + $0xe0] sm:$0xff] %vm1712, %v1661
      %1742 = vst.msk [vmem:[#allocation4 + $0xe8] sm:$0xff] %vm1712, %v1663
      %1743 = vst.msk [vmem:[#allocation4 + $0xf0] sm:$0xff] %vm1712, %v1665
      %1744 = vst.msk [vmem:[#allocation4 + $0xf8] sm:$0xff] %vm1712, %v1667
      %1745 = vst.msk [vmem:[#allocation4 + $0x100] sm:$0xff] %vm1712, %v1669
      %1746 = vst.msk [vmem:[#allocation4 + $0x108] sm:$0xff] %vm1712, %v1671
      %1747 = vst.msk [vmem:[#allocation4 + $0x110] sm:$0xff] %vm1712, %v1673
      %1748 = vst.msk [vmem:[#allocation4 + $0x118] sm:$0xff] %vm1712, %v1675
      %v1749 = vld [vmem:[%s362 + $0x25] sm:$0xff]
      %v1750 = vld [vmem:[%s362 + $0x2d] sm:$0xff]
      %v1751 = vld [vmem:[%s362 + $0x35] sm:$0xff]
      %v1752 = vld [vmem:[%s362 + $0x3d] sm:$0xff]
      %v1753 = vld [vmem:[%s362 + $0x45] sm:$0xff]
      %v1754 = vld [vmem:[%s362 + $0x4d] sm:$0xff]
      %v1755 = vld [vmem:[%s362 + $0x55] sm:$0xff]
      %v1756 = vld [vmem:[%s362 + $0x5d] sm:$0xff]
      %v1757 = vld [vmem:[%s362 + $0x65] sm:$0xff]
      %v1758 = vld [vmem:[%s362 + $0x6d] sm:$0xff]
      %v1759 = vld [vmem:[%s362 + $0x75] sm:$0xff]
      %v1760 = vld [vmem:[%s362 + $0x7d] sm:$0xff]
      %v1761 = vld [vmem:[%s362 + $0x85] sm:$0xff]
      %v1762 = vld [vmem:[%s362 + $0x8d] sm:$0xff]
      %v1763 = vld [vmem:[%s362 + $0x95] sm:$0xff]
      %v1764 = vld [vmem:[%s362 + $0x9d] sm:$0xff]
      %v1765 = vld [vmem:[%s362 + $0xa5] sm:$0xff]
      %v1766 = vld [vmem:[%s362 + $0xad] sm:$0xff]
      %v1767 = vld [vmem:[%s362 + $0xb5] sm:$0xff]
      %v1768 = vld [vmem:[%s362 + $0xbd] sm:$0xff]
      %v1769 = vld [vmem:[%s362 + $0xc5] sm:$0xff]
      %v1770 = vld [vmem:[%s362 + $0xcd] sm:$0xff]
      %v1771 = vld [vmem:[%s362 + $0xd5] sm:$0xff]
      %v1772 = vld [vmem:[%s362 + $0xdd] sm:$0xff]
      %v1773 = vld [vmem:[%s362 + $0xe5] sm:$0xff]
      %v1774 = vld [vmem:[%s362 + $0xed] sm:$0xff]
      %v1775 = vld [vmem:[%s362 + $0xf5] sm:$0xff]
      %v1776 = vld [vmem:[%s362 + $0xfd] sm:$0xff]
      %v1777 = vld [vmem:[%s362 + $0x105] sm:$0xff]
      %v1778 = vld [vmem:[%s362 + $0x10d] sm:$0xff]
      %v1779 = vld [vmem:[%s362 + $0x115] sm:$0xff]
      %v1780 = vld [vmem:[%s362 + $0x11d] sm:$0xff]
      %v1781 = vld [vmem:[%s362 + $0x125] sm:$0xff]
      %v1782 = vld [vmem:[%s362 + $0x12d] sm:$0xff]
      %v1783 = vld [vmem:[%s362 + $0x135] sm:$0xff]
      %v1784 = vld [vmem:[%s362 + $0x13d] sm:$0xff]
      %1821 = vrot.lane.b32.xlu0 %v1749, 56
      %v1822 = vpop.permute.xlu0 %1821
      %1823 = vrot.lane.b32.xlu0 %v1750, 56
      %v1824 = vpop.permute.xlu0 %1823
      %1825 = vrot.lane.b32.xlu0 %v1751, 56
      %v1826 = vpop.permute.xlu0 %1825
      %1827 = vrot.lane.b32.xlu0 %v1752, 56
      %v1828 = vpop.permute.xlu0 %1827
      %1829 = vrot.lane.b32.xlu0 %v1753, 56
      %v1830 = vpop.permute.xlu0 %1829
      %1831 = vrot.lane.b32.xlu0 %v1754, 56
      %v1832 = vpop.permute.xlu0 %1831
      %1833 = vrot.lane.b32.xlu0 %v1755, 56
      %v1834 = vpop.permute.xlu0 %1833
      %1835 = vrot.lane.b32.xlu0 %v1756, 56
      %v1836 = vpop.permute.xlu0 %1835
      %1837 = vrot.lane.b32.xlu0 %v1757, 56
      %v1838 = vpop.permute.xlu0 %1837
      %1839 = vrot.lane.b32.xlu0 %v1758, 56
      %v1840 = vpop.permute.xlu0 %1839
      %1841 = vrot.lane.b32.xlu0 %v1759, 56
      %v1842 = vpop.permute.xlu0 %1841
      %1843 = vrot.lane.b32.xlu0 %v1760, 56
      %v1844 = vpop.permute.xlu0 %1843
      %1845 = vrot.lane.b32.xlu0 %v1761, 56
      %v1846 = vpop.permute.xlu0 %1845
      %1847 = vrot.lane.b32.xlu0 %v1762, 56
      %v1848 = vpop.permute.xlu0 %1847
      %1849 = vrot.lane.b32.xlu0 %v1763, 56
      %v1850 = vpop.permute.xlu0 %1849
      %1851 = vrot.lane.b32.xlu0 %v1764, 56
      %v1852 = vpop.permute.xlu0 %1851
      %1853 = vrot.lane.b32.xlu0 %v1765, 56
      %v1854 = vpop.permute.xlu0 %1853
      %1855 = vrot.lane.b32.xlu0 %v1766, 56
      %v1856 = vpop.permute.xlu0 %1855
      %1857 = vrot.lane.b32.xlu0 %v1767, 56
      %v1858 = vpop.permute.xlu0 %1857
      %1859 = vrot.lane.b32.xlu0 %v1768, 56
      %v1860 = vpop.permute.xlu0 %1859
      %1861 = vrot.lane.b32.xlu0 %v1769, 56
      %v1862 = vpop.permute.xlu0 %1861
      %1863 = vrot.lane.b32.xlu0 %v1770, 56
      %v1864 = vpop.permute.xlu0 %1863
      %1865 = vrot.lane.b32.xlu0 %v1771, 56
      %v1866 = vpop.permute.xlu0 %1865
      %1867 = vrot.lane.b32.xlu0 %v1772, 56
      %v1868 = vpop.permute.xlu0 %1867
      %1869 = vrot.lane.b32.xlu0 %v1773, 56
      %v1870 = vpop.permute.xlu0 %1869
      %1871 = vrot.lane.b32.xlu0 %v1774, 56
      %v1872 = vpop.permute.xlu0 %1871
      %1873 = vrot.lane.b32.xlu0 %v1775, 56
      %v1874 = vpop.permute.xlu0 %1873
      %1875 = vrot.lane.b32.xlu0 %v1776, 56
      %v1876 = vpop.permute.xlu0 %1875
      %1877 = vrot.lane.b32.xlu0 %v1777, 56
      %v1878 = vpop.permute.xlu0 %1877
      %1879 = vrot.lane.b32.xlu0 %v1778, 56
      %v1880 = vpop.permute.xlu0 %1879
      %1881 = vrot.lane.b32.xlu0 %v1779, 56
      %v1882 = vpop.permute.xlu0 %1881
      %1883 = vrot.lane.b32.xlu0 %v1780, 56
      %v1884 = vpop.permute.xlu0 %1883
      %1885 = vrot.lane.b32.xlu0 %v1781, 56
      %v1886 = vpop.permute.xlu0 %1885
      %1887 = vrot.lane.b32.xlu0 %v1782, 56
      %v1888 = vpop.permute.xlu0 %1887
      %1889 = vrot.lane.b32.xlu0 %v1783, 56
      %v1890 = vpop.permute.xlu0 %1889
      %1891 = vrot.lane.b32.xlu0 %v1784, 56
      %v1892 = vpop.permute.xlu0 %1891
      %vm1929 = vcmask 523712
      %1930 = vst.msk [vmem:[#allocation4] sm:$0xff] %vm1929, %v1822
      %1931 = vst.msk [vmem:[#allocation4 + $0x8] sm:$0xff] %vm1929, %v1824
      %1932 = vst.msk [vmem:[#allocation4 + $0x10] sm:$0xff] %vm1929, %v1826
      %1933 = vst.msk [vmem:[#allocation4 + $0x18] sm:$0xff] %vm1929, %v1828
      %1934 = vst.msk [vmem:[#allocation4 + $0x20] sm:$0xff] %vm1929, %v1830
      %1935 = vst.msk [vmem:[#allocation4 + $0x28] sm:$0xff] %vm1929, %v1832
      %1936 = vst.msk [vmem:[#allocation4 + $0x30] sm:$0xff] %vm1929, %v1834
      %1937 = vst.msk [vmem:[#allocation4 + $0x38] sm:$0xff] %vm1929, %v1836
      %1938 = vst.msk [vmem:[#allocation4 + $0x40] sm:$0xff] %vm1929, %v1838
      %1939 = vst.msk [vmem:[#allocation4 + $0x48] sm:$0xff] %vm1929, %v1840
      %1940 = vst.msk [vmem:[#allocation4 + $0x50] sm:$0xff] %vm1929, %v1842
      %1941 = vst.msk [vmem:[#allocation4 + $0x58] sm:$0xff] %vm1929, %v1844
      %1942 = vst.msk [vmem:[#allocation4 + $0x60] sm:$0xff] %vm1929, %v1846
      %1943 = vst.msk [vmem:[#allocation4 + $0x68] sm:$0xff] %vm1929, %v1848
      %1944 = vst.msk [vmem:[#allocation4 + $0x70] sm:$0xff] %vm1929, %v1850
      %1945 = vst.msk [vmem:[#allocation4 + $0x78] sm:$0xff] %vm1929, %v1852
      %1946 = vst.msk [vmem:[#allocation4 + $0x80] sm:$0xff] %vm1929, %v1854
      %1947 = vst.msk [vmem:[#allocation4 + $0x88] sm:$0xff] %vm1929, %v1856
      %1948 = vst.msk [vmem:[#allocation4 + $0x90] sm:$0xff] %vm1929, %v1858
      %1949 = vst.msk [vmem:[#allocation4 + $0x98] sm:$0xff] %vm1929, %v1860
      %1950 = vst.msk [vmem:[#allocation4 + $0xa0] sm:$0xff] %vm1929, %v1862
      %1951 = vst.msk [vmem:[#allocation4 + $0xa8] sm:$0xff] %vm1929, %v1864
      %1952 = vst.msk [vmem:[#allocation4 + $0xb0] sm:$0xff] %vm1929, %v1866
      %1953 = vst.msk [vmem:[#allocation4 + $0xb8] sm:$0xff] %vm1929, %v1868
      %1954 = vst.msk [vmem:[#allocation4 + $0xc0] sm:$0xff] %vm1929, %v1870
      %1955 = vst.msk [vmem:[#allocation4 + $0xc8] sm:$0xff] %vm1929, %v1872
      %1956 = vst.msk [vmem:[#allocation4 + $0xd0] sm:$0xff] %vm1929, %v1874
      %1957 = vst.msk [vmem:[#allocation4 + $0xd8] sm:$0xff] %vm1929, %v1876
      %1958 = vst.msk [vmem:[#allocation4 + $0xe0] sm:$0xff] %vm1929, %v1878
      %1959 = vst.msk [vmem:[#allocation4 + $0xe8] sm:$0xff] %vm1929, %v1880
      %1960 = vst.msk [vmem:[#allocation4 + $0xf0] sm:$0xff] %vm1929, %v1882
      %1961 = vst.msk [vmem:[#allocation4 + $0xf8] sm:$0xff] %vm1929, %v1884
      %1962 = vst.msk [vmem:[#allocation4 + $0x100] sm:$0xff] %vm1929, %v1886
      %1963 = vst.msk [vmem:[#allocation4 + $0x108] sm:$0xff] %vm1929, %v1888
      %1964 = vst.msk [vmem:[#allocation4 + $0x110] sm:$0xff] %vm1929, %v1890
      %1965 = vst.msk [vmem:[#allocation4 + $0x118] sm:$0xff] %vm1929, %v1892
      %v1966 = vld [vmem:[%s362 + $0x26] sm:$0xff]
      %v1967 = vld [vmem:[%s362 + $0x2e] sm:$0xff]
      %v1968 = vld [vmem:[%s362 + $0x36] sm:$0xff]
      %v1969 = vld [vmem:[%s362 + $0x3e] sm:$0xff]
      %v1970 = vld [vmem:[%s362 + $0x46] sm:$0xff]
      %v1971 = vld [vmem:[%s362 + $0x4e] sm:$0xff]
      %v1972 = vld [vmem:[%s362 + $0x56] sm:$0xff]
      %v1973 = vld [vmem:[%s362 + $0x5e] sm:$0xff]
      %v1974 = vld [vmem:[%s362 + $0x66] sm:$0xff]
      %v1975 = vld [vmem:[%s362 + $0x6e] sm:$0xff]
      %v1976 = vld [vmem:[%s362 + $0x76] sm:$0xff]
      %v1977 = vld [vmem:[%s362 + $0x7e] sm:$0xff]
      %v1978 = vld [vmem:[%s362 + $0x86] sm:$0xff]
      %v1979 = vld [vmem:[%s362 + $0x8e] sm:$0xff]
      %v1980 = vld [vmem:[%s362 + $0x96] sm:$0xff]
      %v1981 = vld [vmem:[%s362 + $0x9e] sm:$0xff]
      %v1982 = vld [vmem:[%s362 + $0xa6] sm:$0xff]
      %v1983 = vld [vmem:[%s362 + $0xae] sm:$0xff]
      %v1984 = vld [vmem:[%s362 + $0xb6] sm:$0xff]
      %v1985 = vld [vmem:[%s362 + $0xbe] sm:$0xff]
      %v1986 = vld [vmem:[%s362 + $0xc6] sm:$0xff]
      %v1987 = vld [vmem:[%s362 + $0xce] sm:$0xff]
      %v1988 = vld [vmem:[%s362 + $0xd6] sm:$0xff]
      %v1989 = vld [vmem:[%s362 + $0xde] sm:$0xff]
      %v1990 = vld [vmem:[%s362 + $0xe6] sm:$0xff]
      %v1991 = vld [vmem:[%s362 + $0xee] sm:$0xff]
      %v1992 = vld [vmem:[%s362 + $0xf6] sm:$0xff]
      %v1993 = vld [vmem:[%s362 + $0xfe] sm:$0xff]
      %v1994 = vld [vmem:[%s362 + $0x106] sm:$0xff]
      %v1995 = vld [vmem:[%s362 + $0x10e] sm:$0xff]
      %v1996 = vld [vmem:[%s362 + $0x116] sm:$0xff]
      %v1997 = vld [vmem:[%s362 + $0x11e] sm:$0xff]
      %v1998 = vld [vmem:[%s362 + $0x126] sm:$0xff]
      %v1999 = vld [vmem:[%s362 + $0x12e] sm:$0xff]
      %v2000 = vld [vmem:[%s362 + $0x136] sm:$0xff]
      %v2001 = vld [vmem:[%s362 + $0x13e] sm:$0xff]
      %2038 = vrot.lane.b32.xlu0 %v1966, 64
      %v2039 = vpop.permute.xlu0 %2038
      %2040 = vrot.lane.b32.xlu0 %v1967, 64
      %v2041 = vpop.permute.xlu0 %2040
      %2042 = vrot.lane.b32.xlu0 %v1968, 64
      %v2043 = vpop.permute.xlu0 %2042
      %2044 = vrot.lane.b32.xlu0 %v1969, 64
      %v2045 = vpop.permute.xlu0 %2044
      %2046 = vrot.lane.b32.xlu0 %v1970, 64
      %v2047 = vpop.permute.xlu0 %2046
      %2048 = vrot.lane.b32.xlu0 %v1971, 64
      %v2049 = vpop.permute.xlu0 %2048
      %2050 = vrot.lane.b32.xlu0 %v1972, 64
      %v2051 = vpop.permute.xlu0 %2050
      %2052 = vrot.lane.b32.xlu0 %v1973, 64
      %v2053 = vpop.permute.xlu0 %2052
      %2054 = vrot.lane.b32.xlu0 %v1974, 64
      %v2055 = vpop.permute.xlu0 %2054
      %2056 = vrot.lane.b32.xlu0 %v1975, 64
      %v2057 = vpop.permute.xlu0 %2056
      %2058 = vrot.lane.b32.xlu0 %v1976, 64
      %v2059 = vpop.permute.xlu0 %2058
      %2060 = vrot.lane.b32.xlu0 %v1977, 64
      %v2061 = vpop.permute.xlu0 %2060
      %2062 = vrot.lane.b32.xlu0 %v1978, 64
      %v2063 = vpop.permute.xlu0 %2062
      %2064 = vrot.lane.b32.xlu0 %v1979, 64
      %v2065 = vpop.permute.xlu0 %2064
      %2066 = vrot.lane.b32.xlu0 %v1980, 64
      %v2067 = vpop.permute.xlu0 %2066
      %2068 = vrot.lane.b32.xlu0 %v1981, 64
      %v2069 = vpop.permute.xlu0 %2068
      %2070 = vrot.lane.b32.xlu0 %v1982, 64
      %v2071 = vpop.permute.xlu0 %2070
      %2072 = vrot.lane.b32.xlu0 %v1983, 64
      %v2073 = vpop.permute.xlu0 %2072
      %2074 = vrot.lane.b32.xlu0 %v1984, 64
      %v2075 = vpop.permute.xlu0 %2074
      %2076 = vrot.lane.b32.xlu0 %v1985, 64
      %v2077 = vpop.permute.xlu0 %2076
      %2078 = vrot.lane.b32.xlu0 %v1986, 64
      %v2079 = vpop.permute.xlu0 %2078
      %2080 = vrot.lane.b32.xlu0 %v1987, 64
      %v2081 = vpop.permute.xlu0 %2080
      %2082 = vrot.lane.b32.xlu0 %v1988, 64
      %v2083 = vpop.permute.xlu0 %2082
      %2084 = vrot.lane.b32.xlu0 %v1989, 64
      %v2085 = vpop.permute.xlu0 %2084
      %2086 = vrot.lane.b32.xlu0 %v1990, 64
      %v2087 = vpop.permute.xlu0 %2086
      %2088 = vrot.lane.b32.xlu0 %v1991, 64
      %v2089 = vpop.permute.xlu0 %2088
      %2090 = vrot.lane.b32.xlu0 %v1992, 64
      %v2091 = vpop.permute.xlu0 %2090
      %2092 = vrot.lane.b32.xlu0 %v1993, 64
      %v2093 = vpop.permute.xlu0 %2092
      %2094 = vrot.lane.b32.xlu0 %v1994, 64
      %v2095 = vpop.permute.xlu0 %2094
      %2096 = vrot.lane.b32.xlu0 %v1995, 64
      %v2097 = vpop.permute.xlu0 %2096
      %2098 = vrot.lane.b32.xlu0 %v1996, 64
      %v2099 = vpop.permute.xlu0 %2098
      %2100 = vrot.lane.b32.xlu0 %v1997, 64
      %v2101 = vpop.permute.xlu0 %2100
      %2102 = vrot.lane.b32.xlu0 %v1998, 64
      %v2103 = vpop.permute.xlu0 %2102
      %2104 = vrot.lane.b32.xlu0 %v1999, 64
      %v2105 = vpop.permute.xlu0 %2104
      %2106 = vrot.lane.b32.xlu0 %v2000, 64
      %v2107 = vpop.permute.xlu0 %2106
      %2108 = vrot.lane.b32.xlu0 %v2001, 64
      %v2109 = vpop.permute.xlu0 %2108
      %vm2146 = vcmask 589312
      %2147 = vst.msk [vmem:[#allocation4] sm:$0xff] %vm2146, %v2039
      %2148 = vst.msk [vmem:[#allocation4 + $0x8] sm:$0xff] %vm2146, %v2041
      %2149 = vst.msk [vmem:[#allocation4 + $0x10] sm:$0xff] %vm2146, %v2043
      %2150 = vst.msk [vmem:[#allocation4 + $0x18] sm:$0xff] %vm2146, %v2045
      %2151 = vst.msk [vmem:[#allocation4 + $0x20] sm:$0xff] %vm2146, %v2047
      %2152 = vst.msk [vmem:[#allocation4 + $0x28] sm:$0xff] %vm2146, %v2049
      %2153 = vst.msk [vmem:[#allocation4 + $0x30] sm:$0xff] %vm2146, %v2051
      %2154 = vst.msk [vmem:[#allocation4 + $0x38] sm:$0xff] %vm2146, %v2053
      %2155 = vst.msk [vmem:[#allocation4 + $0x40] sm:$0xff] %vm2146, %v2055
      %2156 = vst.msk [vmem:[#allocation4 + $0x48] sm:$0xff] %vm2146, %v2057
      %2157 = vst.msk [vmem:[#allocation4 + $0x50] sm:$0xff] %vm2146, %v2059
      %2158 = vst.msk [vmem:[#allocation4 + $0x58] sm:$0xff] %vm2146, %v2061
      %2159 = vst.msk [vmem:[#allocation4 + $0x60] sm:$0xff] %vm2146, %v2063
      %2160 = vst.msk [vmem:[#allocation4 + $0x68] sm:$0xff] %vm2146, %v2065
      %2161 = vst.msk [vmem:[#allocation4 + $0x70] sm:$0xff] %vm2146, %v2067
      %2162 = vst.msk [vmem:[#allocation4 + $0x78] sm:$0xff] %vm2146, %v2069
      %2163 = vst.msk [vmem:[#allocation4 + $0x80] sm:$0xff] %vm2146, %v2071
      %2164 = vst.msk [vmem:[#allocation4 + $0x88] sm:$0xff] %vm2146, %v2073
      %2165 = vst.msk [vmem:[#allocation4 + $0x90] sm:$0xff] %vm2146, %v2075
      %2166 = vst.msk [vmem:[#allocation4 + $0x98] sm:$0xff] %vm2146, %v2077
      %2167 = vst.msk [vmem:[#allocation4 + $0xa0] sm:$0xff] %vm2146, %v2079
      %2168 = vst.msk [vmem:[#allocation4 + $0xa8] sm:$0xff] %vm2146, %v2081
      %2169 = vst.msk [vmem:[#allocation4 + $0xb0] sm:$0xff] %vm2146, %v2083
      %2170 = vst.msk [vmem:[#allocation4 + $0xb8] sm:$0xff] %vm2146, %v2085
      %2171 = vst.msk [vmem:[#allocation4 + $0xc0] sm:$0xff] %vm2146, %v2087
      %2172 = vst.msk [vmem:[#allocation4 + $0xc8] sm:$0xff] %vm2146, %v2089
      %2173 = vst.msk [vmem:[#allocation4 + $0xd0] sm:$0xff] %vm2146, %v2091
      %2174 = vst.msk [vmem:[#allocation4 + $0xd8] sm:$0xff] %vm2146, %v2093
      %2175 = vst.msk [vmem:[#allocation4 + $0xe0] sm:$0xff] %vm2146, %v2095
      %2176 = vst.msk [vmem:[#allocation4 + $0xe8] sm:$0xff] %vm2146, %v2097
      %2177 = vst.msk [vmem:[#allocation4 + $0xf0] sm:$0xff] %vm2146, %v2099
      %2178 = vst.msk [vmem:[#allocation4 + $0xf8] sm:$0xff] %vm2146, %v2101
      %2179 = vst.msk [vmem:[#allocation4 + $0x100] sm:$0xff] %vm2146, %v2103
      %2180 = vst.msk [vmem:[#allocation4 + $0x108] sm:$0xff] %vm2146, %v2105
      %2181 = vst.msk [vmem:[#allocation4 + $0x110] sm:$0xff] %vm2146, %v2107
      %2182 = vst.msk [vmem:[#allocation4 + $0x118] sm:$0xff] %vm2146, %v2109
      %v2183 = vld [vmem:[#allocation4] sm:$0xff]
      %v2184 = vld [vmem:[#allocation4 + $0x8] sm:$0xff]
      %v2185 = vld [vmem:[#allocation4 + $0x10] sm:$0xff]
      %v2186 = vld [vmem:[#allocation4 + $0x18] sm:$0xff]
      %v2187 = vld [vmem:[#allocation4 + $0x20] sm:$0xff]
      %v2188 = vld [vmem:[#allocation4 + $0x28] sm:$0xff]
      %v2189 = vld [vmem:[#allocation4 + $0x30] sm:$0xff]
      %v2190 = vld [vmem:[#allocation4 + $0x38] sm:$0xff]
      %v2191 = vld [vmem:[#allocation4 + $0x40] sm:$0xff]
      %v2192 = vld [vmem:[#allocation4 + $0x48] sm:$0xff]
      %v2193 = vld [vmem:[#allocation4 + $0x50] sm:$0xff]
      %v2194 = vld [vmem:[#allocation4 + $0x58] sm:$0xff]
      %v2195 = vld [vmem:[#allocation4 + $0x60] sm:$0xff]
      %v2196 = vld [vmem:[#allocation4 + $0x68] sm:$0xff]
      %v2197 = vld [vmem:[#allocation4 + $0x70] sm:$0xff]
      %v2198 = vld [vmem:[#allocation4 + $0x78] sm:$0xff]
      %v2199 = vld [vmem:[#allocation4 + $0x80] sm:$0xff]
      %v2200 = vld [vmem:[#allocation4 + $0x88] sm:$0xff]
      %v2201 = vld [vmem:[#allocation4 + $0x90] sm:$0xff]
      %v2202 = vld [vmem:[#allocation4 + $0x98] sm:$0xff]
      %v2203 = vld [vmem:[#allocation4 + $0xa0] sm:$0xff]
      %v2204 = vld [vmem:[#allocation4 + $0xa8] sm:$0xff]
      %v2205 = vld [vmem:[#allocation4 + $0xb0] sm:$0xff]
      %v2206 = vld [vmem:[#allocation4 + $0xb8] sm:$0xff]
      %v2207 = vld [vmem:[#allocation4 + $0xc0] sm:$0xff]
      %v2208 = vld [vmem:[#allocation4 + $0xc8] sm:$0xff]
      %v2209 = vld [vmem:[#allocation4 + $0xd0] sm:$0xff]
      %v2210 = vld [vmem:[#allocation4 + $0xd8] sm:$0xff]
      %v2211 = vld [vmem:[#allocation4 + $0xe0] sm:$0xff]
      %v2212 = vld [vmem:[#allocation4 + $0xe8] sm:$0xff]
      %v2213 = vld [vmem:[#allocation4 + $0xf0] sm:$0xff]
      %v2214 = vld [vmem:[#allocation4 + $0xf8] sm:$0xff]
      %v2215 = vld [vmem:[#allocation4 + $0x100] sm:$0xff]
      %v2216 = vld [vmem:[#allocation4 + $0x108] sm:$0xff]
      %v2217 = vld [vmem:[#allocation4 + $0x110] sm:$0xff]
      %v2218 = vld [vmem:[#allocation4 + $0x118] sm:$0xff]
      %v2219 = vpack.c.bf16 %v2184, %v2183
      %v2220 = vpack.c.bf16 %v2186, %v2185
      %v2221 = vpack.c.bf16 %v2188, %v2187
      %v2222 = vpack.c.bf16 %v2190, %v2189
      %v2223 = vpack.c.bf16 %v2192, %v2191
      %v2224 = vpack.c.bf16 %v2194, %v2193
      %v2225 = vpack.c.bf16 %v2196, %v2195
      %v2226 = vpack.c.bf16 %v2198, %v2197
      %v2227 = vpack.c.bf16 %v2200, %v2199
      %v2228 = vpack.c.bf16 %v2202, %v2201
      %v2229 = vpack.c.bf16 %v2204, %v2203
      %v2230 = vpack.c.bf16 %v2206, %v2205
      %v2231 = vpack.c.bf16 %v2208, %v2207
      %v2232 = vpack.c.bf16 %v2210, %v2209
      %v2233 = vpack.c.bf16 %v2212, %v2211
      %v2234 = vpack.c.bf16 %v2214, %v2213
      %v2235 = vpack.c.bf16 %v2216, %v2215
      %v2236 = vpack.c.bf16 %v2218, %v2217
      %v2237 = vld [vmem:[%s1] sm:$0xf]
      %v2238 = vld [vmem:[%s1 + $0x4] sm:$0xf]
      %v2239 = vld [vmem:[%s1 + $0x8] sm:$0xf]
      %v2240 = vld [vmem:[%s1 + $0xc] sm:$0xf]
      %v2241 = vld [vmem:[%s1 + $0x10] sm:$0xf]
      %v2242 = vld [vmem:[%s1 + $0x14] sm:$0xf]
      %v2243 = vld [vmem:[%s1 + $0x18] sm:$0xf]
      %v2244 = vld [vmem:[%s1 + $0x1c] sm:$0xf]
      %v2245 = vld [vmem:[%s1 + $0x20] sm:$0xf]
      %v2246 = vld [vmem:[%s2] sm:$0x1]
      %v2248 = vlaneseq
      %v2249 = vshrl.u32 %v2248, 7
      %v2250 = vsub.s32 0, %v2249
      %v2251 = vrot.slane %v2246, %v2250
      %v2262 = vunpack.c.l.b16 %v2237
      %v2263 = vunpack.c.l.b16 %v2238
      %v2264 = vunpack.c.l.b16 %v2239
      %v2265 = vunpack.c.l.b16 %v2240
      %v2266 = vunpack.c.l.b16 %v2241
      %v2267 = vunpack.c.l.b16 %v2242
      %v2268 = vunpack.c.l.b16 %v2243
      %v2269 = vunpack.c.l.b16 %v2244
      %v2270 = vunpack.c.l.b16 %v2245
      %v2271 = vpack.c.b16 %v2263, %v2262
      %v2272 = vpack.c.b16 %v2265, %v2264
      %v2273 = vpack.c.b16 %v2267, %v2266
      %v2274 = vpack.c.b16 %v2269, %v2268
      %v2275 = vpack.c.b16 %v2270, %v2270
      %vm2280 = vcmask 588800
      %v2282 = vsel %vm2280, %v2219, 0
      %v2285 = vsel %vm2280, %v2220, 0
      %v2288 = vsel %vm2280, %v2221, 0
      %v2291 = vsel %vm2280, %v2222, 0
      %v2294 = vsel %vm2280, %v2223, 0
      %v2297 = vsel %vm2280, %v2224, 0
      %v2300 = vsel %vm2280, %v2225, 0
      %v2303 = vsel %vm2280, %v2226, 0
      %v2306 = vsel %vm2280, %v2227, 0
      %v2309 = vsel %vm2280, %v2228, 0
      %v2312 = vsel %vm2280, %v2229, 0
      %v2315 = vsel %vm2280, %v2230, 0
      %v2318 = vsel %vm2280, %v2231, 0
      %v2321 = vsel %vm2280, %v2232, 0
      %v2324 = vsel %vm2280, %v2233, 0
      %v2327 = vsel %vm2280, %v2234, 0
      %v2330 = vsel %vm2280, %v2235, 0
      %v2333 = vsel %vm2280, %v2236, 0
      %vm2335 = vcmask 1043456
      %v2337 = vsel %vm2335, %v2275, 0
      %2339 = vmatprep.subr.bf16.mxu0 0
      %2340 = vmatpush1.bf16.msra.mxu0 %v2271
      %2341 = vmatprep.subr.bf16.mxu0 0
      %2342 = vmatpush1.bf16.msra.mxu0 %v2272
      %2343 = vmatprep.subr.bf16.mxu0 0
      %2344 = vmatpush1.bf16.msra.mxu0 %v2273
      %2345 = vmatprep.subr.bf16.mxu0 0
      %2346 = vmatpush1.bf16.msra.mxu0 %v2274
      %2347 = vmatprep.subr.bf16.mxu0 0
      %2348 = vmatpush1.bf16.msra.mxu0 %v2337
      %2349 = vmatprep.subr.bf16.mxu0 0
      %2350 = vmatpush1.bf16.msra.mxu0 0
      %2351 = vmatprep.subr.bf16.mxu0 0
      %2352 = vmatpush1.bf16.msra.mxu0 0
      %2353 = vmatprep.subr.bf16.mxu0 0
      %2354 = vmatpush1.bf16.msra.mxu0 0
      %2355 = vmatprep.subr.bf16.mxu0 0
      %2356 = vmatpush1.bf16.msra.mxu0 0
      %2357 = vmatprep.subr.bf16.mxu0 0
      %2358 = vmatpush1.bf16.msra.mxu0 0
      %2359 = vmatprep.subr.bf16.mxu0 0
      %2360 = vmatpush1.bf16.msra.mxu0 0
      %2361 = vmatprep.subr.bf16.mxu0 0
      %2362 = vmatpush1.bf16.msra.mxu0 0
      %2363 = vmatprep.subr.bf16.mxu0 0
      %2364 = vmatpush1.bf16.msra.mxu0 0
      %2365 = vmatprep.subr.bf16.mxu0 0
      %2366 = vmatpush1.bf16.msra.mxu0 0
      %2367 = vmatprep.subr.bf16.mxu0 0
      %2368 = vmatpush1.bf16.msra.mxu0 0
      %2369 = vmatprep.subr.bf16.mxu0 0
      %2370 = vmatpush1.bf16.msra.mxu0 0
      %2371 = vmatprep.mubr.bf16.mxu0 0
      %2372 = vmatmul.mubr.bf16.gmra.mrb[0].mxu0 %v2282
      %v2373 = vpop.f32.mrb[0].mxu0
      %v2374 = vadd.f32 %v2251, %v2373
      %v2375 = vpop.f32.mrb[0].mxu0
      %v2376 = vpop.f32.mrb[0].mxu0
      %v2377 = vadd.f32 %v2251, %v2376
      %v2378 = vpop.f32.mrb[0].mxu0
      %2379 = vmatprep.mubr.bf16.mxu0 0
      %2380 = vmatmul.mubr.bf16.gmra.mrb[0].mxu0 %v2285
      %v2381 = vpop.f32.mrb[0].mxu0
      %v2382 = vadd.f32 %v2251, %v2381
      %v2383 = vpop.f32.mrb[0].mxu0
      %v2384 = vpop.f32.mrb[0].mxu0
      %v2385 = vadd.f32 %v2251, %v2384
      %v2386 = vpop.f32.mrb[0].mxu0
      %2387 = vmatprep.mubr.bf16.mxu0 0
      %2388 = vmatmul.mubr.bf16.gmra.mrb[0].mxu0 %v2288
      %v2389 = vpop.f32.mrb[0].mxu0
      %v2390 = vadd.f32 %v2251, %v2389
      %v2391 = vpop.f32.mrb[0].mxu0
      %v2392 = vpop.f32.mrb[0].mxu0
      %v2393 = vadd.f32 %v2251, %v2392
      %v2394 = vpop.f32.mrb[0].mxu0
      %2395 = vmatprep.mubr.bf16.mxu0 0
      %2396 = vmatmul.mubr.bf16.gmra.mrb[0].mxu0 %v2291
      %v2397 = vpop.f32.mrb[0].mxu0
      %v2398 = vadd.f32 %v2251, %v2397
      %v2399 = vpop.f32.mrb[0].mxu0
      %v2400 = vpop.f32.mrb[0].mxu0
      %v2401 = vadd.f32 %v2251, %v2400
      %v2402 = vpop.f32.mrb[0].mxu0
      %2403 = vmatprep.mubr.bf16.mxu0 0
      %2404 = vmatmul.mubr.bf16.gmra.mrb[0].mxu0 %v2294
      %v2405 = vpop.f32.mrb[0].mxu0
      %v2406 = vadd.f32 %v2251, %v2405
      %v2407 = vpop.f32.mrb[0].mxu0
      %v2408 = vpop.f32.mrb[0].mxu0
      %v2409 = vadd.f32 %v2251, %v2408
      %v2410 = vpop.f32.mrb[0].mxu0
      %2411 = vmatprep.mubr.bf16.mxu0 0
      %2412 = vmatmul.mubr.bf16.gmra.mrb[0].mxu0 %v2297
      %v2413 = vpop.f32.mrb[0].mxu0
      %v2414 = vadd.f32 %v2251, %v2413
      %v2415 = vpop.f32.mrb[0].mxu0
      %v2416 = vpop.f32.mrb[0].mxu0
      %v2417 = vadd.f32 %v2251, %v2416
      %v2418 = vpop.f32.mrb[0].mxu0
      %2419 = vmatprep.mubr.bf16.mxu0 0
      %2420 = vmatmul.mubr.bf16.gmra.mrb[0].mxu0 %v2300
      %v2421 = vpop.f32.mrb[0].mxu0
      %v2422 = vadd.f32 %v2251, %v2421
      %v2423 = vpop.f32.mrb[0].mxu0
      %v2424 = vpop.f32.mrb[0].mxu0
      %v2425 = vadd.f32 %v2251, %v2424
      %v2426 = vpop.f32.mrb[0].mxu0
      %2427 = vmatprep.mubr.bf16.mxu0 0
      %2428 = vmatmul.mubr.bf16.gmra.mrb[0].mxu0 %v2303
      %v2429 = vpop.f32.mrb[0].mxu0
      %v2430 = vadd.f32 %v2251, %v2429
      %v2431 = vpop.f32.mrb[0].mxu0
      %v2432 = vpop.f32.mrb[0].mxu0
      %v2433 = vadd.f32 %v2251, %v2432
      %v2434 = vpop.f32.mrb[0].mxu0
      %2435 = vmatprep.mubr.bf16.mxu0 0
      %2436 = vmatmul.mubr.bf16.gmra.mrb[0].mxu0 %v2306
      %v2437 = vpop.f32.mrb[0].mxu0
      %v2438 = vadd.f32 %v2251, %v2437
      %v2439 = vpop.f32.mrb[0].mxu0
      %v2440 = vpop.f32.mrb[0].mxu0
      %v2441 = vadd.f32 %v2251, %v2440
      %v2442 = vpop.f32.mrb[0].mxu0
      %2443 = vmatprep.mubr.bf16.mxu0 0
      %2444 = vmatmul.mubr.bf16.gmra.mrb[0].mxu0 %v2309
      %v2445 = vpop.f32.mrb[0].mxu0
      %v2446 = vadd.f32 %v2251, %v2445
      %v2447 = vpop.f32.mrb[0].mxu0
      %v2448 = vpop.f32.mrb[0].mxu0
      %v2449 = vadd.f32 %v2251, %v2448
      %v2450 = vpop.f32.mrb[0].mxu0
      %2451 = vmatprep.mubr.bf16.mxu0 0
      %2452 = vmatmul.mubr.bf16.gmra.mrb[0].mxu0 %v2312
      %v2453 = vpop.f32.mrb[0].mxu0
      %v2454 = vadd.f32 %v2251, %v2453
      %v2455 = vpop.f32.mrb[0].mxu0
      %v2456 = vpop.f32.mrb[0].mxu0
      %v2457 = vadd.f32 %v2251, %v2456
      %v2458 = vpop.f32.mrb[0].mxu0
      %2459 = vmatprep.mubr.bf16.mxu0 0
      %2460 = vmatmul.mubr.bf16.gmra.mrb[0].mxu0 %v2315
      %v2461 = vpop.f32.mrb[0].mxu0
      %v2462 = vadd.f32 %v2251, %v2461
      %v2463 = vpop.f32.mrb[0].mxu0
      %v2464 = vpop.f32.mrb[0].mxu0
      %v2465 = vadd.f32 %v2251, %v2464
      %v2466 = vpop.f32.mrb[0].mxu0
      %2467 = vmatprep.mubr.bf16.mxu0 0
      %2468 = vmatmul.mubr.bf16.gmra.mrb[0].mxu0 %v2318
      %v2469 = vpop.f32.mrb[0].mxu0
      %v2470 = vadd.f32 %v2251, %v2469
      %v2471 = vpop.f32.mrb[0].mxu0
      %v2472 = vpop.f32.mrb[0].mxu0
      %v2473 = vadd.f32 %v2251, %v2472
      %v2474 = vpop.f32.mrb[0].mxu0
      %2475 = vmatprep.mubr.bf16.mxu0 0
      %2476 = vmatmul.mubr.bf16.gmra.mrb[0].mxu0 %v2321
      %v2477 = vpop.f32.mrb[0].mxu0
      %v2478 = vadd.f32 %v2251, %v2477
      %v2479 = vpop.f32.mrb[0].mxu0
      %v2480 = vpop.f32.mrb[0].mxu0
      %v2481 = vadd.f32 %v2251, %v2480
      %v2482 = vpop.f32.mrb[0].mxu0
      %2483 = vmatprep.mubr.bf16.mxu0 0
      %2484 = vmatmul.mubr.bf16.gmra.mrb[0].mxu0 %v2324
      %v2485 = vpop.f32.mrb[0].mxu0
      %v2486 = vadd.f32 %v2251, %v2485
      %v2487 = vpop.f32.mrb[0].mxu0
      %v2488 = vpop.f32.mrb[0].mxu0
      %v2489 = vadd.f32 %v2251, %v2488
      %v2490 = vpop.f32.mrb[0].mxu0
      %2491 = vmatprep.mubr.bf16.mxu0 0
      %2492 = vmatmul.mubr.bf16.gmra.mrb[0].mxu0 %v2327
      %v2493 = vpop.f32.mrb[0].mxu0
      %v2494 = vadd.f32 %v2251, %v2493
      %v2495 = vpop.f32.mrb[0].mxu0
      %v2496 = vpop.f32.mrb[0].mxu0
      %v2497 = vadd.f32 %v2251, %v2496
      %v2498 = vpop.f32.mrb[0].mxu0
      %2499 = vmatprep.mubr.bf16.mxu0 0
      %2500 = vmatmul.mubr.bf16.gmra.mrb[0].mxu0 %v2330
      %v2501 = vpop.f32.mrb[0].mxu0
      %v2502 = vadd.f32 %v2251, %v2501
      %v2503 = vpop.f32.mrb[0].mxu0
      %v2504 = vpop.f32.mrb[0].mxu0
      %v2505 = vadd.f32 %v2251, %v2504
      %v2506 = vpop.f32.mrb[0].mxu0
      %2507 = vmatprep.mubr.bf16.mxu0 0
      %2508 = vmatmul.mubr.bf16.gmra.mrb[0].mxu0 %v2333
      %v2509 = vpop.f32.mrb[0].mxu0
      %v2510 = vadd.f32 %v2251, %v2509
      %v2511 = vpop.f32.mrb[0].mxu0
      %v2512 = vpop.f32.mrb[0].mxu0
      %v2513 = vadd.f32 %v2251, %v2512
      %v2514 = vpop.f32.mrb[0].mxu0
      %2515 = vdwg.mxu0
      %v2516 = vmax.f32 %v2374, 0.0
      %v2517 = vmax.f32 %v2377, 0.0
      %v2518 = vmax.f32 %v2382, 0.0
      %v2519 = vmax.f32 %v2385, 0.0
      %v2520 = vmax.f32 %v2390, 0.0
      %v2521 = vmax.f32 %v2393, 0.0
      %v2522 = vmax.f32 %v2398, 0.0
      %v2523 = vmax.f32 %v2401, 0.0
      %v2524 = vmax.f32 %v2406, 0.0
      %v2525 = vmax.f32 %v2409, 0.0
      %v2526 = vmax.f32 %v2414, 0.0
      %v2527 = vmax.f32 %v2417, 0.0
      %v2528 = vmax.f32 %v2422, 0.0
      %v2529 = vmax.f32 %v2425, 0.0
      %v2530 = vmax.f32 %v2430, 0.0
      %v2531 = vmax.f32 %v2433, 0.0
      %v2532 = vmax.f32 %v2438, 0.0
      %v2533 = vmax.f32 %v2441, 0.0
      %v2534 = vmax.f32 %v2446, 0.0
      %v2535 = vmax.f32 %v2449, 0.0
      %v2536 = vmax.f32 %v2454, 0.0
      %v2537 = vmax.f32 %v2457, 0.0
      %v2538 = vmax.f32 %v2462, 0.0
      %v2539 = vmax.f32 %v2465, 0.0
      %v2540 = vmax.f32 %v2470, 0.0
      %v2541 = vmax.f32 %v2473, 0.0
      %v2542 = vmax.f32 %v2478, 0.0
      %v2543 = vmax.f32 %v2481, 0.0
      %v2544 = vmax.f32 %v2486, 0.0
      %v2545 = vmax.f32 %v2489, 0.0
      %v2546 = vmax.f32 %v2494, 0.0
      %v2547 = vmax.f32 %v2497, 0.0
      %v2548 = vmax.f32 %v2502, 0.0
      %v2549 = vmax.f32 %v2505, 0.0
      %v2550 = vmax.f32 %v2510, 0.0
      %v2551 = vmax.f32 %v2513, 0.0
      %v2552 = vlaneseq
      %v2553 = vshrl.u32 %v2552, 7
      %v2554 = vadd.s32 %v2553, 8
      %v2555 = vadd.s32 %v2553, 16
      %v2556 = vadd.s32 %v2553, 24
      %v2557 = vadd.s32 %v2553, 32
      %v2558 = vadd.s32 %v2553, 40
      %v2559 = vadd.s32 %v2553, 48
      %v2560 = vadd.s32 %v2553, 56
      %v2561 = vadd.s32 %v2553, 64
      %v2562 = vadd.s32 %v2553, 72
      %v2563 = vadd.s32 %v2553, 80
      %v2564 = vadd.s32 %v2553, 88
      %v2565 = vadd.s32 %v2553, 96
      %v2566 = vadd.s32 %v2553, 104
      %v2567 = vadd.s32 %v2553, 112
      %v2568 = vadd.s32 %v2553, 120
      %v2569 = vadd.s32 %v2553, 128
      %v2570 = vadd.s32 %v2553, 136
      %v2571 = vadd.s32 %v2553, 144
      %v2572 = vadd.s32 %v2553, 152
      %v2573 = vadd.s32 %v2553, 160
      %v2574 = vadd.s32 %v2553, 168
      %v2575 = vadd.s32 %v2553, 176
      %v2576 = vadd.s32 %v2553, 184
      %v2577 = vadd.s32 %v2553, 192
      %v2578 = vadd.s32 %v2553, 200
      %v2579 = vadd.s32 %v2553, 208
      %v2580 = vadd.s32 %v2553, 216
      %v2581 = vadd.s32 %v2553, 224
      %v2582 = vadd.s32 %v2553, 232
      %v2583 = vadd.s32 %v2553, 240
      %v2584 = vadd.s32 %v2553, 248
      %v2585 = vadd.s32 %v2553, 256
      %v2586 = vadd.s32 %v2553, 264
      %v2587 = vadd.s32 %v2553, 272
      %v2588 = vadd.s32 %v2553, 280
      %vm2589 = vcmp.lt.s32.totalorder %v2553, 0
      %v2590 = vsub.s32 0, %v2553
      %v2591 = vsel %vm2589, %v2590, %v2553
      %v2592 = vmul.u32.u64.compose %v2591, 3817748708
      %v2593 = vextract.low.u32 %v2592
      %v2594 = vextract.high.u32 %v2592
      %v2595 = vshrl.u32 %v2594, 4
      %v2596 = vmul.u32 %v2595, 18
      %v2597 = vsub.s32 %v2591, %v2596
      %v2598 = vsub.s32 0, %v2597
      %v2599 = vsel %vm2589, %v2598, %v2597
      %vm2600 = vcmp.lt.s32.totalorder %v2554, 0
      %v2601 = vsub.s32 0, %v2554
      %v2602 = vsel %vm2600, %v2601, %v2554
      %v2603 = vmul.u32.u64.compose %v2602, 3817748708
      %v2604 = vextract.low.u32 %v2603
      %v2605 = vextract.high.u32 %v2603
      %v2606 = vshrl.u32 %v2605, 4
      %v2607 = vmul.u32 %v2606, 18
      %v2608 = vsub.s32 %v2602, %v2607
      %v2609 = vsub.s32 0, %v2608
      %v2610 = vsel %vm2600, %v2609, %v2608
      %vm2611 = vcmp.lt.s32.totalorder %v2555, 0
      %v2612 = vsub.s32 0, %v2555
      %v2613 = vsel %vm2611, %v2612, %v2555
      %v2614 = vmul.u32.u64.compose %v2613, 3817748708
      %v2615 = vextract.low.u32 %v2614
      %v2616 = vextract.high.u32 %v2614
      %v2617 = vshrl.u32 %v2616, 4
      %v2618 = vmul.u32 %v2617, 18
      %v2619 = vsub.s32 %v2613, %v2618
      %v2620 = vsub.s32 0, %v2619
      %v2621 = vsel %vm2611, %v2620, %v2619
      %vm2622 = vcmp.lt.s32.totalorder %v2556, 0
      %v2623 = vsub.s32 0, %v2556
      %v2624 = vsel %vm2622, %v2623, %v2556
      %v2625 = vmul.u32.u64.compose %v2624, 3817748708
      %v2626 = vextract.low.u32 %v2625
      %v2627 = vextract.high.u32 %v2625
      %v2628 = vshrl.u32 %v2627, 4
      %v2629 = vmul.u32 %v2628, 18
      %v2630 = vsub.s32 %v2624, %v2629
      %v2631 = vsub.s32 0, %v2630
      %v2632 = vsel %vm2622, %v2631, %v2630
      %vm2633 = vcmp.lt.s32.totalorder %v2557, 0
      %v2634 = vsub.s32 0, %v2557
      %v2635 = vsel %vm2633, %v2634, %v2557
      %v2636 = vmul.u32.u64.compose %v2635, 3817748708
      %v2637 = vextract.low.u32 %v2636
      %v2638 = vextract.high.u32 %v2636
      %v2639 = vshrl.u32 %v2638, 4
      %v2640 = vmul.u32 %v2639, 18
      %v2641 = vsub.s32 %v2635, %v2640
      %v2642 = vsub.s32 0, %v2641
      %v2643 = vsel %vm2633, %v2642, %v2641
      %vm2644 = vcmp.lt.s32.totalorder %v2558, 0
      %v2645 = vsub.s32 0, %v2558
      %v2646 = vsel %vm2644, %v2645, %v2558
      %v2647 = vmul.u32.u64.compose %v2646, 3817748708
      %v2648 = vextract.low.u32 %v2647
      %v2649 = vextract.high.u32 %v2647
      %v2650 = vshrl.u32 %v2649, 4
      %v2651 = vmul.u32 %v2650, 18
      %v2652 = vsub.s32 %v2646, %v2651
      %v2653 = vsub.s32 0, %v2652
      %v2654 = vsel %vm2644, %v2653, %v2652
      %vm2655 = vcmp.lt.s32.totalorder %v2559, 0
      %v2656 = vsub.s32 0, %v2559
      %v2657 = vsel %vm2655, %v2656, %v2559
      %v2658 = vmul.u32.u64.compose %v2657, 3817748708
      %v2659 = vextract.low.u32 %v2658
      %v2660 = vextract.high.u32 %v2658
      %v2661 = vshrl.u32 %v2660, 4
      %v2662 = vmul.u32 %v2661, 18
      %v2663 = vsub.s32 %v2657, %v2662
      %v2664 = vsub.s32 0, %v2663
      %v2665 = vsel %vm2655, %v2664, %v2663
      %vm2666 = vcmp.lt.s32.totalorder %v2560, 0
      %v2667 = vsub.s32 0, %v2560
      %v2668 = vsel %vm2666, %v2667, %v2560
      %v2669 = vmul.u32.u64.compose %v2668, 3817748708
      %v2670 = vextract.low.u32 %v2669
      %v2671 = vextract.high.u32 %v2669
      %v2672 = vshrl.u32 %v2671, 4
      %v2673 = vmul.u32 %v2672, 18
      %v2674 = vsub.s32 %v2668, %v2673
      %v2675 = vsub.s32 0, %v2674
      %v2676 = vsel %vm2666, %v2675, %v2674
      %vm2677 = vcmp.lt.s32.totalorder %v2561, 0
      %v2678 = vsub.s32 0, %v2561
      %v2679 = vsel %vm2677, %v2678, %v2561
      %v2680 = vmul.u32.u64.compose %v2679, 3817748708
      %v2681 = vextract.low.u32 %v2680
      %v2682 = vextract.high.u32 %v2680
      %v2683 = vshrl.u32 %v2682, 4
      %v2684 = vmul.u32 %v2683, 18
      %v2685 = vsub.s32 %v2679, %v2684
      %v2686 = vsub.s32 0, %v2685
      %v2687 = vsel %vm2677, %v2686, %v2685
      %vm2688 = vcmp.lt.s32.totalorder %v2562, 0
      %v2689 = vsub.s32 0, %v2562
      %v2690 = vsel %vm2688, %v2689, %v2562
      %v2691 = vmul.u32.u64.compose %v2690, 3817748708
      %v2692 = vextract.low.u32 %v2691
      %v2693 = vextract.high.u32 %v2691
      %v2694 = vshrl.u32 %v2693, 4
      %v2695 = vmul.u32 %v2694, 18
      %v2696 = vsub.s32 %v2690, %v2695
      %v2697 = vsub.s32 0, %v2696
      %v2698 = vsel %vm2688, %v2697, %v2696
      %vm2699 = vcmp.lt.s32.totalorder %v2563, 0
      %v2700 = vsub.s32 0, %v2563
      %v2701 = vsel %vm2699, %v2700, %v2563
      %v2702 = vmul.u32.u64.compose %v2701, 3817748708
      %v2703 = vextract.low.u32 %v2702
      %v2704 = vextract.high.u32 %v2702
      %v2705 = vshrl.u32 %v2704, 4
      %v2706 = vmul.u32 %v2705, 18
      %v2707 = vsub.s32 %v2701, %v2706
      %v2708 = vsub.s32 0, %v2707
      %v2709 = vsel %vm2699, %v2708, %v2707
      %vm2710 = vcmp.lt.s32.totalorder %v2564, 0
      %v2711 = vsub.s32 0, %v2564
      %v2712 = vsel %vm2710, %v2711, %v2564
      %v2713 = vmul.u32.u64.compose %v2712, 3817748708
      %v2714 = vextract.low.u32 %v2713
      %v2715 = vextract.high.u32 %v2713
      %v2716 = vshrl.u32 %v2715, 4
      %v2717 = vmul.u32 %v2716, 18
      %v2718 = vsub.s32 %v2712, %v2717
      %v2719 = vsub.s32 0, %v2718
      %v2720 = vsel %vm2710, %v2719, %v2718
      %vm2721 = vcmp.lt.s32.totalorder %v2565, 0
      %v2722 = vsub.s32 0, %v2565
      %v2723 = vsel %vm2721, %v2722, %v2565
      %v2724 = vmul.u32.u64.compose %v2723, 3817748708
      %v2725 = vextract.low.u32 %v2724
      %v2726 = vextract.high.u32 %v2724
      %v2727 = vshrl.u32 %v2726, 4
      %v2728 = vmul.u32 %v2727, 18
      %v2729 = vsub.s32 %v2723, %v2728
      %v2730 = vsub.s32 0, %v2729
      %v2731 = vsel %vm2721, %v2730, %v2729
      %vm2732 = vcmp.lt.s32.totalorder %v2566, 0
      %v2733 = vsub.s32 0, %v2566
      %v2734 = vsel %vm2732, %v2733, %v2566
      %v2735 = vmul.u32.u64.compose %v2734, 3817748708
      %v2736 = vextract.low.u32 %v2735
      %v2737 = vextract.high.u32 %v2735
      %v2738 = vshrl.u32 %v2737, 4
      %v2739 = vmul.u32 %v2738, 18
      %v2740 = vsub.s32 %v2734, %v2739
      %v2741 = vsub.s32 0, %v2740
      %v2742 = vsel %vm2732, %v2741, %v2740
      %vm2743 = vcmp.lt.s32.totalorder %v2567, 0
      %v2744 = vsub.s32 0, %v2567
      %v2745 = vsel %vm2743, %v2744, %v2567
      %v2746 = vmul.u32.u64.compose %v2745, 3817748708
      %v2747 = vextract.low.u32 %v2746
      %v2748 = vextract.high.u32 %v2746
      %v2749 = vshrl.u32 %v2748, 4
      %v2750 = vmul.u32 %v2749, 18
      %v2751 = vsub.s32 %v2745, %v2750
      %v2752 = vsub.s32 0, %v2751
      %v2753 = vsel %vm2743, %v2752, %v2751
      %vm2754 = vcmp.lt.s32.totalorder %v2568, 0
      %v2755 = vsub.s32 0, %v2568
      %v2756 = vsel %vm2754, %v2755, %v2568
      %v2757 = vmul.u32.u64.compose %v2756, 3817748708
      %v2758 = vextract.low.u32 %v2757
      %v2759 = vextract.high.u32 %v2757
      %v2760 = vshrl.u32 %v2759, 4
      %v2761 = vmul.u32 %v2760, 18
      %v2762 = vsub.s32 %v2756, %v2761
      %v2763 = vsub.s32 0, %v2762
      %v2764 = vsel %vm2754, %v2763, %v2762
      %vm2765 = vcmp.lt.s32.totalorder %v2569, 0
      %v2766 = vsub.s32 0, %v2569
      %v2767 = vsel %vm2765, %v2766, %v2569
      %v2768 = vmul.u32.u64.compose %v2767, 3817748708
      %v2769 = vextract.low.u32 %v2768
      %v2770 = vextract.high.u32 %v2768
      %v2771 = vshrl.u32 %v2770, 4
      %v2772 = vmul.u32 %v2771, 18
      %v2773 = vsub.s32 %v2767, %v2772
      %v2774 = vsub.s32 0, %v2773
      %v2775 = vsel %vm2765, %v2774, %v2773
      %vm2776 = vcmp.lt.s32.totalorder %v2570, 0
      %v2777 = vsub.s32 0, %v2570
      %v2778 = vsel %vm2776, %v2777, %v2570
      %v2779 = vmul.u32.u64.compose %v2778, 3817748708
      %v2780 = vextract.low.u32 %v2779
      %v2781 = vextract.high.u32 %v2779
      %v2782 = vshrl.u32 %v2781, 4
      %v2783 = vmul.u32 %v2782, 18
      %v2784 = vsub.s32 %v2778, %v2783
      %v2785 = vsub.s32 0, %v2784
      %v2786 = vsel %vm2776, %v2785, %v2784
      %vm2787 = vcmp.lt.s32.totalorder %v2571, 0
      %v2788 = vsub.s32 0, %v2571
      %v2789 = vsel %vm2787, %v2788, %v2571
      %v2790 = vmul.u32.u64.compose %v2789, 3817748708
      %v2791 = vextract.low.u32 %v2790
      %v2792 = vextract.high.u32 %v2790
      %v2793 = vshrl.u32 %v2792, 4
      %v2794 = vmul.u32 %v2793, 18
      %v2795 = vsub.s32 %v2789, %v2794
      %v2796 = vsub.s32 0, %v2795
      %v2797 = vsel %vm2787, %v2796, %v2795
      %vm2798 = vcmp.lt.s32.totalorder %v2572, 0
      %v2799 = vsub.s32 0, %v2572
      %v2800 = vsel %vm2798, %v2799, %v2572
      %v2801 = vmul.u32.u64.compose %v2800, 3817748708
      %v2802 = vextract.low.u32 %v2801
      %v2803 = vextract.high.u32 %v2801
      %v2804 = vshrl.u32 %v2803, 4
      %v2805 = vmul.u32 %v2804, 18
      %v2806 = vsub.s32 %v2800, %v2805
      %v2807 = vsub.s32 0, %v2806
      %v2808 = vsel %vm2798, %v2807, %v2806
      %vm2809 = vcmp.lt.s32.totalorder %v2573, 0
      %v2810 = vsub.s32 0, %v2573
      %v2811 = vsel %vm2809, %v2810, %v2573
      %v2812 = vmul.u32.u64.compose %v2811, 3817748708
      %v2813 = vextract.low.u32 %v2812
      %v2814 = vextract.high.u32 %v2812
      %v2815 = vshrl.u32 %v2814, 4
      %v2816 = vmul.u32 %v2815, 18
      %v2817 = vsub.s32 %v2811, %v2816
      %v2818 = vsub.s32 0, %v2817
      %v2819 = vsel %vm2809, %v2818, %v2817
      %vm2820 = vcmp.lt.s32.totalorder %v2574, 0
      %v2821 = vsub.s32 0, %v2574
      %v2822 = vsel %vm2820, %v2821, %v2574
      %v2823 = vmul.u32.u64.compose %v2822, 3817748708
      %v2824 = vextract.low.u32 %v2823
      %v2825 = vextract.high.u32 %v2823
      %v2826 = vshrl.u32 %v2825, 4
      %v2827 = vmul.u32 %v2826, 18
      %v2828 = vsub.s32 %v2822, %v2827
      %v2829 = vsub.s32 0, %v2828
      %v2830 = vsel %vm2820, %v2829, %v2828
      %vm2831 = vcmp.lt.s32.totalorder %v2575, 0
      %v2832 = vsub.s32 0, %v2575
      %v2833 = vsel %vm2831, %v2832, %v2575
      %v2834 = vmul.u32.u64.compose %v2833, 3817748708
      %v2835 = vextract.low.u32 %v2834
      %v2836 = vextract.high.u32 %v2834
      %v2837 = vshrl.u32 %v2836, 4
      %v2838 = vmul.u32 %v2837, 18
      %v2839 = vsub.s32 %v2833, %v2838
      %v2840 = vsub.s32 0, %v2839
      %v2841 = vsel %vm2831, %v2840, %v2839
      %vm2842 = vcmp.lt.s32.totalorder %v2576, 0
      %v2843 = vsub.s32 0, %v2576
      %v2844 = vsel %vm2842, %v2843, %v2576
      %v2845 = vmul.u32.u64.compose %v2844, 3817748708
      %v2846 = vextract.low.u32 %v2845
      %v2847 = vextract.high.u32 %v2845
      %v2848 = vshrl.u32 %v2847, 4
      %v2849 = vmul.u32 %v2848, 18
      %v2850 = vsub.s32 %v2844, %v2849
      %v2851 = vsub.s32 0, %v2850
      %v2852 = vsel %vm2842, %v2851, %v2850
      %vm2853 = vcmp.lt.s32.totalorder %v2577, 0
      %v2854 = vsub.s32 0, %v2577
      %v2855 = vsel %vm2853, %v2854, %v2577
      %v2856 = vmul.u32.u64.compose %v2855, 3817748708
      %v2857 = vextract.low.u32 %v2856
      %v2858 = vextract.high.u32 %v2856
      %v2859 = vshrl.u32 %v2858, 4
      %v2860 = vmul.u32 %v2859, 18
      %v2861 = vsub.s32 %v2855, %v2860
      %v2862 = vsub.s32 0, %v2861
      %v2863 = vsel %vm2853, %v2862, %v2861
      %vm2864 = vcmp.lt.s32.totalorder %v2578, 0
      %v2865 = vsub.s32 0, %v2578
      %v2866 = vsel %vm2864, %v2865, %v2578
      %v2867 = vmul.u32.u64.compose %v2866, 3817748708
      %v2868 = vextract.low.u32 %v2867
      %v2869 = vextract.high.u32 %v2867
      %v2870 = vshrl.u32 %v2869, 4
      %v2871 = vmul.u32 %v2870, 18
      %v2872 = vsub.s32 %v2866, %v2871
      %v2873 = vsub.s32 0, %v2872
      %v2874 = vsel %vm2864, %v2873, %v2872
      %vm2875 = vcmp.lt.s32.totalorder %v2579, 0
      %v2876 = vsub.s32 0, %v2579
      %v2877 = vsel %vm2875, %v2876, %v2579
      %v2878 = vmul.u32.u64.compose %v2877, 3817748708
      %v2879 = vextract.low.u32 %v2878
      %v2880 = vextract.high.u32 %v2878
      %v2881 = vshrl.u32 %v2880, 4
      %v2882 = vmul.u32 %v2881, 18
      %v2883 = vsub.s32 %v2877, %v2882
      %v2884 = vsub.s32 0, %v2883
      %v2885 = vsel %vm2875, %v2884, %v2883
      %vm2886 = vcmp.lt.s32.totalorder %v2580, 0
      %v2887 = vsub.s32 0, %v2580
      %v2888 = vsel %vm2886, %v2887, %v2580
      %v2889 = vmul.u32.u64.compose %v2888, 3817748708
      %v2890 = vextract.low.u32 %v2889
      %v2891 = vextract.high.u32 %v2889
      %v2892 = vshrl.u32 %v2891, 4
      %v2893 = vmul.u32 %v2892, 18
      %v2894 = vsub.s32 %v2888, %v2893
      %v2895 = vsub.s32 0, %v2894
      %v2896 = vsel %vm2886, %v2895, %v2894
      %vm2897 = vcmp.lt.s32.totalorder %v2581, 0
      %v2898 = vsub.s32 0, %v2581
      %v2899 = vsel %vm2897, %v2898, %v2581
      %v2900 = vmul.u32.u64.compose %v2899, 3817748708
      %v2901 = vextract.low.u32 %v2900
      %v2902 = vextract.high.u32 %v2900
      %v2903 = vshrl.u32 %v2902, 4
      %v2904 = vmul.u32 %v2903, 18
      %v2905 = vsub.s32 %v2899, %v2904
      %v2906 = vsub.s32 0, %v2905
      %v2907 = vsel %vm2897, %v2906, %v2905
      %vm2908 = vcmp.lt.s32.totalorder %v2582, 0
      %v2909 = vsub.s32 0, %v2582
      %v2910 = vsel %vm2908, %v2909, %v2582
      %v2911 = vmul.u32.u64.compose %v2910, 3817748708
      %v2912 = vextract.low.u32 %v2911
      %v2913 = vextract.high.u32 %v2911
      %v2914 = vshrl.u32 %v2913, 4
      %v2915 = vmul.u32 %v2914, 18
      %v2916 = vsub.s32 %v2910, %v2915
      %v2917 = vsub.s32 0, %v2916
      %v2918 = vsel %vm2908, %v2917, %v2916
      %vm2919 = vcmp.lt.s32.totalorder %v2583, 0
      %v2920 = vsub.s32 0, %v2583
      %v2921 = vsel %vm2919, %v2920, %v2583
      %v2922 = vmul.u32.u64.compose %v2921, 3817748708
      %v2923 = vextract.low.u32 %v2922
      %v2924 = vextract.high.u32 %v2922
      %v2925 = vshrl.u32 %v2924, 4
      %v2926 = vmul.u32 %v2925, 18
      %v2927 = vsub.s32 %v2921, %v2926
      %v2928 = vsub.s32 0, %v2927
      %v2929 = vsel %vm2919, %v2928, %v2927
      %vm2930 = vcmp.lt.s32.totalorder %v2584, 0
      %v2931 = vsub.s32 0, %v2584
      %v2932 = vsel %vm2930, %v2931, %v2584
      %v2933 = vmul.u32.u64.compose %v2932, 3817748708
      %v2934 = vextract.low.u32 %v2933
      %v2935 = vextract.high.u32 %v2933
      %v2936 = vshrl.u32 %v2935, 4
      %v2937 = vmul.u32 %v2936, 18
      %v2938 = vsub.s32 %v2932, %v2937
      %v2939 = vsub.s32 0, %v2938
      %v2940 = vsel %vm2930, %v2939, %v2938
      %vm2941 = vcmp.lt.s32.totalorder %v2585, 0
      %v2942 = vsub.s32 0, %v2585
      %v2943 = vsel %vm2941, %v2942, %v2585
      %v2944 = vmul.u32.u64.compose %v2943, 3817748708
      %v2945 = vextract.low.u32 %v2944
      %v2946 = vextract.high.u32 %v2944
      %v2947 = vshrl.u32 %v2946, 4
      %v2948 = vmul.u32 %v2947, 18
      %v2949 = vsub.s32 %v2943, %v2948
      %v2950 = vsub.s32 0, %v2949
      %v2951 = vsel %vm2941, %v2950, %v2949
      %vm2952 = vcmp.lt.s32.totalorder %v2586, 0
      %v2953 = vsub.s32 0, %v2586
      %v2954 = vsel %vm2952, %v2953, %v2586
      %v2955 = vmul.u32.u64.compose %v2954, 3817748708
      %v2956 = vextract.low.u32 %v2955
      %v2957 = vextract.high.u32 %v2955
      %v2958 = vshrl.u32 %v2957, 4
      %v2959 = vmul.u32 %v2958, 18
      %v2960 = vsub.s32 %v2954, %v2959
      %v2961 = vsub.s32 0, %v2960
      %v2962 = vsel %vm2952, %v2961, %v2960
      %vm2963 = vcmp.lt.s32.totalorder %v2587, 0
      %v2964 = vsub.s32 0, %v2587
      %v2965 = vsel %vm2963, %v2964, %v2587
      %v2966 = vmul.u32.u64.compose %v2965, 3817748708
      %v2967 = vextract.low.u32 %v2966
      %v2968 = vextract.high.u32 %v2966
      %v2969 = vshrl.u32 %v2968, 4
      %v2970 = vmul.u32 %v2969, 18
      %v2971 = vsub.s32 %v2965, %v2970
      %v2972 = vsub.s32 0, %v2971
      %v2973 = vsel %vm2963, %v2972, %v2971
      %vm2974 = vcmp.lt.s32.totalorder %v2588, 0
      %v2975 = vsub.s32 0, %v2588
      %v2976 = vsel %vm2974, %v2975, %v2588
      %v2977 = vmul.u32.u64.compose %v2976, 3817748708
      %v2978 = vextract.low.u32 %v2977
      %v2979 = vextract.high.u32 %v2977
      %v2980 = vshrl.u32 %v2979, 4
      %v2981 = vmul.u32 %v2980, 18
      %v2982 = vsub.s32 %v2976, %v2981
      %v2983 = vsub.s32 0, %v2982
      %v2984 = vsel %vm2974, %v2983, %v2982
      %vm2985 = vcmp.ne.s32.totalorder %v2599, 0
      %vm2986 = vcmp.ne.s32.totalorder %v2610, 0
      %vm2987 = vcmp.ne.s32.totalorder %v2621, 0
      %vm2988 = vcmp.ne.s32.totalorder %v2632, 0
      %vm2989 = vcmp.ne.s32.totalorder %v2643, 0
      %vm2990 = vcmp.ne.s32.totalorder %v2654, 0
      %vm2991 = vcmp.ne.s32.totalorder %v2665, 0
      %vm2992 = vcmp.ne.s32.totalorder %v2676, 0
      %vm2993 = vcmp.ne.s32.totalorder %v2687, 0
      %vm2994 = vcmp.ne.s32.totalorder %v2698, 0
      %vm2995 = vcmp.ne.s32.totalorder %v2709, 0
      %vm2996 = vcmp.ne.s32.totalorder %v2720, 0
      %vm2997 = vcmp.ne.s32.totalorder %v2731, 0
      %vm2998 = vcmp.ne.s32.totalorder %v2742, 0
      %vm2999 = vcmp.ne.s32.totalorder %v2753, 0
      %vm3000 = vcmp.ne.s32.totalorder %v2764, 0
      %vm3001 = vcmp.ne.s32.totalorder %v2775, 0
      %vm3002 = vcmp.ne.s32.totalorder %v2786, 0
      %vm3003 = vcmp.ne.s32.totalorder %v2797, 0
      %vm3004 = vcmp.ne.s32.totalorder %v2808, 0
      %vm3005 = vcmp.ne.s32.totalorder %v2819, 0
      %vm3006 = vcmp.ne.s32.totalorder %v2830, 0
      %vm3007 = vcmp.ne.s32.totalorder %v2841, 0
      %vm3008 = vcmp.ne.s32.totalorder %v2852, 0
      %vm3009 = vcmp.ne.s32.totalorder %v2863, 0
      %vm3010 = vcmp.ne.s32.totalorder %v2874, 0
      %vm3011 = vcmp.ne.s32.totalorder %v2885, 0
      %vm3012 = vcmp.ne.s32.totalorder %v2896, 0
      %vm3013 = vcmp.ne.s32.totalorder %v2907, 0
      %vm3014 = vcmp.ne.s32.totalorder %v2918, 0
      %vm3015 = vcmp.ne.s32.totalorder %v2929, 0
      %vm3016 = vcmp.ne.s32.totalorder %v2940, 0
      %vm3017 = vcmp.ne.s32.totalorder %v2951, 0
      %vm3018 = vcmp.ne.s32.totalorder %v2962, 0
      %vm3019 = vcmp.ne.s32.totalorder %v2973, 0
      %vm3020 = vcmp.ne.s32.totalorder %v2984, 0
      %vm3021 = vcmp.lt.s32.totalorder %v2599, 0
      %vm3022 = vcmp.lt.s32.totalorder %v2610, 0
      %vm3023 = vcmp.lt.s32.totalorder %v2621, 0
      %vm3024 = vcmp.lt.s32.totalorder %v2632, 0
      %vm3025 = vcmp.lt.s32.totalorder %v2643, 0
      %vm3026 = vcmp.lt.s32.totalorder %v2654, 0
      %vm3027 = vcmp.lt.s32.totalorder %v2665, 0
      %vm3028 = vcmp.lt.s32.totalorder %v2676, 0
      %vm3029 = vcmp.lt.s32.totalorder %v2687, 0
      %vm3030 = vcmp.lt.s32.totalorder %v2698, 0
      %vm3031 = vcmp.lt.s32.totalorder %v2709, 0
      %vm3032 = vcmp.lt.s32.totalorder %v2720, 0
      %vm3033 = vcmp.lt.s32.totalorder %v2731, 0
      %vm3034 = vcmp.lt.s32.totalorder %v2742, 0
      %vm3035 = vcmp.lt.s32.totalorder %v2753, 0
      %vm3036 = vcmp.lt.s32.totalorder %v2764, 0
      %vm3037 = vcmp.lt.s32.totalorder %v2775, 0
      %vm3038 = vcmp.lt.s32.totalorder %v2786, 0
      %vm3039 = vcmp.lt.s32.totalorder %v2797, 0
      %vm3040 = vcmp.lt.s32.totalorder %v2808, 0
      %vm3041 = vcmp.lt.s32.totalorder %v2819, 0
      %vm3042 = vcmp.lt.s32.totalorder %v2830, 0
      %vm3043 = vcmp.lt.s32.totalorder %v2841, 0
      %vm3044 = vcmp.lt.s32.totalorder %v2852, 0
      %vm3045 = vcmp.lt.s32.totalorder %v2863, 0
      %vm3046 = vcmp.lt.s32.totalorder %v2874, 0
      %vm3047 = vcmp.lt.s32.totalorder %v2885, 0
      %vm3048 = vcmp.lt.s32.totalorder %v2896, 0
      %vm3049 = vcmp.lt.s32.totalorder %v2907, 0
      %vm3050 = vcmp.lt.s32.totalorder %v2918, 0
      %vm3051 = vcmp.lt.s32.totalorder %v2929, 0
      %vm3052 = vcmp.lt.s32.totalorder %v2940, 0
      %vm3053 = vcmp.lt.s32.totalorder %v2951, 0
      %vm3054 = vcmp.lt.s32.totalorder %v2962, 0
      %vm3055 = vcmp.lt.s32.totalorder %v2973, 0
      %vm3056 = vcmp.lt.s32.totalorder %v2984, 0
      %vm3057 = vmand %vm3021, %vm2985
      %vm3058 = vmand %vm3022, %vm2986
      %vm3059 = vmand %vm3023, %vm2987
      %vm3060 = vmand %vm3024, %vm2988
      %vm3061 = vmand %vm3025, %vm2989
      %vm3062 = vmand %vm3026, %vm2990
      %vm3063 = vmand %vm3027, %vm2991
      %vm3064 = vmand %vm3028, %vm2992
      %vm3065 = vmand %vm3029, %vm2993
      %vm3066 = vmand %vm3030, %vm2994
      %vm3067 = vmand %vm3031, %vm2995
      %vm3068 = vmand %vm3032, %vm2996
      %vm3069 = vmand %vm3033, %vm2997
      %vm3070 = vmand %vm3034, %vm2998
      %vm3071 = vmand %vm3035, %vm2999
      %vm3072 = vmand %vm3036, %vm3000
      %vm3073 = vmand %vm3037, %vm3001
      %vm3074 = vmand %vm3038, %vm3002
      %vm3075 = vmand %vm3039, %vm3003
      %vm3076 = vmand %vm3040, %vm3004
      %vm3077 = vmand %vm3041, %vm3005
      %vm3078 = vmand %vm3042, %vm3006
      %vm3079 = vmand %vm3043, %vm3007
      %vm3080 = vmand %vm3044, %vm3008
      %vm3081 = vmand %vm3045, %vm3009
      %vm3082 = vmand %vm3046, %vm3010
      %vm3083 = vmand %vm3047, %vm3011
      %vm3084 = vmand %vm3048, %vm3012
      %vm3085 = vmand %vm3049, %vm3013
      %vm3086 = vmand %vm3050, %vm3014
      %vm3087 = vmand %vm3051, %vm3015
      %vm3088 = vmand %vm3052, %vm3016
      %vm3089 = vmand %vm3053, %vm3017
      %vm3090 = vmand %vm3054, %vm3018
      %vm3091 = vmand %vm3055, %vm3019
      %vm3092 = vmand %vm3056, %vm3020
      %v3093 = vadd.s32 %v2599, 18
      %v3094 = vadd.s32 %v2610, 18
      %v3095 = vadd.s32 %v2621, 18
      %v3096 = vadd.s32 %v2632, 18
      %v3097 = vadd.s32 %v2643, 18
      %v3098 = vadd.s32 %v2654, 18
      %v3099 = vadd.s32 %v2665, 18
      %v3100 = vadd.s32 %v2676, 18
      %v3101 = vadd.s32 %v2687, 18
      %v3102 = vadd.s32 %v2698, 18
      %v3103 = vadd.s32 %v2709, 18
      %v3104 = vadd.s32 %v2720, 18
      %v3105 = vadd.s32 %v2731, 18
      %v3106 = vadd.s32 %v2742, 18
      %v3107 = vadd.s32 %v2753, 18
      %v3108 = vadd.s32 %v2764, 18
      %v3109 = vadd.s32 %v2775, 18
      %v3110 = vadd.s32 %v2786, 18
      %v3111 = vadd.s32 %v2797, 18
      %v3112 = vadd.s32 %v2808, 18
      %v3113 = vadd.s32 %v2819, 18
      %v3114 = vadd.s32 %v2830, 18
      %v3115 = vadd.s32 %v2841, 18
      %v3116 = vadd.s32 %v2852, 18
      %v3117 = vadd.s32 %v2863, 18
      %v3118 = vadd.s32 %v2874, 18
      %v3119 = vadd.s32 %v2885, 18
      %v3120 = vadd.s32 %v2896, 18
      %v3121 = vadd.s32 %v2907, 18
      %v3122 = vadd.s32 %v2918, 18
      %v3123 = vadd.s32 %v2929, 18
      %v3124 = vadd.s32 %v2940, 18
      %v3125 = vadd.s32 %v2951, 18
      %v3126 = vadd.s32 %v2962, 18
      %v3127 = vadd.s32 %v2973, 18
      %v3128 = vadd.s32 %v2984, 18
      %v3129 = vsel %vm3057, %v3093, %v2599
      %v3130 = vsel %vm3058, %v3094, %v2610
      %v3131 = vsel %vm3059, %v3095, %v2621
      %v3132 = vsel %vm3060, %v3096, %v2632
      %v3133 = vsel %vm3061, %v3097, %v2643
      %v3134 = vsel %vm3062, %v3098, %v2654
      %v3135 = vsel %vm3063, %v3099, %v2665
      %v3136 = vsel %vm3064, %v3100, %v2676
      %v3137 = vsel %vm3065, %v3101, %v2687
      %v3138 = vsel %vm3066, %v3102, %v2698
      %v3139 = vsel %vm3067, %v3103, %v2709
      %v3140 = vsel %vm3068, %v3104, %v2720
      %v3141 = vsel %vm3069, %v3105, %v2731
      %v3142 = vsel %vm3070, %v3106, %v2742
      %v3143 = vsel %vm3071, %v3107, %v2753
      %v3144 = vsel %vm3072, %v3108, %v2764
      %v3145 = vsel %vm3073, %v3109, %v2775
      %v3146 = vsel %vm3074, %v3110, %v2786
      %v3147 = vsel %vm3075, %v3111, %v2797
      %v3148 = vsel %vm3076, %v3112, %v2808
      %v3149 = vsel %vm3077, %v3113, %v2819
      %v3150 = vsel %vm3078, %v3114, %v2830
      %v3151 = vsel %vm3079, %v3115, %v2841
      %v3152 = vsel %vm3080, %v3116, %v2852
      %v3153 = vsel %vm3081, %v3117, %v2863
      %v3154 = vsel %vm3082, %v3118, %v2874
      %v3155 = vsel %vm3083, %v3119, %v2885
      %v3156 = vsel %vm3084, %v3120, %v2896
      %v3157 = vsel %vm3085, %v3121, %v2907
      %v3158 = vsel %vm3086, %v3122, %v2918
      %v3159 = vsel %vm3087, %v3123, %v2929
      %v3160 = vsel %vm3088, %v3124, %v2940
      %v3161 = vsel %vm3089, %v3125, %v2951
      %v3162 = vsel %vm3090, %v3126, %v2962
      %v3163 = vsel %vm3091, %v3127, %v2973
      %v3164 = vsel %vm3092, %v3128, %v2984
      %vm3165 = vcmp.lt.s32.totalorder %v3129, 16
      %vm3166 = vcmp.lt.s32.totalorder %v3130, 16
      %vm3167 = vcmp.lt.s32.totalorder %v3131, 16
      %vm3168 = vcmp.lt.s32.totalorder %v3132, 16
      %vm3169 = vcmp.lt.s32.totalorder %v3133, 16
      %vm3170 = vcmp.lt.s32.totalorder %v3134, 16
      %vm3171 = vcmp.lt.s32.totalorder %v3135, 16
      %vm3172 = vcmp.lt.s32.totalorder %v3136, 16
      %vm3173 = vcmp.lt.s32.totalorder %v3137, 16
      %vm3174 = vcmp.lt.s32.totalorder %v3138, 16
      %vm3175 = vcmp.lt.s32.totalorder %v3139, 16
      %vm3176 = vcmp.lt.s32.totalorder %v3140, 16
      %vm3177 = vcmp.lt.s32.totalorder %v3141, 16
      %vm3178 = vcmp.lt.s32.totalorder %v3142, 16
      %vm3179 = vcmp.lt.s32.totalorder %v3143, 16
      %vm3180 = vcmp.lt.s32.totalorder %v3144, 16
      %vm3181 = vcmp.lt.s32.totalorder %v3145, 16
      %vm3182 = vcmp.lt.s32.totalorder %v3146, 16
      %vm3183 = vcmp.lt.s32.totalorder %v3147, 16
      %vm3184 = vcmp.lt.s32.totalorder %v3148, 16
      %vm3185 = vcmp.lt.s32.totalorder %v3149, 16
      %vm3186 = vcmp.lt.s32.totalorder %v3150, 16
      %vm3187 = vcmp.lt.s32.totalorder %v3151, 16
      %vm3188 = vcmp.lt.s32.totalorder %v3152, 16
      %vm3189 = vcmp.lt.s32.totalorder %v3153, 16
      %vm3190 = vcmp.lt.s32.totalorder %v3154, 16
      %vm3191 = vcmp.lt.s32.totalorder %v3155, 16
      %vm3192 = vcmp.lt.s32.totalorder %v3156, 16
      %vm3193 = vcmp.lt.s32.totalorder %v3157, 16
      %vm3194 = vcmp.lt.s32.totalorder %v3158, 16
      %vm3195 = vcmp.lt.s32.totalorder %v3159, 16
      %vm3196 = vcmp.lt.s32.totalorder %v3160, 16
      %vm3197 = vcmp.lt.s32.totalorder %v3161, 16
      %vm3198 = vcmp.lt.s32.totalorder %v3162, 16
      %vm3199 = vcmp.lt.s32.totalorder %v3163, 16
      %vm3200 = vcmp.lt.s32.totalorder %v3164, 16
      %v3201 = vsel %vm3165, 1, 0
      %v3202 = vsel %vm3166, 1, 0
      %v3203 = vsel %vm3167, 1, 0
      %v3204 = vsel %vm3168, 1, 0
      %v3205 = vsel %vm3169, 1, 0
      %v3206 = vsel %vm3170, 1, 0
      %v3207 = vsel %vm3171, 1, 0
      %v3208 = vsel %vm3172, 1, 0
      %v3209 = vsel %vm3173, 1, 0
      %v3210 = vsel %vm3174, 1, 0
      %v3211 = vsel %vm3175, 1, 0
      %v3212 = vsel %vm3176, 1, 0
      %v3213 = vsel %vm3177, 1, 0
      %v3214 = vsel %vm3178, 1, 0
      %v3215 = vsel %vm3179, 1, 0
      %v3216 = vsel %vm3180, 1, 0
      %v3217 = vsel %vm3181, 1, 0
      %v3218 = vsel %vm3182, 1, 0
      %v3219 = vsel %vm3183, 1, 0
      %v3220 = vsel %vm3184, 1, 0
      %v3221 = vsel %vm3185, 1, 0
      %v3222 = vsel %vm3186, 1, 0
      %v3223 = vsel %vm3187, 1, 0
      %v3224 = vsel %vm3188, 1, 0
      %v3225 = vsel %vm3189, 1, 0
      %v3226 = vsel %vm3190, 1, 0
      %v3227 = vsel %vm3191, 1, 0
      %v3228 = vsel %vm3192, 1, 0
      %v3229 = vsel %vm3193, 1, 0
      %v3230 = vsel %vm3194, 1, 0
      %v3231 = vsel %vm3195, 1, 0
      %v3232 = vsel %vm3196, 1, 0
      %v3233 = vsel %vm3197, 1, 0
      %v3234 = vsel %vm3198, 1, 0
      %v3235 = vsel %vm3199, 1, 0
      %v3236 = vsel %vm3200, 1, 0
      %vm3237 = vcmp.eq.s32.totalorder %v3201, 1
      %vm3238 = vcmp.eq.s32.totalorder %v3202, 1
      %vm3239 = vcmp.eq.s32.totalorder %v3203, 1
      %vm3240 = vcmp.eq.s32.totalorder %v3204, 1
      %vm3241 = vcmp.eq.s32.totalorder %v3205, 1
      %vm3242 = vcmp.eq.s32.totalorder %v3206, 1
      %vm3243 = vcmp.eq.s32.totalorder %v3207, 1
      %vm3244 = vcmp.eq.s32.totalorder %v3208, 1
      %vm3245 = vcmp.eq.s32.totalorder %v3209, 1
      %vm3246 = vcmp.eq.s32.totalorder %v3210, 1
      %vm3247 = vcmp.eq.s32.totalorder %v3211, 1
      %vm3248 = vcmp.eq.s32.totalorder %v3212, 1
      %vm3249 = vcmp.eq.s32.totalorder %v3213, 1
      %vm3250 = vcmp.eq.s32.totalorder %v3214, 1
      %vm3251 = vcmp.eq.s32.totalorder %v3215, 1
      %vm3252 = vcmp.eq.s32.totalorder %v3216, 1
      %vm3253 = vcmp.eq.s32.totalorder %v3217, 1
      %vm3254 = vcmp.eq.s32.totalorder %v3218, 1
      %vm3255 = vcmp.eq.s32.totalorder %v3219, 1
      %vm3256 = vcmp.eq.s32.totalorder %v3220, 1
      %vm3257 = vcmp.eq.s32.totalorder %v3221, 1
      %vm3258 = vcmp.eq.s32.totalorder %v3222, 1
      %vm3259 = vcmp.eq.s32.totalorder %v3223, 1
      %vm3260 = vcmp.eq.s32.totalorder %v3224, 1
      %vm3261 = vcmp.eq.s32.totalorder %v3225, 1
      %vm3262 = vcmp.eq.s32.totalorder %v3226, 1
      %vm3263 = vcmp.eq.s32.totalorder %v3227, 1
      %vm3264 = vcmp.eq.s32.totalorder %v3228, 1
      %vm3265 = vcmp.eq.s32.totalorder %v3229, 1
      %vm3266 = vcmp.eq.s32.totalorder %v3230, 1
      %vm3267 = vcmp.eq.s32.totalorder %v3231, 1
      %vm3268 = vcmp.eq.s32.totalorder %v3232, 1
      %vm3269 = vcmp.eq.s32.totalorder %v3233, 1
      %vm3270 = vcmp.eq.s32.totalorder %v3234, 1
      %vm3271 = vcmp.eq.s32.totalorder %v3235, 1
      %vm3272 = vcmp.eq.s32.totalorder %v3236, 1
      %v3273 = vsel %vm3237, %v2516, 0.0
      %v3274 = vsel %vm3238, %v2517, 0.0
      %v3275 = vsel %vm3239, %v2518, 0.0
      %v3276 = vsel %vm3240, %v2519, 0.0
      %v3277 = vsel %vm3241, %v2520, 0.0
      %v3278 = vsel %vm3242, %v2521, 0.0
      %v3279 = vsel %vm3243, %v2522, 0.0
      %v3280 = vsel %vm3244, %v2523, 0.0
      %v3281 = vsel %vm3245, %v2524, 0.0
      %v3282 = vsel %vm3246, %v2525, 0.0
      %v3283 = vsel %vm3247, %v2526, 0.0
      %v3284 = vsel %vm3248, %v2527, 0.0
      %v3285 = vsel %vm3249, %v2528, 0.0
      %v3286 = vsel %vm3250, %v2529, 0.0
      %v3287 = vsel %vm3251, %v2530, 0.0
      %v3288 = vsel %vm3252, %v2531, 0.0
      %v3289 = vsel %vm3253, %v2532, 0.0
      %v3290 = vsel %vm3254, %v2533, 0.0
      %v3291 = vsel %vm3255, %v2534, 0.0
      %v3292 = vsel %vm3256, %v2535, 0.0
      %v3293 = vsel %vm3257, %v2536, 0.0
      %v3294 = vsel %vm3258, %v2537, 0.0
      %v3295 = vsel %vm3259, %v2538, 0.0
      %v3296 = vsel %vm3260, %v2539, 0.0
      %v3297 = vsel %vm3261, %v2540, 0.0
      %v3298 = vsel %vm3262, %v2541, 0.0
      %v3299 = vsel %vm3263, %v2542, 0.0
      %v3300 = vsel %vm3264, %v2543, 0.0
      %v3301 = vsel %vm3265, %v2544, 0.0
      %v3302 = vsel %vm3266, %v2545, 0.0
      %v3303 = vsel %vm3267, %v2546, 0.0
      %v3304 = vsel %vm3268, %v2547, 0.0
      %v3305 = vsel %vm3269, %v2548, 0.0
      %v3306 = vsel %vm3270, %v2549, 0.0
      %v3307 = vsel %vm3271, %v2550, 0.0
      %v3308 = vsel %vm3272, %v2551, 0.0
      %vm3309 = vcmask 130048
      %3310 = vst.msk [vmem:[#allocation2] sm:$0xff] %vm3309, 0.0
      %3311 = vst.msk [vmem:[#allocation2 + $0x8] sm:$0xff] %vm3309, 0.0
      %3312 = vst.msk [vmem:[#allocation2 + $0x10] sm:$0xff] %vm3309, 0.0
      %3313 = vst.msk [vmem:[#allocation2 + $0x18] sm:$0xff] %vm3309, 0.0
      %3314 = vst.msk [vmem:[#allocation2 + $0x20] sm:$0xff] %vm3309, 0.0
      %3315 = vst.msk [vmem:[#allocation2 + $0x28] sm:$0xff] %vm3309, 0.0
      %3316 = vst.msk [vmem:[#allocation2 + $0x30] sm:$0xff] %vm3309, 0.0
      %3317 = vst.msk [vmem:[#allocation2 + $0x38] sm:$0xff] %vm3309, 0.0
      %3318 = vst.msk [vmem:[#allocation2 + $0x40] sm:$0xff] %vm3309, 0.0
      %3319 = vst.msk [vmem:[#allocation2 + $0x48] sm:$0xff] %vm3309, 0.0
      %3320 = vst.msk [vmem:[#allocation2 + $0x50] sm:$0xff] %vm3309, 0.0
      %3321 = vst.msk [vmem:[#allocation2 + $0x58] sm:$0xff] %vm3309, 0.0
      %3322 = vst.msk [vmem:[#allocation2 + $0x60] sm:$0xff] %vm3309, 0.0
      %3323 = vst.msk [vmem:[#allocation2 + $0x68] sm:$0xff] %vm3309, 0.0
      %3324 = vst.msk [vmem:[#allocation2 + $0x70] sm:$0xff] %vm3309, 0.0
      %3325 = vst.msk [vmem:[#allocation2 + $0x78] sm:$0xff] %vm3309, 0.0
      %3326 = vst.msk [vmem:[#allocation2 + $0x80] sm:$0xff] %vm3309, 0.0
      %3327 = vst.msk [vmem:[#allocation2 + $0x88] sm:$0xff] %vm3309, 0.0
      %3328 = vst.msk [vmem:[#allocation2 + $0x90] sm:$0xff] %vm3309, 0.0
      %3329 = vst.msk [vmem:[#allocation2 + $0x98] sm:$0xff] %vm3309, 0.0
      %3330 = vst.msk [vmem:[#allocation2 + $0xa0] sm:$0xff] %vm3309, 0.0
      %3331 = vst.msk [vmem:[#allocation2 + $0xa8] sm:$0xff] %vm3309, 0.0
      %3332 = vst.msk [vmem:[#allocation2 + $0xb0] sm:$0xff] %vm3309, 0.0
      %3333 = vst.msk [vmem:[#allocation2 + $0xb8] sm:$0xff] %vm3309, 0.0
      %3334 = vst.msk [vmem:[#allocation2 + $0xc0] sm:$0xff] %vm3309, 0.0
      %3335 = vst.msk [vmem:[#allocation2 + $0xc8] sm:$0xff] %vm3309, 0.0
      %3336 = vst.msk [vmem:[#allocation2 + $0xd0] sm:$0xff] %vm3309, 0.0
      %3337 = vst.msk [vmem:[#allocation2 + $0xd8] sm:$0xff] %vm3309, 0.0
      %3338 = vst.msk [vmem:[#allocation2 + $0xe0] sm:$0xff] %vm3309, 0.0
      %3339 = vst.msk [vmem:[#allocation2 + $0xe8] sm:$0xff] %vm3309, 0.0
      %3340 = vst.msk [vmem:[#allocation2 + $0xf0] sm:$0xff] %vm3309, 0.0
      %3341 = vst.msk [vmem:[#allocation2 + $0xf8] sm:$0xff] %vm3309, 0.0
      %3342 = vst.msk [vmem:[#allocation2 + $0x100] sm:$0xff] %vm3309, 0.0
      %3343 = vst.msk [vmem:[#allocation2 + $0x108] sm:$0xff] %vm3309, 0.0
      %3344 = vst.msk [vmem:[#allocation2 + $0x110] sm:$0xff] %vm3309, 0.0
      %3345 = vst.msk [vmem:[#allocation2 + $0x118] sm:$0xff] %vm3309, 0.0
      %3346 = vst.msk [vmem:[#allocation2 + $0x120] sm:$0xff] %vm3309, 0.0
      %3347 = vst.msk [vmem:[#allocation2 + $0x128] sm:$0xff] %vm3309, 0.0
      %3348 = vst.msk [vmem:[#allocation2 + $0x130] sm:$0xff] %vm3309, 0.0
      %3349 = vst.msk [vmem:[#allocation2 + $0x138] sm:$0xff] %vm3309, 0.0
      %3350 = vst.msk [vmem:[#allocation2 + $0x140] sm:$0xff] %vm3309, 0.0
      %3351 = vst.msk [vmem:[#allocation2 + $0x148] sm:$0xff] %vm3309, 0.0
      %vm3352 = vcmask 128000
      %3353 = vst.msk [vmem:[#allocation2 + $0x150] sm:$0x3f] %vm3352, 0.0
      %3354 = vst.msk [vmem:[#allocation2 + $0x13] sm:$0xff] %vm3309, %v3273
      %3355 = vst.msk [vmem:[#allocation2 + $0x1b] sm:$0xff] %vm3309, %v3274
      %3356 = vst.msk [vmem:[#allocation2 + $0x23] sm:$0xff] %vm3309, %v3275
      %3357 = vst.msk [vmem:[#allocation2 + $0x2b] sm:$0xff] %vm3309, %v3276
      %3358 = vst.msk [vmem:[#allocation2 + $0x33] sm:$0xff] %vm3309, %v3277
      %3359 = vst.msk [vmem:[#allocation2 + $0x3b] sm:$0xff] %vm3309, %v3278
      %3360 = vst.msk [vmem:[#allocation2 + $0x43] sm:$0xff] %vm3309, %v3279
      %3361 = vst.msk [vmem:[#allocation2 + $0x4b] sm:$0xff] %vm3309, %v3280
      %3362 = vst.msk [vmem:[#allocation2 + $0x53] sm:$0xff] %vm3309, %v3281
      %3363 = vst.msk [vmem:[#allocation2 + $0x5b] sm:$0xff] %vm3309, %v3282
      %3364 = vst.msk [vmem:[#allocation2 + $0x63] sm:$0xff] %vm3309, %v3283
      %3365 = vst.msk [vmem:[#allocation2 + $0x6b] sm:$0xff] %vm3309, %v3284
      %3366 = vst.msk [vmem:[#allocation2 + $0x73] sm:$0xff] %vm3309, %v3285
      %3367 = vst.msk [vmem:[#allocation2 + $0x7b] sm:$0xff] %vm3309, %v3286
      %3368 = vst.msk [vmem:[#allocation2 + $0x83] sm:$0xff] %vm3309, %v3287
      %3369 = vst.msk [vmem:[#allocation2 + $0x8b] sm:$0xff] %vm3309, %v3288
      %3370 = vst.msk [vmem:[#allocation2 + $0x93] sm:$0xff] %vm3309, %v3289
      %3371 = vst.msk [vmem:[#allocation2 + $0x9b] sm:$0xff] %vm3309, %v3290
      %3372 = vst.msk [vmem:[#allocation2 + $0xa3] sm:$0xff] %vm3309, %v3291
      %3373 = vst.msk [vmem:[#allocation2 + $0xab] sm:$0xff] %vm3309, %v3292
      %3374 = vst.msk [vmem:[#allocation2 + $0xb3] sm:$0xff] %vm3309, %v3293
      %3375 = vst.msk [vmem:[#allocation2 + $0xbb] sm:$0xff] %vm3309, %v3294
      %3376 = vst.msk [vmem:[#allocation2 + $0xc3] sm:$0xff] %vm3309, %v3295
      %3377 = vst.msk [vmem:[#allocation2 + $0xcb] sm:$0xff] %vm3309, %v3296
      %3378 = vst.msk [vmem:[#allocation2 + $0xd3] sm:$0xff] %vm3309, %v3297
      %3379 = vst.msk [vmem:[#allocation2 + $0xdb] sm:$0xff] %vm3309, %v3298
      %3380 = vst.msk [vmem:[#allocation2 + $0xe3] sm:$0xff] %vm3309, %v3299
      %3381 = vst.msk [vmem:[#allocation2 + $0xeb] sm:$0xff] %vm3309, %v3300
      %3382 = vst.msk [vmem:[#allocation2 + $0xf3] sm:$0xff] %vm3309, %v3301
      %3383 = vst.msk [vmem:[#allocation2 + $0xfb] sm:$0xff] %vm3309, %v3302
      %3384 = vst.msk [vmem:[#allocation2 + $0x103] sm:$0xff] %vm3309, %v3303
      %3385 = vst.msk [vmem:[#allocation2 + $0x10b] sm:$0xff] %vm3309, %v3304
      %3386 = vst.msk [vmem:[#allocation2 + $0x113] sm:$0xff] %vm3309, %v3305
      %3387 = vst.msk [vmem:[#allocation2 + $0x11b] sm:$0xff] %vm3309, %v3306
      %3388 = vst.msk [vmem:[#allocation2 + $0x123] sm:$0xff] %vm3309, %v3307
      %3389 = vst.msk [vmem:[#allocation2 + $0x12b] sm:$0xff] %vm3309, %v3308
      %v3390 = vld [vmem:[#allocation2] ss:$2 sm:$0xff]
      %s3391 = scalar_lea.vmem [#allocation2], 16
      %v3392 = vld [vmem:[%s3391] ss:$2 sm:$0xff]
      %s3393 = scalar_lea.vmem [#allocation2], 32
      %v3394 = vld [vmem:[%s3393] ss:$2 sm:$0xff]
      %s3395 = scalar_lea.vmem [#allocation2], 48
      %v3396 = vld [vmem:[%s3395] ss:$2 sm:$0xff]
      %s3397 = scalar_lea.vmem [#allocation2], 64
      %v3398 = vld [vmem:[%s3397] ss:$2 sm:$0xff]
      %s3399 = scalar_lea.vmem [#allocation2], 80
      %v3400 = vld [vmem:[%s3399] ss:$2 sm:$0xff]
      %s3401 = scalar_lea.vmem [#allocation2], 96
      %v3402 = vld [vmem:[%s3401] ss:$2 sm:$0xff]
      %s3403 = scalar_lea.vmem [#allocation2], 112
      %v3404 = vld [vmem:[%s3403] ss:$2 sm:$0xff]
      %s3405 = scalar_lea.vmem [#allocation2], 128
      %v3406 = vld [vmem:[%s3405] ss:$2 sm:$0xff]
      %s3407 = scalar_lea.vmem [#allocation2], 144
      %v3408 = vld [vmem:[%s3407] ss:$2 sm:$0xff]
      %s3409 = scalar_lea.vmem [#allocation2], 160
      %v3410 = vld [vmem:[%s3409] ss:$2 sm:$0xff]
      %s3411 = scalar_lea.vmem [#allocation2], 176
      %v3412 = vld [vmem:[%s3411] ss:$2 sm:$0xff]
      %s3413 = scalar_lea.vmem [#allocation2], 192
      %v3414 = vld [vmem:[%s3413] ss:$2 sm:$0xff]
      %s3415 = scalar_lea.vmem [#allocation2], 208
      %v3416 = vld [vmem:[%s3415] ss:$2 sm:$0xff]
      %s3417 = scalar_lea.vmem [#allocation2], 224
      %v3418 = vld [vmem:[%s3417] ss:$2 sm:$0xff]
      %s3419 = scalar_lea.vmem [#allocation2], 240
      %v3420 = vld [vmem:[%s3419] ss:$2 sm:$0xff]
      %s3421 = scalar_lea.vmem [#allocation2], 256
      %v3422 = vld [vmem:[%s3421] ss:$2 sm:$0xff]
      %s3423 = scalar_lea.vmem [#allocation2], 272
      %v3424 = vld [vmem:[%s3423] ss:$2 sm:$0xff]
      %3425 = vst.msk [vmem:[#allocation5] sm:$0xff] %vm3309, %v3390
      %3426 = vst.msk [vmem:[#allocation5 + $0x10] sm:$0xff] %vm3309, %v3392
      %3427 = vst.msk [vmem:[#allocation5 + $0x20] sm:$0xff] %vm3309, %v3394
      %3428 = vst.msk [vmem:[#allocation5 + $0x30] sm:$0xff] %vm3309, %v3396
      %3429 = vst.msk [vmem:[#allocation5 + $0x40] sm:$0xff] %vm3309, %v3398
      %3430 = vst.msk [vmem:[#allocation5 + $0x50] sm:$0xff] %vm3309, %v3400
      %3431 = vst.msk [vmem:[#allocation5 + $0x60] sm:$0xff] %vm3309, %v3402
      %3432 = vst.msk [vmem:[#allocation5 + $0x70] sm:$0xff] %vm3309, %v3404
      %3433 = vst.msk [vmem:[#allocation5 + $0x80] sm:$0xff] %vm3309, %v3406
      %3434 = vst.msk [vmem:[#allocation5 + $0x90] sm:$0xff] %vm3309, %v3408
      %3435 = vst.msk [vmem:[#allocation5 + $0xa0] sm:$0xff] %vm3309, %v3410
      %3436 = vst.msk [vmem:[#allocation5 + $0xb0] sm:$0xff] %vm3309, %v3412
      %3437 = vst.msk [vmem:[#allocation5 + $0xc0] sm:$0xff] %vm3309, %v3414
      %3438 = vst.msk [vmem:[#allocation5 + $0xd0] sm:$0xff] %vm3309, %v3416
      %3439 = vst.msk [vmem:[#allocation5 + $0xe0] sm:$0xff] %vm3309, %v3418
      %3440 = vst.msk [vmem:[#allocation5 + $0xf0] sm:$0xff] %vm3309, %v3420
      %3441 = vst.msk [vmem:[#allocation5 + $0x100] sm:$0xff] %vm3309, %v3422
      %3442 = vst.msk [vmem:[#allocation5 + $0x110] sm:$0xff] %vm3309, %v3424
      %s3443 = scalar_lea.vmem [#allocation2], 1
      %v3444 = vld [vmem:[%s3443] ss:$2 sm:$0xff]
      %s3445 = scalar_lea.vmem [#allocation2], 17
      %v3446 = vld [vmem:[%s3445] ss:$2 sm:$0xff]
      %s3447 = scalar_lea.vmem [#allocation2], 33
      %v3448 = vld [vmem:[%s3447] ss:$2 sm:$0xff]
      %s3449 = scalar_lea.vmem [#allocation2], 49
      %v3450 = vld [vmem:[%s3449] ss:$2 sm:$0xff]
      %s3451 = scalar_lea.vmem [#allocation2], 65
      %v3452 = vld [vmem:[%s3451] ss:$2 sm:$0xff]
      %s3453 = scalar_lea.vmem [#allocation2], 81
      %v3454 = vld [vmem:[%s3453] ss:$2 sm:$0xff]
      %s3455 = scalar_lea.vmem [#allocation2], 97
      %v3456 = vld [vmem:[%s3455] ss:$2 sm:$0xff]
      %s3457 = scalar_lea.vmem [#allocation2], 113
      %v3458 = vld [vmem:[%s3457] ss:$2 sm:$0xff]
      %s3459 = scalar_lea.vmem [#allocation2], 129
      %v3460 = vld [vmem:[%s3459] ss:$2 sm:$0xff]
      %s3461 = scalar_lea.vmem [#allocation2], 145
      %v3462 = vld [vmem:[%s3461] ss:$2 sm:$0xff]
      %s3463 = scalar_lea.vmem [#allocation2], 161
      %v3464 = vld [vmem:[%s3463] ss:$2 sm:$0xff]
      %s3465 = scalar_lea.vmem [#allocation2], 177
      %v3466 = vld [vmem:[%s3465] ss:$2 sm:$0xff]
      %s3467 = scalar_lea.vmem [#allocation2], 193
      %v3468 = vld [vmem:[%s3467] ss:$2 sm:$0xff]
      %s3469 = scalar_lea.vmem [#allocation2], 209
      %v3470 = vld [vmem:[%s3469] ss:$2 sm:$0xff]
      %s3471 = scalar_lea.vmem [#allocation2], 225
      %v3472 = vld [vmem:[%s3471] ss:$2 sm:$0xff]
      %s3473 = scalar_lea.vmem [#allocation2], 241
      %v3474 = vld [vmem:[%s3473] ss:$2 sm:$0xff]
      %s3475 = scalar_lea.vmem [#allocation2], 257
      %v3476 = vld [vmem:[%s3475] ss:$2 sm:$0xff]
      %s3477 = scalar_lea.vmem [#allocation2], 273
      %v3478 = vld [vmem:[%s3477] ss:$2 sm:$0xff]
      %3497 = vrot.lane.b32.xlu0 %v3444, 16
      %v3498 = vpop.permute.xlu0 %3497
      %3499 = vrot.lane.b32.xlu0 %v3446, 16
      %v3500 = vpop.permute.xlu0 %3499
      %3501 = vrot.lane.b32.xlu0 %v3448, 16
      %v3502 = vpop.permute.xlu0 %3501
      %3503 = vrot.lane.b32.xlu0 %v3450, 16
      %v3504 = vpop.permute.xlu0 %3503
      %3505 = vrot.lane.b32.xlu0 %v3452, 16
      %v3506 = vpop.permute.xlu0 %3505
      %3507 = vrot.lane.b32.xlu0 %v3454, 16
      %v3508 = vpop.permute.xlu0 %3507
      %3509 = vrot.lane.b32.xlu0 %v3456, 16
      %v3510 = vpop.permute.xlu0 %3509
      %3511 = vrot.lane.b32.xlu0 %v3458, 16
      %v3512 = vpop.permute.xlu0 %3511
      %3513 = vrot.lane.b32.xlu0 %v3460, 16
      %v3514 = vpop.permute.xlu0 %3513
      %3515 = vrot.lane.b32.xlu0 %v3462, 16
      %v3516 = vpop.permute.xlu0 %3515
      %3517 = vrot.lane.b32.xlu0 %v3464, 16
      %v3518 = vpop.permute.xlu0 %3517
      %3519 = vrot.lane.b32.xlu0 %v3466, 16
      %v3520 = vpop.permute.xlu0 %3519
      %3521 = vrot.lane.b32.xlu0 %v3468, 16
      %v3522 = vpop.permute.xlu0 %3521
      %3523 = vrot.lane.b32.xlu0 %v3470, 16
      %v3524 = vpop.permute.xlu0 %3523
      %3525 = vrot.lane.b32.xlu0 %v3472, 16
      %v3526 = vpop.permute.xlu0 %3525
      %3527 = vrot.lane.b32.xlu0 %v3474, 16
      %v3528 = vpop.permute.xlu0 %3527
      %3529 = vrot.lane.b32.xlu0 %v3476, 16
      %v3530 = vpop.permute.xlu0 %3529
      %3531 = vrot.lane.b32.xlu0 %v3478, 16
      %v3532 = vpop.permute.xlu0 %3531
      %vm3551 = vcmask 261248
      %3552 = vst.msk [vmem:[#allocation5] sm:$0xff] %vm3551, %v3498
      %3553 = vst.msk [vmem:[#allocation5 + $0x10] sm:$0xff] %vm3551, %v3500
      %3554 = vst.msk [vmem:[#allocation5 + $0x20] sm:$0xff] %vm3551, %v3502
      %3555 = vst.msk [vmem:[#allocation5 + $0x30] sm:$0xff] %vm3551, %v3504
      %3556 = vst.msk [vmem:[#allocation5 + $0x40] sm:$0xff] %vm3551, %v3506
      %3557 = vst.msk [vmem:[#allocation5 + $0x50] sm:$0xff] %vm3551, %v3508
      %3558 = vst.msk [vmem:[#allocation5 + $0x60] sm:$0xff] %vm3551, %v3510
      %3559 = vst.msk [vmem:[#allocation5 + $0x70] sm:$0xff] %vm3551, %v3512
      %3560 = vst.msk [vmem:[#allocation5 + $0x80] sm:$0xff] %vm3551, %v3514
      %3561 = vst.msk [vmem:[#allocation5 + $0x90] sm:$0xff] %vm3551, %v3516
      %3562 = vst.msk [vmem:[#allocation5 + $0xa0] sm:$0xff] %vm3551, %v3518
      %3563 = vst.msk [vmem:[#allocation5 + $0xb0] sm:$0xff] %vm3551, %v3520
      %3564 = vst.msk [vmem:[#allocation5 + $0xc0] sm:$0xff] %vm3551, %v3522
      %3565 = vst.msk [vmem:[#allocation5 + $0xd0] sm:$0xff] %vm3551, %v3524
      %3566 = vst.msk [vmem:[#allocation5 + $0xe0] sm:$0xff] %vm3551, %v3526
      %3567 = vst.msk [vmem:[#allocation5 + $0xf0] sm:$0xff] %vm3551, %v3528
      %3568 = vst.msk [vmem:[#allocation5 + $0x100] sm:$0xff] %vm3551, %v3530
      %3569 = vst.msk [vmem:[#allocation5 + $0x110] sm:$0xff] %vm3551, %v3532
      %s3570 = scalar_lea.vmem [#allocation2], 2
      %v3571 = vld [vmem:[%s3570] ss:$2 sm:$0xff]
      %s3572 = scalar_lea.vmem [#allocation2], 18
      %v3573 = vld [vmem:[%s3572] ss:$2 sm:$0xff]
      %s3574 = scalar_lea.vmem [#allocation2], 34
      %v3575 = vld [vmem:[%s3574] ss:$2 sm:$0xff]
      %s3576 = scalar_lea.vmem [#allocation2], 50
      %v3577 = vld [vmem:[%s3576] ss:$2 sm:$0xff]
      %s3578 = scalar_lea.vmem [#allocation2], 66
      %v3579 = vld [vmem:[%s3578] ss:$2 sm:$0xff]
      %s3580 = scalar_lea.vmem [#allocation2], 82
      %v3581 = vld [vmem:[%s3580] ss:$2 sm:$0xff]
      %s3582 = scalar_lea.vmem [#allocation2], 98
      %v3583 = vld [vmem:[%s3582] ss:$2 sm:$0xff]
      %s3584 = scalar_lea.vmem [#allocation2], 114
      %v3585 = vld [vmem:[%s3584] ss:$2 sm:$0xff]
      %s3586 = scalar_lea.vmem [#allocation2], 130
      %v3587 = vld [vmem:[%s3586] ss:$2 sm:$0xff]
      %s3588 = scalar_lea.vmem [#allocation2], 146
      %v3589 = vld [vmem:[%s3588] ss:$2 sm:$0xff]
      %s3590 = scalar_lea.vmem [#allocation2], 162
      %v3591 = vld [vmem:[%s3590] ss:$2 sm:$0xff]
      %s3592 = scalar_lea.vmem [#allocation2], 178
      %v3593 = vld [vmem:[%s3592] ss:$2 sm:$0xff]
      %s3594 = scalar_lea.vmem [#allocation2], 194
      %v3595 = vld [vmem:[%s3594] ss:$2 sm:$0xff]
      %s3596 = scalar_lea.vmem [#allocation2], 210
      %v3597 = vld [vmem:[%s3596] ss:$2 sm:$0xff]
      %s3598 = scalar_lea.vmem [#allocation2], 226
      %v3599 = vld [vmem:[%s3598] ss:$2 sm:$0xff]
      %s3600 = scalar_lea.vmem [#allocation2], 242
      %v3601 = vld [vmem:[%s3600] ss:$2 sm:$0xff]
      %s3602 = scalar_lea.vmem [#allocation2], 258
      %v3603 = vld [vmem:[%s3602] ss:$2 sm:$0xff]
      %s3604 = scalar_lea.vmem [#allocation2], 274
      %v3605 = vld [vmem:[%s3604] ss:$2 sm:$0xff]
      %3624 = vrot.lane.b32.xlu0 %v3571, 32
      %v3625 = vpop.permute.xlu0 %3624
      %3626 = vrot.lane.b32.xlu0 %v3573, 32
      %v3627 = vpop.permute.xlu0 %3626
      %3628 = vrot.lane.b32.xlu0 %v3575, 32
      %v3629 = vpop.permute.xlu0 %3628
      %3630 = vrot.lane.b32.xlu0 %v3577, 32
      %v3631 = vpop.permute.xlu0 %3630
      %3632 = vrot.lane.b32.xlu0 %v3579, 32
      %v3633 = vpop.permute.xlu0 %3632
      %3634 = vrot.lane.b32.xlu0 %v3581, 32
      %v3635 = vpop.permute.xlu0 %3634
      %3636 = vrot.lane.b32.xlu0 %v3583, 32
      %v3637 = vpop.permute.xlu0 %3636
      %3638 = vrot.lane.b32.xlu0 %v3585, 32
      %v3639 = vpop.permute.xlu0 %3638
      %3640 = vrot.lane.b32.xlu0 %v3587, 32
      %v3641 = vpop.permute.xlu0 %3640
      %3642 = vrot.lane.b32.xlu0 %v3589, 32
      %v3643 = vpop.permute.xlu0 %3642
      %3644 = vrot.lane.b32.xlu0 %v3591, 32
      %v3645 = vpop.permute.xlu0 %3644
      %3646 = vrot.lane.b32.xlu0 %v3593, 32
      %v3647 = vpop.permute.xlu0 %3646
      %3648 = vrot.lane.b32.xlu0 %v3595, 32
      %v3649 = vpop.permute.xlu0 %3648
      %3650 = vrot.lane.b32.xlu0 %v3597, 32
      %v3651 = vpop.permute.xlu0 %3650
      %3652 = vrot.lane.b32.xlu0 %v3599, 32
      %v3653 = vpop.permute.xlu0 %3652
      %3654 = vrot.lane.b32.xlu0 %v3601, 32
      %v3655 = vpop.permute.xlu0 %3654
      %3656 = vrot.lane.b32.xlu0 %v3603, 32
      %v3657 = vpop.permute.xlu0 %3656
      %3658 = vrot.lane.b32.xlu0 %v3605, 32
      %v3659 = vpop.permute.xlu0 %3658
      %vm3678 = vcmask 392448
      %3679 = vst.msk [vmem:[#allocation5] sm:$0xff] %vm3678, %v3625
      %3680 = vst.msk [vmem:[#allocation5 + $0x10] sm:$0xff] %vm3678, %v3627
      %3681 = vst.msk [vmem:[#allocation5 + $0x20] sm:$0xff] %vm3678, %v3629
      %3682 = vst.msk [vmem:[#allocation5 + $0x30] sm:$0xff] %vm3678, %v3631
      %3683 = vst.msk [vmem:[#allocation5 + $0x40] sm:$0xff] %vm3678, %v3633
      %3684 = vst.msk [vmem:[#allocation5 + $0x50] sm:$0xff] %vm3678, %v3635
      %3685 = vst.msk [vmem:[#allocation5 + $0x60] sm:$0xff] %vm3678, %v3637
      %3686 = vst.msk [vmem:[#allocation5 + $0x70] sm:$0xff] %vm3678, %v3639
      %3687 = vst.msk [vmem:[#allocation5 + $0x80] sm:$0xff] %vm3678, %v3641
      %3688 = vst.msk [vmem:[#allocation5 + $0x90] sm:$0xff] %vm3678, %v3643
      %3689 = vst.msk [vmem:[#allocation5 + $0xa0] sm:$0xff] %vm3678, %v3645
      %3690 = vst.msk [vmem:[#allocation5 + $0xb0] sm:$0xff] %vm3678, %v3647
      %3691 = vst.msk [vmem:[#allocation5 + $0xc0] sm:$0xff] %vm3678, %v3649
      %3692 = vst.msk [vmem:[#allocation5 + $0xd0] sm:$0xff] %vm3678, %v3651
      %3693 = vst.msk [vmem:[#allocation5 + $0xe0] sm:$0xff] %vm3678, %v3653
      %3694 = vst.msk [vmem:[#allocation5 + $0xf0] sm:$0xff] %vm3678, %v3655
      %3695 = vst.msk [vmem:[#allocation5 + $0x100] sm:$0xff] %vm3678, %v3657
      %3696 = vst.msk [vmem:[#allocation5 + $0x110] sm:$0xff] %vm3678, %v3659
      %v3697 = vld [vmem:[%s3572] ss:$2 sm:$0xff]
      %v3698 = vld [vmem:[%s3574] ss:$2 sm:$0xff]
      %v3699 = vld [vmem:[%s3576] ss:$2 sm:$0xff]
      %v3700 = vld [vmem:[%s3578] ss:$2 sm:$0xff]
      %v3701 = vld [vmem:[%s3580] ss:$2 sm:$0xff]
      %v3702 = vld [vmem:[%s3582] ss:$2 sm:$0xff]
      %v3703 = vld [vmem:[%s3584] ss:$2 sm:$0xff]
      %v3704 = vld [vmem:[%s3586] ss:$2 sm:$0xff]
      %v3705 = vld [vmem:[%s3588] ss:$2 sm:$0xff]
      %v3706 = vld [vmem:[%s3590] ss:$2 sm:$0xff]
      %v3707 = vld [vmem:[%s3592] ss:$2 sm:$0xff]
      %v3708 = vld [vmem:[%s3594] ss:$2 sm:$0xff]
      %v3709 = vld [vmem:[%s3596] ss:$2 sm:$0xff]
      %v3710 = vld [vmem:[%s3598] ss:$2 sm:$0xff]
      %v3711 = vld [vmem:[%s3600] ss:$2 sm:$0xff]
      %v3712 = vld [vmem:[%s3602] ss:$2 sm:$0xff]
      %v3713 = vld [vmem:[%s3604] ss:$2 sm:$0xff]
      %s3714 = scalar_lea.vmem [#allocation2], 290
      %v3715 = vld [vmem:[%s3714] ss:$2 sm:$0xff]
      %3734 = vrot.lane.b32.xlu0 %v3697, 48
      %v3735 = vpop.permute.xlu0 %3734
      %3736 = vrot.lane.b32.xlu0 %v3698, 48
      %v3737 = vpop.permute.xlu0 %3736
      %3738 = vrot.lane.b32.xlu0 %v3699, 48
      %v3739 = vpop.permute.xlu0 %3738
      %3740 = vrot.lane.b32.xlu0 %v3700, 48
      %v3741 = vpop.permute.xlu0 %3740
      %3742 = vrot.lane.b32.xlu0 %v3701, 48
      %v3743 = vpop.permute.xlu0 %3742
      %3744 = vrot.lane.b32.xlu0 %v3702, 48
      %v3745 = vpop.permute.xlu0 %3744
      %3746 = vrot.lane.b32.xlu0 %v3703, 48
      %v3747 = vpop.permute.xlu0 %3746
      %3748 = vrot.lane.b32.xlu0 %v3704, 48
      %v3749 = vpop.permute.xlu0 %3748
      %3750 = vrot.lane.b32.xlu0 %v3705, 48
      %v3751 = vpop.permute.xlu0 %3750
      %3752 = vrot.lane.b32.xlu0 %v3706, 48
      %v3753 = vpop.permute.xlu0 %3752
      %3754 = vrot.lane.b32.xlu0 %v3707, 48
      %v3755 = vpop.permute.xlu0 %3754
      %3756 = vrot.lane.b32.xlu0 %v3708, 48
      %v3757 = vpop.permute.xlu0 %3756
      %3758 = vrot.lane.b32.xlu0 %v3709, 48
      %v3759 = vpop.permute.xlu0 %3758
      %3760 = vrot.lane.b32.xlu0 %v3710, 48
      %v3761 = vpop.permute.xlu0 %3760
      %3762 = vrot.lane.b32.xlu0 %v3711, 48
      %v3763 = vpop.permute.xlu0 %3762
      %3764 = vrot.lane.b32.xlu0 %v3712, 48
      %v3765 = vpop.permute.xlu0 %3764
      %3766 = vrot.lane.b32.xlu0 %v3713, 48
      %v3767 = vpop.permute.xlu0 %3766
      %3768 = vrot.lane.b32.xlu0 %v3715, 48
      %v3769 = vpop.permute.xlu0 %3768
      %vm3788 = vcmask 523648
      %3789 = vst.msk [vmem:[#allocation5] sm:$0xff] %vm3788, %v3735
      %3790 = vst.msk [vmem:[#allocation5 + $0x10] sm:$0xff] %vm3788, %v3737
      %3791 = vst.msk [vmem:[#allocation5 + $0x20] sm:$0xff] %vm3788, %v3739
      %3792 = vst.msk [vmem:[#allocation5 + $0x30] sm:$0xff] %vm3788, %v3741
      %3793 = vst.msk [vmem:[#allocation5 + $0x40] sm:$0xff] %vm3788, %v3743
      %3794 = vst.msk [vmem:[#allocation5 + $0x50] sm:$0xff] %vm3788, %v3745
      %3795 = vst.msk [vmem:[#allocation5 + $0x60] sm:$0xff] %vm3788, %v3747
      %3796 = vst.msk [vmem:[#allocation5 + $0x70] sm:$0xff] %vm3788, %v3749
      %3797 = vst.msk [vmem:[#allocation5 + $0x80] sm:$0xff] %vm3788, %v3751
      %3798 = vst.msk [vmem:[#allocation5 + $0x90] sm:$0xff] %vm3788, %v3753
      %3799 = vst.msk [vmem:[#allocation5 + $0xa0] sm:$0xff] %vm3788, %v3755
      %3800 = vst.msk [vmem:[#allocation5 + $0xb0] sm:$0xff] %vm3788, %v3757
      %3801 = vst.msk [vmem:[#allocation5 + $0xc0] sm:$0xff] %vm3788, %v3759
      %3802 = vst.msk [vmem:[#allocation5 + $0xd0] sm:$0xff] %vm3788, %v3761
      %3803 = vst.msk [vmem:[#allocation5 + $0xe0] sm:$0xff] %vm3788, %v3763
      %3804 = vst.msk [vmem:[#allocation5 + $0xf0] sm:$0xff] %vm3788, %v3765
      %3805 = vst.msk [vmem:[#allocation5 + $0x100] sm:$0xff] %vm3788, %v3767
      %3806 = vst.msk [vmem:[#allocation5 + $0x110] sm:$0xff] %vm3788, %v3769
      %s3807 = scalar_lea.vmem [#allocation2], 19
      %v3808 = vld [vmem:[%s3807] ss:$2 sm:$0xff]
      %s3809 = scalar_lea.vmem [#allocation2], 35
      %v3810 = vld [vmem:[%s3809] ss:$2 sm:$0xff]
      %s3811 = scalar_lea.vmem [#allocation2], 51
      %v3812 = vld [vmem:[%s3811] ss:$2 sm:$0xff]
      %s3813 = scalar_lea.vmem [#allocation2], 67
      %v3814 = vld [vmem:[%s3813] ss:$2 sm:$0xff]
      %s3815 = scalar_lea.vmem [#allocation2], 83
      %v3816 = vld [vmem:[%s3815] ss:$2 sm:$0xff]
      %s3817 = scalar_lea.vmem [#allocation2], 99
      %v3818 = vld [vmem:[%s3817] ss:$2 sm:$0xff]
      %s3819 = scalar_lea.vmem [#allocation2], 115
      %v3820 = vld [vmem:[%s3819] ss:$2 sm:$0xff]
      %s3821 = scalar_lea.vmem [#allocation2], 131
      %v3822 = vld [vmem:[%s3821] ss:$2 sm:$0xff]
      %s3823 = scalar_lea.vmem [#allocation2], 147
      %v3824 = vld [vmem:[%s3823] ss:$2 sm:$0xff]
      %s3825 = scalar_lea.vmem [#allocation2], 163
      %v3826 = vld [vmem:[%s3825] ss:$2 sm:$0xff]
      %s3827 = scalar_lea.vmem [#allocation2], 179
      %v3828 = vld [vmem:[%s3827] ss:$2 sm:$0xff]
      %s3829 = scalar_lea.vmem [#allocation2], 195
      %v3830 = vld [vmem:[%s3829] ss:$2 sm:$0xff]
      %s3831 = scalar_lea.vmem [#allocation2], 211
      %v3832 = vld [vmem:[%s3831] ss:$2 sm:$0xff]
      %s3833 = scalar_lea.vmem [#allocation2], 227
      %v3834 = vld [vmem:[%s3833] ss:$2 sm:$0xff]
      %s3835 = scalar_lea.vmem [#allocation2], 243
      %v3836 = vld [vmem:[%s3835] ss:$2 sm:$0xff]
      %s3837 = scalar_lea.vmem [#allocation2], 259
      %v3838 = vld [vmem:[%s3837] ss:$2 sm:$0xff]
      %s3839 = scalar_lea.vmem [#allocation2], 275
      %v3840 = vld [vmem:[%s3839] ss:$2 sm:$0xff]
      %s3841 = scalar_lea.vmem [#allocation2], 291
      %v3842 = vld [vmem:[%s3841] ss:$2 sm:$0xff]
      %3861 = vrot.lane.b32.xlu0 %v3808, 64
      %v3862 = vpop.permute.xlu0 %3861
      %3863 = vrot.lane.b32.xlu0 %v3810, 64
      %v3864 = vpop.permute.xlu0 %3863
      %3865 = vrot.lane.b32.xlu0 %v3812, 64
      %v3866 = vpop.permute.xlu0 %3865
      %3867 = vrot.lane.b32.xlu0 %v3814, 64
      %v3868 = vpop.permute.xlu0 %3867
      %3869 = vrot.lane.b32.xlu0 %v3816, 64
      %v3870 = vpop.permute.xlu0 %3869
      %3871 = vrot.lane.b32.xlu0 %v3818, 64
      %v3872 = vpop.permute.xlu0 %3871
      %3873 = vrot.lane.b32.xlu0 %v3820, 64
      %v3874 = vpop.permute.xlu0 %3873
      %3875 = vrot.lane.b32.xlu0 %v3822, 64
      %v3876 = vpop.permute.xlu0 %3875
      %3877 = vrot.lane.b32.xlu0 %v3824, 64
      %v3878 = vpop.permute.xlu0 %3877
      %3879 = vrot.lane.b32.xlu0 %v3826, 64
      %v3880 = vpop.permute.xlu0 %3879
      %3881 = vrot.lane.b32.xlu0 %v3828, 64
      %v3882 = vpop.permute.xlu0 %3881
      %3883 = vrot.lane.b32.xlu0 %v3830, 64
      %v3884 = vpop.permute.xlu0 %3883
      %3885 = vrot.lane.b32.xlu0 %v3832, 64
      %v3886 = vpop.permute.xlu0 %3885
      %3887 = vrot.lane.b32.xlu0 %v3834, 64
      %v3888 = vpop.permute.xlu0 %3887
      %3889 = vrot.lane.b32.xlu0 %v3836, 64
      %v3890 = vpop.permute.xlu0 %3889
      %3891 = vrot.lane.b32.xlu0 %v3838, 64
      %v3892 = vpop.permute.xlu0 %3891
      %3893 = vrot.lane.b32.xlu0 %v3840, 64
      %v3894 = vpop.permute.xlu0 %3893
      %3895 = vrot.lane.b32.xlu0 %v3842, 64
      %v3896 = vpop.permute.xlu0 %3895
      %vm3915 = vcmask 654848
      %3916 = vst.msk [vmem:[#allocation5] sm:$0xff] %vm3915, %v3862
      %3917 = vst.msk [vmem:[#allocation5 + $0x10] sm:$0xff] %vm3915, %v3864
      %3918 = vst.msk [vmem:[#allocation5 + $0x20] sm:$0xff] %vm3915, %v3866
      %3919 = vst.msk [vmem:[#allocation5 + $0x30] sm:$0xff] %vm3915, %v3868
      %3920 = vst.msk [vmem:[#allocation5 + $0x40] sm:$0xff] %vm3915, %v3870
      %3921 = vst.msk [vmem:[#allocation5 + $0x50] sm:$0xff] %vm3915, %v3872
      %3922 = vst.msk [vmem:[#allocation5 + $0x60] sm:$0xff] %vm3915, %v3874
      %3923 = vst.msk [vmem:[#allocation5 + $0x70] sm:$0xff] %vm3915, %v3876
      %3924 = vst.msk [vmem:[#allocation5 + $0x80] sm:$0xff] %vm3915, %v3878
      %3925 = vst.msk [vmem:[#allocation5 + $0x90] sm:$0xff] %vm3915, %v3880
      %3926 = vst.msk [vmem:[#allocation5 + $0xa0] sm:$0xff] %vm3915, %v3882
      %3927 = vst.msk [vmem:[#allocation5 + $0xb0] sm:$0xff] %vm3915, %v3884
      %3928 = vst.msk [vmem:[#allocation5 + $0xc0] sm:$0xff] %vm3915, %v3886
      %3929 = vst.msk [vmem:[#allocation5 + $0xd0] sm:$0xff] %vm3915, %v3888
      %3930 = vst.msk [vmem:[#allocation5 + $0xe0] sm:$0xff] %vm3915, %v3890
      %3931 = vst.msk [vmem:[#allocation5 + $0xf0] sm:$0xff] %vm3915, %v3892
      %3932 = vst.msk [vmem:[#allocation5 + $0x100] sm:$0xff] %vm3915, %v3894
      %3933 = vst.msk [vmem:[#allocation5 + $0x110] sm:$0xff] %vm3915, %v3896
      %s3934 = scalar_lea.vmem [#allocation2], 20
      %v3935 = vld [vmem:[%s3934] ss:$2 sm:$0xff]
      %s3936 = scalar_lea.vmem [#allocation2], 36
      %v3937 = vld [vmem:[%s3936] ss:$2 sm:$0xff]
      %s3938 = scalar_lea.vmem [#allocation2], 52
      %v3939 = vld [vmem:[%s3938] ss:$2 sm:$0xff]
      %s3940 = scalar_lea.vmem [#allocation2], 68
      %v3941 = vld [vmem:[%s3940] ss:$2 sm:$0xff]
      %s3942 = scalar_lea.vmem [#allocation2], 84
      %v3943 = vld [vmem:[%s3942] ss:$2 sm:$0xff]
      %s3944 = scalar_lea.vmem [#allocation2], 100
      %v3945 = vld [vmem:[%s3944] ss:$2 sm:$0xff]
      %s3946 = scalar_lea.vmem [#allocation2], 116
      %v3947 = vld [vmem:[%s3946] ss:$2 sm:$0xff]
      %s3948 = scalar_lea.vmem [#allocation2], 132
      %v3949 = vld [vmem:[%s3948] ss:$2 sm:$0xff]
      %s3950 = scalar_lea.vmem [#allocation2], 148
      %v3951 = vld [vmem:[%s3950] ss:$2 sm:$0xff]
      %s3952 = scalar_lea.vmem [#allocation2], 164
      %v3953 = vld [vmem:[%s3952] ss:$2 sm:$0xff]
      %s3954 = scalar_lea.vmem [#allocation2], 180
      %v3955 = vld [vmem:[%s3954] ss:$2 sm:$0xff]
      %s3956 = scalar_lea.vmem [#allocation2], 196
      %v3957 = vld [vmem:[%s3956] ss:$2 sm:$0xff]
      %s3958 = scalar_lea.vmem [#allocation2], 212
      %v3959 = vld [vmem:[%s3958] ss:$2 sm:$0xff]
      %s3960 = scalar_lea.vmem [#allocation2], 228
      %v3961 = vld [vmem:[%s3960] ss:$2 sm:$0xff]
      %s3962 = scalar_lea.vmem [#allocation2], 244
      %v3963 = vld [vmem:[%s3962] ss:$2 sm:$0xff]
      %s3964 = scalar_lea.vmem [#allocation2], 260
      %v3965 = vld [vmem:[%s3964] ss:$2 sm:$0xff]
      %s3966 = scalar_lea.vmem [#allocation2], 276
      %v3967 = vld [vmem:[%s3966] ss:$2 sm:$0xff]
      %s3968 = scalar_lea.vmem [#allocation2], 292
      %v3969 = vld [vmem:[%s3968] ss:$2 sm:$0xff]
      %3988 = vrot.lane.b32.xlu0 %v3935, 80
      %v3989 = vpop.permute.xlu0 %3988
      %3990 = vrot.lane.b32.xlu0 %v3937, 80
      %v3991 = vpop.permute.xlu0 %3990
      %3992 = vrot.lane.b32.xlu0 %v3939, 80
      %v3993 = vpop.permute.xlu0 %3992
      %3994 = vrot.lane.b32.xlu0 %v3941, 80
      %v3995 = vpop.permute.xlu0 %3994
      %3996 = vrot.lane.b32.xlu0 %v3943, 80
      %v3997 = vpop.permute.xlu0 %3996
      %3998 = vrot.lane.b32.xlu0 %v3945, 80
      %v3999 = vpop.permute.xlu0 %3998
      %4000 = vrot.lane.b32.xlu0 %v3947, 80
      %v4001 = vpop.permute.xlu0 %4000
      %4002 = vrot.lane.b32.xlu0 %v3949, 80
      %v4003 = vpop.permute.xlu0 %4002
      %4004 = vrot.lane.b32.xlu0 %v3951, 80
      %v4005 = vpop.permute.xlu0 %4004
      %4006 = vrot.lane.b32.xlu0 %v3953, 80
      %v4007 = vpop.permute.xlu0 %4006
      %4008 = vrot.lane.b32.xlu0 %v3955, 80
      %v4009 = vpop.permute.xlu0 %4008
      %4010 = vrot.lane.b32.xlu0 %v3957, 80
      %v4011 = vpop.permute.xlu0 %4010
      %4012 = vrot.lane.b32.xlu0 %v3959, 80
      %v4013 = vpop.permute.xlu0 %4012
      %4014 = vrot.lane.b32.xlu0 %v3961, 80
      %v4015 = vpop.permute.xlu0 %4014
      %4016 = vrot.lane.b32.xlu0 %v3963, 80
      %v4017 = vpop.permute.xlu0 %4016
      %4018 = vrot.lane.b32.xlu0 %v3965, 80
      %v4019 = vpop.permute.xlu0 %4018
      %4020 = vrot.lane.b32.xlu0 %v3967, 80
      %v4021 = vpop.permute.xlu0 %4020
      %4022 = vrot.lane.b32.xlu0 %v3969, 80
      %v4023 = vpop.permute.xlu0 %4022
      %vm4042 = vcmask 786048
      %4043 = vst.msk [vmem:[#allocation5] sm:$0xff] %vm4042, %v3989
      %4044 = vst.msk [vmem:[#allocation5 + $0x10] sm:$0xff] %vm4042, %v3991
      %4045 = vst.msk [vmem:[#allocation5 + $0x20] sm:$0xff] %vm4042, %v3993
      %4046 = vst.msk [vmem:[#allocation5 + $0x30] sm:$0xff] %vm4042, %v3995
      %4047 = vst.msk [vmem:[#allocation5 + $0x40] sm:$0xff] %vm4042, %v3997
      %4048 = vst.msk [vmem:[#allocation5 + $0x50] sm:$0xff] %vm4042, %v3999
      %4049 = vst.msk [vmem:[#allocation5 + $0x60] sm:$0xff] %vm4042, %v4001
      %4050 = vst.msk [vmem:[#allocation5 + $0x70] sm:$0xff] %vm4042, %v4003
      %4051 = vst.msk [vmem:[#allocation5 + $0x80] sm:$0xff] %vm4042, %v4005
      %4052 = vst.msk [vmem:[#allocation5 + $0x90] sm:$0xff] %vm4042, %v4007
      %4053 = vst.msk [vmem:[#allocation5 + $0xa0] sm:$0xff] %vm4042, %v4009
      %4054 = vst.msk [vmem:[#allocation5 + $0xb0] sm:$0xff] %vm4042, %v4011
      %4055 = vst.msk [vmem:[#allocation5 + $0xc0] sm:$0xff] %vm4042, %v4013
      %4056 = vst.msk [vmem:[#allocation5 + $0xd0] sm:$0xff] %vm4042, %v4015
      %4057 = vst.msk [vmem:[#allocation5 + $0xe0] sm:$0xff] %vm4042, %v4017
      %4058 = vst.msk [vmem:[#allocation5 + $0xf0] sm:$0xff] %vm4042, %v4019
      %4059 = vst.msk [vmem:[#allocation5 + $0x100] sm:$0xff] %vm4042, %v4021
      %4060 = vst.msk [vmem:[#allocation5 + $0x110] sm:$0xff] %vm4042, %v4023
      %v4061 = vld [vmem:[%s3936] ss:$2 sm:$0xff]
      %v4062 = vld [vmem:[%s3938] ss:$2 sm:$0xff]
      %v4063 = vld [vmem:[%s3940] ss:$2 sm:$0xff]
      %v4064 = vld [vmem:[%s3942] ss:$2 sm:$0xff]
      %v4065 = vld [vmem:[%s3944] ss:$2 sm:$0xff]
      %v4066 = vld [vmem:[%s3946] ss:$2 sm:$0xff]
      %v4067 = vld [vmem:[%s3948] ss:$2 sm:$0xff]
      %v4068 = vld [vmem:[%s3950] ss:$2 sm:$0xff]
      %v4069 = vld [vmem:[%s3952] ss:$2 sm:$0xff]
      %v4070 = vld [vmem:[%s3954] ss:$2 sm:$0xff]
      %v4071 = vld [vmem:[%s3956] ss:$2 sm:$0xff]
      %v4072 = vld [vmem:[%s3958] ss:$2 sm:$0xff]
      %v4073 = vld [vmem:[%s3960] ss:$2 sm:$0xff]
      %v4074 = vld [vmem:[%s3962] ss:$2 sm:$0xff]
      %v4075 = vld [vmem:[%s3964] ss:$2 sm:$0xff]
      %v4076 = vld [vmem:[%s3966] ss:$2 sm:$0xff]
      %v4077 = vld [vmem:[%s3968] ss:$2 sm:$0xff]
      %s4078 = scalar_lea.vmem [#allocation2], 308
      %v4079 = vld [vmem:[%s4078] ss:$2 sm:$0xff]
      %4098 = vrot.lane.b32.xlu0 %v4061, 96
      %v4099 = vpop.permute.xlu0 %4098
      %4100 = vrot.lane.b32.xlu0 %v4062, 96
      %v4101 = vpop.permute.xlu0 %4100
      %4102 = vrot.lane.b32.xlu0 %v4063, 96
      %v4103 = vpop.permute.xlu0 %4102
      %4104 = vrot.lane.b32.xlu0 %v4064, 96
      %v4105 = vpop.permute.xlu0 %4104
      %4106 = vrot.lane.b32.xlu0 %v4065, 96
      %v4107 = vpop.permute.xlu0 %4106
      %4108 = vrot.lane.b32.xlu0 %v4066, 96
      %v4109 = vpop.permute.xlu0 %4108
      %4110 = vrot.lane.b32.xlu0 %v4067, 96
      %v4111 = vpop.permute.xlu0 %4110
      %4112 = vrot.lane.b32.xlu0 %v4068, 96
      %v4113 = vpop.permute.xlu0 %4112
      %4114 = vrot.lane.b32.xlu0 %v4069, 96
      %v4115 = vpop.permute.xlu0 %4114
      %4116 = vrot.lane.b32.xlu0 %v4070, 96
      %v4117 = vpop.permute.xlu0 %4116
      %4118 = vrot.lane.b32.xlu0 %v4071, 96
      %v4119 = vpop.permute.xlu0 %4118
      %4120 = vrot.lane.b32.xlu0 %v4072, 96
      %v4121 = vpop.permute.xlu0 %4120
      %4122 = vrot.lane.b32.xlu0 %v4073, 96
      %v4123 = vpop.permute.xlu0 %4122
      %4124 = vrot.lane.b32.xlu0 %v4074, 96
      %v4125 = vpop.permute.xlu0 %4124
      %4126 = vrot.lane.b32.xlu0 %v4075, 96
      %v4127 = vpop.permute.xlu0 %4126
      %4128 = vrot.lane.b32.xlu0 %v4076, 96
      %v4129 = vpop.permute.xlu0 %4128
      %4130 = vrot.lane.b32.xlu0 %v4077, 96
      %v4131 = vpop.permute.xlu0 %4130
      %4132 = vrot.lane.b32.xlu0 %v4079, 96
      %v4133 = vpop.permute.xlu0 %4132
      %vm4152 = vcmask 917248
      %4153 = vst.msk [vmem:[#allocation5] sm:$0xff] %vm4152, %v4099
      %4154 = vst.msk [vmem:[#allocation5 + $0x10] sm:$0xff] %vm4152, %v4101
      %4155 = vst.msk [vmem:[#allocation5 + $0x20] sm:$0xff] %vm4152, %v4103
      %4156 = vst.msk [vmem:[#allocation5 + $0x30] sm:$0xff] %vm4152, %v4105
      %4157 = vst.msk [vmem:[#allocation5 + $0x40] sm:$0xff] %vm4152, %v4107
      %4158 = vst.msk [vmem:[#allocation5 + $0x50] sm:$0xff] %vm4152, %v4109
      %4159 = vst.msk [vmem:[#allocation5 + $0x60] sm:$0xff] %vm4152, %v4111
      %4160 = vst.msk [vmem:[#allocation5 + $0x70] sm:$0xff] %vm4152, %v4113
      %4161 = vst.msk [vmem:[#allocation5 + $0x80] sm:$0xff] %vm4152, %v4115
      %4162 = vst.msk [vmem:[#allocation5 + $0x90] sm:$0xff] %vm4152, %v4117
      %4163 = vst.msk [vmem:[#allocation5 + $0xa0] sm:$0xff] %vm4152, %v4119
      %4164 = vst.msk [vmem:[#allocation5 + $0xb0] sm:$0xff] %vm4152, %v4121
      %4165 = vst.msk [vmem:[#allocation5 + $0xc0] sm:$0xff] %vm4152, %v4123
      %4166 = vst.msk [vmem:[#allocation5 + $0xd0] sm:$0xff] %vm4152, %v4125
      %4167 = vst.msk [vmem:[#allocation5 + $0xe0] sm:$0xff] %vm4152, %v4127
      %4168 = vst.msk [vmem:[#allocation5 + $0xf0] sm:$0xff] %vm4152, %v4129
      %4169 = vst.msk [vmem:[#allocation5 + $0x100] sm:$0xff] %vm4152, %v4131
      %4170 = vst.msk [vmem:[#allocation5 + $0x110] sm:$0xff] %vm4152, %v4133
      %s4171 = scalar_lea.vmem [#allocation2], 37
      %v4172 = vld [vmem:[%s4171] ss:$2 sm:$0xff]
      %s4173 = scalar_lea.vmem [#allocation2], 53
      %v4174 = vld [vmem:[%s4173] ss:$2 sm:$0xff]
      %s4175 = scalar_lea.vmem [#allocation2], 69
      %v4176 = vld [vmem:[%s4175] ss:$2 sm:$0xff]
      %s4177 = scalar_lea.vmem [#allocation2], 85
      %v4178 = vld [vmem:[%s4177] ss:$2 sm:$0xff]
      %s4179 = scalar_lea.vmem [#allocation2], 101
      %v4180 = vld [vmem:[%s4179] ss:$2 sm:$0xff]
      %s4181 = scalar_lea.vmem [#allocation2], 117
      %v4182 = vld [vmem:[%s4181] ss:$2 sm:$0xff]
      %s4183 = scalar_lea.vmem [#allocation2], 133
      %v4184 = vld [vmem:[%s4183] ss:$2 sm:$0xff]
      %s4185 = scalar_lea.vmem [#allocation2], 149
      %v4186 = vld [vmem:[%s4185] ss:$2 sm:$0xff]
      %s4187 = scalar_lea.vmem [#allocation2], 165
      %v4188 = vld [vmem:[%s4187] ss:$2 sm:$0xff]
      %s4189 = scalar_lea.vmem [#allocation2], 181
      %v4190 = vld [vmem:[%s4189] ss:$2 sm:$0xff]
      %s4191 = scalar_lea.vmem [#allocation2], 197
      %v4192 = vld [vmem:[%s4191] ss:$2 sm:$0xff]
      %s4193 = scalar_lea.vmem [#allocation2], 213
      %v4194 = vld [vmem:[%s4193] ss:$2 sm:$0xff]
      %s4195 = scalar_lea.vmem [#allocation2], 229
      %v4196 = vld [vmem:[%s4195] ss:$2 sm:$0xff]
      %s4197 = scalar_lea.vmem [#allocation2], 245
      %v4198 = vld [vmem:[%s4197] ss:$2 sm:$0xff]
      %s4199 = scalar_lea.vmem [#allocation2], 261
      %v4200 = vld [vmem:[%s4199] ss:$2 sm:$0xff]
      %s4201 = scalar_lea.vmem [#allocation2], 277
      %v4202 = vld [vmem:[%s4201] ss:$2 sm:$0xff]
      %s4203 = scalar_lea.vmem [#allocation2], 293
      %v4204 = vld [vmem:[%s4203] ss:$2 sm:$0xff]
      %s4205 = scalar_lea.vmem [#allocation2], 309
      %v4206 = vld [vmem:[%s4205] ss:$2 sm:$0xff]
      %4225 = vrot.lane.b32.xlu0 %v4172, 112
      %v4226 = vpop.permute.xlu0 %4225
      %4227 = vrot.lane.b32.xlu0 %v4174, 112
      %v4228 = vpop.permute.xlu0 %4227
      %4229 = vrot.lane.b32.xlu0 %v4176, 112
      %v4230 = vpop.permute.xlu0 %4229
      %4231 = vrot.lane.b32.xlu0 %v4178, 112
      %v4232 = vpop.permute.xlu0 %4231
      %4233 = vrot.lane.b32.xlu0 %v4180, 112
      %v4234 = vpop.permute.xlu0 %4233
      %4235 = vrot.lane.b32.xlu0 %v4182, 112
      %v4236 = vpop.permute.xlu0 %4235
      %4237 = vrot.lane.b32.xlu0 %v4184, 112
      %v4238 = vpop.permute.xlu0 %4237
      %4239 = vrot.lane.b32.xlu0 %v4186, 112
      %v4240 = vpop.permute.xlu0 %4239
      %4241 = vrot.lane.b32.xlu0 %v4188, 112
      %v4242 = vpop.permute.xlu0 %4241
      %4243 = vrot.lane.b32.xlu0 %v4190, 112
      %v4244 = vpop.permute.xlu0 %4243
      %4245 = vrot.lane.b32.xlu0 %v4192, 112
      %v4246 = vpop.permute.xlu0 %4245
      %4247 = vrot.lane.b32.xlu0 %v4194, 112
      %v4248 = vpop.permute.xlu0 %4247
      %4249 = vrot.lane.b32.xlu0 %v4196, 112
      %v4250 = vpop.permute.xlu0 %4249
      %4251 = vrot.lane.b32.xlu0 %v4198, 112
      %v4252 = vpop.permute.xlu0 %4251
      %4253 = vrot.lane.b32.xlu0 %v4200, 112
      %v4254 = vpop.permute.xlu0 %4253
      %4255 = vrot.lane.b32.xlu0 %v4202, 112
      %v4256 = vpop.permute.xlu0 %4255
      %4257 = vrot.lane.b32.xlu0 %v4204, 112
      %v4258 = vpop.permute.xlu0 %4257
      %4259 = vrot.lane.b32.xlu0 %v4206, 112
      %v4260 = vpop.permute.xlu0 %4259
      %vm4279 = vcmask 1048448
      %4280 = vst.msk [vmem:[#allocation5] sm:$0xff] %vm4279, %v4226
      %4281 = vst.msk [vmem:[#allocation5 + $0x10] sm:$0xff] %vm4279, %v4228
      %4282 = vst.msk [vmem:[#allocation5 + $0x20] sm:$0xff] %vm4279, %v4230
      %4283 = vst.msk [vmem:[#allocation5 + $0x30] sm:$0xff] %vm4279, %v4232
      %4284 = vst.msk [vmem:[#allocation5 + $0x40] sm:$0xff] %vm4279, %v4234
      %4285 = vst.msk [vmem:[#allocation5 + $0x50] sm:$0xff] %vm4279, %v4236
      %4286 = vst.msk [vmem:[#allocation5 + $0x60] sm:$0xff] %vm4279, %v4238
      %4287 = vst.msk [vmem:[#allocation5 + $0x70] sm:$0xff] %vm4279, %v4240
      %4288 = vst.msk [vmem:[#allocation5 + $0x80] sm:$0xff] %vm4279, %v4242
      %4289 = vst.msk [vmem:[#allocation5 + $0x90] sm:$0xff] %vm4279, %v4244
      %4290 = vst.msk [vmem:[#allocation5 + $0xa0] sm:$0xff] %vm4279, %v4246
      %4291 = vst.msk [vmem:[#allocation5 + $0xb0] sm:$0xff] %vm4279, %v4248
      %4292 = vst.msk [vmem:[#allocation5 + $0xc0] sm:$0xff] %vm4279, %v4250
      %4293 = vst.msk [vmem:[#allocation5 + $0xd0] sm:$0xff] %vm4279, %v4252
      %4294 = vst.msk [vmem:[#allocation5 + $0xe0] sm:$0xff] %vm4279, %v4254
      %4295 = vst.msk [vmem:[#allocation5 + $0xf0] sm:$0xff] %vm4279, %v4256
      %4296 = vst.msk [vmem:[#allocation5 + $0x100] sm:$0xff] %vm4279, %v4258
      %4297 = vst.msk [vmem:[#allocation5 + $0x110] sm:$0xff] %vm4279, %v4260
      %s4298 = scalar_lea.vmem [#allocation2], 38
      %v4299 = vld [vmem:[%s4298] ss:$2 sm:$0xff]
      %s4300 = scalar_lea.vmem [#allocation2], 54
      %v4301 = vld [vmem:[%s4300] ss:$2 sm:$0xff]
      %s4302 = scalar_lea.vmem [#allocation2], 70
      %v4303 = vld [vmem:[%s4302] ss:$2 sm:$0xff]
      %s4304 = scalar_lea.vmem [#allocation2], 86
      %v4305 = vld [vmem:[%s4304] ss:$2 sm:$0xff]
      %s4306 = scalar_lea.vmem [#allocation2], 102
      %v4307 = vld [vmem:[%s4306] ss:$2 sm:$0xff]
      %s4308 = scalar_lea.vmem [#allocation2], 118
      %v4309 = vld [vmem:[%s4308] ss:$2 sm:$0xff]
      %s4310 = scalar_lea.vmem [#allocation2], 134
      %v4311 = vld [vmem:[%s4310] ss:$2 sm:$0xff]
      %s4312 = scalar_lea.vmem [#allocation2], 150
      %v4313 = vld [vmem:[%s4312] ss:$2 sm:$0xff]
      %s4314 = scalar_lea.vmem [#allocation2], 166
      %v4315 = vld [vmem:[%s4314] ss:$2 sm:$0xff]
      %s4316 = scalar_lea.vmem [#allocation2], 182
      %v4317 = vld [vmem:[%s4316] ss:$2 sm:$0xff]
      %s4318 = scalar_lea.vmem [#allocation2], 198
      %v4319 = vld [vmem:[%s4318] ss:$2 sm:$0xff]
      %s4320 = scalar_lea.vmem [#allocation2], 214
      %v4321 = vld [vmem:[%s4320] ss:$2 sm:$0xff]
      %s4322 = scalar_lea.vmem [#allocation2], 230
      %v4323 = vld [vmem:[%s4322] ss:$2 sm:$0xff]
      %s4324 = scalar_lea.vmem [#allocation2], 246
      %v4325 = vld [vmem:[%s4324] ss:$2 sm:$0xff]
      %s4326 = scalar_lea.vmem [#allocation2], 262
      %v4327 = vld [vmem:[%s4326] ss:$2 sm:$0xff]
      %s4328 = scalar_lea.vmem [#allocation2], 278
      %v4329 = vld [vmem:[%s4328] ss:$2 sm:$0xff]
      %s4330 = scalar_lea.vmem [#allocation2], 294
      %v4331 = vld [vmem:[%s4330] ss:$2 sm:$0xff]
      %s4332 = scalar_lea.vmem [#allocation2], 310
      %v4333 = vld [vmem:[%s4332] ss:$2 sm:$0xff]
      %4334 = vst.msk [vmem:[#allocation5 + $0x8] sm:$0xff] %vm3309, %v4299
      %4335 = vst.msk [vmem:[#allocation5 + $0x18] sm:$0xff] %vm3309, %v4301
      %4336 = vst.msk [vmem:[#allocation5 + $0x28] sm:$0xff] %vm3309, %v4303
      %4337 = vst.msk [vmem:[#allocation5 + $0x38] sm:$0xff] %vm3309, %v4305
      %4338 = vst.msk [vmem:[#allocation5 + $0x48] sm:$0xff] %vm3309, %v4307
      %4339 = vst.msk [vmem:[#allocation5 + $0x58] sm:$0xff] %vm3309, %v4309
      %4340 = vst.msk [vmem:[#allocation5 + $0x68] sm:$0xff] %vm3309, %v4311
      %4341 = vst.msk [vmem:[#allocation5 + $0x78] sm:$0xff] %vm3309, %v4313
      %4342 = vst.msk [vmem:[#allocation5 + $0x88] sm:$0xff] %vm3309, %v4315
      %4343 = vst.msk [vmem:[#allocation5 + $0x98] sm:$0xff] %vm3309, %v4317
      %4344 = vst.msk [vmem:[#allocation5 + $0xa8] sm:$0xff] %vm3309, %v4319
      %4345 = vst.msk [vmem:[#allocation5 + $0xb8] sm:$0xff] %vm3309, %v4321
      %4346 = vst.msk [vmem:[#allocation5 + $0xc8] sm:$0xff] %vm3309, %v4323
      %4347 = vst.msk [vmem:[#allocation5 + $0xd8] sm:$0xff] %vm3309, %v4325
      %4348 = vst.msk [vmem:[#allocation5 + $0xe8] sm:$0xff] %vm3309, %v4327
      %4349 = vst.msk [vmem:[#allocation5 + $0xf8] sm:$0xff] %vm3309, %v4329
      %4350 = vst.msk [vmem:[#allocation5 + $0x108] sm:$0xff] %vm3309, %v4331
      %4351 = vst.msk [vmem:[#allocation5 + $0x118] sm:$0xff] %vm3309, %v4333
      %v4352 = vld [vmem:[#allocation5] sm:$0xff]
      %v4353 = vld [vmem:[#allocation5 + $0x8] sm:$0xff]
      %v4354 = vld [vmem:[#allocation5 + $0x10] sm:$0xff]
      %v4355 = vld [vmem:[#allocation5 + $0x18] sm:$0xff]
      %v4356 = vld [vmem:[#allocation5 + $0x20] sm:$0xff]
      %v4357 = vld [vmem:[#allocation5 + $0x28] sm:$0xff]
      %v4358 = vld [vmem:[#allocation5 + $0x30] sm:$0xff]
      %v4359 = vld [vmem:[#allocation5 + $0x38] sm:$0xff]
      %v4360 = vld [vmem:[#allocation5 + $0x40] sm:$0xff]
      %v4361 = vld [vmem:[#allocation5 + $0x48] sm:$0xff]
      %v4362 = vld [vmem:[#allocation5 + $0x50] sm:$0xff]
      %v4363 = vld [vmem:[#allocation5 + $0x58] sm:$0xff]
      %v4364 = vld [vmem:[#allocation5 + $0x60] sm:$0xff]
      %v4365 = vld [vmem:[#allocation5 + $0x68] sm:$0xff]
      %v4366 = vld [vmem:[#allocation5 + $0x70] sm:$0xff]
      %v4367 = vld [vmem:[#allocation5 + $0x78] sm:$0xff]
      %v4368 = vld [vmem:[#allocation5 + $0x80] sm:$0xff]
      %v4369 = vld [vmem:[#allocation5 + $0x88] sm:$0xff]
      %v4370 = vld [vmem:[#allocation5 + $0x90] sm:$0xff]
      %v4371 = vld [vmem:[#allocation5 + $0x98] sm:$0xff]
      %v4372 = vld [vmem:[#allocation5 + $0xa0] sm:$0xff]
      %v4373 = vld [vmem:[#allocation5 + $0xa8] sm:$0xff]
      %v4374 = vld [vmem:[#allocation5 + $0xb0] sm:$0xff]
      %v4375 = vld [vmem:[#allocation5 + $0xb8] sm:$0xff]
      %v4376 = vld [vmem:[#allocation5 + $0xc0] sm:$0xff]
      %v4377 = vld [vmem:[#allocation5 + $0xc8] sm:$0xff]
      %v4378 = vld [vmem:[#allocation5 + $0xd0] sm:$0xff]
      %v4379 = vld [vmem:[#allocation5 + $0xd8] sm:$0xff]
      %v4380 = vld [vmem:[#allocation5 + $0xe0] sm:$0xff]
      %v4381 = vld [vmem:[#allocation5 + $0xe8] sm:$0xff]
      %v4382 = vld [vmem:[#allocation5 + $0xf0] sm:$0xff]
      %v4383 = vld [vmem:[#allocation5 + $0xf8] sm:$0xff]
      %v4384 = vld [vmem:[#allocation5 + $0x100] sm:$0xff]
      %v4385 = vld [vmem:[#allocation5 + $0x108] sm:$0xff]
      %v4386 = vld [vmem:[#allocation5 + $0x110] sm:$0xff]
      %v4387 = vld [vmem:[#allocation5 + $0x118] sm:$0xff]
      %v4388 = vpack.c.bf16 %v4354, %v4352
      %v4389 = vpack.c.bf16 %v4355, %v4353
      %v4390 = vpack.c.bf16 %v4358, %v4356
      %v4391 = vpack.c.bf16 %v4359, %v4357
      %v4392 = vpack.c.bf16 %v4362, %v4360
      %v4393 = vpack.c.bf16 %v4363, %v4361
      %v4394 = vpack.c.bf16 %v4366, %v4364
      %v4395 = vpack.c.bf16 %v4367, %v4365
      %v4396 = vpack.c.bf16 %v4370, %v4368
      %v4397 = vpack.c.bf16 %v4371, %v4369
      %v4398 = vpack.c.bf16 %v4374, %v4372
      %v4399 = vpack.c.bf16 %v4375, %v4373
      %v4400 = vpack.c.bf16 %v4378, %v4376
      %v4401 = vpack.c.bf16 %v4379, %v4377
      %v4402 = vpack.c.bf16 %v4382, %v4380
      %v4403 = vpack.c.bf16 %v4383, %v4381
      %v4404 = vpack.c.bf16 %v4386, %v4384
      %v4405 = vpack.c.bf16 %v4387, %v4385
      %v4406 = vld [vmem:[%s3] sm:$0xf]
      %v4407 = vld [vmem:[%s3 + $0x4] sm:$0xf]
      %v4408 = vld [vmem:[%s3 + $0x8] sm:$0xf]
      %v4409 = vld [vmem:[%s3 + $0xc] sm:$0xf]
      %v4410 = vld [vmem:[%s3 + $0x10] sm:$0xf]
      %v4411 = vld [vmem:[%s3 + $0x14] sm:$0xf]
      %v4412 = vld [vmem:[%s3 + $0x18] sm:$0xf]
      %v4413 = vld [vmem:[%s3 + $0x1c] sm:$0xf]
      %v4414 = vld [vmem:[%s3 + $0x20] sm:$0xf]
      %v4415 = vld [vmem:[%s3 + $0x24] sm:$0xf]
      %v4416 = vld [vmem:[%s3 + $0x28] sm:$0xf]
      %v4417 = vld [vmem:[%s3 + $0x2c] sm:$0xf]
      %v4418 = vld [vmem:[%s3 + $0x30] sm:$0xf]
      %v4419 = vld [vmem:[%s3 + $0x34] sm:$0xf]
      %v4420 = vld [vmem:[%s3 + $0x38] sm:$0xf]
      %v4421 = vld [vmem:[%s3 + $0x3c] sm:$0xf]
      %v4422 = vld [vmem:[%s3 + $0x40] sm:$0xf]
      %v4423 = vld [vmem:[%s3 + $0x44] sm:$0xf]
      %v4424 = vld [vmem:[%s4] sm:$0x1]
      %v4426 = vlaneseq
      %v4427 = vshrl.u32 %v4426, 7
      %v4428 = vsub.s32 0, %v4427
      %v4429 = vrot.slane %v4424, %v4428
      %v4449 = vunpack.c.l.b16 %v4406
      %v4450 = vunpack.c.l.b16 %v4407
      %v4451 = vunpack.c.l.b16 %v4408
      %v4452 = vunpack.c.l.b16 %v4409
      %v4453 = vunpack.c.l.b16 %v4410
      %v4454 = vunpack.c.l.b16 %v4411
      %v4455 = vunpack.c.l.b16 %v4412
      %v4456 = vunpack.c.l.b16 %v4413
      %v4457 = vunpack.c.l.b16 %v4414
      %v4458 = vunpack.c.l.b16 %v4415
      %v4459 = vunpack.c.l.b16 %v4416
      %v4460 = vunpack.c.l.b16 %v4417
      %v4461 = vunpack.c.l.b16 %v4418
      %v4462 = vunpack.c.l.b16 %v4419
      %v4463 = vunpack.c.l.b16 %v4420
      %v4464 = vunpack.c.l.b16 %v4421
      %v4465 = vunpack.c.l.b16 %v4422
      %v4466 = vunpack.c.l.b16 %v4423
      %v4467 = vpack.c.b16 %v4450, %v4449
      %v4468 = vpack.c.b16 %v4452, %v4451
      %v4469 = vpack.c.b16 %v4454, %v4453
      %v4470 = vpack.c.b16 %v4456, %v4455
      %v4471 = vpack.c.b16 %v4458, %v4457
      %v4472 = vpack.c.b16 %v4460, %v4459
      %v4473 = vpack.c.b16 %v4462, %v4461
      %v4474 = vpack.c.b16 %v4464, %v4463
      %v4475 = vpack.c.b16 %v4466, %v4465
      %v4486 = vsel %vm3309, %v4389, 0
      %v4489 = vsel %vm3309, %v4391, 0
      %v4492 = vsel %vm3309, %v4393, 0
      %v4495 = vsel %vm3309, %v4395, 0
      %v4498 = vsel %vm3309, %v4397, 0
      %v4501 = vsel %vm3309, %v4399, 0
      %v4504 = vsel %vm3309, %v4401, 0
      %v4507 = vsel %vm3309, %v4403, 0
      %v4510 = vsel %vm3309, %v4405, 0
      %4512 = vmatprep.subr.bf16.mxu0 0
      %4513 = vmatpush1.bf16.msra.mxu0 %v4467
      %4514 = vmatprep.subr.bf16.mxu0 0
      %4515 = vmatpush1.bf16.msra.mxu0 %v4468
      %4516 = vmatprep.subr.bf16.mxu0 0
      %4517 = vmatpush1.bf16.msra.mxu0 %v4469
      %4518 = vmatprep.subr.bf16.mxu0 0
      %4519 = vmatpush1.bf16.msra.mxu0 %v4470
      %4520 = vmatprep.subr.bf16.mxu0 0
      %4521 = vmatpush1.bf16.msra.mxu0 %v4471
      %4522 = vmatprep.subr.bf16.mxu0 0
      %4523 = vmatpush1.bf16.msra.mxu0 %v4472
      %4524 = vmatprep.subr.bf16.mxu0 0
      %4525 = vmatpush1.bf16.msra.mxu0 %v4473
      %4526 = vmatprep.subr.bf16.mxu0 0
      %4527 = vmatpush1.bf16.msra.mxu0 %v4474
      %4528 = vmatprep.subr.bf16.mxu0 0
      %4529 = vmatpush1.bf16.msra.mxu0 %v4475
      %4530 = vmatprep.subr.bf16.mxu0 0
      %4531 = vmatpush1.bf16.msra.mxu0 0
      %4532 = vmatprep.subr.bf16.mxu0 0
      %4533 = vmatpush1.bf16.msra.mxu0 0
      %4534 = vmatprep.subr.bf16.mxu0 0
      %4535 = vmatpush1.bf16.msra.mxu0 0
      %4536 = vmatprep.subr.bf16.mxu0 0
      %4537 = vmatpush1.bf16.msra.mxu0 0
      %4538 = vmatprep.subr.bf16.mxu0 0
      %4539 = vmatpush1.bf16.msra.mxu0 0
      %4540 = vmatprep.subr.bf16.mxu0 0
      %4541 = vmatpush1.bf16.msra.mxu0 0
      %4542 = vmatprep.subr.bf16.mxu0 0
      %4543 = vmatpush1.bf16.msra.mxu0 0
      %4544 = vmatprep.mubr.bf16.mxu0 %v4486
      %4545 = vmatmul.mubr.bf16.gmra.mrb[0].mxu0 %v4388
      %v4546 = vpop.f32.mrb[0].mxu0
      %v4547 = vadd.f32 %v4429, %v4546
      %v4548 = vpop.f32.mrb[0].mxu0
      %v4549 = vpop.f32.mrb[0].mxu0
      %v4550 = vadd.f32 %v4429, %v4549
      %v4551 = vpop.f32.mrb[0].mxu0
      %4552 = vmatprep.mubr.bf16.mxu0 %v4489
      %4553 = vmatmul.mubr.bf16.gmra.mrb[0].mxu0 %v4390
      %v4554 = vpop.f32.mrb[0].mxu0
      %v4555 = vadd.f32 %v4429, %v4554
      %v4556 = vpop.f32.mrb[0].mxu0
      %v4557 = vpop.f32.mrb[0].mxu0
      %v4558 = vadd.f32 %v4429, %v4557
      %v4559 = vpop.f32.mrb[0].mxu0
      %4560 = vmatprep.mubr.bf16.mxu0 %v4492
      %4561 = vmatmul.mubr.bf16.gmra.mrb[0].mxu0 %v4392
      %v4562 = vpop.f32.mrb[0].mxu0
      %v4563 = vadd.f32 %v4429, %v4562
      %v4564 = vpop.f32.mrb[0].mxu0
      %v4565 = vpop.f32.mrb[0].mxu0
      %v4566 = vadd.f32 %v4429, %v4565
      %v4567 = vpop.f32.mrb[0].mxu0
      %4568 = vmatprep.mubr.bf16.mxu0 %v4495
      %4569 = vmatmul.mubr.bf16.gmra.mrb[0].mxu0 %v4394
      %v4570 = vpop.f32.mrb[0].mxu0
      %v4571 = vadd.f32 %v4429, %v4570
      %v4572 = vpop.f32.mrb[0].mxu0
      %v4573 = vpop.f32.mrb[0].mxu0
      %v4574 = vadd.f32 %v4429, %v4573
      %v4575 = vpop.f32.mrb[0].mxu0
      %4576 = vmatprep.mubr.bf16.mxu0 %v4498
      %4577 = vmatmul.mubr.bf16.gmra.mrb[0].mxu0 %v4396
      %v4578 = vpop.f32.mrb[0].mxu0
      %v4579 = vadd.f32 %v4429, %v4578
      %v4580 = vpop.f32.mrb[0].mxu0
      %v4581 = vpop.f32.mrb[0].mxu0
      %v4582 = vadd.f32 %v4429, %v4581
      %v4583 = vpop.f32.mrb[0].mxu0
      %4584 = vmatprep.mubr.bf16.mxu0 %v4501
      %4585 = vmatmul.mubr.bf16.gmra.mrb[0].mxu0 %v4398
      %v4586 = vpop.f32.mrb[0].mxu0
      %v4587 = vadd.f32 %v4429, %v4586
      %v4588 = vpop.f32.mrb[0].mxu0
      %v4589 = vpop.f32.mrb[0].mxu0
      %v4590 = vadd.f32 %v4429, %v4589
      %v4591 = vpop.f32.mrb[0].mxu0
      %4592 = vmatprep.mubr.bf16.mxu0 %v4504
      %4593 = vmatmul.mubr.bf16.gmra.mrb[0].mxu0 %v4400
      %v4594 = vpop.f32.mrb[0].mxu0
      %v4595 = vadd.f32 %v4429, %v4594
      %v4596 = vpop.f32.mrb[0].mxu0
      %v4597 = vpop.f32.mrb[0].mxu0
      %v4598 = vadd.f32 %v4429, %v4597
      %v4599 = vpop.f32.mrb[0].mxu0
      %4600 = vmatprep.mubr.bf16.mxu0 %v4507
      %4601 = vmatmul.mubr.bf16.gmra.mrb[0].mxu0 %v4402
      %v4602 = vpop.f32.mrb[0].mxu0
      %v4603 = vadd.f32 %v4429, %v4602
      %v4604 = vpop.f32.mrb[0].mxu0
      %v4605 = vpop.f32.mrb[0].mxu0
      %v4606 = vadd.f32 %v4429, %v4605
      %v4607 = vpop.f32.mrb[0].mxu0
      %4608 = vmatprep.mubr.bf16.mxu0 %v4510
      %4609 = vmatmul.mubr.bf16.gmra.mrb[0].mxu0 %v4404
      %v4610 = vpop.f32.mrb[0].mxu0
      %v4611 = vadd.f32 %v4429, %v4610
      %v4612 = vpop.f32.mrb[0].mxu0
      %v4613 = vpop.f32.mrb[0].mxu0
      %v4614 = vadd.f32 %v4429, %v4613
      %v4615 = vpop.f32.mrb[0].mxu0
      %4616 = vdwg.mxu0
      %v4617 = vmax.f32 %v4547, 0.0
      %v4618 = vmax.f32 %v4550, 0.0
      %v4619 = vmax.f32 %v4555, 0.0
      %v4620 = vmax.f32 %v4558, 0.0
      %v4621 = vmax.f32 %v4563, 0.0
      %v4622 = vmax.f32 %v4566, 0.0
      %v4623 = vmax.f32 %v4571, 0.0
      %v4624 = vmax.f32 %v4574, 0.0
      %v4625 = vmax.f32 %v4579, 0.0
      %v4626 = vmax.f32 %v4582, 0.0
      %v4627 = vmax.f32 %v4587, 0.0
      %v4628 = vmax.f32 %v4590, 0.0
      %v4629 = vmax.f32 %v4595, 0.0
      %v4630 = vmax.f32 %v4598, 0.0
      %v4631 = vmax.f32 %v4603, 0.0
      %v4632 = vmax.f32 %v4606, 0.0
      %v4633 = vmax.f32 %v4611, 0.0
      %v4634 = vmax.f32 %v4614, 0.0
      %vm4635 = vcmp.lt.s32.totalorder %v3129, 8
      %vm4636 = vcmp.lt.s32.totalorder %v3130, 8
      %vm4637 = vcmp.lt.s32.totalorder %v3131, 8
      %vm4638 = vcmp.lt.s32.totalorder %v3132, 8
      %vm4639 = vcmp.lt.s32.totalorder %v3133, 8
      %vm4640 = vcmp.lt.s32.totalorder %v3134, 8
      %vm4641 = vcmp.lt.s32.totalorder %v3135, 8
      %vm4642 = vcmp.lt.s32.totalorder %v3136, 8
      %vm4643 = vcmp.lt.s32.totalorder %v3137, 8
      %vm4644 = vcmp.lt.s32.totalorder %v3138, 8
      %vm4645 = vcmp.lt.s32.totalorder %v3139, 8
      %vm4646 = vcmp.lt.s32.totalorder %v3140, 8
      %vm4647 = vcmp.lt.s32.totalorder %v3141, 8
      %vm4648 = vcmp.lt.s32.totalorder %v3142, 8
      %vm4649 = vcmp.lt.s32.totalorder %v3143, 8
      %vm4650 = vcmp.lt.s32.totalorder %v3144, 8
      %vm4651 = vcmp.lt.s32.totalorder %v3145, 8
      %vm4652 = vcmp.lt.s32.totalorder %v3146, 8
      %v4653 = vsel %vm4635, 1, 0
      %v4654 = vsel %vm4636, 1, 0
      %v4655 = vsel %vm4637, 1, 0
      %v4656 = vsel %vm4638, 1, 0
      %v4657 = vsel %vm4639, 1, 0
      %v4658 = vsel %vm4640, 1, 0
      %v4659 = vsel %vm4641, 1, 0
      %v4660 = vsel %vm4642, 1, 0
      %v4661 = vsel %vm4643, 1, 0
      %v4662 = vsel %vm4644, 1, 0
      %v4663 = vsel %vm4645, 1, 0
      %v4664 = vsel %vm4646, 1, 0
      %v4665 = vsel %vm4647, 1, 0
      %v4666 = vsel %vm4648, 1, 0
      %v4667 = vsel %vm4649, 1, 0
      %v4668 = vsel %vm4650, 1, 0
      %v4669 = vsel %vm4651, 1, 0
      %v4670 = vsel %vm4652, 1, 0
      %vm4671 = vcmp.eq.s32.totalorder %v4653, 1
      %vm4672 = vcmp.eq.s32.totalorder %v4654, 1
      %vm4673 = vcmp.eq.s32.totalorder %v4655, 1
      %vm4674 = vcmp.eq.s32.totalorder %v4656, 1
      %vm4675 = vcmp.eq.s32.totalorder %v4657, 1
      %vm4676 = vcmp.eq.s32.totalorder %v4658, 1
      %vm4677 = vcmp.eq.s32.totalorder %v4659, 1
      %vm4678 = vcmp.eq.s32.totalorder %v4660, 1
      %vm4679 = vcmp.eq.s32.totalorder %v4661, 1
      %vm4680 = vcmp.eq.s32.totalorder %v4662, 1
      %vm4681 = vcmp.eq.s32.totalorder %v4663, 1
      %vm4682 = vcmp.eq.s32.totalorder %v4664, 1
      %vm4683 = vcmp.eq.s32.totalorder %v4665, 1
      %vm4684 = vcmp.eq.s32.totalorder %v4666, 1
      %vm4685 = vcmp.eq.s32.totalorder %v4667, 1
      %vm4686 = vcmp.eq.s32.totalorder %v4668, 1
      %vm4687 = vcmp.eq.s32.totalorder %v4669, 1
      %vm4688 = vcmp.eq.s32.totalorder %v4670, 1
      %v4689 = vsel %vm4671, %v4617, 0.0
      %v4690 = vsel %vm4672, %v4618, 0.0
      %v4691 = vsel %vm4673, %v4619, 0.0
      %v4692 = vsel %vm4674, %v4620, 0.0
      %v4693 = vsel %vm4675, %v4621, 0.0
      %v4694 = vsel %vm4676, %v4622, 0.0
      %v4695 = vsel %vm4677, %v4623, 0.0
      %v4696 = vsel %vm4678, %v4624, 0.0
      %v4697 = vsel %vm4679, %v4625, 0.0
      %v4698 = vsel %vm4680, %v4626, 0.0
      %v4699 = vsel %vm4681, %v4627, 0.0
      %v4700 = vsel %vm4682, %v4628, 0.0
      %v4701 = vsel %vm4683, %v4629, 0.0
      %v4702 = vsel %vm4684, %v4630, 0.0
      %v4703 = vsel %vm4685, %v4631, 0.0
      %v4704 = vsel %vm4686, %v4632, 0.0
      %v4705 = vsel %vm4687, %v4633, 0.0
      %v4706 = vsel %vm4688, %v4634, 0.0
      %v4707 = vpack.c.bf16 %v4690, %v4689
      %v4708 = vpack.c.bf16 %v4692, %v4691
      %v4709 = vpack.c.bf16 %v4694, %v4693
      %v4710 = vpack.c.bf16 %v4696, %v4695
      %v4711 = vpack.c.bf16 %v4698, %v4697
      %v4712 = vpack.c.bf16 %v4700, %v4699
      %v4713 = vpack.c.bf16 %v4702, %v4701
      %v4714 = vpack.c.bf16 %v4704, %v4703
      %v4715 = vpack.c.bf16 %v4706, %v4705
      %v4725 = vunpack.c.l.b16 %v4707
      %v4726 = vunpack.c.h.b16 %v4707
      %v4727 = vunpack.c.l.b16 %v4708
      %v4728 = vunpack.c.h.b16 %v4708
      %v4729 = vunpack.c.l.b16 %v4709
      %v4730 = vunpack.c.h.b16 %v4709
      %v4731 = vunpack.c.l.b16 %v4710
      %v4732 = vunpack.c.h.b16 %v4710
      %v4733 = vunpack.c.l.b16 %v4711
      %v4734 = vunpack.c.h.b16 %v4711
      %v4735 = vunpack.c.l.b16 %v4712
      %v4736 = vunpack.c.h.b16 %v4712
      %v4737 = vunpack.c.l.b16 %v4713
      %v4738 = vunpack.c.h.b16 %v4713
      %v4739 = vunpack.c.l.b16 %v4714
      %v4740 = vunpack.c.h.b16 %v4714
      %v4741 = vunpack.c.l.b16 %v4715
      %v4742 = vunpack.c.h.b16 %v4715
      %v4743 = vpack.c.b16 %v4725, %v4725
      %v4744 = vpack.c.b16 %v4726, %v4726
      %v4745 = vpack.c.b16 %v4727, %v4727
      %v4746 = vpack.c.b16 %v4728, %v4728
      %v4747 = vpack.c.b16 %v4729, %v4729
      %v4748 = vpack.c.b16 %v4730, %v4730
      %v4749 = vpack.c.b16 %v4731, %v4731
      %v4750 = vpack.c.b16 %v4732, %v4732
      %v4751 = vpack.c.b16 %v4733, %v4733
      %v4752 = vpack.c.b16 %v4734, %v4734
      %v4753 = vpack.c.b16 %v4735, %v4735
      %v4754 = vpack.c.b16 %v4736, %v4736
      %v4755 = vpack.c.b16 %v4737, %v4737
      %v4756 = vpack.c.b16 %v4738, %v4738
      %v4757 = vpack.c.b16 %v4739, %v4739
      %v4758 = vpack.c.b16 %v4740, %v4740
      %v4759 = vpack.c.b16 %v4741, %v4741
      %v4760 = vpack.c.b16 %v4742, %v4742
      %vm4779 = vcmask 257024
      %4780 = vst.msk [vmem:[%s367] sm:$0xf] %vm4779, %v4743
      %4781 = vst.msk [vmem:[%s367 + $0x4] sm:$0xf] %vm4779, %v4744
      %4782 = vst.msk [vmem:[%s367 + $0x8] sm:$0xf] %vm4779, %v4745
      %4783 = vst.msk [vmem:[%s367 + $0xc] sm:$0xf] %vm4779, %v4746
      %4784 = vst.msk [vmem:[%s367 + $0x10] sm:$0xf] %vm4779, %v4747
      %4785 = vst.msk [vmem:[%s367 + $0x14] sm:$0xf] %vm4779, %v4748
      %4786 = vst.msk [vmem:[%s367 + $0x18] sm:$0xf] %vm4779, %v4749
      %4787 = vst.msk [vmem:[%s367 + $0x1c] sm:$0xf] %vm4779, %v4750
      %4788 = vst.msk [vmem:[%s367 + $0x20] sm:$0xf] %vm4779, %v4751
      %4789 = vst.msk [vmem:[%s367 + $0x24] sm:$0xf] %vm4779, %v4752
      %4790 = vst.msk [vmem:[%s367 + $0x28] sm:$0xf] %vm4779, %v4753
      %4791 = vst.msk [vmem:[%s367 + $0x2c] sm:$0xf] %vm4779, %v4754
      %4792 = vst.msk [vmem:[%s367 + $0x30] sm:$0xf] %vm4779, %v4755
      %4793 = vst.msk [vmem:[%s367 + $0x34] sm:$0xf] %vm4779, %v4756
      %4794 = vst.msk [vmem:[%s367 + $0x38] sm:$0xf] %vm4779, %v4757
      %4795 = vst.msk [vmem:[%s367 + $0x3c] sm:$0xf] %vm4779, %v4758
      %4796 = vst.msk [vmem:[%s367 + $0x40] sm:$0xf] %vm4779, %v4759
      %4797 = vst.msk [vmem:[%s367 + $0x44] sm:$0xf] %vm4779, %v4760
      %vm4798 = vcmask 261120
      %4799 = vst.msk [vmem:[#allocation3] sm:$0xff] %vm4798, 0.0
      %4800 = vst.msk [vmem:[#allocation3 + $0x8] sm:$0xff] %vm4798, 0.0
      %4801 = vst.msk [vmem:[#allocation3 + $0x10] sm:$0xff] %vm4798, 0.0
      %4802 = vst.msk [vmem:[#allocation3 + $0x18] sm:$0xff] %vm4798, 0.0
      %4803 = vst.msk [vmem:[#allocation3 + $0x20] sm:$0xff] %vm4798, 0.0
      %4804 = vst.msk [vmem:[#allocation3 + $0x28] sm:$0xff] %vm4798, 0.0
      %4805 = vst.msk [vmem:[#allocation3 + $0x30] sm:$0xff] %vm4798, 0.0
      %4806 = vst.msk [vmem:[#allocation3 + $0x38] sm:$0xff] %vm4798, 0.0
      %4807 = vst.msk [vmem:[#allocation3 + $0x40] sm:$0xff] %vm4798, 0.0
      %4808 = vst.msk [vmem:[#allocation3 + $0x48] sm:$0xff] %vm4798, 0.0
      %4809 = vst.msk [vmem:[#allocation3 + $0x50] sm:$0xff] %vm4798, 0.0
      %4810 = vst.msk [vmem:[#allocation3 + $0x58] sm:$0xff] %vm4798, 0.0
      %4811 = vst.msk [vmem:[#allocation3 + $0x60] sm:$0xff] %vm4798, 0.0
      %4812 = vst.msk [vmem:[#allocation3 + $0x68] sm:$0xff] %vm4798, 0.0
      %4813 = vst.msk [vmem:[#allocation3 + $0x70] sm:$0xff] %vm4798, 0.0
      %4814 = vst.msk [vmem:[#allocation3 + $0x78] sm:$0xff] %vm4798, 0.0
      %4815 = vst.msk [vmem:[#allocation3 + $0x80] sm:$0xff] %vm4798, 0.0
      %4816 = vst.msk [vmem:[#allocation3 + $0x88] sm:$0xff] %vm4798, 0.0
      %4817 = vst.msk [vmem:[#allocation3 + $0x90] sm:$0xff] %vm4798, 0.0
      %4818 = vst.msk [vmem:[#allocation3 + $0x98] sm:$0xff] %vm4798, 0.0
      %4819 = vst.msk [vmem:[#allocation3 + $0xa0] sm:$0xff] %vm4798, 0.0
      %4820 = vst.msk [vmem:[#allocation3 + $0xa8] sm:$0xff] %vm4798, 0.0
      %4821 = vst.msk [vmem:[#allocation3 + $0xb0] sm:$0xff] %vm4798, 0.0
      %4822 = vst.msk [vmem:[#allocation3 + $0xb8] sm:$0xff] %vm4798, 0.0
      %4823 = vst.msk [vmem:[#allocation3 + $0xc0] sm:$0xff] %vm4798, 0.0
      %4824 = vst.msk [vmem:[#allocation3 + $0xc8] sm:$0xff] %vm4798, 0.0
      %4825 = vst.msk [vmem:[#allocation3 + $0xd0] sm:$0xff] %vm4798, 0.0
      %4826 = vst.msk [vmem:[#allocation3 + $0xd8] sm:$0xff] %vm4798, 0.0
      %4827 = vst.msk [vmem:[#allocation3 + $0xe0] sm:$0xff] %vm4798, 0.0
      %4828 = vst.msk [vmem:[#allocation3 + $0xe8] sm:$0xff] %vm4798, 0.0
      %4829 = vst.msk [vmem:[#allocation3 + $0xf0] sm:$0xff] %vm4798, 0.0
      %4830 = vst.msk [vmem:[#allocation3 + $0xf8] sm:$0xff] %vm4798, 0.0
      %4831 = vst.msk [vmem:[#allocation3 + $0x100] sm:$0xff] %vm4798, 0.0
      %4832 = vst.msk [vmem:[#allocation3 + $0x108] sm:$0xff] %vm4798, 0.0
      %4833 = vst.msk [vmem:[#allocation3 + $0x110] sm:$0xff] %vm4798, 0.0
      %4834 = vst.msk [vmem:[#allocation3 + $0x118] sm:$0xff] %vm4798, 0.0
      %4835 = vst.msk [vmem:[#allocation3 + $0x120] sm:$0xff] %vm4798, 0.0
      %4836 = vst.msk [vmem:[#allocation3 + $0x128] sm:$0xff] %vm4798, 0.0
      %4837 = vst.msk [vmem:[#allocation3 + $0x130] sm:$0xff] %vm4798, 0.0
      %4838 = vst.msk [vmem:[#allocation3 + $0x138] sm:$0xff] %vm4798, 0.0
      %4839 = vst.msk [vmem:[#allocation3 + $0x140] sm:$0xff] %vm4798, 0.0
      %4840 = vst.msk [vmem:[#allocation3 + $0x148] sm:$0xff] %vm4798, 0.0
      %vm4841 = vcmask 259072
      %4842 = vst.msk [vmem:[#allocation3 + $0x150] sm:$0x3f] %vm4841, 0.0
      %4843 = vst.msk [vmem:[#allocation3 + $0x13] sm:$0xff] %vm4798, %v4689
      %4844 = vst.msk [vmem:[#allocation3 + $0x1b] sm:$0xff] %vm4798, %v4690
      %4845 = vst.msk [vmem:[#allocation3 + $0x23] sm:$0xff] %vm4798, %v4691
      %4846 = vst.msk [vmem:[#allocation3 + $0x2b] sm:$0xff] %vm4798, %v4692
      %4847 = vst.msk [vmem:[#allocation3 + $0x33] sm:$0xff] %vm4798, %v4693
      %4848 = vst.msk [vmem:[#allocation3 + $0x3b] sm:$0xff] %vm4798, %v4694
      %4849 = vst.msk [vmem:[#allocation3 + $0x43] sm:$0xff] %vm4798, %v4695
      %4850 = vst.msk [vmem:[#allocation3 + $0x4b] sm:$0xff] %vm4798, %v4696
      %4851 = vst.msk [vmem:[#allocation3 + $0x53] sm:$0xff] %vm4798, %v4697
      %4852 = vst.msk [vmem:[#allocation3 + $0x5b] sm:$0xff] %vm4798, %v4698
      %4853 = vst.msk [vmem:[#allocation3 + $0x63] sm:$0xff] %vm4798, %v4699
      %4854 = vst.msk [vmem:[#allocation3 + $0x6b] sm:$0xff] %vm4798, %v4700
      %4855 = vst.msk [vmem:[#allocation3 + $0x73] sm:$0xff] %vm4798, %v4701
      %4856 = vst.msk [vmem:[#allocation3 + $0x7b] sm:$0xff] %vm4798, %v4702
      %4857 = vst.msk [vmem:[#allocation3 + $0x83] sm:$0xff] %vm4798, %v4703
      %4858 = vst.msk [vmem:[#allocation3 + $0x8b] sm:$0xff] %vm4798, %v4704
      %4859 = vst.msk [vmem:[#allocation3 + $0x93] sm:$0xff] %vm4798, %v4705
      %4860 = vst.msk [vmem:[#allocation3 + $0x9b] sm:$0xff] %vm4798, %v4706
      %v4861 = vld [vmem:[#allocation3] sm:$0xff]
      %v4862 = vld [vmem:[#allocation3 + $0x8] sm:$0xff]
      %v4863 = vld [vmem:[#allocation3 + $0x10] sm:$0xff]
      %v4864 = vld [vmem:[#allocation3 + $0x18] sm:$0xff]
      %v4865 = vld [vmem:[#allocation3 + $0x20] sm:$0xff]
      %v4866 = vld [vmem:[#allocation3 + $0x28] sm:$0xff]
      %v4867 = vld [vmem:[#allocation3 + $0x30] sm:$0xff]
      %v4868 = vld [vmem:[#allocation3 + $0x38] sm:$0xff]
      %v4869 = vld [vmem:[#allocation3 + $0x40] sm:$0xff]
      %v4870 = vld [vmem:[#allocation3 + $0x48] sm:$0xff]
      %v4871 = vld [vmem:[#allocation3 + $0x50] sm:$0xff]
      %v4872 = vld [vmem:[#allocation3 + $0x58] sm:$0xff]
      %v4873 = vld [vmem:[#allocation3 + $0x60] sm:$0xff]
      %v4874 = vld [vmem:[#allocation3 + $0x68] sm:$0xff]
      %v4875 = vld [vmem:[#allocation3 + $0x70] sm:$0xff]
      %v4876 = vld [vmem:[#allocation3 + $0x78] sm:$0xff]
      %v4877 = vld [vmem:[#allocation3 + $0x80] sm:$0xff]
      %v4878 = vld [vmem:[#allocation3 + $0x88] sm:$0xff]
      %4879 = vst.msk [vmem:[#allocation6] sm:$0xff] %vm4798, %v4861
      %4880 = vst.msk [vmem:[#allocation6 + $0x18] sm:$0xff] %vm4798, %v4862
      %4881 = vst.msk [vmem:[#allocation6 + $0x30] sm:$0xff] %vm4798, %v4863
      %4882 = vst.msk [vmem:[#allocation6 + $0x48] sm:$0xff] %vm4798, %v4864
      %4883 = vst.msk [vmem:[#allocation6 + $0x60] sm:$0xff] %vm4798, %v4865
      %4884 = vst.msk [vmem:[#allocation6 + $0x78] sm:$0xff] %vm4798, %v4866
      %4885 = vst.msk [vmem:[#allocation6 + $0x90] sm:$0xff] %vm4798, %v4867
      %4886 = vst.msk [vmem:[#allocation6 + $0xa8] sm:$0xff] %vm4798, %v4868
      %4887 = vst.msk [vmem:[#allocation6 + $0xc0] sm:$0xff] %vm4798, %v4869
      %4888 = vst.msk [vmem:[#allocation6 + $0xd8] sm:$0xff] %vm4798, %v4870
      %4889 = vst.msk [vmem:[#allocation6 + $0xf0] sm:$0xff] %vm4798, %v4871
      %4890 = vst.msk [vmem:[#allocation6 + $0x108] sm:$0xff] %vm4798, %v4872
      %4891 = vst.msk [vmem:[#allocation6 + $0x120] sm:$0xff] %vm4798, %v4873
      %4892 = vst.msk [vmem:[#allocation6 + $0x138] sm:$0xff] %vm4798, %v4874
      %4893 = vst.msk [vmem:[#allocation6 + $0x150] sm:$0xff] %vm4798, %v4875
      %4894 = vst.msk [vmem:[#allocation6 + $0x168] sm:$0xff] %vm4798, %v4876
      %4895 = vst.msk [vmem:[#allocation6 + $0x180] sm:$0xff] %vm4798, %v4877
      %4896 = vst.msk [vmem:[#allocation6 + $0x198] sm:$0xff] %vm4798, %v4878
      %v4897 = vld [vmem:[#allocation3 + $0x1] sm:$0xff]
      %v4898 = vld [vmem:[#allocation3 + $0x9] sm:$0xff]
      %v4899 = vld [vmem:[#allocation3 + $0x11] sm:$0xff]
      %v4900 = vld [vmem:[#allocation3 + $0x19] sm:$0xff]
      %v4901 = vld [vmem:[#allocation3 + $0x21] sm:$0xff]
      %v4902 = vld [vmem:[#allocation3 + $0x29] sm:$0xff]
      %v4903 = vld [vmem:[#allocation3 + $0x31] sm:$0xff]
      %v4904 = vld [vmem:[#allocation3 + $0x39] sm:$0xff]
      %v4905 = vld [vmem:[#allocation3 + $0x41] sm:$0xff]
      %v4906 = vld [vmem:[#allocation3 + $0x49] sm:$0xff]
      %v4907 = vld [vmem:[#allocation3 + $0x51] sm:$0xff]
      %v4908 = vld [vmem:[#allocation3 + $0x59] sm:$0xff]
      %v4909 = vld [vmem:[#allocation3 + $0x61] sm:$0xff]
      %v4910 = vld [vmem:[#allocation3 + $0x69] sm:$0xff]
      %v4911 = vld [vmem:[#allocation3 + $0x71] sm:$0xff]
      %v4912 = vld [vmem:[#allocation3 + $0x79] sm:$0xff]
      %v4913 = vld [vmem:[#allocation3 + $0x81] sm:$0xff]
      %v4914 = vld [vmem:[#allocation3 + $0x89] sm:$0xff]
      %4933 = vrot.lane.b32.xlu0 %v4897, 32
      %v4934 = vpop.permute.xlu0 %4933
      %4935 = vrot.lane.b32.xlu0 %v4898, 32
      %v4936 = vpop.permute.xlu0 %4935
      %4937 = vrot.lane.b32.xlu0 %v4899, 32
      %v4938 = vpop.permute.xlu0 %4937
      %4939 = vrot.lane.b32.xlu0 %v4900, 32
      %v4940 = vpop.permute.xlu0 %4939
      %4941 = vrot.lane.b32.xlu0 %v4901, 32
      %v4942 = vpop.permute.xlu0 %4941
      %4943 = vrot.lane.b32.xlu0 %v4902, 32
      %v4944 = vpop.permute.xlu0 %4943
      %4945 = vrot.lane.b32.xlu0 %v4903, 32
      %v4946 = vpop.permute.xlu0 %4945
      %4947 = vrot.lane.b32.xlu0 %v4904, 32
      %v4948 = vpop.permute.xlu0 %4947
      %4949 = vrot.lane.b32.xlu0 %v4905, 32
      %v4950 = vpop.permute.xlu0 %4949
      %4951 = vrot.lane.b32.xlu0 %v4906, 32
      %v4952 = vpop.permute.xlu0 %4951
      %4953 = vrot.lane.b32.xlu0 %v4907, 32
      %v4954 = vpop.permute.xlu0 %4953
      %4955 = vrot.lane.b32.xlu0 %v4908, 32
      %v4956 = vpop.permute.xlu0 %4955
      %4957 = vrot.lane.b32.xlu0 %v4909, 32
      %v4958 = vpop.permute.xlu0 %4957
      %4959 = vrot.lane.b32.xlu0 %v4910, 32
      %v4960 = vpop.permute.xlu0 %4959
      %4961 = vrot.lane.b32.xlu0 %v4911, 32
      %v4962 = vpop.permute.xlu0 %4961
      %4963 = vrot.lane.b32.xlu0 %v4912, 32
      %v4964 = vpop.permute.xlu0 %4963
      %4965 = vrot.lane.b32.xlu0 %v4913, 32
      %v4966 = vpop.permute.xlu0 %4965
      %4967 = vrot.lane.b32.xlu0 %v4914, 32
      %v4968 = vpop.permute.xlu0 %4967
      %vm4987 = vcmask 523520
      %4988 = vst.msk [vmem:[#allocation6] sm:$0xff] %vm4987, %v4934
      %4989 = vst.msk [vmem:[#allocation6 + $0x18] sm:$0xff] %vm4987, %v4936
      %4990 = vst.msk [vmem:[#allocation6 + $0x30] sm:$0xff] %vm4987, %v4938
      %4991 = vst.msk [vmem:[#allocation6 + $0x48] sm:$0xff] %vm4987, %v4940
      %4992 = vst.msk [vmem:[#allocation6 + $0x60] sm:$0xff] %vm4987, %v4942
      %4993 = vst.msk [vmem:[#allocation6 + $0x78] sm:$0xff] %vm4987, %v4944
      %4994 = vst.msk [vmem:[#allocation6 + $0x90] sm:$0xff] %vm4987, %v4946
      %4995 = vst.msk [vmem:[#allocation6 + $0xa8] sm:$0xff] %vm4987, %v4948
      %4996 = vst.msk [vmem:[#allocation6 + $0xc0] sm:$0xff] %vm4987, %v4950
      %4997 = vst.msk [vmem:[#allocation6 + $0xd8] sm:$0xff] %vm4987, %v4952
      %4998 = vst.msk [vmem:[#allocation6 + $0xf0] sm:$0xff] %vm4987, %v4954
      %4999 = vst.msk [vmem:[#allocation6 + $0x108] sm:$0xff] %vm4987, %v4956
      %5000 = vst.msk [vmem:[#allocation6 + $0x120] sm:$0xff] %vm4987, %v4958
      %5001 = vst.msk [vmem:[#allocation6 + $0x138] sm:$0xff] %vm4987, %v4960
      %5002 = vst.msk [vmem:[#allocation6 + $0x150] sm:$0xff] %vm4987, %v4962
      %5003 = vst.msk [vmem:[#allocation6 + $0x168] sm:$0xff] %vm4987, %v4964
      %5004 = vst.msk [vmem:[#allocation6 + $0x180] sm:$0xff] %vm4987, %v4966
      %5005 = vst.msk [vmem:[#allocation6 + $0x198] sm:$0xff] %vm4987, %v4968
      %v5006 = vld [vmem:[#allocation3 + $0x2] sm:$0xff]
      %v5007 = vld [vmem:[#allocation3 + $0xa] sm:$0xff]
      %v5008 = vld [vmem:[#allocation3 + $0x12] sm:$0xff]
      %v5009 = vld [vmem:[#allocation3 + $0x1a] sm:$0xff]
      %v5010 = vld [vmem:[#allocation3 + $0x22] sm:$0xff]
      %v5011 = vld [vmem:[#allocation3 + $0x2a] sm:$0xff]
      %v5012 = vld [vmem:[#allocation3 + $0x32] sm:$0xff]
      %v5013 = vld [vmem:[#allocation3 + $0x3a] sm:$0xff]
      %v5014 = vld [vmem:[#allocation3 + $0x42] sm:$0xff]
      %v5015 = vld [vmem:[#allocation3 + $0x4a] sm:$0xff]
      %v5016 = vld [vmem:[#allocation3 + $0x52] sm:$0xff]
      %v5017 = vld [vmem:[#allocation3 + $0x5a] sm:$0xff]
      %v5018 = vld [vmem:[#allocation3 + $0x62] sm:$0xff]
      %v5019 = vld [vmem:[#allocation3 + $0x6a] sm:$0xff]
      %v5020 = vld [vmem:[#allocation3 + $0x72] sm:$0xff]
      %v5021 = vld [vmem:[#allocation3 + $0x7a] sm:$0xff]
      %v5022 = vld [vmem:[#allocation3 + $0x82] sm:$0xff]
      %v5023 = vld [vmem:[#allocation3 + $0x8a] sm:$0xff]
      %5042 = vrot.lane.b32.xlu0 %v5006, 64
      %v5043 = vpop.permute.xlu0 %5042
      %5044 = vrot.lane.b32.xlu0 %v5007, 64
      %v5045 = vpop.permute.xlu0 %5044
      %5046 = vrot.lane.b32.xlu0 %v5008, 64
      %v5047 = vpop.permute.xlu0 %5046
      %5048 = vrot.lane.b32.xlu0 %v5009, 64
      %v5049 = vpop.permute.xlu0 %5048
      %5050 = vrot.lane.b32.xlu0 %v5010, 64
      %v5051 = vpop.permute.xlu0 %5050
      %5052 = vrot.lane.b32.xlu0 %v5011, 64
      %v5053 = vpop.permute.xlu0 %5052
      %5054 = vrot.lane.b32.xlu0 %v5012, 64
      %v5055 = vpop.permute.xlu0 %5054
      %5056 = vrot.lane.b32.xlu0 %v5013, 64
      %v5057 = vpop.permute.xlu0 %5056
      %5058 = vrot.lane.b32.xlu0 %v5014, 64
      %v5059 = vpop.permute.xlu0 %5058
      %5060 = vrot.lane.b32.xlu0 %v5015, 64
      %v5061 = vpop.permute.xlu0 %5060
      %5062 = vrot.lane.b32.xlu0 %v5016, 64
      %v5063 = vpop.permute.xlu0 %5062
      %5064 = vrot.lane.b32.xlu0 %v5017, 64
      %v5065 = vpop.permute.xlu0 %5064
      %5066 = vrot.lane.b32.xlu0 %v5018, 64
      %v5067 = vpop.permute.xlu0 %5066
      %5068 = vrot.lane.b32.xlu0 %v5019, 64
      %v5069 = vpop.permute.xlu0 %5068
      %5070 = vrot.lane.b32.xlu0 %v5020, 64
      %v5071 = vpop.permute.xlu0 %5070
      %5072 = vrot.lane.b32.xlu0 %v5021, 64
      %v5073 = vpop.permute.xlu0 %5072
      %5074 = vrot.lane.b32.xlu0 %v5022, 64
      %v5075 = vpop.permute.xlu0 %5074
      %5076 = vrot.lane.b32.xlu0 %v5023, 64
      %v5077 = vpop.permute.xlu0 %5076
      %vm5096 = vcmask 785920
      %5097 = vst.msk [vmem:[#allocation6] sm:$0xff] %vm5096, %v5043
      %5098 = vst.msk [vmem:[#allocation6 + $0x18] sm:$0xff] %vm5096, %v5045
      %5099 = vst.msk [vmem:[#allocation6 + $0x30] sm:$0xff] %vm5096, %v5047
      %5100 = vst.msk [vmem:[#allocation6 + $0x48] sm:$0xff] %vm5096, %v5049
      %5101 = vst.msk [vmem:[#allocation6 + $0x60] sm:$0xff] %vm5096, %v5051
      %5102 = vst.msk [vmem:[#allocation6 + $0x78] sm:$0xff] %vm5096, %v5053
      %5103 = vst.msk [vmem:[#allocation6 + $0x90] sm:$0xff] %vm5096, %v5055
      %5104 = vst.msk [vmem:[#allocation6 + $0xa8] sm:$0xff] %vm5096, %v5057
      %5105 = vst.msk [vmem:[#allocation6 + $0xc0] sm:$0xff] %vm5096, %v5059
      %5106 = vst.msk [vmem:[#allocation6 + $0xd8] sm:$0xff] %vm5096, %v5061
      %5107 = vst.msk [vmem:[#allocation6 + $0xf0] sm:$0xff] %vm5096, %v5063
      %5108 = vst.msk [vmem:[#allocation6 + $0x108] sm:$0xff] %vm5096, %v5065
      %5109 = vst.msk [vmem:[#allocation6 + $0x120] sm:$0xff] %vm5096, %v5067
      %5110 = vst.msk [vmem:[#allocation6 + $0x138] sm:$0xff] %vm5096, %v5069
      %5111 = vst.msk [vmem:[#allocation6 + $0x150] sm:$0xff] %vm5096, %v5071
      %5112 = vst.msk [vmem:[#allocation6 + $0x168] sm:$0xff] %vm5096, %v5073
      %5113 = vst.msk [vmem:[#allocation6 + $0x180] sm:$0xff] %vm5096, %v5075
      %5114 = vst.msk [vmem:[#allocation6 + $0x198] sm:$0xff] %vm5096, %v5077
      %v5115 = vld [vmem:[#allocation3 + $0x12] sm:$0xff]
      %v5116 = vld [vmem:[#allocation3 + $0x1a] sm:$0xff]
      %v5117 = vld [vmem:[#allocation3 + $0x22] sm:$0xff]
      %v5118 = vld [vmem:[#allocation3 + $0x2a] sm:$0xff]
      %v5119 = vld [vmem:[#allocation3 + $0x32] sm:$0xff]
      %v5120 = vld [vmem:[#allocation3 + $0x3a] sm:$0xff]
      %v5121 = vld [vmem:[#allocation3 + $0x42] sm:$0xff]
      %v5122 = vld [vmem:[#allocation3 + $0x4a] sm:$0xff]
      %v5123 = vld [vmem:[#allocation3 + $0x52] sm:$0xff]
      %v5124 = vld [vmem:[#allocation3 + $0x5a] sm:$0xff]
      %v5125 = vld [vmem:[#allocation3 + $0x62] sm:$0xff]
      %v5126 = vld [vmem:[#allocation3 + $0x6a] sm:$0xff]
      %v5127 = vld [vmem:[#allocation3 + $0x72] sm:$0xff]
      %v5128 = vld [vmem:[#allocation3 + $0x7a] sm:$0xff]
      %v5129 = vld [vmem:[#allocation3 + $0x82] sm:$0xff]
      %v5130 = vld [vmem:[#allocation3 + $0x8a] sm:$0xff]
      %v5131 = vld [vmem:[#allocation3 + $0x92] sm:$0xff]
      %v5132 = vld [vmem:[#allocation3 + $0x9a] sm:$0xff]
      %5151 = vrot.lane.b32.xlu0 %v5115, 96
      %v5152 = vpop.permute.xlu0 %5151
      %5153 = vrot.lane.b32.xlu0 %v5116, 96
      %v5154 = vpop.permute.xlu0 %5153
      %5155 = vrot.lane.b32.xlu0 %v5117, 96
      %v5156 = vpop.permute.xlu0 %5155
      %5157 = vrot.lane.b32.xlu0 %v5118, 96
      %v5158 = vpop.permute.xlu0 %5157
      %5159 = vrot.lane.b32.xlu0 %v5119, 96
      %v5160 = vpop.permute.xlu0 %5159
      %5161 = vrot.lane.b32.xlu0 %v5120, 96
      %v5162 = vpop.permute.xlu0 %5161
      %5163 = vrot.lane.b32.xlu0 %v5121, 96
      %v5164 = vpop.permute.xlu0 %5163
      %5165 = vrot.lane.b32.xlu0 %v5122, 96
      %v5166 = vpop.permute.xlu0 %5165
      %5167 = vrot.lane.b32.xlu0 %v5123, 96
      %v5168 = vpop.permute.xlu0 %5167
      %5169 = vrot.lane.b32.xlu0 %v5124, 96
      %v5170 = vpop.permute.xlu0 %5169
      %5171 = vrot.lane.b32.xlu0 %v5125, 96
      %v5172 = vpop.permute.xlu0 %5171
      %5173 = vrot.lane.b32.xlu0 %v5126, 96
      %v5174 = vpop.permute.xlu0 %5173
      %5175 = vrot.lane.b32.xlu0 %v5127, 96
      %v5176 = vpop.permute.xlu0 %5175
      %5177 = vrot.lane.b32.xlu0 %v5128, 96
      %v5178 = vpop.permute.xlu0 %5177
      %5179 = vrot.lane.b32.xlu0 %v5129, 96
      %v5180 = vpop.permute.xlu0 %5179
      %5181 = vrot.lane.b32.xlu0 %v5130, 96
      %v5182 = vpop.permute.xlu0 %5181
      %5183 = vrot.lane.b32.xlu0 %v5131, 96
      %v5184 = vpop.permute.xlu0 %5183
      %5185 = vrot.lane.b32.xlu0 %v5132, 96
      %v5186 = vpop.permute.xlu0 %5185
      %vm5205 = vcmask 1048320
      %5206 = vst.msk [vmem:[#allocation6] sm:$0xff] %vm5205, %v5152
      %5207 = vst.msk [vmem:[#allocation6 + $0x18] sm:$0xff] %vm5205, %v5154
      %5208 = vst.msk [vmem:[#allocation6 + $0x30] sm:$0xff] %vm5205, %v5156
      %5209 = vst.msk [vmem:[#allocation6 + $0x48] sm:$0xff] %vm5205, %v5158
      %5210 = vst.msk [vmem:[#allocation6 + $0x60] sm:$0xff] %vm5205, %v5160
      %5211 = vst.msk [vmem:[#allocation6 + $0x78] sm:$0xff] %vm5205, %v5162
      %5212 = vst.msk [vmem:[#allocation6 + $0x90] sm:$0xff] %vm5205, %v5164
      %5213 = vst.msk [vmem:[#allocation6 + $0xa8] sm:$0xff] %vm5205, %v5166
      %5214 = vst.msk [vmem:[#allocation6 + $0xc0] sm:$0xff] %vm5205, %v5168
      %5215 = vst.msk [vmem:[#allocation6 + $0xd8] sm:$0xff] %vm5205, %v5170
      %5216 = vst.msk [vmem:[#allocation6 + $0xf0] sm:$0xff] %vm5205, %v5172
      %5217 = vst.msk [vmem:[#allocation6 + $0x108] sm:$0xff] %vm5205, %v5174
      %5218 = vst.msk [vmem:[#allocation6 + $0x120] sm:$0xff] %vm5205, %v5176
      %5219 = vst.msk [vmem:[#allocation6 + $0x138] sm:$0xff] %vm5205, %v5178
      %5220 = vst.msk [vmem:[#allocation6 + $0x150] sm:$0xff] %vm5205, %v5180
      %5221 = vst.msk [vmem:[#allocation6 + $0x168] sm:$0xff] %vm5205, %v5182
      %5222 = vst.msk [vmem:[#allocation6 + $0x180] sm:$0xff] %vm5205, %v5184
      %5223 = vst.msk [vmem:[#allocation6 + $0x198] sm:$0xff] %vm5205, %v5186
      %v5224 = vld [vmem:[#allocation3 + $0x13] sm:$0xff]
      %v5225 = vld [vmem:[#allocation3 + $0x1b] sm:$0xff]
      %v5226 = vld [vmem:[#allocation3 + $0x23] sm:$0xff]
      %v5227 = vld [vmem:[#allocation3 + $0x2b] sm:$0xff]
      %v5228 = vld [vmem:[#allocation3 + $0x33] sm:$0xff]
      %v5229 = vld [vmem:[#allocation3 + $0x3b] sm:$0xff]
      %v5230 = vld [vmem:[#allocation3 + $0x43] sm:$0xff]
      %v5231 = vld [vmem:[#allocation3 + $0x4b] sm:$0xff]
      %v5232 = vld [vmem:[#allocation3 + $0x53] sm:$0xff]
      %v5233 = vld [vmem:[#allocation3 + $0x5b] sm:$0xff]
      %v5234 = vld [vmem:[#allocation3 + $0x63] sm:$0xff]
      %v5235 = vld [vmem:[#allocation3 + $0x6b] sm:$0xff]
      %v5236 = vld [vmem:[#allocation3 + $0x73] sm:$0xff]
      %v5237 = vld [vmem:[#allocation3 + $0x7b] sm:$0xff]
      %v5238 = vld [vmem:[#allocation3 + $0x83] sm:$0xff]
      %v5239 = vld [vmem:[#allocation3 + $0x8b] sm:$0xff]
      %v5240 = vld [vmem:[#allocation3 + $0x93] sm:$0xff]
      %v5241 = vld [vmem:[#allocation3 + $0x9b] sm:$0xff]
      %5242 = vst.msk [vmem:[#allocation6 + $0x8] sm:$0xff] %vm4798, %v5224
      %5243 = vst.msk [vmem:[#allocation6 + $0x20] sm:$0xff] %vm4798, %v5225
      %5244 = vst.msk [vmem:[#allocation6 + $0x38] sm:$0xff] %vm4798, %v5226
      %5245 = vst.msk [vmem:[#allocation6 + $0x50] sm:$0xff] %vm4798, %v5227
      %5246 = vst.msk [vmem:[#allocation6 + $0x68] sm:$0xff] %vm4798, %v5228
      %5247 = vst.msk [vmem:[#allocation6 + $0x80] sm:$0xff] %vm4798, %v5229
      %5248 = vst.msk [vmem:[#allocation6 + $0x98] sm:$0xff] %vm4798, %v5230
      %5249 = vst.msk [vmem:[#allocation6 + $0xb0] sm:$0xff] %vm4798, %v5231
      %5250 = vst.msk [vmem:[#allocation6 + $0xc8] sm:$0xff] %vm4798, %v5232
      %5251 = vst.msk [vmem:[#allocation6 + $0xe0] sm:$0xff] %vm4798, %v5233
      %5252 = vst.msk [vmem:[#allocation6 + $0xf8] sm:$0xff] %vm4798, %v5234
      %5253 = vst.msk [vmem:[#allocation6 + $0x110] sm:$0xff] %vm4798, %v5235
      %5254 = vst.msk [vmem:[#allocation6 + $0x128] sm:$0xff] %vm4798, %v5236
      %5255 = vst.msk [vmem:[#allocation6 + $0x140] sm:$0xff] %vm4798, %v5237
      %5256 = vst.msk [vmem:[#allocation6 + $0x158] sm:$0xff] %vm4798, %v5238
      %5257 = vst.msk [vmem:[#allocation6 + $0x170] sm:$0xff] %vm4798, %v5239
      %5258 = vst.msk [vmem:[#allocation6 + $0x188] sm:$0xff] %vm4798, %v5240
      %5259 = vst.msk [vmem:[#allocation6 + $0x1a0] sm:$0xff] %vm4798, %v5241
      %v5260 = vld [vmem:[#allocation3 + $0x14] sm:$0xff]
      %v5261 = vld [vmem:[#allocation3 + $0x1c] sm:$0xff]
      %v5262 = vld [vmem:[#allocation3 + $0x24] sm:$0xff]
      %v5263 = vld [vmem:[#allocation3 + $0x2c] sm:$0xff]
      %v5264 = vld [vmem:[#allocation3 + $0x34] sm:$0xff]
      %v5265 = vld [vmem:[#allocation3 + $0x3c] sm:$0xff]
      %v5266 = vld [vmem:[#allocation3 + $0x44] sm:$0xff]
      %v5267 = vld [vmem:[#allocation3 + $0x4c] sm:$0xff]
      %v5268 = vld [vmem:[#allocation3 + $0x54] sm:$0xff]
      %v5269 = vld [vmem:[#allocation3 + $0x5c] sm:$0xff]
      %v5270 = vld [vmem:[#allocation3 + $0x64] sm:$0xff]
      %v5271 = vld [vmem:[#allocation3 + $0x6c] sm:$0xff]
      %v5272 = vld [vmem:[#allocation3 + $0x74] sm:$0xff]
      %v5273 = vld [vmem:[#allocation3 + $0x7c] sm:$0xff]
      %v5274 = vld [vmem:[#allocation3 + $0x84] sm:$0xff]
      %v5275 = vld [vmem:[#allocation3 + $0x8c] sm:$0xff]
      %v5276 = vld [vmem:[#allocation3 + $0x94] sm:$0xff]
      %v5277 = vld [vmem:[#allocation3 + $0x9c] sm:$0xff]
      %5296 = vrot.lane.b32.xlu0 %v5260, 32
      %v5297 = vpop.permute.xlu0 %5296
      %5298 = vrot.lane.b32.xlu0 %v5261, 32
      %v5299 = vpop.permute.xlu0 %5298
      %5300 = vrot.lane.b32.xlu0 %v5262, 32
      %v5301 = vpop.permute.xlu0 %5300
      %5302 = vrot.lane.b32.xlu0 %v5263, 32
      %v5303 = vpop.permute.xlu0 %5302
      %5304 = vrot.lane.b32.xlu0 %v5264, 32
      %v5305 = vpop.permute.xlu0 %5304
      %5306 = vrot.lane.b32.xlu0 %v5265, 32
      %v5307 = vpop.permute.xlu0 %5306
      %5308 = vrot.lane.b32.xlu0 %v5266, 32
      %v5309 = vpop.permute.xlu0 %5308
      %5310 = vrot.lane.b32.xlu0 %v5267, 32
      %v5311 = vpop.permute.xlu0 %5310
      %5312 = vrot.lane.b32.xlu0 %v5268, 32
      %v5313 = vpop.permute.xlu0 %5312
      %5314 = vrot.lane.b32.xlu0 %v5269, 32
      %v5315 = vpop.permute.xlu0 %5314
      %5316 = vrot.lane.b32.xlu0 %v5270, 32
      %v5317 = vpop.permute.xlu0 %5316
      %5318 = vrot.lane.b32.xlu0 %v5271, 32
      %v5319 = vpop.permute.xlu0 %5318
      %5320 = vrot.lane.b32.xlu0 %v5272, 32
      %v5321 = vpop.permute.xlu0 %5320
      %5322 = vrot.lane.b32.xlu0 %v5273, 32
      %v5323 = vpop.permute.xlu0 %5322
      %5324 = vrot.lane.b32.xlu0 %v5274, 32
      %v5325 = vpop.permute.xlu0 %5324
      %5326 = vrot.lane.b32.xlu0 %v5275, 32
      %v5327 = vpop.permute.xlu0 %5326
      %5328 = vrot.lane.b32.xlu0 %v5276, 32
      %v5329 = vpop.permute.xlu0 %5328
      %5330 = vrot.lane.b32.xlu0 %v5277, 32
      %v5331 = vpop.permute.xlu0 %5330
      %5350 = vst.msk [vmem:[#allocation6 + $0x8] sm:$0xff] %vm4987, %v5297
      %5351 = vst.msk [vmem:[#allocation6 + $0x20] sm:$0xff] %vm4987, %v5299
      %5352 = vst.msk [vmem:[#allocation6 + $0x38] sm:$0xff] %vm4987, %v5301
      %5353 = vst.msk [vmem:[#allocation6 + $0x50] sm:$0xff] %vm4987, %v5303
      %5354 = vst.msk [vmem:[#allocation6 + $0x68] sm:$0xff] %vm4987, %v5305
      %5355 = vst.msk [vmem:[#allocation6 + $0x80] sm:$0xff] %vm4987, %v5307
      %5356 = vst.msk [vmem:[#allocation6 + $0x98] sm:$0xff] %vm4987, %v5309
      %5357 = vst.msk [vmem:[#allocation6 + $0xb0] sm:$0xff] %vm4987, %v5311
      %5358 = vst.msk [vmem:[#allocation6 + $0xc8] sm:$0xff] %vm4987, %v5313
      %5359 = vst.msk [vmem:[#allocation6 + $0xe0] sm:$0xff] %vm4987, %v5315
      %5360 = vst.msk [vmem:[#allocation6 + $0xf8] sm:$0xff] %vm4987, %v5317
      %5361 = vst.msk [vmem:[#allocation6 + $0x110] sm:$0xff] %vm4987, %v5319
      %5362 = vst.msk [vmem:[#allocation6 + $0x128] sm:$0xff] %vm4987, %v5321
      %5363 = vst.msk [vmem:[#allocation6 + $0x140] sm:$0xff] %vm4987, %v5323
      %5364 = vst.msk [vmem:[#allocation6 + $0x158] sm:$0xff] %vm4987, %v5325
      %5365 = vst.msk [vmem:[#allocation6 + $0x170] sm:$0xff] %vm4987, %v5327
      %5366 = vst.msk [vmem:[#allocation6 + $0x188] sm:$0xff] %vm4987, %v5329
      %5367 = vst.msk [vmem:[#allocation6 + $0x1a0] sm:$0xff] %vm4987, %v5331
      %v5368 = vld [vmem:[#allocation3 + $0x24] sm:$0xff]
      %v5369 = vld [vmem:[#allocation3 + $0x2c] sm:$0xff]
      %v5370 = vld [vmem:[#allocation3 + $0x34] sm:$0xff]
      %v5371 = vld [vmem:[#allocation3 + $0x3c] sm:$0xff]
      %v5372 = vld [vmem:[#allocation3 + $0x44] sm:$0xff]
      %v5373 = vld [vmem:[#allocation3 + $0x4c] sm:$0xff]
      %v5374 = vld [vmem:[#allocation3 + $0x54] sm:$0xff]
      %v5375 = vld [vmem:[#allocation3 + $0x5c] sm:$0xff]
      %v5376 = vld [vmem:[#allocation3 + $0x64] sm:$0xff]
      %v5377 = vld [vmem:[#allocation3 + $0x6c] sm:$0xff]
      %v5378 = vld [vmem:[#allocation3 + $0x74] sm:$0xff]
      %v5379 = vld [vmem:[#allocation3 + $0x7c] sm:$0xff]
      %v5380 = vld [vmem:[#allocation3 + $0x84] sm:$0xff]
      %v5381 = vld [vmem:[#allocation3 + $0x8c] sm:$0xff]
      %v5382 = vld [vmem:[#allocation3 + $0x94] sm:$0xff]
      %v5383 = vld [vmem:[#allocation3 + $0x9c] sm:$0xff]
      %v5384 = vld [vmem:[#allocation3 + $0xa4] sm:$0xff]
      %v5385 = vld [vmem:[#allocation3 + $0xac] sm:$0xff]
      %5404 = vrot.lane.b32.xlu0 %v5368, 64
      %v5405 = vpop.permute.xlu0 %5404
      %5406 = vrot.lane.b32.xlu0 %v5369, 64
      %v5407 = vpop.permute.xlu0 %5406
      %5408 = vrot.lane.b32.xlu0 %v5370, 64
      %v5409 = vpop.permute.xlu0 %5408
      %5410 = vrot.lane.b32.xlu0 %v5371, 64
      %v5411 = vpop.permute.xlu0 %5410
      %5412 = vrot.lane.b32.xlu0 %v5372, 64
      %v5413 = vpop.permute.xlu0 %5412
      %5414 = vrot.lane.b32.xlu0 %v5373, 64
      %v5415 = vpop.permute.xlu0 %5414
      %5416 = vrot.lane.b32.xlu0 %v5374, 64
      %v5417 = vpop.permute.xlu0 %5416
      %5418 = vrot.lane.b32.xlu0 %v5375, 64
      %v5419 = vpop.permute.xlu0 %5418
      %5420 = vrot.lane.b32.xlu0 %v5376, 64
      %v5421 = vpop.permute.xlu0 %5420
      %5422 = vrot.lane.b32.xlu0 %v5377, 64
      %v5423 = vpop.permute.xlu0 %5422
      %5424 = vrot.lane.b32.xlu0 %v5378, 64
      %v5425 = vpop.permute.xlu0 %5424
      %5426 = vrot.lane.b32.xlu0 %v5379, 64
      %v5427 = vpop.permute.xlu0 %5426
      %5428 = vrot.lane.b32.xlu0 %v5380, 64
      %v5429 = vpop.permute.xlu0 %5428
      %5430 = vrot.lane.b32.xlu0 %v5381, 64
      %v5431 = vpop.permute.xlu0 %5430
      %5432 = vrot.lane.b32.xlu0 %v5382, 64
      %v5433 = vpop.permute.xlu0 %5432
      %5434 = vrot.lane.b32.xlu0 %v5383, 64
      %v5435 = vpop.permute.xlu0 %5434
      %5436 = vrot.lane.b32.xlu0 %v5384, 64
      %v5437 = vpop.permute.xlu0 %5436
      %5438 = vrot.lane.b32.xlu0 %v5385, 64
      %v5439 = vpop.permute.xlu0 %5438
      %5458 = vst.msk [vmem:[#allocation6 + $0x8] sm:$0xff] %vm5096, %v5405
      %5459 = vst.msk [vmem:[#allocation6 + $0x20] sm:$0xff] %vm5096, %v5407
      %5460 = vst.msk [vmem:[#allocation6 + $0x38] sm:$0xff] %vm5096, %v5409
      %5461 = vst.msk [vmem:[#allocation6 + $0x50] sm:$0xff] %vm5096, %v5411
      %5462 = vst.msk [vmem:[#allocation6 + $0x68] sm:$0xff] %vm5096, %v5413
      %5463 = vst.msk [vmem:[#allocation6 + $0x80] sm:$0xff] %vm5096, %v5415
      %5464 = vst.msk [vmem:[#allocation6 + $0x98] sm:$0xff] %vm5096, %v5417
      %5465 = vst.msk [vmem:[#allocation6 + $0xb0] sm:$0xff] %vm5096, %v5419
      %5466 = vst.msk [vmem:[#allocation6 + $0xc8] sm:$0xff] %vm5096, %v5421
      %5467 = vst.msk [vmem:[#allocation6 + $0xe0] sm:$0xff] %vm5096, %v5423
      %5468 = vst.msk [vmem:[#allocation6 + $0xf8] sm:$0xff] %vm5096, %v5425
      %5469 = vst.msk [vmem:[#allocation6 + $0x110] sm:$0xff] %vm5096, %v5427
      %5470 = vst.msk [vmem:[#allocation6 + $0x128] sm:$0xff] %vm5096, %v5429
      %5471 = vst.msk [vmem:[#allocation6 + $0x140] sm:$0xff] %vm5096, %v5431
      %5472 = vst.msk [vmem:[#allocation6 + $0x158] sm:$0xff] %vm5096, %v5433
      %5473 = vst.msk [vmem:[#allocation6 + $0x170] sm:$0xff] %vm5096, %v5435
      %5474 = vst.msk [vmem:[#allocation6 + $0x188] sm:$0xff] %vm5096, %v5437
      %5475 = vst.msk [vmem:[#allocation6 + $0x1a0] sm:$0xff] %vm5096, %v5439
      %v5476 = vld [vmem:[#allocation3 + $0x25] sm:$0xff]
      %v5477 = vld [vmem:[#allocation3 + $0x2d] sm:$0xff]
      %v5478 = vld [vmem:[#allocation3 + $0x35] sm:$0xff]
      %v5479 = vld [vmem:[#allocation3 + $0x3d] sm:$0xff]
      %v5480 = vld [vmem:[#allocation3 + $0x45] sm:$0xff]
      %v5481 = vld [vmem:[#allocation3 + $0x4d] sm:$0xff]
      %v5482 = vld [vmem:[#allocation3 + $0x55] sm:$0xff]
      %v5483 = vld [vmem:[#allocation3 + $0x5d] sm:$0xff]
      %v5484 = vld [vmem:[#allocation3 + $0x65] sm:$0xff]
      %v5485 = vld [vmem:[#allocation3 + $0x6d] sm:$0xff]
      %v5486 = vld [vmem:[#allocation3 + $0x75] sm:$0xff]
      %v5487 = vld [vmem:[#allocation3 + $0x7d] sm:$0xff]
      %v5488 = vld [vmem:[#allocation3 + $0x85] sm:$0xff]
      %v5489 = vld [vmem:[#allocation3 + $0x8d] sm:$0xff]
      %v5490 = vld [vmem:[#allocation3 + $0x95] sm:$0xff]
      %v5491 = vld [vmem:[#allocation3 + $0x9d] sm:$0xff]
      %v5492 = vld [vmem:[#allocation3 + $0xa5] sm:$0xff]
      %v5493 = vld [vmem:[#allocation3 + $0xad] sm:$0xff]
      %5512 = vrot.lane.b32.xlu0 %v5476, 96
      %v5513 = vpop.permute.xlu0 %5512
      %5514 = vrot.lane.b32.xlu0 %v5477, 96
      %v5515 = vpop.permute.xlu0 %5514
      %5516 = vrot.lane.b32.xlu0 %v5478, 96
      %v5517 = vpop.permute.xlu0 %5516
      %5518 = vrot.lane.b32.xlu0 %v5479, 96
      %v5519 = vpop.permute.xlu0 %5518
      %5520 = vrot.lane.b32.xlu0 %v5480, 96
      %v5521 = vpop.permute.xlu0 %5520
      %5522 = vrot.lane.b32.xlu0 %v5481, 96
      %v5523 = vpop.permute.xlu0 %5522
      %5524 = vrot.lane.b32.xlu0 %v5482, 96
      %v5525 = vpop.permute.xlu0 %5524
      %5526 = vrot.lane.b32.xlu0 %v5483, 96
      %v5527 = vpop.permute.xlu0 %5526
      %5528 = vrot.lane.b32.xlu0 %v5484, 96
      %v5529 = vpop.permute.xlu0 %5528
      %5530 = vrot.lane.b32.xlu0 %v5485, 96
      %v5531 = vpop.permute.xlu0 %5530
      %5532 = vrot.lane.b32.xlu0 %v5486, 96
      %v5533 = vpop.permute.xlu0 %5532
      %5534 = vrot.lane.b32.xlu0 %v5487, 96
      %v5535 = vpop.permute.xlu0 %5534
      %5536 = vrot.lane.b32.xlu0 %v5488, 96
      %v5537 = vpop.permute.xlu0 %5536
      %5538 = vrot.lane.b32.xlu0 %v5489, 96
      %v5539 = vpop.permute.xlu0 %5538
      %5540 = vrot.lane.b32.xlu0 %v5490, 96
      %v5541 = vpop.permute.xlu0 %5540
      %5542 = vrot.lane.b32.xlu0 %v5491, 96
      %v5543 = vpop.permute.xlu0 %5542
      %5544 = vrot.lane.b32.xlu0 %v5492, 96
      %v5545 = vpop.permute.xlu0 %5544
      %5546 = vrot.lane.b32.xlu0 %v5493, 96
      %v5547 = vpop.permute.xlu0 %5546
      %5566 = vst.msk [vmem:[#allocation6 + $0x8] sm:$0xff] %vm5205, %v5513
      %5567 = vst.msk [vmem:[#allocation6 + $0x20] sm:$0xff] %vm5205, %v5515
      %5568 = vst.msk [vmem:[#allocation6 + $0x38] sm:$0xff] %vm5205, %v5517
      %5569 = vst.msk [vmem:[#allocation6 + $0x50] sm:$0xff] %vm5205, %v5519
      %5570 = vst.msk [vmem:[#allocation6 + $0x68] sm:$0xff] %vm5205, %v5521
      %5571 = vst.msk [vmem:[#allocation6 + $0x80] sm:$0xff] %vm5205, %v5523
      %5572 = vst.msk [vmem:[#allocation6 + $0x98] sm:$0xff] %vm5205, %v5525
      %5573 = vst.msk [vmem:[#allocation6 + $0xb0] sm:$0xff] %vm5205, %v5527
      %5574 = vst.msk [vmem:[#allocation6 + $0xc8] sm:$0xff] %vm5205, %v5529
      %5575 = vst.msk [vmem:[#allocation6 + $0xe0] sm:$0xff] %vm5205, %v5531
      %5576 = vst.msk [vmem:[#allocation6 + $0xf8] sm:$0xff] %vm5205, %v5533
      %5577 = vst.msk [vmem:[#allocation6 + $0x110] sm:$0xff] %vm5205, %v5535
      %5578 = vst.msk [vmem:[#allocation6 + $0x128] sm:$0xff] %vm5205, %v5537
      %5579 = vst.msk [vmem:[#allocation6 + $0x140] sm:$0xff] %vm5205, %v5539
      %5580 = vst.msk [vmem:[#allocation6 + $0x158] sm:$0xff] %vm5205, %v5541
      %5581 = vst.msk [vmem:[#allocation6 + $0x170] sm:$0xff] %vm5205, %v5543
      %5582 = vst.msk [vmem:[#allocation6 + $0x188] sm:$0xff] %vm5205, %v5545
      %5583 = vst.msk [vmem:[#allocation6 + $0x1a0] sm:$0xff] %vm5205, %v5547
      %v5584 = vld [vmem:[#allocation3 + $0x26] sm:$0xff]
      %v5585 = vld [vmem:[#allocation3 + $0x2e] sm:$0xff]
      %v5586 = vld [vmem:[#allocation3 + $0x36] sm:$0xff]
      %v5587 = vld [vmem:[#allocation3 + $0x3e] sm:$0xff]
      %v5588 = vld [vmem:[#allocation3 + $0x46] sm:$0xff]
      %v5589 = vld [vmem:[#allocation3 + $0x4e] sm:$0xff]
      %v5590 = vld [vmem:[#allocation3 + $0x56] sm:$0xff]
      %v5591 = vld [vmem:[#allocation3 + $0x5e] sm:$0xff]
      %v5592 = vld [vmem:[#allocation3 + $0x66] sm:$0xff]
      %v5593 = vld [vmem:[#allocation3 + $0x6e] sm:$0xff]
      %v5594 = vld [vmem:[#allocation3 + $0x76] sm:$0xff]
      %v5595 = vld [vmem:[#allocation3 + $0x7e] sm:$0xff]
      %v5596 = vld [vmem:[#allocation3 + $0x86] sm:$0xff]
      %v5597 = vld [vmem:[#allocation3 + $0x8e] sm:$0xff]
      %v5598 = vld [vmem:[#allocation3 + $0x96] sm:$0xff]
      %v5599 = vld [vmem:[#allocation3 + $0x9e] sm:$0xff]
      %v5600 = vld [vmem:[#allocation3 + $0xa6] sm:$0xff]
      %v5601 = vld [vmem:[#allocation3 + $0xae] sm:$0xff]
      %5602 = vst.msk [vmem:[#allocation6 + $0x10] sm:$0xff] %vm4798, %v5584
      %5603 = vst.msk [vmem:[#allocation6 + $0x28] sm:$0xff] %vm4798, %v5585
      %5604 = vst.msk [vmem:[#allocation6 + $0x40] sm:$0xff] %vm4798, %v5586
      %5605 = vst.msk [vmem:[#allocation6 + $0x58] sm:$0xff] %vm4798, %v5587
      %5606 = vst.msk [vmem:[#allocation6 + $0x70] sm:$0xff] %vm4798, %v5588
      %5607 = vst.msk [vmem:[#allocation6 + $0x88] sm:$0xff] %vm4798, %v5589
      %5608 = vst.msk [vmem:[#allocation6 + $0xa0] sm:$0xff] %vm4798, %v5590
      %5609 = vst.msk [vmem:[#allocation6 + $0xb8] sm:$0xff] %vm4798, %v5591
      %5610 = vst.msk [vmem:[#allocation6 + $0xd0] sm:$0xff] %vm4798, %v5592
      %5611 = vst.msk [vmem:[#allocation6 + $0xe8] sm:$0xff] %vm4798, %v5593
      %5612 = vst.msk [vmem:[#allocation6 + $0x100] sm:$0xff] %vm4798, %v5594
      %5613 = vst.msk [vmem:[#allocation6 + $0x118] sm:$0xff] %vm4798, %v5595
      %5614 = vst.msk [vmem:[#allocation6 + $0x130] sm:$0xff] %vm4798, %v5596
      %5615 = vst.msk [vmem:[#allocation6 + $0x148] sm:$0xff] %vm4798, %v5597
      %5616 = vst.msk [vmem:[#allocation6 + $0x160] sm:$0xff] %vm4798, %v5598
      %5617 = vst.msk [vmem:[#allocation6 + $0x178] sm:$0xff] %vm4798, %v5599
      %5618 = vst.msk [vmem:[#allocation6 + $0x190] sm:$0xff] %vm4798, %v5600
      %5619 = vst.msk [vmem:[#allocation6 + $0x1a8] sm:$0xff] %vm4798, %v5601
      %v5620 = vld [vmem:[#allocation6] sm:$0xff]
      %v5621 = vld [vmem:[#allocation6 + $0x8] sm:$0xff]
      %v5622 = vld [vmem:[#allocation6 + $0x10] sm:$0xff]
      %v5623 = vld [vmem:[#allocation6 + $0x18] sm:$0xff]
      %v5624 = vld [vmem:[#allocation6 + $0x20] sm:$0xff]
      %v5625 = vld [vmem:[#allocation6 + $0x28] sm:$0xff]
      %v5626 = vld [vmem:[#allocation6 + $0x30] sm:$0xff]
      %v5627 = vld [vmem:[#allocation6 + $0x38] sm:$0xff]
      %v5628 = vld [vmem:[#allocation6 + $0x40] sm:$0xff]
      %v5629 = vld [vmem:[#allocation6 + $0x48] sm:$0xff]
      %v5630 = vld [vmem:[#allocation6 + $0x50] sm:$0xff]
      %v5631 = vld [vmem:[#allocation6 + $0x58] sm:$0xff]
      %v5632 = vld [vmem:[#allocation6 + $0x60] sm:$0xff]
      %v5633 = vld [vmem:[#allocation6 + $0x68] sm:$0xff]
      %v5634 = vld [vmem:[#allocation6 + $0x70] sm:$0xff]
      %v5635 = vld [vmem:[#allocation6 + $0x78] sm:$0xff]
      %v5636 = vld [vmem:[#allocation6 + $0x80] sm:$0xff]
      %v5637 = vld [vmem:[#allocation6 + $0x88] sm:$0xff]
      %v5638 = vld [vmem:[#allocation6 + $0x90] sm:$0xff]
      %v5639 = vld [vmem:[#allocation6 + $0x98] sm:$0xff]
      %v5640 = vld [vmem:[#allocation6 + $0xa0] sm:$0xff]
      %v5641 = vld [vmem:[#allocation6 + $0xa8] sm:$0xff]
      %v5642 = vld [vmem:[#allocation6 + $0xb0] sm:$0xff]
      %v5643 = vld [vmem:[#allocation6 + $0xb8] sm:$0xff]
      %v5644 = vld [vmem:[#allocation6 + $0xc0] sm:$0xff]
      %v5645 = vld [vmem:[#allocation6 + $0xc8] sm:$0xff]
      %v5646 = vld [vmem:[#allocation6 + $0xd0] sm:$0xff]
      %v5647 = vld [vmem:[#allocation6 + $0xd8] sm:$0xff]
      %v5648 = vld [vmem:[#allocation6 + $0xe0] sm:$0xff]
      %v5649 = vld [vmem:[#allocation6 + $0xe8] sm:$0xff]
      %v5650 = vld [vmem:[#allocation6 + $0xf0] sm:$0xff]
      %v5651 = vld [vmem:[#allocation6 + $0xf8] sm:$0xff]
      %v5652 = vld [vmem:[#allocation6 + $0x100] sm:$0xff]
      %v5653 = vld [vmem:[#allocation6 + $0x108] sm:$0xff]
      %v5654 = vld [vmem:[#allocation6 + $0x110] sm:$0xff]
      %v5655 = vld [vmem:[#allocation6 + $0x118] sm:$0xff]
      %v5656 = vld [vmem:[#allocation6 + $0x120] sm:$0xff]
      %v5657 = vld [vmem:[#allocation6 + $0x128] sm:$0xff]
      %v5658 = vld [vmem:[#allocation6 + $0x130] sm:$0xff]
      %v5659 = vld [vmem:[#allocation6 + $0x138] sm:$0xff]
      %v5660 = vld [vmem:[#allocation6 + $0x140] sm:$0xff]
      %v5661 = vld [vmem:[#allocation6 + $0x148] sm:$0xff]
      %v5662 = vld [vmem:[#allocation6 + $0x150] sm:$0xff]
      %v5663 = vld [vmem:[#allocation6 + $0x158] sm:$0xff]
      %v5664 = vld [vmem:[#allocation6 + $0x160] sm:$0xff]
      %v5665 = vld [vmem:[#allocation6 + $0x168] sm:$0xff]
      %v5666 = vld [vmem:[#allocation6 + $0x170] sm:$0xff]
      %v5667 = vld [vmem:[#allocation6 + $0x178] sm:$0xff]
      %v5668 = vld [vmem:[#allocation6 + $0x180] sm:$0xff]
      %v5669 = vld [vmem:[#allocation6 + $0x188] sm:$0xff]
      %v5670 = vld [vmem:[#allocation6 + $0x190] sm:$0xff]
      %v5671 = vld [vmem:[#allocation6 + $0x198] sm:$0xff]
      %v5672 = vld [vmem:[#allocation6 + $0x1a0] sm:$0xff]
      %v5673 = vld [vmem:[#allocation6 + $0x1a8] sm:$0xff]
      %v5674 = vpack.c.bf16 %v5623, %v5620
      %v5675 = vpack.c.bf16 %v5624, %v5621
      %v5676 = vpack.c.bf16 %v5625, %v5622
      %v5677 = vpack.c.bf16 %v5629, %v5626
      %v5678 = vpack.c.bf16 %v5630, %v5627
      %v5679 = vpack.c.bf16 %v5631, %v5628
      %v5680 = vpack.c.bf16 %v5635, %v5632
      %v5681 = vpack.c.bf16 %v5636, %v5633
      %v5682 = vpack.c.bf16 %v5637, %v5634
      %v5683 = vpack.c.bf16 %v5641, %v5638
      %v5684 = vpack.c.bf16 %v5642, %v5639
      %v5685 = vpack.c.bf16 %v5643, %v5640
      %v5686 = vpack.c.bf16 %v5647, %v5644
      %v5687 = vpack.c.bf16 %v5648, %v5645
      %v5688 = vpack.c.bf16 %v5649, %v5646
      %v5689 = vpack.c.bf16 %v5653, %v5650
      %v5690 = vpack.c.bf16 %v5654, %v5651
      %v5691 = vpack.c.bf16 %v5655, %v5652
      %v5692 = vpack.c.bf16 %v5659, %v5656
      %v5693 = vpack.c.bf16 %v5660, %v5657
      %v5694 = vpack.c.bf16 %v5661, %v5658
      %v5695 = vpack.c.bf16 %v5665, %v5662
      %v5696 = vpack.c.bf16 %v5666, %v5663
      %v5697 = vpack.c.bf16 %v5667, %v5664
      %v5698 = vpack.c.bf16 %v5671, %v5668
      %v5699 = vpack.c.bf16 %v5672, %v5669
      %v5700 = vpack.c.bf16 %v5673, %v5670
      %v5701 = vld [vmem:[%s5] sm:$0xf]
      %v5702 = vld [vmem:[%s5 + $0x4] sm:$0xf]
      %v5703 = vld [vmem:[%s5 + $0x8] sm:$0xf]
      %v5704 = vld [vmem:[%s5 + $0xc] sm:$0xf]
      %v5705 = vld [vmem:[%s5 + $0x10] sm:$0xf]
      %v5706 = vld [vmem:[%s5 + $0x14] sm:$0xf]
      %v5707 = vld [vmem:[%s5 + $0x18] sm:$0xf]
      %v5708 = vld [vmem:[%s5 + $0x1c] sm:$0xf]
      %v5709 = vld [vmem:[%s5 + $0x20] sm:$0xf]
      %v5710 = vld [vmem:[%s5 + $0x24] sm:$0xf]
      %v5711 = vld [vmem:[%s5 + $0x28] sm:$0xf]
      %v5712 = vld [vmem:[%s5 + $0x2c] sm:$0xf]
      %v5713 = vld [vmem:[%s5 + $0x30] sm:$0xf]
      %v5714 = vld [vmem:[%s5 + $0x34] sm:$0xf]
      %v5715 = vld [vmem:[%s5 + $0x38] sm:$0xf]
      %v5716 = vld [vmem:[%s5 + $0x3c] sm:$0xf]
      %v5717 = vld [vmem:[%s5 + $0x40] sm:$0xf]
      %v5718 = vld [vmem:[%s5 + $0x44] sm:$0xf]
      %v5719 = vld [vmem:[%s5 + $0x48] sm:$0xf]
      %v5720 = vld [vmem:[%s5 + $0x4c] sm:$0xf]
      %v5721 = vld [vmem:[%s5 + $0x50] sm:$0xf]
      %v5722 = vld [vmem:[%s5 + $0x54] sm:$0xf]
      %v5723 = vld [vmem:[%s5 + $0x58] sm:$0xf]
      %v5724 = vld [vmem:[%s5 + $0x5c] sm:$0xf]
      %v5725 = vld [vmem:[%s5 + $0x60] sm:$0xf]
      %v5726 = vld [vmem:[%s5 + $0x64] sm:$0xf]
      %v5727 = vld [vmem:[%s5 + $0x68] sm:$0xf]
      %v5728 = vld [vmem:[%s5 + $0x6c] sm:$0xf]
      %v5729 = vld [vmem:[%s5 + $0x70] sm:$0xf]
      %v5730 = vld [vmem:[%s5 + $0x74] sm:$0xf]
      %v5731 = vld [vmem:[%s5 + $0x78] sm:$0xf]
      %v5732 = vld [vmem:[%s5 + $0x7c] sm:$0xf]
      %v5733 = vld [vmem:[%s5 + $0x80] sm:$0xf]
      %v5734 = vld [vmem:[%s5 + $0x84] sm:$0xf]
      %v5735 = vld [vmem:[%s5 + $0x88] sm:$0xf]
      %v5736 = vld [vmem:[%s5 + $0x8c] sm:$0xf]
      %v5737 = vld [vmem:[%s6] sm:$0x1]
      %v5739 = vlaneseq
      %v5740 = vshrl.u32 %v5739, 7
      %v5741 = vsub.s32 0, %v5740
      %v5742 = vrot.slane %v5737, %v5741
      %v5780 = vunpack.c.l.b16 %v5701
      %v5781 = vunpack.c.l.b16 %v5702
      %v5782 = vunpack.c.l.b16 %v5703
      %v5783 = vunpack.c.l.b16 %v5704
      %v5784 = vunpack.c.l.b16 %v5705
      %v5785 = vunpack.c.l.b16 %v5706
      %v5786 = vunpack.c.l.b16 %v5707
      %v5787 = vunpack.c.l.b16 %v5708
      %v5788 = vunpack.c.l.b16 %v5709
      %v5789 = vunpack.c.l.b16 %v5710
      %v5790 = vunpack.c.l.b16 %v5711
      %v5791 = vunpack.c.l.b16 %v5712
      %v5792 = vunpack.c.l.b16 %v5713
      %v5793 = vunpack.c.l.b16 %v5714
      %v5794 = vunpack.c.l.b16 %v5715
      %v5795 = vunpack.c.l.b16 %v5716
      %v5796 = vunpack.c.l.b16 %v5717
      %v5797 = vunpack.c.l.b16 %v5718
      %v5798 = vunpack.c.l.b16 %v5719
      %v5799 = vunpack.c.l.b16 %v5720
      %v5800 = vunpack.c.l.b16 %v5721
      %v5801 = vunpack.c.l.b16 %v5722
      %v5802 = vunpack.c.l.b16 %v5723
      %v5803 = vunpack.c.l.b16 %v5724
      %v5804 = vunpack.c.l.b16 %v5725
      %v5805 = vunpack.c.l.b16 %v5726
      %v5806 = vunpack.c.l.b16 %v5727
      %v5807 = vunpack.c.l.b16 %v5728
      %v5808 = vunpack.c.l.b16 %v5729
      %v5809 = vunpack.c.l.b16 %v5730
      %v5810 = vunpack.c.l.b16 %v5731
      %v5811 = vunpack.c.l.b16 %v5732
      %v5812 = vunpack.c.l.b16 %v5733
      %v5813 = vunpack.c.l.b16 %v5734
      %v5814 = vunpack.c.l.b16 %v5735
      %v5815 = vunpack.c.l.b16 %v5736
      %v5816 = vpack.c.b16 %v5781, %v5780
      %v5817 = vpack.c.b16 %v5783, %v5782
      %v5818 = vpack.c.b16 %v5785, %v5784
      %v5819 = vpack.c.b16 %v5787, %v5786
      %v5820 = vpack.c.b16 %v5789, %v5788
      %v5821 = vpack.c.b16 %v5791, %v5790
      %v5822 = vpack.c.b16 %v5793, %v5792
      %v5823 = vpack.c.b16 %v5795, %v5794
      %v5824 = vpack.c.b16 %v5797, %v5796
      %v5825 = vpack.c.b16 %v5799, %v5798
      %v5826 = vpack.c.b16 %v5801, %v5800
      %v5827 = vpack.c.b16 %v5803, %v5802
      %v5828 = vpack.c.b16 %v5805, %v5804
      %v5829 = vpack.c.b16 %v5807, %v5806
      %v5830 = vpack.c.b16 %v5809, %v5808
      %v5831 = vpack.c.b16 %v5811, %v5810
      %v5832 = vpack.c.b16 %v5813, %v5812
      %v5833 = vpack.c.b16 %v5815, %v5814
      %v5853 = vsel %vm4798, %v5676, 0
      %v5856 = vsel %vm4798, %v5679, 0
      %v5859 = vsel %vm4798, %v5682, 0
      %v5862 = vsel %vm4798, %v5685, 0
      %v5865 = vsel %vm4798, %v5688, 0
      %v5868 = vsel %vm4798, %v5691, 0
      %v5871 = vsel %vm4798, %v5694, 0
      %v5874 = vsel %vm4798, %v5697, 0
      %v5877 = vsel %vm4798, %v5700, 0
      %5879 = vmatprep.subr.bf16.mxu0 0
      %5880 = vmatpush1.bf16.msra.mxu0 %v5816
      %5881 = vmatprep.subr.bf16.mxu0 0
      %5882 = vmatpush1.bf16.msra.mxu0 %v5817
      %5883 = vmatprep.subr.bf16.mxu0 0
      %5884 = vmatpush1.bf16.msra.mxu0 %v5818
      %5885 = vmatprep.subr.bf16.mxu0 0
      %5886 = vmatpush1.bf16.msra.mxu0 %v5819
      %5887 = vmatprep.subr.bf16.mxu0 0
      %5888 = vmatpush1.bf16.msra.mxu0 %v5820
      %5889 = vmatprep.subr.bf16.mxu0 0
      %5890 = vmatpush1.bf16.msra.mxu0 %v5821
      %5891 = vmatprep.subr.bf16.mxu0 0
      %5892 = vmatpush1.bf16.msra.mxu0 %v5822
      %5893 = vmatprep.subr.bf16.mxu0 0
      %5894 = vmatpush1.bf16.msra.mxu0 %v5823
      %5895 = vmatprep.subr.bf16.mxu0 0
      %5896 = vmatpush1.bf16.msra.mxu0 %v5824
      %5897 = vmatprep.subr.bf16.mxu0 0
      %5898 = vmatpush1.bf16.msra.mxu0 %v5825
      %5899 = vmatprep.subr.bf16.mxu0 0
      %5900 = vmatpush1.bf16.msra.mxu0 %v5826
      %5901 = vmatprep.subr.bf16.mxu0 0
      %5902 = vmatpush1.bf16.msra.mxu0 %v5827
      %5903 = vmatprep.subr.bf16.mxu0 0
      %5904 = vmatpush1.bf16.msra.mxu0 %v5828
      %5905 = vmatprep.subr.bf16.mxu0 0
      %5906 = vmatpush1.bf16.msra.mxu0 %v5829
      %5907 = vmatprep.subr.bf16.mxu0 0
      %5908 = vmatpush1.bf16.msra.mxu0 %v5830
      %5909 = vmatprep.subr.bf16.mxu0 0
      %5910 = vmatpush1.bf16.msra.mxu0 %v5831
      %5911 = vmatprep.mubr.bf16.mxu0 %v5675
      %5912 = vmatmul.mubr.bf16.gmra.mrb[0].mxu0 %v5674
      %v5913 = vpop.f32.mrb[0].mxu0
      %v5914 = vadd.f32 %v5742, %v5913
      %v5915 = vpop.f32.mrb[0].mxu0
      %v5916 = vpop.f32.mrb[0].mxu0
      %v5917 = vadd.f32 %v5742, %v5916
      %v5918 = vpop.f32.mrb[0].mxu0
      %5919 = vmatprep.mubr.bf16.mxu0 %v5678
      %5920 = vmatmul.mubr.bf16.gmra.mrb[0].mxu0 %v5677
      %v5921 = vpop.f32.mrb[0].mxu0
      %v5922 = vadd.f32 %v5742, %v5921
      %v5923 = vpop.f32.mrb[0].mxu0
      %v5924 = vpop.f32.mrb[0].mxu0
      %v5925 = vadd.f32 %v5742, %v5924
      %v5926 = vpop.f32.mrb[0].mxu0
      %5927 = vmatprep.mubr.bf16.mxu0 %v5681
      %5928 = vmatmul.mubr.bf16.gmra.mrb[0].mxu0 %v5680
      %v5929 = vpop.f32.mrb[0].mxu0
      %v5930 = vadd.f32 %v5742, %v5929
      %v5931 = vpop.f32.mrb[0].mxu0
      %v5932 = vpop.f32.mrb[0].mxu0
      %v5933 = vadd.f32 %v5742, %v5932
      %v5934 = vpop.f32.mrb[0].mxu0
      %5935 = vmatprep.mubr.bf16.mxu0 %v5684
      %5936 = vmatmul.mubr.bf16.gmra.mrb[0].mxu0 %v5683
      %v5937 = vpop.f32.mrb[0].mxu0
      %v5938 = vadd.f32 %v5742, %v5937
      %v5939 = vpop.f32.mrb[0].mxu0
      %v5940 = vpop.f32.mrb[0].mxu0
      %v5941 = vadd.f32 %v5742, %v5940
      %v5942 = vpop.f32.mrb[0].mxu0
      %5943 = vmatprep.mubr.bf16.mxu0 %v5687
      %5944 = vmatmul.mubr.bf16.gmra.mrb[0].mxu0 %v5686
      %v5945 = vpop.f32.mrb[0].mxu0
      %v5946 = vadd.f32 %v5742, %v5945
      %v5947 = vpop.f32.mrb[0].mxu0
      %v5948 = vpop.f32.mrb[0].mxu0
      %v5949 = vadd.f32 %v5742, %v5948
      %v5950 = vpop.f32.mrb[0].mxu0
      %5951 = vmatprep.mubr.bf16.mxu0 %v5690
      %5952 = vmatmul.mubr.bf16.gmra.mrb[0].mxu0 %v5689
      %v5953 = vpop.f32.mrb[0].mxu0
      %v5954 = vadd.f32 %v5742, %v5953
      %v5955 = vpop.f32.mrb[0].mxu0
      %v5956 = vpop.f32.mrb[0].mxu0
      %v5957 = vadd.f32 %v5742, %v5956
      %v5958 = vpop.f32.mrb[0].mxu0
      %5959 = vmatprep.mubr.bf16.mxu0 %v5693
      %5960 = vmatmul.mubr.bf16.gmra.mrb[0].mxu0 %v5692
      %v5961 = vpop.f32.mrb[0].mxu0
      %v5962 = vadd.f32 %v5742, %v5961
      %v5963 = vpop.f32.mrb[0].mxu0
      %v5964 = vpop.f32.mrb[0].mxu0
      %v5965 = vadd.f32 %v5742, %v5964
      %v5966 = vpop.f32.mrb[0].mxu0
      %5967 = vmatprep.mubr.bf16.mxu0 %v5696
      %5968 = vmatmul.mubr.bf16.gmra.mrb[0].mxu0 %v5695
      %v5969 = vpop.f32.mrb[0].mxu0
      %v5970 = vadd.f32 %v5742, %v5969
      %v5971 = vpop.f32.mrb[0].mxu0
      %v5972 = vpop.f32.mrb[0].mxu0
      %v5973 = vadd.f32 %v5742, %v5972
      %v5974 = vpop.f32.mrb[0].mxu0
      %5975 = vmatprep.mubr.bf16.mxu0 %v5699
      %5976 = vmatmul.mubr.bf16.gmra.mrb[0].mxu0 %v5698
      %v5977 = vpop.f32.mrb[0].mxu0
      %v5978 = vadd.f32 %v5742, %v5977
      %v5979 = vpop.f32.mrb[0].mxu0
      %v5980 = vpop.f32.mrb[0].mxu0
      %v5981 = vadd.f32 %v5742, %v5980
      %v5982 = vpop.f32.mrb[0].mxu0
      %5983 = vdwg.mxu0
      %5984 = vmatprep.subr.bf16.mxu0 0
      %5985 = vmatpush1.bf16.msra.mxu0 %v5832
      %5986 = vmatprep.subr.bf16.mxu0 0
      %5987 = vmatpush1.bf16.msra.mxu0 %v5833
      %5988 = vmatprep.subr.bf16.mxu0 0
      %5989 = vmatpush1.bf16.msra.mxu0 0
      %5990 = vmatprep.subr.bf16.mxu0 0
      %5991 = vmatpush1.bf16.msra.mxu0 0
      %5992 = vmatprep.subr.bf16.mxu0 0
      %5993 = vmatpush1.bf16.msra.mxu0 0
      %5994 = vmatprep.subr.bf16.mxu0 0
      %5995 = vmatpush1.bf16.msra.mxu0 0
      %5996 = vmatprep.subr.bf16.mxu0 0
      %5997 = vmatpush1.bf16.msra.mxu0 0
      %5998 = vmatprep.subr.bf16.mxu0 0
      %5999 = vmatpush1.bf16.msra.mxu0 0
      %6000 = vmatprep.subr.bf16.mxu0 0
      %6001 = vmatpush1.bf16.msra.mxu0 0
      %6002 = vmatprep.subr.bf16.mxu0 0
      %6003 = vmatpush1.bf16.msra.mxu0 0
      %6004 = vmatprep.subr.bf16.mxu0 0
      %6005 = vmatpush1.bf16.msra.mxu0 0
      %6006 = vmatprep.subr.bf16.mxu0 0
      %6007 = vmatpush1.bf16.msra.mxu0 0
      %6008 = vmatprep.subr.bf16.mxu0 0
      %6009 = vmatpush1.bf16.msra.mxu0 0
      %6010 = vmatprep.subr.bf16.mxu0 0
      %6011 = vmatpush1.bf16.msra.mxu0 0
      %6012 = vmatprep.subr.bf16.mxu0 0
      %6013 = vmatpush1.bf16.msra.mxu0 0
      %6014 = vmatprep.subr.bf16.mxu0 0
      %6015 = vmatpush1.bf16.msra.mxu0 0
      %6016 = vmatprep.mubr.bf16.mxu0 0
      %6017 = vmatmul.mubr.bf16.gmra.mrb[0].mxu0 %v5853
      %v6018 = vpop.f32.mrb[0].mxu0
      %v6019 = vadd.f32 %v5914, %v6018
      %v6020 = vpop.f32.mrb[0].mxu0
      %v6021 = vpop.f32.mrb[0].mxu0
      %v6022 = vadd.f32 %v5917, %v6021
      %v6023 = vpop.f32.mrb[0].mxu0
      %6024 = vmatprep.mubr.bf16.mxu0 0
      %6025 = vmatmul.mubr.bf16.gmra.mrb[0].mxu0 %v5856
      %v6026 = vpop.f32.mrb[0].mxu0
      %v6027 = vadd.f32 %v5922, %v6026
      %v6028 = vpop.f32.mrb[0].mxu0
      %v6029 = vpop.f32.mrb[0].mxu0
      %v6030 = vadd.f32 %v5925, %v6029
      %v6031 = vpop.f32.mrb[0].mxu0
      %6032 = vmatprep.mubr.bf16.mxu0 0
      %6033 = vmatmul.mubr.bf16.gmra.mrb[0].mxu0 %v5859
      %v6034 = vpop.f32.mrb[0].mxu0
      %v6035 = vadd.f32 %v5930, %v6034
      %v6036 = vpop.f32.mrb[0].mxu0
      %v6037 = vpop.f32.mrb[0].mxu0
      %v6038 = vadd.f32 %v5933, %v6037
      %v6039 = vpop.f32.mrb[0].mxu0
      %6040 = vmatprep.mubr.bf16.mxu0 0
      %6041 = vmatmul.mubr.bf16.gmra.mrb[0].mxu0 %v5862
      %v6042 = vpop.f32.mrb[0].mxu0
      %v6043 = vadd.f32 %v5938, %v6042
      %v6044 = vpop.f32.mrb[0].mxu0
      %v6045 = vpop.f32.mrb[0].mxu0
      %v6046 = vadd.f32 %v5941, %v6045
      %v6047 = vpop.f32.mrb[0].mxu0
      %6048 = vmatprep.mubr.bf16.mxu0 0
      %6049 = vmatmul.mubr.bf16.gmra.mrb[0].mxu0 %v5865
      %v6050 = vpop.f32.mrb[0].mxu0
      %v6051 = vadd.f32 %v5946, %v6050
      %v6052 = vpop.f32.mrb[0].mxu0
      %v6053 = vpop.f32.mrb[0].mxu0
      %v6054 = vadd.f32 %v5949, %v6053
      %v6055 = vpop.f32.mrb[0].mxu0
      %6056 = vmatprep.mubr.bf16.mxu0 0
      %6057 = vmatmul.mubr.bf16.gmra.mrb[0].mxu0 %v5868
      %v6058 = vpop.f32.mrb[0].mxu0
      %v6059 = vadd.f32 %v5954, %v6058
      %v6060 = vpop.f32.mrb[0].mxu0
      %v6061 = vpop.f32.mrb[0].mxu0
      %v6062 = vadd.f32 %v5957, %v6061
      %v6063 = vpop.f32.mrb[0].mxu0
      %6064 = vmatprep.mubr.bf16.mxu0 0
      %6065 = vmatmul.mubr.bf16.gmra.mrb[0].mxu0 %v5871
      %v6066 = vpop.f32.mrb[0].mxu0
      %v6067 = vadd.f32 %v5962, %v6066
      %v6068 = vpop.f32.mrb[0].mxu0
      %v6069 = vpop.f32.mrb[0].mxu0
      %v6070 = vadd.f32 %v5965, %v6069
      %v6071 = vpop.f32.mrb[0].mxu0
      %6072 = vmatprep.mubr.bf16.mxu0 0
      %6073 = vmatmul.mubr.bf16.gmra.mrb[0].mxu0 %v5874
      %v6074 = vpop.f32.mrb[0].mxu0
      %v6075 = vadd.f32 %v5970, %v6074
      %v6076 = vpop.f32.mrb[0].mxu0
      %v6077 = vpop.f32.mrb[0].mxu0
      %v6078 = vadd.f32 %v5973, %v6077
      %v6079 = vpop.f32.mrb[0].mxu0
      %6080 = vmatprep.mubr.bf16.mxu0 0
      %6081 = vmatmul.mubr.bf16.gmra.mrb[0].mxu0 %v5877
      %v6082 = vpop.f32.mrb[0].mxu0
      %v6083 = vadd.f32 %v5978, %v6082
      %v6084 = vpop.f32.mrb[0].mxu0
      %v6085 = vpop.f32.mrb[0].mxu0
      %v6086 = vadd.f32 %v5981, %v6085
      %v6087 = vpop.f32.mrb[0].mxu0
      %6088 = vdwg.mxu0
      %v6089 = vmax.f32 %v6019, 0.0
      %v6090 = vmax.f32 %v6022, 0.0
      %v6091 = vmax.f32 %v6027, 0.0
      %v6092 = vmax.f32 %v6030, 0.0
      %v6093 = vmax.f32 %v6035, 0.0
      %v6094 = vmax.f32 %v6038, 0.0
      %v6095 = vmax.f32 %v6043, 0.0
      %v6096 = vmax.f32 %v6046, 0.0
      %v6097 = vmax.f32 %v6051, 0.0
      %v6098 = vmax.f32 %v6054, 0.0
      %v6099 = vmax.f32 %v6059, 0.0
      %v6100 = vmax.f32 %v6062, 0.0
      %v6101 = vmax.f32 %v6067, 0.0
      %v6102 = vmax.f32 %v6070, 0.0
      %v6103 = vmax.f32 %v6075, 0.0
      %v6104 = vmax.f32 %v6078, 0.0
      %v6105 = vmax.f32 %v6083, 0.0
      %v6106 = vmax.f32 %v6086, 0.0
      %v6107 = vpack.c.bf16 %v6090, %v6089
      %v6108 = vpack.c.bf16 %v6092, %v6091
      %v6109 = vpack.c.bf16 %v6094, %v6093
      %v6110 = vpack.c.bf16 %v6096, %v6095
      %v6111 = vpack.c.bf16 %v6098, %v6097
      %v6112 = vpack.c.bf16 %v6100, %v6099
      %v6113 = vpack.c.bf16 %v6102, %v6101
      %v6114 = vpack.c.bf16 %v6104, %v6103
      %v6115 = vpack.c.bf16 %v6106, %v6105
      %v6116 = vld [vmem:[%s7] sm:$0xf]
      %v6117 = vld [vmem:[%s7 + $0x4] sm:$0xf]
      %v6118 = vld [vmem:[%s7 + $0x8] sm:$0xf]
      %v6119 = vld [vmem:[%s7 + $0xc] sm:$0xf]
      %v6120 = vld [vmem:[%s8] sm:$0x1]
      %v6122 = vlaneseq
      %v6123 = vshrl.u32 %v6122, 7
      %v6124 = vsub.s32 0, %v6123
      %v6125 = vrot.slane %v6120, %v6124
      %v6131 = vunpack.c.l.b16 %v6116
      %v6132 = vunpack.c.l.b16 %v6117
      %v6133 = vunpack.c.l.b16 %v6118
      %v6134 = vunpack.c.l.b16 %v6119
      %v6135 = vpack.c.b16 %v6132, %v6131
      %v6136 = vpack.c.b16 %v6134, %v6133
      %v6140 = vsel %vm4798, %v6107, 0
      %v6143 = vsel %vm4798, %v6108, 0
      %v6146 = vsel %vm4798, %v6109, 0
      %v6149 = vsel %vm4798, %v6110, 0
      %v6152 = vsel %vm4798, %v6111, 0
      %v6155 = vsel %vm4798, %v6112, 0
      %v6158 = vsel %vm4798, %v6113, 0
      %v6161 = vsel %vm4798, %v6114, 0
      %v6164 = vsel %vm4798, %v6115, 0
      %6166 = vmatprep.subr.bf16.mxu0 0
      %6167 = vmatpush1.bf16.msra.mxu0 %v6135
      %6168 = vmatprep.subr.bf16.mxu0 0
      %6169 = vmatpush1.bf16.msra.mxu0 %v6136
      %6170 = vmatprep.subr.bf16.mxu0 0
      %6171 = vmatpush1.bf16.msra.mxu0 0
      %6172 = vmatprep.subr.bf16.mxu0 0
      %6173 = vmatpush1.bf16.msra.mxu0 0
      %6174 = vmatprep.subr.bf16.mxu0 0
      %6175 = vmatpush1.bf16.msra.mxu0 0
      %6176 = vmatprep.subr.bf16.mxu0 0
      %6177 = vmatpush1.bf16.msra.mxu0 0
      %6178 = vmatprep.subr.bf16.mxu0 0
      %6179 = vmatpush1.bf16.msra.mxu0 0
      %6180 = vmatprep.subr.bf16.mxu0 0
      %6181 = vmatpush1.bf16.msra.mxu0 0
      %6182 = vmatprep.subr.bf16.mxu0 0
      %6183 = vmatpush1.bf16.msra.mxu0 0
      %6184 = vmatprep.subr.bf16.mxu0 0
      %6185 = vmatpush1.bf16.msra.mxu0 0
      %6186 = vmatprep.subr.bf16.mxu0 0
      %6187 = vmatpush1.bf16.msra.mxu0 0
      %6188 = vmatprep.subr.bf16.mxu0 0
      %6189 = vmatpush1.bf16.msra.mxu0 0
      %6190 = vmatprep.subr.bf16.mxu0 0
      %6191 = vmatpush1.bf16.msra.mxu0 0
      %6192 = vmatprep.subr.bf16.mxu0 0
      %6193 = vmatpush1.bf16.msra.mxu0 0
      %6194 = vmatprep.subr.bf16.mxu0 0
      %6195 = vmatpush1.bf16.msra.mxu0 0
      %6196 = vmatprep.subr.bf16.mxu0 0
      %6197 = vmatpush1.bf16.msra.mxu0 0
      %6198 = vmatprep.mubr.bf16.mxu0 0
      %6199 = vmatmul.mubr.bf16.gmra.mrb[0].mxu0 %v6140
      %v6200 = vpop.f32.mrb[0].mxu0
      %v6201 = vadd.f32 %v6125, %v6200
      %v6202 = vpop.f32.mrb[0].mxu0
      %v6203 = vpop.f32.mrb[0].mxu0
      %v6204 = vadd.f32 %v6125, %v6203
      %v6205 = vpop.f32.mrb[0].mxu0
      %6206 = vmatprep.mubr.bf16.mxu0 0
      %6207 = vmatmul.mubr.bf16.gmra.mrb[0].mxu0 %v6143
      %v6208 = vpop.f32.mrb[0].mxu0
      %v6209 = vadd.f32 %v6125, %v6208
      %v6210 = vpop.f32.mrb[0].mxu0
      %v6211 = vpop.f32.mrb[0].mxu0
      %v6212 = vadd.f32 %v6125, %v6211
      %v6213 = vpop.f32.mrb[0].mxu0
      %6214 = vmatprep.mubr.bf16.mxu0 0
      %6215 = vmatmul.mubr.bf16.gmra.mrb[0].mxu0 %v6146
      %v6216 = vpop.f32.mrb[0].mxu0
      %v6217 = vadd.f32 %v6125, %v6216
      %v6218 = vpop.f32.mrb[0].mxu0
      %v6219 = vpop.f32.mrb[0].mxu0
      %v6220 = vadd.f32 %v6125, %v6219
      %v6221 = vpop.f32.mrb[0].mxu0
      %6222 = vmatprep.mubr.bf16.mxu0 0
      %6223 = vmatmul.mubr.bf16.gmra.mrb[0].mxu0 %v6149
      %v6224 = vpop.f32.mrb[0].mxu0
      %v6225 = vadd.f32 %v6125, %v6224
      %v6226 = vpop.f32.mrb[0].mxu0
      %v6227 = vpop.f32.mrb[0].mxu0
      %v6228 = vadd.f32 %v6125, %v6227
      %v6229 = vpop.f32.mrb[0].mxu0
      %6230 = vmatprep.mubr.bf16.mxu0 0
      %6231 = vmatmul.mubr.bf16.gmra.mrb[0].mxu0 %v6152
      %v6232 = vpop.f32.mrb[0].mxu0
      %v6233 = vadd.f32 %v6125, %v6232
      %v6234 = vpop.f32.mrb[0].mxu0
      %v6235 = vpop.f32.mrb[0].mxu0
      %v6236 = vadd.f32 %v6125, %v6235
      %v6237 = vpop.f32.mrb[0].mxu0
      %6238 = vmatprep.mubr.bf16.mxu0 0
      %6239 = vmatmul.mubr.bf16.gmra.mrb[0].mxu0 %v6155
      %v6240 = vpop.f32.mrb[0].mxu0
      %v6241 = vadd.f32 %v6125, %v6240
      %v6242 = vpop.f32.mrb[0].mxu0
      %v6243 = vpop.f32.mrb[0].mxu0
      %v6244 = vadd.f32 %v6125, %v6243
      %v6245 = vpop.f32.mrb[0].mxu0
      %6246 = vmatprep.mubr.bf16.mxu0 0
      %6247 = vmatmul.mubr.bf16.gmra.mrb[0].mxu0 %v6158
      %v6248 = vpop.f32.mrb[0].mxu0
      %v6249 = vadd.f32 %v6125, %v6248
      %v6250 = vpop.f32.mrb[0].mxu0
      %v6251 = vpop.f32.mrb[0].mxu0
      %v6252 = vadd.f32 %v6125, %v6251
      %v6253 = vpop.f32.mrb[0].mxu0
      %6254 = vmatprep.mubr.bf16.mxu0 0
      %6255 = vmatmul.mubr.bf16.gmra.mrb[0].mxu0 %v6161
      %v6256 = vpop.f32.mrb[0].mxu0
      %v6257 = vadd.f32 %v6125, %v6256
      %v6258 = vpop.f32.mrb[0].mxu0
      %v6259 = vpop.f32.mrb[0].mxu0
      %v6260 = vadd.f32 %v6125, %v6259
      %v6261 = vpop.f32.mrb[0].mxu0
      %6262 = vmatprep.mubr.bf16.mxu0 0
      %6263 = vmatmul.mubr.bf16.gmra.mrb[0].mxu0 %v6164
      %v6264 = vpop.f32.mrb[0].mxu0
      %v6265 = vadd.f32 %v6125, %v6264
      %v6266 = vpop.f32.mrb[0].mxu0
      %v6267 = vpop.f32.mrb[0].mxu0
      %v6268 = vadd.f32 %v6125, %v6267
      %v6269 = vpop.f32.mrb[0].mxu0
      %6270 = vdwg.mxu0
      %v6271 = vlaneseq
      %v6272 = vand.u32 %v6271, 127
      %v6273 = vsub.f32 0.0, %v6201
      %v6274 = vsub.f32 0.0, %v6204
      %v6275 = vsub.f32 0.0, %v6209
      %v6276 = vsub.f32 0.0, %v6212
      %v6277 = vsub.f32 0.0, %v6217
      %v6278 = vsub.f32 0.0, %v6220
      %v6279 = vsub.f32 0.0, %v6225
      %v6280 = vsub.f32 0.0, %v6228
      %v6281 = vsub.f32 0.0, %v6233
      %v6282 = vsub.f32 0.0, %v6236
      %v6283 = vsub.f32 0.0, %v6241
      %v6284 = vsub.f32 0.0, %v6244
      %v6285 = vsub.f32 0.0, %v6249
      %v6286 = vsub.f32 0.0, %v6252
      %v6287 = vsub.f32 0.0, %v6257
      %v6288 = vsub.f32 0.0, %v6260
      %v6289 = vsub.f32 0.0, %v6265
      %v6290 = vsub.f32 0.0, %v6268
      %v6291 = vmul.f32 %v6273, 1.442695
      %v6292 = vpow.pop %v6291
      %v6293 = vmul.f32 %v6274, 1.442695
      %v6294 = vpow.pop %v6293
      %v6295 = vmul.f32 %v6275, 1.442695
      %v6296 = vpow.pop %v6295
      %v6297 = vmul.f32 %v6276, 1.442695
      %v6298 = vpow.pop %v6297
      %v6299 = vmul.f32 %v6277, 1.442695
      %v6300 = vpow.pop %v6299
      %v6301 = vmul.f32 %v6278, 1.442695
      %v6302 = vpow.pop %v6301
      %v6303 = vmul.f32 %v6279, 1.442695
      %v6304 = vpow.pop %v6303
      %v6305 = vmul.f32 %v6280, 1.442695
      %v6306 = vpow.pop %v6305
      %v6307 = vmul.f32 %v6281, 1.442695
      %v6308 = vpow.pop %v6307
      %v6309 = vmul.f32 %v6282, 1.442695
      %v6310 = vpow.pop %v6309
      %v6311 = vmul.f32 %v6283, 1.442695
      %v6312 = vpow.pop %v6311
      %v6313 = vmul.f32 %v6284, 1.442695
      %v6314 = vpow.pop %v6313
      %v6315 = vmul.f32 %v6285, 1.442695
      %v6316 = vpow.pop %v6315
      %v6317 = vmul.f32 %v6286, 1.442695
      %v6318 = vpow.pop %v6317
      %v6319 = vmul.f32 %v6287, 1.442695
      %v6320 = vpow.pop %v6319
      %v6321 = vmul.f32 %v6288, 1.442695
      %v6322 = vpow.pop %v6321
      %v6323 = vmul.f32 %v6289, 1.442695
      %v6324 = vpow.pop %v6323
      %v6325 = vmul.f32 %v6290, 1.442695
      %v6326 = vpow.pop %v6325
      %v6327 = vadd.f32 %v6292, 1.0
      %v6328 = vadd.f32 %v6294, 1.0
      %v6329 = vadd.f32 %v6296, 1.0
      %v6330 = vadd.f32 %v6298, 1.0
      %v6331 = vadd.f32 %v6300, 1.0
      %v6332 = vadd.f32 %v6302, 1.0
      %v6333 = vadd.f32 %v6304, 1.0
      %v6334 = vadd.f32 %v6306, 1.0
      %v6335 = vadd.f32 %v6308, 1.0
      %v6336 = vadd.f32 %v6310, 1.0
      %v6337 = vadd.f32 %v6312, 1.0
      %v6338 = vadd.f32 %v6314, 1.0
      %v6339 = vadd.f32 %v6316, 1.0
      %v6340 = vadd.f32 %v6318, 1.0
      %v6341 = vadd.f32 %v6320, 1.0
      %v6342 = vadd.f32 %v6322, 1.0
      %v6343 = vadd.f32 %v6324, 1.0
      %v6344 = vadd.f32 %v6326, 1.0
      %v6345 = vrcp.pop %v6327
      %v6346 = vmul.f32 1.0, %v6345
      %v6347 = vrcp.pop %v6328
      %v6348 = vmul.f32 1.0, %v6347
      %v6349 = vrcp.pop %v6329
      %v6350 = vmul.f32 1.0, %v6349
      %v6351 = vrcp.pop %v6330
      %v6352 = vmul.f32 1.0, %v6351
      %v6353 = vrcp.pop %v6331
      %v6354 = vmul.f32 1.0, %v6353
      %v6355 = vrcp.pop %v6332
      %v6356 = vmul.f32 1.0, %v6355
      %v6357 = vrcp.pop %v6333
      %v6358 = vmul.f32 1.0, %v6357
      %v6359 = vrcp.pop %v6334
      %v6360 = vmul.f32 1.0, %v6359
      %v6361 = vrcp.pop %v6335
      %v6362 = vmul.f32 1.0, %v6361
      %v6363 = vrcp.pop %v6336
      %v6364 = vmul.f32 1.0, %v6363
      %v6365 = vrcp.pop %v6337
      %v6366 = vmul.f32 1.0, %v6365
      %v6367 = vrcp.pop %v6338
      %v6368 = vmul.f32 1.0, %v6367
      %v6369 = vrcp.pop %v6339
      %v6370 = vmul.f32 1.0, %v6369
      %v6371 = vrcp.pop %v6340
      %v6372 = vmul.f32 1.0, %v6371
      %v6373 = vrcp.pop %v6341
      %v6374 = vmul.f32 1.0, %v6373
      %v6375 = vrcp.pop %v6342
      %v6376 = vmul.f32 1.0, %v6375
      %v6377 = vrcp.pop %v6343
      %v6378 = vmul.f32 1.0, %v6377
      %v6379 = vrcp.pop %v6344
      %v6380 = vmul.f32 1.0, %v6379
      %vm6381 = vcmp.lt.s32.totalorder %v6272, 3
      %v6382 = vsel %vm6381, %v6346, %v6201
      %v6383 = vsel %vm6381, %v6348, %v6204
      %v6384 = vsel %vm6381, %v6350, %v6209
      %v6385 = vsel %vm6381, %v6352, %v6212
      %v6386 = vsel %vm6381, %v6354, %v6217
      %v6387 = vsel %vm6381, %v6356, %v6220
      %v6388 = vsel %vm6381, %v6358, %v6225
      %v6389 = vsel %vm6381, %v6360, %v6228
      %v6390 = vsel %vm6381, %v6362, %v6233
      %v6391 = vsel %vm6381, %v6364, %v6236
      %v6392 = vsel %vm6381, %v6366, %v6241
      %v6393 = vsel %vm6381, %v6368, %v6244
      %v6394 = vsel %vm6381, %v6370, %v6249
      %v6395 = vsel %vm6381, %v6372, %v6252
      %v6396 = vsel %vm6381, %v6374, %v6257
      %v6397 = vsel %vm6381, %v6376, %v6260
      %v6398 = vsel %vm6381, %v6378, %v6265
      %v6399 = vsel %vm6381, %v6380, %v6268
      %6400 = vst.msk [vmem:[%s372] sm:$0xff] %vm3309, %v6382
      %6401 = vst.msk [vmem:[%s372 + $0x8] sm:$0xff] %vm3309, %v6383
      %6402 = vst.msk [vmem:[%s372 + $0x10] sm:$0xff] %vm3309, %v6384
      %6403 = vst.msk [vmem:[%s372 + $0x18] sm:$0xff] %vm3309, %v6385
      %6404 = vst.msk [vmem:[%s372 + $0x20] sm:$0xff] %vm3309, %v6386
      %6405 = vst.msk [vmem:[%s372 + $0x28] sm:$0xff] %vm3309, %v6387
      %6406 = vst.msk [vmem:[%s372 + $0x30] sm:$0xff] %vm3309, %v6388
      %6407 = vst.msk [vmem:[%s372 + $0x38] sm:$0xff] %vm3309, %v6389
      %6408 = vst.msk [vmem:[%s372 + $0x40] sm:$0xff] %vm3309, %v6390
      %6409 = vst.msk [vmem:[%s372 + $0x48] sm:$0xff] %vm3309, %v6391
      %6410 = vst.msk [vmem:[%s372 + $0x50] sm:$0xff] %vm3309, %v6392
      %6411 = vst.msk [vmem:[%s372 + $0x58] sm:$0xff] %vm3309, %v6393
      %6412 = vst.msk [vmem:[%s372 + $0x60] sm:$0xff] %vm3309, %v6394
      %6413 = vst.msk [vmem:[%s372 + $0x68] sm:$0xff] %vm3309, %v6395
      %6414 = vst.msk [vmem:[%s372 + $0x70] sm:$0xff] %vm3309, %v6396
      %6415 = vst.msk [vmem:[%s372 + $0x78] sm:$0xff] %vm3309, %v6397
      %6416 = vst.msk [vmem:[%s372 + $0x80] sm:$0xff] %vm3309, %v6398
      %6417 = vst.msk [vmem:[%s372 + $0x88] sm:$0xff] %vm3309, %v6399
      %p6418 = scmp.lt.s32.totalorder %s22, 1
      %s6419 = scalar_select %p6418, %s22, 1
      %s6420 = smul.addr %s6419, 18
      %s6421 = smul.addr %s6420, 4
      %s6422 = scalar_lea.vmem %s9, %s6421
      %p6423 = scmp.lt.s32.totalorder %s22, 1
      %s6424 = scalar_select %p6423, %s22, 1
      %s6425 = smul.addr %s6424, 18
      %s6426 = smul.addr %s6425, 8
      %s6427 = scalar_lea.vmem %s10, %s6426
      // Predicated region
      $region57: #{generalized_rcnn_forward.2} parent=55 // pred_check
        %p6428 = pneg %p234
      $region58: #{generalized_rcnn_forward.2} parent=55 // pred_check_branch
        %6430 = sbr.rel (%p6428) target = $region60
      $region59: #{generalized_rcnn_forward.2} parent=55 // pred_region
        _
      $region60: #{generalized_rcnn_forward.2} parent=55 // pred_fallthru
        _
      // Predicated region
      $region61: #{generalized_rcnn_forward.2} parent=55 // pred_check
        %p6431 = pneg %p260
      $region62: #{generalized_rcnn_forward.2} parent=55 // pred_check_branch
        %6433 = sbr.rel (%p6431) target = $region64
      $region63: #{generalized_rcnn_forward.2} parent=55 // pred_region
        _
      $region64: #{generalized_rcnn_forward.2} parent=55 // pred_fallthru
        _
    $region56: #{generalized_rcnn_forward.2} parent=5 // pred_fallthru
      _
    %p6434 = scmp.le.s32.totalorder 2, %s17
    // Predicated region
    $region65: #{generalized_rcnn_forward.2} parent=5 // pred_check
      %p6435 = pneg %p6434
    $region66: #{generalized_rcnn_forward.2} parent=5 // pred_check_branch
      %6437 = sbr.rel (%p6435) target = $region68
    $region67: #{generalized_rcnn_forward.2} parent=5 // pred_region
      %s6438 = ssub.s32 %s17, 2
      // Predicated region
      $region69: #{generalized_rcnn_forward.2} parent=67 // pred_check
        %p6439 = pneg %p240
      $region70: #{generalized_rcnn_forward.2} parent=67 // pred_check_branch
        %6441 = sbr.rel (%p6439) target = $region72
      $region71: #{generalized_rcnn_forward.2} parent=67 // pred_region
        %p6442 = scmp.lt.s32.totalorder %s23, 1
        %s6443 = scalar_select %p6442, %s23, 1
        %s6444 = smul.addr %s6443, 18
        %s6445 = smul.addr %s6444, 4
        %s6446 = scalar_lea.vmem %s9, %s6445
      $region72: #{generalized_rcnn_forward.2} parent=67 // pred_fallthru
        _
      // Predicated region
      $region73: #{generalized_rcnn_forward.2} parent=67 // pred_check
        %p6447 = pneg %p266
      $region74: #{generalized_rcnn_forward.2} parent=67 // pred_check_branch
        %6449 = sbr.rel (%p6447) target = $region76
      $region75: #{generalized_rcnn_forward.2} parent=67 // pred_region
        %p6450 = scmp.lt.s32.totalorder %s23, 1
        %s6451 = scalar_select %p6450, %s23, 1
        %s6452 = smul.addr %s6451, 18
        %s6453 = smul.addr %s6452, 8
        %s6454 = scalar_lea.vmem %s10, %s6453
      $region76: #{generalized_rcnn_forward.2} parent=67 // pred_fallthru
        _
    $region68: #{generalized_rcnn_forward.2} parent=5 // pred_fallthru
      _
  $region6: #{generalized_rcnn_forward.2} parent=0 // loop_footer
    %s21 = sadd.s32 1, %s17
  $region7: #{generalized_rcnn_forward.2} parent=0 // loop_footer_branch
    %16 = sbr.rel target = $region3
  $region8: #{generalized_rcnn_forward.2} parent=0 // loop_exit
    _

</llo_original>
